<compile_context>
chip_gen: v7x
topology: tpu7x:2x2x1
jax: 0.10.0
libtpu: 0.0.40
codegen_flags: <defaults>
</compile_context>

<pallas_src>
import functools

import jax
import jax.numpy as jnp
import numpy as np
from jax.experimental import pallas as pl
from jax.experimental.pallas import tpu as pltpu


def _generator_kernel(x_ref, w_ref, b_ref, out_ref, xpad_ref, patch_ref, *,
                      H, W, C, n_blocks, negative_slope):
    """Fused 3-block residual generator for one batch element (grid axis = N)."""
    # Zero the padded scratch once; the 1-pixel border (and alignment pad) stays
    # zero for every conv, only the interior is rewritten per layer.
    xpad_ref[...] = jnp.zeros_like(xpad_ref)

    act = x_ref[0]                                         # (H, W, C), VMEM value
    for blk in range(n_blocks):
        identity = act
        for j in range(2):                                 # conv1, conv2 of the block
            layer = 2 * blk + j
            # 'same' padding entirely in VMEM (no HBM jnp.pad round-trip).
            xpad_ref[1:H + 1, 1:W + 1, :] = act
            # im2col: concatenate the 9 shifted views along K into the patch
            # scratch -> (H*W, 9*C).  Lane offsets are multiples of 128.
            for dy in range(3):
                for dx in range(3):
                    tap = dy * 3 + dx
                    patch_ref[:, tap * C:(tap + 1) * C] = (
                        xpad_ref[dy:dy + H, dx:dx + W, :].reshape(H * W, C))
            # One large MXU matmul per conv: (H*W, 9C) x (9C, Cout), f32 accum.
            acc = jnp.dot(patch_ref[...], w_ref[layer],
                          preferred_element_type=jnp.float32)
            acc = acc + b_ref[layer]                       # (1, Cout) broadcast
            acc = jnp.where(acc > 0, acc, negative_slope * acc)   # LeakyReLU(0.2)
            act = acc.reshape(H, W, C)
        act = act + identity                               # residual add (native layout)

    out_ref[0] = act.astype(out_ref.dtype)


def generator_forward(x, all_params, *, negative_slope=0.2):
    """x: (N, H, W, C) f32.  all_params: list of (w1, b1, w2, b2) per block,
    with w* in HWIO (3, 3, C, Cout) and b* (Cout,)."""
    N, H, W, C = x.shape
    n_blocks = len(all_params)
    n_layers = 2 * n_blocks

    # Flatten conv weights to (n_layers, 9*C, Cout) with tap-major (dy, dx) K
    # ordering, matching the in-kernel im2col; biases -> (n_layers, 1, Cout).
    ws, bs = [], []
    for (w1, b1, w2, b2) in all_params:
        ws += [w1, w2]
        bs += [b1, b2]
    Cout = ws[0].shape[-1]
    w_all = jnp.stack([w.reshape(9 * C, Cout) for w in ws])      # (6, 1152, 128)
    b_all = jnp.stack([b.reshape(1, Cout) for b in bs])          # (6, 1, 128)

    # Width of the padded activation scratch, rounded up to a sublane multiple.
    WP = max(8, ((W + 2 + 7) // 8) * 8)

    kern = functools.partial(_generator_kernel, H=H, W=W, C=C,
                             n_blocks=n_blocks, negative_slope=negative_slope)

    flops = int(2 * N * H * W * (9 * C) * Cout * n_layers)
    bytes_accessed = int((x.size + N * H * W * Cout + w_all.size + b_all.size) * 4)

    return pl.pallas_call(
        kern,
        out_shape=jax.ShapeDtypeStruct((N, H, W, Cout), x.dtype),
        grid=(N,),
        in_specs=[
            pl.BlockSpec((1, H, W, C), lambda n: (n, 0, 0, 0)),          # input
            pl.BlockSpec((n_layers, 9 * C, Cout), lambda n: (0, 0, 0)),  # all weights
            pl.BlockSpec((n_layers, 1, Cout), lambda n: (0, 0, 0)),      # all biases
        ],
        out_specs=pl.BlockSpec((1, H, W, Cout), lambda n: (n, 0, 0, 0)),
        scratch_shapes=[
            pltpu.VMEM((H + 2, WP, C), jnp.float32),       # zero-padded activation
            pltpu.VMEM((H * W, 9 * C), jnp.float32),       # im2col patches
        ],
        compiler_params=pltpu.CompilerParams(
            dimension_semantics=("parallel",),             # batch -> TCs on v7x
        ),
        cost_estimate=pl.CostEstimate(flops=flops, transcendentals=0,
                                      bytes_accessed=bytes_accessed),
    )(x, w_all, b_all)


# ---------------- pure-JAX reference (for correctness check) ----------------
def _ref_conv(x, w, b):
    out = jax.lax.conv_general_dilated(
        x, w, window_strides=(1, 1), padding="SAME",
        dimension_numbers=("NHWC", "HWIO", "NHWC"))
    return out + b.reshape(1, 1, 1, -1)


def _ref_block(x, params):
    w1, b1, w2, b2 = params
    y = jax.nn.leaky_relu(_ref_conv(x, w1, b1), 0.2)
    y = jax.nn.leaky_relu(_ref_conv(y, w2, b2), 0.2)
    return y + x


def _ref_generator(x, all_params):
    out = x
    for params in all_params:
        out = _ref_block(out, params)
    return out


def init_params(key, n_blocks=3, channels=128):
    params = []
    for _ in range(n_blocks):
        key, k1, k2, k3, k4 = jax.random.split(key, 5)
        w1 = jax.random.normal(k1, (3, 3, channels, channels), jnp.float32) * 0.05
        b1 = jax.random.normal(k2, (channels,), jnp.float32) * 0.01
        w2 = jax.random.normal(k3, (3, 3, channels, channels), jnp.float32) * 0.05
        b2 = jax.random.normal(k4, (channels,), jnp.float32) * 0.01
        params.append((w1, b1, w2, b2))
    return params


if __name__ == "__main__":
    key = jax.random.PRNGKey(0)
    key, kx = jax.random.split(key)

    # Channel count (128) is fixed by the module; keep batch / spatial small.
    N, H, W, C = 2, 8, 8, 128
    x = jax.random.normal(kx, (N, H, W, C), jnp.float32)   # NHWC (== NCHW (2,128,8,8))

    params = init_params(key, n_blocks=3, channels=C)

    fwd = jax.jit(generator_forward)
    out = jax.block_until_ready(fwd(x, params))
    ref = jax.block_until_ready(_ref_generator(x, params))

    assert out.shape == (N, H, W, C)
    np.testing.assert_allclose(np.asarray(out), np.asarray(ref), rtol=2e-4, atol=2e-4)

    print("KERNEL_OK")
</pallas_src>

<mosaic_0001>
module attributes {stable_mosaic.version = 11 : i64} {
  func.func @_generator_kernel(%arg0: i32, %arg1: memref<1x8x8x128xf32, #tpu.memory_space<vmem>>, %arg2: memref<6x1152x128xf32, #tpu.memory_space<vmem>>, %arg3: memref<6x1x128xf32, #tpu.memory_space<vmem>>, %arg4: memref<1x8x8x128xf32, #tpu.memory_space<vmem>>, %arg5: memref<10x16x128xf32, #tpu.memory_space<vmem>>, %arg6: memref<64x1152xf32, #tpu.memory_space<vmem>>) attributes {dimension_semantics = [#tpu.dimension_semantics<parallel>], iteration_bounds = array<i64: 2>, scalar_prefetch = 0 : i64, scratch_operands = 2 : i64, tpu.core_type = #tpu.core_type<tc>, window_params = [{transform_indices = @transform_0, window_bounds = array<i64: 1, 8, 8, 128>}, {pipeline_mode = #tpu.pipeline_mode<synchronous>, transform_indices = @transform_1, window_bounds = array<i64: 6, 1152, 128>}, {pipeline_mode = #tpu.pipeline_mode<synchronous>, transform_indices = @transform_2, window_bounds = array<i64: 6, 1, 128>}, {transform_indices = @transform_3, window_bounds = array<i64: 1, 8, 8, 128>}]} {
    %cst = arith.constant 0.000000e+00 : f32
    %0 = vector.broadcast %cst : f32 to vector<10x16x128xf32>
    %c0 = arith.constant 0 : index
    %c0_0 = arith.constant 0 : index
    %c0_1 = arith.constant 0 : index
    %1 = vector.load %arg5[%c0, %c0_0, %c0_1] : memref<10x16x128xf32, #tpu.memory_space<vmem>>, vector<10x16x128xf32>
    tpu.vector_store %arg5[%c0, %c0_0, %c0_1], %0 {strides = array<i32>} : memref<10x16x128xf32, #tpu.memory_space<vmem>>, vector<10x16x128xf32>,
    %c0_2 = arith.constant 0 : index
    %c0_3 = arith.constant 0 : index
    %c0_4 = arith.constant 0 : index
    %c0_5 = arith.constant 0 : index
    %2 = vector.load %arg1[%c0_2, %c0_3, %c0_4, %c0_5] : memref<1x8x8x128xf32, #tpu.memory_space<vmem>>, vector<1x8x8x128xf32>
    %3 = vector.shape_cast %2 : vector<1x8x8x128xf32> to vector<8x8x128xf32>
    %c1 = arith.constant 1 : index
    %c1_6 = arith.constant 1 : index
    %c0_7 = arith.constant 0 : index
    %4 = vector.load %arg5[%c1, %c1_6, %c0_7] : memref<10x16x128xf32, #tpu.memory_space<vmem>>, vector<8x8x128xf32>
    tpu.vector_store %arg5[%c1, %c1_6, %c0_7], %3 {strides = array<i32>} : memref<10x16x128xf32, #tpu.memory_space<vmem>>, vector<8x8x128xf32>,
    %c0_8 = arith.constant 0 : index
    %c0_9 = arith.constant 0 : index
    %c0_10 = arith.constant 0 : index
    %5 = vector.load %arg5[%c0_8, %c0_9, %c0_10] : memref<10x16x128xf32, #tpu.memory_space<vmem>>, vector<8x8x128xf32>
    %6 = vector.shape_cast %5 : vector<8x8x128xf32> to vector<64x128xf32>
    %c0_11 = arith.constant 0 : index
    %c0_12 = arith.constant 0 : index
    %7 = vector.load %arg6[%c0_11, %c0_12] : memref<64x1152xf32, #tpu.memory_space<vmem>>, vector<64x128xf32>
    tpu.vector_store %arg6[%c0_11, %c0_12], %6 {strides = array<i32>} : memref<64x1152xf32, #tpu.memory_space<vmem>>, vector<64x128xf32>,
    %c0_13 = arith.constant 0 : index
    %c1_14 = arith.constant 1 : index
    %c0_15 = arith.constant 0 : index
    %8 = vector.load %arg5[%c0_13, %c1_14, %c0_15] : memref<10x16x128xf32, #tpu.memory_space<vmem>>, vector<8x8x128xf32>
    %9 = vector.shape_cast %8 : vector<8x8x128xf32> to vector<64x128xf32>
    %c0_16 = arith.constant 0 : index
    %c128 = arith.constant 128 : index
    %10 = vector.load %arg6[%c0_16, %c128] : memref<64x1152xf32, #tpu.memory_space<vmem>>, vector<64x128xf32>
    tpu.vector_store %arg6[%c0_16, %c128], %9 {strides = array<i32>} : memref<64x1152xf32, #tpu.memory_space<vmem>>, vector<64x128xf32>,
    %c0_17 = arith.constant 0 : index
    %c2 = arith.constant 2 : index
    %c0_18 = arith.constant 0 : index
    %11 = vector.load %arg5[%c0_17, %c2, %c0_18] : memref<10x16x128xf32, #tpu.memory_space<vmem>>, vector<8x8x128xf32>
    %12 = vector.shape_cast %11 : vector<8x8x128xf32> to vector<64x128xf32>
    %c0_19 = arith.constant 0 : index
    %c256 = arith.constant 256 : index
    %13 = vector.load %arg6[%c0_19, %c256] : memref<64x1152xf32, #tpu.memory_space<vmem>>, vector<64x128xf32>
    tpu.vector_store %arg6[%c0_19, %c256], %12 {strides = array<i32>} : memref<64x1152xf32, #tpu.memory_space<vmem>>, vector<64x128xf32>,
    %c1_20 = arith.constant 1 : index
    %c0_21 = arith.constant 0 : index
    %c0_22 = arith.constant 0 : index
    %14 = vector.load %arg5[%c1_20, %c0_21, %c0_22] : memref<10x16x128xf32, #tpu.memory_space<vmem>>, vector<8x8x128xf32>
    %15 = vector.shape_cast %14 : vector<8x8x128xf32> to vector<64x128xf32>
    %c0_23 = arith.constant 0 : index
    %c384 = arith.constant 384 : index
    %16 = vector.load %arg6[%c0_23, %c384] : memref<64x1152xf32, #tpu.memory_space<vmem>>, vector<64x128xf32>
    tpu.vector_store %arg6[%c0_23, %c384], %15 {strides = array<i32>} : memref<64x1152xf32, #tpu.memory_space<vmem>>, vector<64x128xf32>,
    %c1_24 = arith.constant 1 : index
    %c1_25 = arith.constant 1 : index
    %c0_26 = arith.constant 0 : index
    %17 = vector.load %arg5[%c1_24, %c1_25, %c0_26] : memref<10x16x128xf32, #tpu.memory_space<vmem>>, vector<8x8x128xf32>
    %18 = vector.shape_cast %17 : vector<8x8x128xf32> to vector<64x128xf32>
    %c0_27 = arith.constant 0 : index
    %c512 = arith.constant 512 : index
    %19 = vector.load %arg6[%c0_27, %c512] : memref<64x1152xf32, #tpu.memory_space<vmem>>, vector<64x128xf32>
    tpu.vector_store %arg6[%c0_27, %c512], %18 {strides = array<i32>} : memref<64x1152xf32, #tpu.memory_space<vmem>>, vector<64x128xf32>,
    %c1_28 = arith.constant 1 : index
    %c2_29 = arith.constant 2 : index
    %c0_30 = arith.constant 0 : index
    %20 = vector.load %arg5[%c1_28, %c2_29, %c0_30] : memref<10x16x128xf32, #tpu.memory_space<vmem>>, vector<8x8x128xf32>
    %21 = vector.shape_cast %20 : vector<8x8x128xf32> to vector<64x128xf32>
    %c0_31 = arith.constant 0 : index
    %c640 = arith.constant 640 : index
    %22 = vector.load %arg6[%c0_31, %c640] : memref<64x1152xf32, #tpu.memory_space<vmem>>, vector<64x128xf32>
    tpu.vector_store %arg6[%c0_31, %c640], %21 {strides = array<i32>} : memref<64x1152xf32, #tpu.memory_space<vmem>>, vector<64x128xf32>,
    %c2_32 = arith.constant 2 : index
    %c0_33 = arith.constant 0 : index
    %c0_34 = arith.constant 0 : index
    %23 = vector.load %arg5[%c2_32, %c0_33, %c0_34] : memref<10x16x128xf32, #tpu.memory_space<vmem>>, vector<8x8x128xf32>
    %24 = vector.shape_cast %23 : vector<8x8x128xf32> to vector<64x128xf32>
    %c0_35 = arith.constant 0 : index
    %c768 = arith.constant 768 : index
    %25 = vector.load %arg6[%c0_35, %c768] : memref<64x1152xf32, #tpu.memory_space<vmem>>, vector<64x128xf32>
    tpu.vector_store %arg6[%c0_35, %c768], %24 {strides = array<i32>} : memref<64x1152xf32, #tpu.memory_space<vmem>>, vector<64x128xf32>,
    %c2_36 = arith.constant 2 : index
    %c1_37 = arith.constant 1 : index
    %c0_38 = arith.constant 0 : index
    %26 = vector.load %arg5[%c2_36, %c1_37, %c0_38] : memref<10x16x128xf32, #tpu.memory_space<vmem>>, vector<8x8x128xf32>
    %27 = vector.shape_cast %26 : vector<8x8x128xf32> to vector<64x128xf32>
    %c0_39 = arith.constant 0 : index
    %c896 = arith.constant 896 : index
    %28 = vector.load %arg6[%c0_39, %c896] : memref<64x1152xf32, #tpu.memory_space<vmem>>, vector<64x128xf32>
    tpu.vector_store %arg6[%c0_39, %c896], %27 {strides = array<i32>} : memref<64x1152xf32, #tpu.memory_space<vmem>>, vector<64x128xf32>,
    %c2_40 = arith.constant 2 : index
    %c2_41 = arith.constant 2 : index
    %c0_42 = arith.constant 0 : index
    %29 = vector.load %arg5[%c2_40, %c2_41, %c0_42] : memref<10x16x128xf32, #tpu.memory_space<vmem>>, vector<8x8x128xf32>
    %30 = vector.shape_cast %29 : vector<8x8x128xf32> to vector<64x128xf32>
    %c0_43 = arith.constant 0 : index
    %c1024 = arith.constant 1024 : index
    %31 = vector.load %arg6[%c0_43, %c1024] : memref<64x1152xf32, #tpu.memory_space<vmem>>, vector<64x128xf32>
    tpu.vector_store %arg6[%c0_43, %c1024], %30 {strides = array<i32>} : memref<64x1152xf32, #tpu.memory_space<vmem>>, vector<64x128xf32>,
    %c0_44 = arith.constant 0 : index
    %c0_45 = arith.constant 0 : index
    %32 = vector.load %arg6[%c0_44, %c0_45] : memref<64x1152xf32, #tpu.memory_space<vmem>>, vector<64x1152xf32>
    %c0_46 = arith.constant 0 : index
    %c0_47 = arith.constant 0 : index
    %c0_48 = arith.constant 0 : index
    %33 = vector.load %arg2[%c0_46, %c0_47, %c0_48] : memref<6x1152x128xf32, #tpu.memory_space<vmem>>, vector<1x1152x128xf32>
    %34 = vector.shape_cast %33 : vector<1x1152x128xf32> to vector<1152x128xf32>
    %cst_49 = arith.constant dense<0.000000e+00> : vector<64x128xf32>
    %35 = tpu.matmul %32, %34, %cst_49 {dimension_numbers = #tpu.dot_dimension_numbers<[1], [0], [0], [1], [0, 0, 1, 1], [], []>} : vector<64x1152xf32>, vector<1152x128xf32>, vector<64x128xf32> -> vector<64x128xf32>
    %c0_50 = arith.constant 0 : index
    %c0_51 = arith.constant 0 : index
    %c0_52 = arith.constant 0 : index
    %36 = vector.load %arg3[%c0_50, %c0_51, %c0_52] : memref<6x1x128xf32, #tpu.memory_space<vmem>>, vector<1x1x128xf32>
    %37 = vector.shape_cast %36 : vector<1x1x128xf32> to vector<1x128xf32>
    %38 = vector.broadcast %37 : vector<1x128xf32> to vector<64x128xf32>
    %39 = arith.addf %35, %38 : vector<64x128xf32>
    %cst_53 = arith.constant 0.000000e+00 : f32
    %40 = vector.broadcast %cst_53 : f32 to vector<64x128xf32>
    %41 = arith.cmpf ogt, %39, %40 : vector<64x128xf32>
    %cst_54 = arith.constant 2.000000e-01 : f32
    %42 = vector.broadcast %cst_54 : f32 to vector<64x128xf32>
    %43 = arith.mulf %42, %39 : vector<64x128xf32>
    %44 = arith.select %41, %39, %43 : vector<64x128xi1>, vector<64x128xf32>
    %45 = vector.shape_cast %44 : vector<64x128xf32> to vector<8x8x128xf32>
    %c1_55 = arith.constant 1 : index
    %c1_56 = arith.constant 1 : index
    %c0_57 = arith.constant 0 : index
    %46 = vector.load %arg5[%c1_55, %c1_56, %c0_57] : memref<10x16x128xf32, #tpu.memory_space<vmem>>, vector<8x8x128xf32>
    tpu.vector_store %arg5[%c1_55, %c1_56, %c0_57], %45 {strides = array<i32>} : memref<10x16x128xf32, #tpu.memory_space<vmem>>, vector<8x8x128xf32>,
    %c0_58 = arith.constant 0 : index
    %c0_59 = arith.constant 0 : index
    %c0_60 = arith.constant 0 : index
    %47 = vector.load %arg5[%c0_58, %c0_59, %c0_60] : memref<10x16x128xf32, #tpu.memory_space<vmem>>, vector<8x8x128xf32>
    %48 = vector.shape_cast %47 : vector<8x8x128xf32> to vector<64x128xf32>
    %c0_61 = arith.constant 0 : index
    %c0_62 = arith.constant 0 : index
    %49 = vector.load %arg6[%c0_61, %c0_62] : memref<64x1152xf32, #tpu.memory_space<vmem>>, vector<64x128xf32>
    tpu.vector_store %arg6[%c0_61, %c0_62], %48 {strides = array<i32>} : memref<64x1152xf32, #tpu.memory_space<vmem>>, vector<64x128xf32>,
    %c0_63 = arith.constant 0 : index
    %c1_64 = arith.constant 1 : index
    %c0_65 = arith.constant 0 : index
    %50 = vector.load %arg5[%c0_63, %c1_64, %c0_65] : memref<10x16x128xf32, #tpu.memory_space<vmem>>, vector<8x8x128xf32>
    %51 = vector.shape_cast %50 : vector<8x8x128xf32> to vector<64x128xf32>
    %c0_66 = arith.constant 0 : index
    %c128_67 = arith.constant 128 : index
    %52 = vector.load %arg6[%c0_66, %c128_67] : memref<64x1152xf32, #tpu.memory_space<vmem>>, vector<64x128xf32>
    tpu.vector_store %arg6[%c0_66, %c128_67], %51 {strides = array<i32>} : memref<64x1152xf32, #tpu.memory_space<vmem>>, vector<64x128xf32>,
    %c0_68 = arith.constant 0 : index
    %c2_69 = arith.constant 2 : index
    %c0_70 = arith.constant 0 : index
    %53 = vector.load %arg5[%c0_68, %c2_69, %c0_70] : memref<10x16x128xf32, #tpu.memory_space<vmem>>, vector<8x8x128xf32>
    %54 = vector.shape_cast %53 : vector<8x8x128xf32> to vector<64x128xf32>
    %c0_71 = arith.constant 0 : index
    %c256_72 = arith.constant 256 : index
    %55 = vector.load %arg6[%c0_71, %c256_72] : memref<64x1152xf32, #tpu.memory_space<vmem>>, vector<64x128xf32>
    tpu.vector_store %arg6[%c0_71, %c256_72], %54 {strides = array<i32>} : memref<64x1152xf32, #tpu.memory_space<vmem>>, vector<64x128xf32>,
    %c1_73 = arith.constant 1 : index
    %c0_74 = arith.constant 0 : index
    %c0_75 = arith.constant 0 : index
    %56 = vector.load %arg5[%c1_73, %c0_74, %c0_75] : memref<10x16x128xf32, #tpu.memory_space<vmem>>, vector<8x8x128xf32>
    %57 = vector.shape_cast %56 : vector<8x8x128xf32> to vector<64x128xf32>
    %c0_76 = arith.constant 0 : index
    %c384_77 = arith.constant 384 : index
    %58 = vector.load %arg6[%c0_76, %c384_77] : memref<64x1152xf32, #tpu.memory_space<vmem>>, vector<64x128xf32>
    tpu.vector_store %arg6[%c0_76, %c384_77], %57 {strides = array<i32>} : memref<64x1152xf32, #tpu.memory_space<vmem>>, vector<64x128xf32>,
    %c1_78 = arith.constant 1 : index
    %c1_79 = arith.constant 1 : index
    %c0_80 = arith.constant 0 : index
    %59 = vector.load %arg5[%c1_78, %c1_79, %c0_80] : memref<10x16x128xf32, #tpu.memory_space<vmem>>, vector<8x8x128xf32>
    %60 = vector.shape_cast %59 : vector<8x8x128xf32> to vector<64x128xf32>
    %c0_81 = arith.constant 0 : index
    %c512_82 = arith.constant 512 : index
    %61 = vector.load %arg6[%c0_81, %c512_82] : memref<64x1152xf32, #tpu.memory_space<vmem>>, vector<64x128xf32>
    tpu.vector_store %arg6[%c0_81, %c512_82], %60 {strides = array<i32>} : memref<64x1152xf32, #tpu.memory_space<vmem>>, vector<64x128xf32>,
    %c1_83 = arith.constant 1 : index
    %c2_84 = arith.constant 2 : index
    %c0_85 = arith.constant 0 : index
    %62 = vector.load %arg5[%c1_83, %c2_84, %c0_85] : memref<10x16x128xf32, #tpu.memory_space<vmem>>, vector<8x8x128xf32>
    %63 = vector.shape_cast %62 : vector<8x8x128xf32> to vector<64x128xf32>
    %c0_86 = arith.constant 0 : index
    %c640_87 = arith.constant 640 : index
    %64 = vector.load %arg6[%c0_86, %c640_87] : memref<64x1152xf32, #tpu.memory_space<vmem>>, vector<64x128xf32>
    tpu.vector_store %arg6[%c0_86, %c640_87], %63 {strides = array<i32>} : memref<64x1152xf32, #tpu.memory_space<vmem>>, vector<64x128xf32>,
    %c2_88 = arith.constant 2 : index
    %c0_89 = arith.constant 0 : index
    %c0_90 = arith.constant 0 : index
    %65 = vector.load %arg5[%c2_88, %c0_89, %c0_90] : memref<10x16x128xf32, #tpu.memory_space<vmem>>, vector<8x8x128xf32>
    %66 = vector.shape_cast %65 : vector<8x8x128xf32> to vector<64x128xf32>
    %c0_91 = arith.constant 0 : index
    %c768_92 = arith.constant 768 : index
    %67 = vector.load %arg6[%c0_91, %c768_92] : memref<64x1152xf32, #tpu.memory_space<vmem>>, vector<64x128xf32>
    tpu.vector_store %arg6[%c0_91, %c768_92], %66 {strides = array<i32>} : memref<64x1152xf32, #tpu.memory_space<vmem>>, vector<64x128xf32>,
    %c2_93 = arith.constant 2 : index
    %c1_94 = arith.constant 1 : index
    %c0_95 = arith.constant 0 : index
    %68 = vector.load %arg5[%c2_93, %c1_94, %c0_95] : memref<10x16x128xf32, #tpu.memory_space<vmem>>, vector<8x8x128xf32>
    %69 = vector.shape_cast %68 : vector<8x8x128xf32> to vector<64x128xf32>
    %c0_96 = arith.constant 0 : index
    %c896_97 = arith.constant 896 : index
    %70 = vector.load %arg6[%c0_96, %c896_97] : memref<64x1152xf32, #tpu.memory_space<vmem>>, vector<64x128xf32>
    tpu.vector_store %arg6[%c0_96, %c896_97], %69 {strides = array<i32>} : memref<64x1152xf32, #tpu.memory_space<vmem>>, vector<64x128xf32>,
    %c2_98 = arith.constant 2 : index
    %c2_99 = arith.constant 2 : index
    %c0_100 = arith.constant 0 : index
    %71 = vector.load %arg5[%c2_98, %c2_99, %c0_100] : memref<10x16x128xf32, #tpu.memory_space<vmem>>, vector<8x8x128xf32>
    %72 = vector.shape_cast %71 : vector<8x8x128xf32> to vector<64x128xf32>
    %c0_101 = arith.constant 0 : index
    %c1024_102 = arith.constant 1024 : index
    %73 = vector.load %arg6[%c0_101, %c1024_102] : memref<64x1152xf32, #tpu.memory_space<vmem>>, vector<64x128xf32>
    tpu.vector_store %arg6[%c0_101, %c1024_102], %72 {strides = array<i32>} : memref<64x1152xf32, #tpu.memory_space<vmem>>, vector<64x128xf32>,
    %c0_103 = arith.constant 0 : index
    %c0_104 = arith.constant 0 : index
    %74 = vector.load %arg6[%c0_103, %c0_104] : memref<64x1152xf32, #tpu.memory_space<vmem>>, vector<64x1152xf32>
    %c1_105 = arith.constant 1 : index
    %c0_106 = arith.constant 0 : index
    %c0_107 = arith.constant 0 : index
    %75 = vector.load %arg2[%c1_105, %c0_106, %c0_107] : memref<6x1152x128xf32, #tpu.memory_space<vmem>>, vector<1x1152x128xf32>
    %76 = vector.shape_cast %75 : vector<1x1152x128xf32> to vector<1152x128xf32>
    %cst_108 = arith.constant dense<0.000000e+00> : vector<64x128xf32>
    %77 = tpu.matmul %74, %76, %cst_108 {dimension_numbers = #tpu.dot_dimension_numbers<[1], [0], [0], [1], [0, 0, 1, 1], [], []>} : vector<64x1152xf32>, vector<1152x128xf32>, vector<64x128xf32> -> vector<64x128xf32>
    %c1_109 = arith.constant 1 : index
    %c0_110 = arith.constant 0 : index
    %c0_111 = arith.constant 0 : index
    %78 = vector.load %arg3[%c1_109, %c0_110, %c0_111] : memref<6x1x128xf32, #tpu.memory_space<vmem>>, vector<1x1x128xf32>
    %79 = vector.shape_cast %78 : vector<1x1x128xf32> to vector<1x128xf32>
    %80 = vector.broadcast %79 : vector<1x128xf32> to vector<64x128xf32>
    %81 = arith.addf %77, %80 : vector<64x128xf32>
    %cst_112 = arith.constant 0.000000e+00 : f32
    %82 = vector.broadcast %cst_112 : f32 to vector<64x128xf32>
    %83 = arith.cmpf ogt, %81, %82 : vector<64x128xf32>
    %cst_113 = arith.constant 2.000000e-01 : f32
    %84 = vector.broadcast %cst_113 : f32 to vector<64x128xf32>
    %85 = arith.mulf %84, %81 : vector<64x128xf32>
    %86 = arith.select %83, %81, %85 : vector<64x128xi1>, vector<64x128xf32>
    %87 = vector.shape_cast %86 : vector<64x128xf32> to vector<8x8x128xf32>
    %88 = arith.addf %87, %3 : vector<8x8x128xf32>
    %c1_114 = arith.constant 1 : index
    %c1_115 = arith.constant 1 : index
    %c0_116 = arith.constant 0 : index
    %89 = vector.load %arg5[%c1_114, %c1_115, %c0_116] : memref<10x16x128xf32, #tpu.memory_space<vmem>>, vector<8x8x128xf32>
    tpu.vector_store %arg5[%c1_114, %c1_115, %c0_116], %88 {strides = array<i32>} : memref<10x16x128xf32, #tpu.memory_space<vmem>>, vector<8x8x128xf32>,
    %c0_117 = arith.constant 0 : index
    %c0_118 = arith.constant 0 : index
    %c0_119 = arith.constant 0 : index
    %90 = vector.load %arg5[%c0_117, %c0_118, %c0_119] : memref<10x16x128xf32, #tpu.memory_space<vmem>>, vector<8x8x128xf32>
    %91 = vector.shape_cast %90 : vector<8x8x128xf32> to vector<64x128xf32>
    %c0_120 = arith.constant 0 : index
    %c0_121 = arith.constant 0 : index
    %92 = vector.load %arg6[%c0_120, %c0_121] : memref<64x1152xf32, #tpu.memory_space<vmem>>, vector<64x128xf32>
    tpu.vector_store %arg6[%c0_120, %c0_121], %91 {strides = array<i32>} : memref<64x1152xf32, #tpu.memory_space<vmem>>, vector<64x128xf32>,
    %c0_122 = arith.constant 0 : index
    %c1_123 = arith.constant 1 : index
    %c0_124 = arith.constant 0 : index
    %93 = vector.load %arg5[%c0_122, %c1_123, %c0_124] : memref<10x16x128xf32, #tpu.memory_space<vmem>>, vector<8x8x128xf32>
    %94 = vector.shape_cast %93 : vector<8x8x128xf32> to vector<64x128xf32>
    %c0_125 = arith.constant 0 : index
    %c128_126 = arith.constant 128 : index
    %95 = vector.load %arg6[%c0_125, %c128_126] : memref<64x1152xf32, #tpu.memory_space<vmem>>, vector<64x128xf32>
    tpu.vector_store %arg6[%c0_125, %c128_126], %94 {strides = array<i32>} : memref<64x1152xf32, #tpu.memory_space<vmem>>, vector<64x128xf32>,
    %c0_127 = arith.constant 0 : index
    %c2_128 = arith.constant 2 : index
    %c0_129 = arith.constant 0 : index
    %96 = vector.load %arg5[%c0_127, %c2_128, %c0_129] : memref<10x16x128xf32, #tpu.memory_space<vmem>>, vector<8x8x128xf32>
    %97 = vector.shape_cast %96 : vector<8x8x128xf32> to vector<64x128xf32>
    %c0_130 = arith.constant 0 : index
    %c256_131 = arith.constant 256 : index
    %98 = vector.load %arg6[%c0_130, %c256_131] : memref<64x1152xf32, #tpu.memory_space<vmem>>, vector<64x128xf32>
    tpu.vector_store %arg6[%c0_130, %c256_131], %97 {strides = array<i32>} : memref<64x1152xf32, #tpu.memory_space<vmem>>, vector<64x128xf32>,
    %c1_132 = arith.constant 1 : index
    %c0_133 = arith.constant 0 : index
    %c0_134 = arith.constant 0 : index
    %99 = vector.load %arg5[%c1_132, %c0_133, %c0_134] : memref<10x16x128xf32, #tpu.memory_space<vmem>>, vector<8x8x128xf32>
    %100 = vector.shape_cast %99 : vector<8x8x128xf32> to vector<64x128xf32>
    %c0_135 = arith.constant 0 : index
    %c384_136 = arith.constant 384 : index
    %101 = vector.load %arg6[%c0_135, %c384_136] : memref<64x1152xf32, #tpu.memory_space<vmem>>, vector<64x128xf32>
    tpu.vector_store %arg6[%c0_135, %c384_136], %100 {strides = array<i32>} : memref<64x1152xf32, #tpu.memory_space<vmem>>, vector<64x128xf32>,
    %c1_137 = arith.constant 1 : index
    %c1_138 = arith.constant 1 : index
    %c0_139 = arith.constant 0 : index
    %102 = vector.load %arg5[%c1_137, %c1_138, %c0_139] : memref<10x16x128xf32, #tpu.memory_space<vmem>>, vector<8x8x128xf32>
    %103 = vector.shape_cast %102 : vector<8x8x128xf32> to vector<64x128xf32>
    %c0_140 = arith.constant 0 : index
    %c512_141 = arith.constant 512 : index
    %104 = vector.load %arg6[%c0_140, %c512_141] : memref<64x1152xf32, #tpu.memory_space<vmem>>, vector<64x128xf32>
    tpu.vector_store %arg6[%c0_140, %c512_141], %103 {strides = array<i32>} : memref<64x1152xf32, #tpu.memory_space<vmem>>, vector<64x128xf32>,
    %c1_142 = arith.constant 1 : index
    %c2_143 = arith.constant 2 : index
    %c0_144 = arith.constant 0 : index
    %105 = vector.load %arg5[%c1_142, %c2_143, %c0_144] : memref<10x16x128xf32, #tpu.memory_space<vmem>>, vector<8x8x128xf32>
    %106 = vector.shape_cast %105 : vector<8x8x128xf32> to vector<64x128xf32>
    %c0_145 = arith.constant 0 : index
    %c640_146 = arith.constant 640 : index
    %107 = vector.load %arg6[%c0_145, %c640_146] : memref<64x1152xf32, #tpu.memory_space<vmem>>, vector<64x128xf32>
    tpu.vector_store %arg6[%c0_145, %c640_146], %106 {strides = array<i32>} : memref<64x1152xf32, #tpu.memory_space<vmem>>, vector<64x128xf32>,
    %c2_147 = arith.constant 2 : index
    %c0_148 = arith.constant 0 : index
    %c0_149 = arith.constant 0 : index
    %108 = vector.load %arg5[%c2_147, %c0_148, %c0_149] : memref<10x16x128xf32, #tpu.memory_space<vmem>>, vector<8x8x128xf32>
    %109 = vector.shape_cast %108 : vector<8x8x128xf32> to vector<64x128xf32>
    %c0_150 = arith.constant 0 : index
    %c768_151 = arith.constant 768 : index
    %110 = vector.load %arg6[%c0_150, %c768_151] : memref<64x1152xf32, #tpu.memory_space<vmem>>, vector<64x128xf32>
    tpu.vector_store %arg6[%c0_150, %c768_151], %109 {strides = array<i32>} : memref<64x1152xf32, #tpu.memory_space<vmem>>, vector<64x128xf32>,
    %c2_152 = arith.constant 2 : index
    %c1_153 = arith.constant 1 : index
    %c0_154 = arith.constant 0 : index
    %111 = vector.load %arg5[%c2_152, %c1_153, %c0_154] : memref<10x16x128xf32, #tpu.memory_space<vmem>>, vector<8x8x128xf32>
    %112 = vector.shape_cast %111 : vector<8x8x128xf32> to vector<64x128xf32>
    %c0_155 = arith.constant 0 : index
    %c896_156 = arith.constant 896 : index
    %113 = vector.load %arg6[%c0_155, %c896_156] : memref<64x1152xf32, #tpu.memory_space<vmem>>, vector<64x128xf32>
    tpu.vector_store %arg6[%c0_155, %c896_156], %112 {strides = array<i32>} : memref<64x1152xf32, #tpu.memory_space<vmem>>, vector<64x128xf32>,
    %c2_157 = arith.constant 2 : index
    %c2_158 = arith.constant 2 : index
    %c0_159 = arith.constant 0 : index
    %114 = vector.load %arg5[%c2_157, %c2_158, %c0_159] : memref<10x16x128xf32, #tpu.memory_space<vmem>>, vector<8x8x128xf32>
    %115 = vector.shape_cast %114 : vector<8x8x128xf32> to vector<64x128xf32>
    %c0_160 = arith.constant 0 : index
    %c1024_161 = arith.constant 1024 : index
    %116 = vector.load %arg6[%c0_160, %c1024_161] : memref<64x1152xf32, #tpu.memory_space<vmem>>, vector<64x128xf32>
    tpu.vector_store %arg6[%c0_160, %c1024_161], %115 {strides = array<i32>} : memref<64x1152xf32, #tpu.memory_space<vmem>>, vector<64x128xf32>,
    %c0_162 = arith.constant 0 : index
    %c0_163 = arith.constant 0 : index
    %117 = vector.load %arg6[%c0_162, %c0_163] : memref<64x1152xf32, #tpu.memory_space<vmem>>, vector<64x1152xf32>
    %c2_164 = arith.constant 2 : index
    %c0_165 = arith.constant 0 : index
    %c0_166 = arith.constant 0 : index
    %118 = vector.load %arg2[%c2_164, %c0_165, %c0_166] : memref<6x1152x128xf32, #tpu.memory_space<vmem>>, vector<1x1152x128xf32>
    %119 = vector.shape_cast %118 : vector<1x1152x128xf32> to vector<1152x128xf32>
    %cst_167 = arith.constant dense<0.000000e+00> : vector<64x128xf32>
    %120 = tpu.matmul %117, %119, %cst_167 {dimension_numbers = #tpu.dot_dimension_numbers<[1], [0], [0], [1], [0, 0, 1, 1], [], []>} : vector<64x1152xf32>, vector<1152x128xf32>, vector<64x128xf32> -> vector<64x128xf32>
    %c2_168 = arith.constant 2 : index
    %c0_169 = arith.constant 0 : index
    %c0_170 = arith.constant 0 : index
    %121 = vector.load %arg3[%c2_168, %c0_169, %c0_170] : memref<6x1x128xf32, #tpu.memory_space<vmem>>, vector<1x1x128xf32>
    %122 = vector.shape_cast %121 : vector<1x1x128xf32> to vector<1x128xf32>
    %123 = vector.broadcast %122 : vector<1x128xf32> to vector<64x128xf32>
    %124 = arith.addf %120, %123 : vector<64x128xf32>
    %cst_171 = arith.constant 0.000000e+00 : f32
    %125 = vector.broadcast %cst_171 : f32 to vector<64x128xf32>
    %126 = arith.cmpf ogt, %124, %125 : vector<64x128xf32>
    %cst_172 = arith.constant 2.000000e-01 : f32
    %127 = vector.broadcast %cst_172 : f32 to vector<64x128xf32>
    %128 = arith.mulf %127, %124 : vector<64x128xf32>
    %129 = arith.select %126, %124, %128 : vector<64x128xi1>, vector<64x128xf32>
    %130 = vector.shape_cast %129 : vector<64x128xf32> to vector<8x8x128xf32>
    %c1_173 = arith.constant 1 : index
    %c1_174 = arith.constant 1 : index
    %c0_175 = arith.constant 0 : index
    %131 = vector.load %arg5[%c1_173, %c1_174, %c0_175] : memref<10x16x128xf32, #tpu.memory_space<vmem>>, vector<8x8x128xf32>
    tpu.vector_store %arg5[%c1_173, %c1_174, %c0_175], %130 {strides = array<i32>} : memref<10x16x128xf32, #tpu.memory_space<vmem>>, vector<8x8x128xf32>,
    %c0_176 = arith.constant 0 : index
    %c0_177 = arith.constant 0 : index
    %c0_178 = arith.constant 0 : index
    %132 = vector.load %arg5[%c0_176, %c0_177, %c0_178] : memref<10x16x128xf32, #tpu.memory_space<vmem>>, vector<8x8x128xf32>
    %133 = vector.shape_cast %132 : vector<8x8x128xf32> to vector<64x128xf32>
    %c0_179 = arith.constant 0 : index
    %c0_180 = arith.constant 0 : index
    %134 = vector.load %arg6[%c0_179, %c0_180] : memref<64x1152xf32, #tpu.memory_space<vmem>>, vector<64x128xf32>
    tpu.vector_store %arg6[%c0_179, %c0_180], %133 {strides = array<i32>} : memref<64x1152xf32, #tpu.memory_space<vmem>>, vector<64x128xf32>,
    %c0_181 = arith.constant 0 : index
    %c1_182 = arith.constant 1 : index
    %c0_183 = arith.constant 0 : index
    %135 = vector.load %arg5[%c0_181, %c1_182, %c0_183] : memref<10x16x128xf32, #tpu.memory_space<vmem>>, vector<8x8x128xf32>
    %136 = vector.shape_cast %135 : vector<8x8x128xf32> to vector<64x128xf32>
    %c0_184 = arith.constant 0 : index
    %c128_185 = arith.constant 128 : index
    %137 = vector.load %arg6[%c0_184, %c128_185] : memref<64x1152xf32, #tpu.memory_space<vmem>>, vector<64x128xf32>
    tpu.vector_store %arg6[%c0_184, %c128_185], %136 {strides = array<i32>} : memref<64x1152xf32, #tpu.memory_space<vmem>>, vector<64x128xf32>,
    %c0_186 = arith.constant 0 : index
    %c2_187 = arith.constant 2 : index
    %c0_188 = arith.constant 0 : index
    %138 = vector.load %arg5[%c0_186, %c2_187, %c0_188] : memref<10x16x128xf32, #tpu.memory_space<vmem>>, vector<8x8x128xf32>
    %139 = vector.shape_cast %138 : vector<8x8x128xf32> to vector<64x128xf32>
    %c0_189 = arith.constant 0 : index
    %c256_190 = arith.constant 256 : index
    %140 = vector.load %arg6[%c0_189, %c256_190] : memref<64x1152xf32, #tpu.memory_space<vmem>>, vector<64x128xf32>
    tpu.vector_store %arg6[%c0_189, %c256_190], %139 {strides = array<i32>} : memref<64x1152xf32, #tpu.memory_space<vmem>>, vector<64x128xf32>,
    %c1_191 = arith.constant 1 : index
    %c0_192 = arith.constant 0 : index
    %c0_193 = arith.constant 0 : index
    %141 = vector.load %arg5[%c1_191, %c0_192, %c0_193] : memref<10x16x128xf32, #tpu.memory_space<vmem>>, vector<8x8x128xf32>
    %142 = vector.shape_cast %141 : vector<8x8x128xf32> to vector<64x128xf32>
    %c0_194 = arith.constant 0 : index
    %c384_195 = arith.constant 384 : index
    %143 = vector.load %arg6[%c0_194, %c384_195] : memref<64x1152xf32, #tpu.memory_space<vmem>>, vector<64x128xf32>
    tpu.vector_store %arg6[%c0_194, %c384_195], %142 {strides = array<i32>} : memref<64x1152xf32, #tpu.memory_space<vmem>>, vector<64x128xf32>,
    %c1_196 = arith.constant 1 : index
    %c1_197 = arith.constant 1 : index
    %c0_198 = arith.constant 0 : index
    %144 = vector.load %arg5[%c1_196, %c1_197, %c0_198] : memref<10x16x128xf32, #tpu.memory_space<vmem>>, vector<8x8x128xf32>
    %145 = vector.shape_cast %144 : vector<8x8x128xf32> to vector<64x128xf32>
    %c0_199 = arith.constant 0 : index
    %c512_200 = arith.constant 512 : index
    %146 = vector.load %arg6[%c0_199, %c512_200] : memref<64x1152xf32, #tpu.memory_space<vmem>>, vector<64x128xf32>
    tpu.vector_store %arg6[%c0_199, %c512_200], %145 {strides = array<i32>} : memref<64x1152xf32, #tpu.memory_space<vmem>>, vector<64x128xf32>,
    %c1_201 = arith.constant 1 : index
    %c2_202 = arith.constant 2 : index
    %c0_203 = arith.constant 0 : index
    %147 = vector.load %arg5[%c1_201, %c2_202, %c0_203] : memref<10x16x128xf32, #tpu.memory_space<vmem>>, vector<8x8x128xf32>
    %148 = vector.shape_cast %147 : vector<8x8x128xf32> to vector<64x128xf32>
    %c0_204 = arith.constant 0 : index
    %c640_205 = arith.constant 640 : index
    %149 = vector.load %arg6[%c0_204, %c640_205] : memref<64x1152xf32, #tpu.memory_space<vmem>>, vector<64x128xf32>
    tpu.vector_store %arg6[%c0_204, %c640_205], %148 {strides = array<i32>} : memref<64x1152xf32, #tpu.memory_space<vmem>>, vector<64x128xf32>,
    %c2_206 = arith.constant 2 : index
    %c0_207 = arith.constant 0 : index
    %c0_208 = arith.constant 0 : index
    %150 = vector.load %arg5[%c2_206, %c0_207, %c0_208] : memref<10x16x128xf32, #tpu.memory_space<vmem>>, vector<8x8x128xf32>
    %151 = vector.shape_cast %150 : vector<8x8x128xf32> to vector<64x128xf32>
    %c0_209 = arith.constant 0 : index
    %c768_210 = arith.constant 768 : index
    %152 = vector.load %arg6[%c0_209, %c768_210] : memref<64x1152xf32, #tpu.memory_space<vmem>>, vector<64x128xf32>
    tpu.vector_store %arg6[%c0_209, %c768_210], %151 {strides = array<i32>} : memref<64x1152xf32, #tpu.memory_space<vmem>>, vector<64x128xf32>,
    %c2_211 = arith.constant 2 : index
    %c1_212 = arith.constant 1 : index
    %c0_213 = arith.constant 0 : index
    %153 = vector.load %arg5[%c2_211, %c1_212, %c0_213] : memref<10x16x128xf32, #tpu.memory_space<vmem>>, vector<8x8x128xf32>
    %154 = vector.shape_cast %153 : vector<8x8x128xf32> to vector<64x128xf32>
    %c0_214 = arith.constant 0 : index
    %c896_215 = arith.constant 896 : index
    %155 = vector.load %arg6[%c0_214, %c896_215] : memref<64x1152xf32, #tpu.memory_space<vmem>>, vector<64x128xf32>
    tpu.vector_store %arg6[%c0_214, %c896_215], %154 {strides = array<i32>} : memref<64x1152xf32, #tpu.memory_space<vmem>>, vector<64x128xf32>,
    %c2_216 = arith.constant 2 : index
    %c2_217 = arith.constant 2 : index
    %c0_218 = arith.constant 0 : index
    %156 = vector.load %arg5[%c2_216, %c2_217, %c0_218] : memref<10x16x128xf32, #tpu.memory_space<vmem>>, vector<8x8x128xf32>
    %157 = vector.shape_cast %156 : vector<8x8x128xf32> to vector<64x128xf32>
    %c0_219 = arith.constant 0 : index
    %c1024_220 = arith.constant 1024 : index
    %158 = vector.load %arg6[%c0_219, %c1024_220] : memref<64x1152xf32, #tpu.memory_space<vmem>>, vector<64x128xf32>
    tpu.vector_store %arg6[%c0_219, %c1024_220], %157 {strides = array<i32>} : memref<64x1152xf32, #tpu.memory_space<vmem>>, vector<64x128xf32>,
    %c0_221 = arith.constant 0 : index
    %c0_222 = arith.constant 0 : index
    %159 = vector.load %arg6[%c0_221, %c0_222] : memref<64x1152xf32, #tpu.memory_space<vmem>>, vector<64x1152xf32>
    %c3 = arith.constant 3 : index
    %c0_223 = arith.constant 0 : index
    %c0_224 = arith.constant 0 : index
    %160 = vector.load %arg2[%c3, %c0_223, %c0_224] : memref<6x1152x128xf32, #tpu.memory_space<vmem>>, vector<1x1152x128xf32>
    %161 = vector.shape_cast %160 : vector<1x1152x128xf32> to vector<1152x128xf32>
    %cst_225 = arith.constant dense<0.000000e+00> : vector<64x128xf32>
    %162 = tpu.matmul %159, %161, %cst_225 {dimension_numbers = #tpu.dot_dimension_numbers<[1], [0], [0], [1], [0, 0, 1, 1], [], []>} : vector<64x1152xf32>, vector<1152x128xf32>, vector<64x128xf32> -> vector<64x128xf32>
    %c3_226 = arith.constant 3 : index
    %c0_227 = arith.constant 0 : index
    %c0_228 = arith.constant 0 : index
    %163 = vector.load %arg3[%c3_226, %c0_227, %c0_228] : memref<6x1x128xf32, #tpu.memory_space<vmem>>, vector<1x1x128xf32>
    %164 = vector.shape_cast %163 : vector<1x1x128xf32> to vector<1x128xf32>
    %165 = vector.broadcast %164 : vector<1x128xf32> to vector<64x128xf32>
    %166 = arith.addf %162, %165 : vector<64x128xf32>
    %cst_229 = arith.constant 0.000000e+00 : f32
    %167 = vector.broadcast %cst_229 : f32 to vector<64x128xf32>
    %168 = arith.cmpf ogt, %166, %167 : vector<64x128xf32>
    %cst_230 = arith.constant 2.000000e-01 : f32
    %169 = vector.broadcast %cst_230 : f32 to vector<64x128xf32>
    %170 = arith.mulf %169, %166 : vector<64x128xf32>
    %171 = arith.select %168, %166, %170 : vector<64x128xi1>, vector<64x128xf32>
    %172 = vector.shape_cast %171 : vector<64x128xf32> to vector<8x8x128xf32>
    %173 = arith.addf %172, %88 : vector<8x8x128xf32>
    %c1_231 = arith.constant 1 : index
    %c1_232 = arith.constant 1 : index
    %c0_233 = arith.constant 0 : index
    %174 = vector.load %arg5[%c1_231, %c1_232, %c0_233] : memref<10x16x128xf32, #tpu.memory_space<vmem>>, vector<8x8x128xf32>
    tpu.vector_store %arg5[%c1_231, %c1_232, %c0_233], %173 {strides = array<i32>} : memref<10x16x128xf32, #tpu.memory_space<vmem>>, vector<8x8x128xf32>,
    %c0_234 = arith.constant 0 : index
    %c0_235 = arith.constant 0 : index
    %c0_236 = arith.constant 0 : index
    %175 = vector.load %arg5[%c0_234, %c0_235, %c0_236] : memref<10x16x128xf32, #tpu.memory_space<vmem>>, vector<8x8x128xf32>
    %176 = vector.shape_cast %175 : vector<8x8x128xf32> to vector<64x128xf32>
    %c0_237 = arith.constant 0 : index
    %c0_238 = arith.constant 0 : index
    %177 = vector.load %arg6[%c0_237, %c0_238] : memref<64x1152xf32, #tpu.memory_space<vmem>>, vector<64x128xf32>
    tpu.vector_store %arg6[%c0_237, %c0_238], %176 {strides = array<i32>} : memref<64x1152xf32, #tpu.memory_space<vmem>>, vector<64x128xf32>,
    %c0_239 = arith.constant 0 : index
    %c1_240 = arith.constant 1 : index
    %c0_241 = arith.constant 0 : index
    %178 = vector.load %arg5[%c0_239, %c1_240, %c0_241] : memref<10x16x128xf32, #tpu.memory_space<vmem>>, vector<8x8x128xf32>
    %179 = vector.shape_cast %178 : vector<8x8x128xf32> to vector<64x128xf32>
    %c0_242 = arith.constant 0 : index
    %c128_243 = arith.constant 128 : index
    %180 = vector.load %arg6[%c0_242, %c128_243] : memref<64x1152xf32, #tpu.memory_space<vmem>>, vector<64x128xf32>
    tpu.vector_store %arg6[%c0_242, %c128_243], %179 {strides = array<i32>} : memref<64x1152xf32, #tpu.memory_space<vmem>>, vector<64x128xf32>,
    %c0_244 = arith.constant 0 : index
    %c2_245 = arith.constant 2 : index
    %c0_246 = arith.constant 0 : index
    %181 = vector.load %arg5[%c0_244, %c2_245, %c0_246] : memref<10x16x128xf32, #tpu.memory_space<vmem>>, vector<8x8x128xf32>
    %182 = vector.shape_cast %181 : vector<8x8x128xf32> to vector<64x128xf32>
    %c0_247 = arith.constant 0 : index
    %c256_248 = arith.constant 256 : index
    %183 = vector.load %arg6[%c0_247, %c256_248] : memref<64x1152xf32, #tpu.memory_space<vmem>>, vector<64x128xf32>
    tpu.vector_store %arg6[%c0_247, %c256_248], %182 {strides = array<i32>} : memref<64x1152xf32, #tpu.memory_space<vmem>>, vector<64x128xf32>,
    %c1_249 = arith.constant 1 : index
    %c0_250 = arith.constant 0 : index
    %c0_251 = arith.constant 0 : index
    %184 = vector.load %arg5[%c1_249, %c0_250, %c0_251] : memref<10x16x128xf32, #tpu.memory_space<vmem>>, vector<8x8x128xf32>
    %185 = vector.shape_cast %184 : vector<8x8x128xf32> to vector<64x128xf32>
    %c0_252 = arith.constant 0 : index
    %c384_253 = arith.constant 384 : index
    %186 = vector.load %arg6[%c0_252, %c384_253] : memref<64x1152xf32, #tpu.memory_space<vmem>>, vector<64x128xf32>
    tpu.vector_store %arg6[%c0_252, %c384_253], %185 {strides = array<i32>} : memref<64x1152xf32, #tpu.memory_space<vmem>>, vector<64x128xf32>,
    %c1_254 = arith.constant 1 : index
    %c1_255 = arith.constant 1 : index
    %c0_256 = arith.constant 0 : index
    %187 = vector.load %arg5[%c1_254, %c1_255, %c0_256] : memref<10x16x128xf32, #tpu.memory_space<vmem>>, vector<8x8x128xf32>
    %188 = vector.shape_cast %187 : vector<8x8x128xf32> to vector<64x128xf32>
    %c0_257 = arith.constant 0 : index
    %c512_258 = arith.constant 512 : index
    %189 = vector.load %arg6[%c0_257, %c512_258] : memref<64x1152xf32, #tpu.memory_space<vmem>>, vector<64x128xf32>
    tpu.vector_store %arg6[%c0_257, %c512_258], %188 {strides = array<i32>} : memref<64x1152xf32, #tpu.memory_space<vmem>>, vector<64x128xf32>,
    %c1_259 = arith.constant 1 : index
    %c2_260 = arith.constant 2 : index
    %c0_261 = arith.constant 0 : index
    %190 = vector.load %arg5[%c1_259, %c2_260, %c0_261] : memref<10x16x128xf32, #tpu.memory_space<vmem>>, vector<8x8x128xf32>
    %191 = vector.shape_cast %190 : vector<8x8x128xf32> to vector<64x128xf32>
    %c0_262 = arith.constant 0 : index
    %c640_263 = arith.constant 640 : index
    %192 = vector.load %arg6[%c0_262, %c640_263] : memref<64x1152xf32, #tpu.memory_space<vmem>>, vector<64x128xf32>
    tpu.vector_store %arg6[%c0_262, %c640_263], %191 {strides = array<i32>} : memref<64x1152xf32, #tpu.memory_space<vmem>>, vector<64x128xf32>,
    %c2_264 = arith.constant 2 : index
    %c0_265 = arith.constant 0 : index
    %c0_266 = arith.constant 0 : index
    %193 = vector.load %arg5[%c2_264, %c0_265, %c0_266] : memref<10x16x128xf32, #tpu.memory_space<vmem>>, vector<8x8x128xf32>
    %194 = vector.shape_cast %193 : vector<8x8x128xf32> to vector<64x128xf32>
    %c0_267 = arith.constant 0 : index
    %c768_268 = arith.constant 768 : index
    %195 = vector.load %arg6[%c0_267, %c768_268] : memref<64x1152xf32, #tpu.memory_space<vmem>>, vector<64x128xf32>
    tpu.vector_store %arg6[%c0_267, %c768_268], %194 {strides = array<i32>} : memref<64x1152xf32, #tpu.memory_space<vmem>>, vector<64x128xf32>,
    %c2_269 = arith.constant 2 : index
    %c1_270 = arith.constant 1 : index
    %c0_271 = arith.constant 0 : index
    %196 = vector.load %arg5[%c2_269, %c1_270, %c0_271] : memref<10x16x128xf32, #tpu.memory_space<vmem>>, vector<8x8x128xf32>
    %197 = vector.shape_cast %196 : vector<8x8x128xf32> to vector<64x128xf32>
    %c0_272 = arith.constant 0 : index
    %c896_273 = arith.constant 896 : index
    %198 = vector.load %arg6[%c0_272, %c896_273] : memref<64x1152xf32, #tpu.memory_space<vmem>>, vector<64x128xf32>
    tpu.vector_store %arg6[%c0_272, %c896_273], %197 {strides = array<i32>} : memref<64x1152xf32, #tpu.memory_space<vmem>>, vector<64x128xf32>,
    %c2_274 = arith.constant 2 : index
    %c2_275 = arith.constant 2 : index
    %c0_276 = arith.constant 0 : index
    %199 = vector.load %arg5[%c2_274, %c2_275, %c0_276] : memref<10x16x128xf32, #tpu.memory_space<vmem>>, vector<8x8x128xf32>
    %200 = vector.shape_cast %199 : vector<8x8x128xf32> to vector<64x128xf32>
    %c0_277 = arith.constant 0 : index
    %c1024_278 = arith.constant 1024 : index
    %201 = vector.load %arg6[%c0_277, %c1024_278] : memref<64x1152xf32, #tpu.memory_space<vmem>>, vector<64x128xf32>
    tpu.vector_store %arg6[%c0_277, %c1024_278], %200 {strides = array<i32>} : memref<64x1152xf32, #tpu.memory_space<vmem>>, vector<64x128xf32>,
    %c0_279 = arith.constant 0 : index
    %c0_280 = arith.constant 0 : index
    %202 = vector.load %arg6[%c0_279, %c0_280] : memref<64x1152xf32, #tpu.memory_space<vmem>>, vector<64x1152xf32>
    %c4 = arith.constant 4 : index
    %c0_281 = arith.constant 0 : index
    %c0_282 = arith.constant 0 : index
    %203 = vector.load %arg2[%c4, %c0_281, %c0_282] : memref<6x1152x128xf32, #tpu.memory_space<vmem>>, vector<1x1152x128xf32>
    %204 = vector.shape_cast %203 : vector<1x1152x128xf32> to vector<1152x128xf32>
    %cst_283 = arith.constant dense<0.000000e+00> : vector<64x128xf32>
    %205 = tpu.matmul %202, %204, %cst_283 {dimension_numbers = #tpu.dot_dimension_numbers<[1], [0], [0], [1], [0, 0, 1, 1], [], []>} : vector<64x1152xf32>, vector<1152x128xf32>, vector<64x128xf32> -> vector<64x128xf32>
    %c4_284 = arith.constant 4 : index
    %c0_285 = arith.constant 0 : index
    %c0_286 = arith.constant 0 : index
    %206 = vector.load %arg3[%c4_284, %c0_285, %c0_286] : memref<6x1x128xf32, #tpu.memory_space<vmem>>, vector<1x1x128xf32>
    %207 = vector.shape_cast %206 : vector<1x1x128xf32> to vector<1x128xf32>
    %208 = vector.broadcast %207 : vector<1x128xf32> to vector<64x128xf32>
    %209 = arith.addf %205, %208 : vector<64x128xf32>
    %cst_287 = arith.constant 0.000000e+00 : f32
    %210 = vector.broadcast %cst_287 : f32 to vector<64x128xf32>
    %211 = arith.cmpf ogt, %209, %210 : vector<64x128xf32>
    %cst_288 = arith.constant 2.000000e-01 : f32
    %212 = vector.broadcast %cst_288 : f32 to vector<64x128xf32>
    %213 = arith.mulf %212, %209 : vector<64x128xf32>
    %214 = arith.select %211, %209, %213 : vector<64x128xi1>, vector<64x128xf32>
    %215 = vector.shape_cast %214 : vector<64x128xf32> to vector<8x8x128xf32>
    %c1_289 = arith.constant 1 : index
    %c1_290 = arith.constant 1 : index
    %c0_291 = arith.constant 0 : index
    %216 = vector.load %arg5[%c1_289, %c1_290, %c0_291] : memref<10x16x128xf32, #tpu.memory_space<vmem>>, vector<8x8x128xf32>
    tpu.vector_store %arg5[%c1_289, %c1_290, %c0_291], %215 {strides = array<i32>} : memref<10x16x128xf32, #tpu.memory_space<vmem>>, vector<8x8x128xf32>,
    %c0_292 = arith.constant 0 : index
    %c0_293 = arith.constant 0 : index
    %c0_294 = arith.constant 0 : index
    %217 = vector.load %arg5[%c0_292, %c0_293, %c0_294] : memref<10x16x128xf32, #tpu.memory_space<vmem>>, vector<8x8x128xf32>
    %218 = vector.shape_cast %217 : vector<8x8x128xf32> to vector<64x128xf32>
    %c0_295 = arith.constant 0 : index
    %c0_296 = arith.constant 0 : index
    %219 = vector.load %arg6[%c0_295, %c0_296] : memref<64x1152xf32, #tpu.memory_space<vmem>>, vector<64x128xf32>
    tpu.vector_store %arg6[%c0_295, %c0_296], %218 {strides = array<i32>} : memref<64x1152xf32, #tpu.memory_space<vmem>>, vector<64x128xf32>,
    %c0_297 = arith.constant 0 : index
    %c1_298 = arith.constant 1 : index
    %c0_299 = arith.constant 0 : index
    %220 = vector.load %arg5[%c0_297, %c1_298, %c0_299] : memref<10x16x128xf32, #tpu.memory_space<vmem>>, vector<8x8x128xf32>
    %221 = vector.shape_cast %220 : vector<8x8x128xf32> to vector<64x128xf32>
    %c0_300 = arith.constant 0 : index
    %c128_301 = arith.constant 128 : index
    %222 = vector.load %arg6[%c0_300, %c128_301] : memref<64x1152xf32, #tpu.memory_space<vmem>>, vector<64x128xf32>
    tpu.vector_store %arg6[%c0_300, %c128_301], %221 {strides = array<i32>} : memref<64x1152xf32, #tpu.memory_space<vmem>>, vector<64x128xf32>,
    %c0_302 = arith.constant 0 : index
    %c2_303 = arith.constant 2 : index
    %c0_304 = arith.constant 0 : index
    %223 = vector.load %arg5[%c0_302, %c2_303, %c0_304] : memref<10x16x128xf32, #tpu.memory_space<vmem>>, vector<8x8x128xf32>
    %224 = vector.shape_cast %223 : vector<8x8x128xf32> to vector<64x128xf32>
    %c0_305 = arith.constant 0 : index
    %c256_306 = arith.constant 256 : index
    %225 = vector.load %arg6[%c0_305, %c256_306] : memref<64x1152xf32, #tpu.memory_space<vmem>>, vector<64x128xf32>
    tpu.vector_store %arg6[%c0_305, %c256_306], %224 {strides = array<i32>} : memref<64x1152xf32, #tpu.memory_space<vmem>>, vector<64x128xf32>,
    %c1_307 = arith.constant 1 : index
    %c0_308 = arith.constant 0 : index
    %c0_309 = arith.constant 0 : index
    %226 = vector.load %arg5[%c1_307, %c0_308, %c0_309] : memref<10x16x128xf32, #tpu.memory_space<vmem>>, vector<8x8x128xf32>
    %227 = vector.shape_cast %226 : vector<8x8x128xf32> to vector<64x128xf32>
    %c0_310 = arith.constant 0 : index
    %c384_311 = arith.constant 384 : index
    %228 = vector.load %arg6[%c0_310, %c384_311] : memref<64x1152xf32, #tpu.memory_space<vmem>>, vector<64x128xf32>
    tpu.vector_store %arg6[%c0_310, %c384_311], %227 {strides = array<i32>} : memref<64x1152xf32, #tpu.memory_space<vmem>>, vector<64x128xf32>,
    %c1_312 = arith.constant 1 : index
    %c1_313 = arith.constant 1 : index
    %c0_314 = arith.constant 0 : index
    %229 = vector.load %arg5[%c1_312, %c1_313, %c0_314] : memref<10x16x128xf32, #tpu.memory_space<vmem>>, vector<8x8x128xf32>
    %230 = vector.shape_cast %229 : vector<8x8x128xf32> to vector<64x128xf32>
    %c0_315 = arith.constant 0 : index
    %c512_316 = arith.constant 512 : index
    %231 = vector.load %arg6[%c0_315, %c512_316] : memref<64x1152xf32, #tpu.memory_space<vmem>>, vector<64x128xf32>
    tpu.vector_store %arg6[%c0_315, %c512_316], %230 {strides = array<i32>} : memref<64x1152xf32, #tpu.memory_space<vmem>>, vector<64x128xf32>,
    %c1_317 = arith.constant 1 : index
    %c2_318 = arith.constant 2 : index
    %c0_319 = arith.constant 0 : index
    %232 = vector.load %arg5[%c1_317, %c2_318, %c0_319] : memref<10x16x128xf32, #tpu.memory_space<vmem>>, vector<8x8x128xf32>
    %233 = vector.shape_cast %232 : vector<8x8x128xf32> to vector<64x128xf32>
    %c0_320 = arith.constant 0 : index
    %c640_321 = arith.constant 640 : index
    %234 = vector.load %arg6[%c0_320, %c640_321] : memref<64x1152xf32, #tpu.memory_space<vmem>>, vector<64x128xf32>
    tpu.vector_store %arg6[%c0_320, %c640_321], %233 {strides = array<i32>} : memref<64x1152xf32, #tpu.memory_space<vmem>>, vector<64x128xf32>,
    %c2_322 = arith.constant 2 : index
    %c0_323 = arith.constant 0 : index
    %c0_324 = arith.constant 0 : index
    %235 = vector.load %arg5[%c2_322, %c0_323, %c0_324] : memref<10x16x128xf32, #tpu.memory_space<vmem>>, vector<8x8x128xf32>
    %236 = vector.shape_cast %235 : vector<8x8x128xf32> to vector<64x128xf32>
    %c0_325 = arith.constant 0 : index
    %c768_326 = arith.constant 768 : index
    %237 = vector.load %arg6[%c0_325, %c768_326] : memref<64x1152xf32, #tpu.memory_space<vmem>>, vector<64x128xf32>
    tpu.vector_store %arg6[%c0_325, %c768_326], %236 {strides = array<i32>} : memref<64x1152xf32, #tpu.memory_space<vmem>>, vector<64x128xf32>,
    %c2_327 = arith.constant 2 : index
    %c1_328 = arith.constant 1 : index
    %c0_329 = arith.constant 0 : index
    %238 = vector.load %arg5[%c2_327, %c1_328, %c0_329] : memref<10x16x128xf32, #tpu.memory_space<vmem>>, vector<8x8x128xf32>
    %239 = vector.shape_cast %238 : vector<8x8x128xf32> to vector<64x128xf32>
    %c0_330 = arith.constant 0 : index
    %c896_331 = arith.constant 896 : index
    %240 = vector.load %arg6[%c0_330, %c896_331] : memref<64x1152xf32, #tpu.memory_space<vmem>>, vector<64x128xf32>
    tpu.vector_store %arg6[%c0_330, %c896_331], %239 {strides = array<i32>} : memref<64x1152xf32, #tpu.memory_space<vmem>>, vector<64x128xf32>,
    %c2_332 = arith.constant 2 : index
    %c2_333 = arith.constant 2 : index
    %c0_334 = arith.constant 0 : index
    %241 = vector.load %arg5[%c2_332, %c2_333, %c0_334] : memref<10x16x128xf32, #tpu.memory_space<vmem>>, vector<8x8x128xf32>
    %242 = vector.shape_cast %241 : vector<8x8x128xf32> to vector<64x128xf32>
    %c0_335 = arith.constant 0 : index
    %c1024_336 = arith.constant 1024 : index
    %243 = vector.load %arg6[%c0_335, %c1024_336] : memref<64x1152xf32, #tpu.memory_space<vmem>>, vector<64x128xf32>
    tpu.vector_store %arg6[%c0_335, %c1024_336], %242 {strides = array<i32>} : memref<64x1152xf32, #tpu.memory_space<vmem>>, vector<64x128xf32>,
    %c0_337 = arith.constant 0 : index
    %c0_338 = arith.constant 0 : index
    %244 = vector.load %arg6[%c0_337, %c0_338] : memref<64x1152xf32, #tpu.memory_space<vmem>>, vector<64x1152xf32>
    %c5 = arith.constant 5 : index
    %c0_339 = arith.constant 0 : index
    %c0_340 = arith.constant 0 : index
    %245 = vector.load %arg2[%c5, %c0_339, %c0_340] : memref<6x1152x128xf32, #tpu.memory_space<vmem>>, vector<1x1152x128xf32>
    %246 = vector.shape_cast %245 : vector<1x1152x128xf32> to vector<1152x128xf32>
    %cst_341 = arith.constant dense<0.000000e+00> : vector<64x128xf32>
    %247 = tpu.matmul %244, %246, %cst_341 {dimension_numbers = #tpu.dot_dimension_numbers<[1], [0], [0], [1], [0, 0, 1, 1], [], []>} : vector<64x1152xf32>, vector<1152x128xf32>, vector<64x128xf32> -> vector<64x128xf32>
    %c5_342 = arith.constant 5 : index
    %c0_343 = arith.constant 0 : index
    %c0_344 = arith.constant 0 : index
    %248 = vector.load %arg3[%c5_342, %c0_343, %c0_344] : memref<6x1x128xf32, #tpu.memory_space<vmem>>, vector<1x1x128xf32>
    %249 = vector.shape_cast %248 : vector<1x1x128xf32> to vector<1x128xf32>
    %250 = vector.broadcast %249 : vector<1x128xf32> to vector<64x128xf32>
    %251 = arith.addf %247, %250 : vector<64x128xf32>
    %cst_345 = arith.constant 0.000000e+00 : f32
    %252 = vector.broadcast %cst_345 : f32 to vector<64x128xf32>
    %253 = arith.cmpf ogt, %251, %252 : vector<64x128xf32>
    %cst_346 = arith.constant 2.000000e-01 : f32
    %254 = vector.broadcast %cst_346 : f32 to vector<64x128xf32>
    %255 = arith.mulf %254, %251 : vector<64x128xf32>
    %256 = arith.select %253, %251, %255 : vector<64x128xi1>, vector<64x128xf32>
    %257 = vector.shape_cast %256 : vector<64x128xf32> to vector<8x8x128xf32>
    %258 = arith.addf %257, %173 : vector<8x8x128xf32>
    %c0_347 = arith.constant 0 : index
    %c0_348 = arith.constant 0 : index
    %c0_349 = arith.constant 0 : index
    %c0_350 = arith.constant 0 : index
    %259 = vector.load %arg4[%c0_347, %c0_348, %c0_349, %c0_350] : memref<1x8x8x128xf32, #tpu.memory_space<vmem>>, vector<1x8x8x128xf32>
    %260 = vector.shape_cast %259 : vector<1x8x8x128xf32> to vector<8x8x128xf32>
    %261 = vector.shape_cast %258 : vector<8x8x128xf32> to vector<1x8x8x128xf32>
    tpu.vector_store %arg4[%c0_347, %c0_348, %c0_349, %c0_350], %261 {strides = array<i32>} : memref<1x8x8x128xf32, #tpu.memory_space<vmem>>, vector<1x8x8x128xf32>,
    return
  }
  func.func @transform_0(%arg0: i32) -> (i32, i32, i32, i32) {
    %c0_i32 = arith.constant 0 : i32
    %c0_i32_0 = arith.constant 0 : i32
    %c0_i32_1 = arith.constant 0 : i32
    %c0_i32_2 = arith.constant 0 : i32
    return %arg0, %c0_i32, %c0_i32_0, %c0_i32_1 : i32, i32, i32, i32
  }
  func.func @transform_1(%arg0: i32) -> (i32, i32, i32) {
    %c0_i32 = arith.constant 0 : i32
    %c0_i32_0 = arith.constant 0 : i32
    %c0_i32_1 = arith.constant 0 : i32
    %c0_i32_2 = arith.constant 0 : i32
    return %c0_i32, %c0_i32_0, %c0_i32_1 : i32, i32, i32
  }
  func.func @transform_2(%arg0: i32) -> (i32, i32, i32) {
    %c0_i32 = arith.constant 0 : i32
    %c0_i32_0 = arith.constant 0 : i32
    %c0_i32_1 = arith.constant 0 : i32
    %c0_i32_2 = arith.constant 0 : i32
    return %c0_i32, %c0_i32_0, %c0_i32_1 : i32, i32, i32
  }
  func.func @transform_3(%arg0: i32) -> (i32, i32, i32, i32) {
    %c0_i32 = arith.constant 0 : i32
    %c0_i32_0 = arith.constant 0 : i32
    %c0_i32_1 = arith.constant 0 : i32
    %c0_i32_2 = arith.constant 0 : i32
    return %arg0, %c0_i32, %c0_i32_0, %c0_i32_1 : i32, i32, i32, i32
  }
}

</mosaic_0001>

<llo_original>
// kernel: generator_forward.1
$region0: #{generator_forward.1}
  #allocation0 [shape = 'u32[]', space=smem, size = 0x4, offset = 0x4, fixed_abs, tag = 'smem constant byte address 0x4 - core index']
  #allocation1 [shape = 'u32[144,128]{1,0:T(1,128)}', space=vmem, size = 0x12000, scoped, tag = 'internal scratch']
  #allocation2 [shape = 'f32[10,16,128]{2,1,0:T(8,128)}', space=vmem, size = 0x14000, scoped, tag = 'scratch operand']
  #allocation3 [shape = 'f32[64,1152]{1,0:T(8,128)}', space=vmem, size = 0x48000, scoped, tag = 'scratch operand']
  %s0 = inlined_call_operand.vmem [shape: f32[2,8,8,128], index: 0, kind: input, shape index: {}]
  %s1 = inlined_call_operand.vmem [shape: f32[6,1152,128], index: 1, kind: input, shape index: {}]
  %s2 = inlined_call_operand.vmem [shape: f32[6,1,128], index: 2, kind: input, shape index: {}]
  %s3 = inlined_call_operand.hbm [shape: f32[2,8,8,128], index: 3, kind: output, shape index: {}]
  %s4 = sld [smem:[#allocation0]]
  $region45: #{generator_forward.1} parent=0
    _
  %s6 = ssub.s32 1, %s4
  %s7 = scalar_select 0, %s6, %s4
  $region1: #{generator_forward.1} parent=0
    #allocation4 [shape = 'u8[65536]{0}', space=vmem, size = 0x10000, scoped, tag = 'output window, operand 0']
    #allocation5 [shape = 's32[2]{0}', space=sflag, size = 0x8, scoped, tag = 'scoped memory for generator_forward.1']
    %8 = vsyncpa [#allocation5], 0
    %s9 = scalar_lea.sflag [#allocation5], 1
    %10 = vsyncpa %s9, 0
    loop: start=0, step=1, limit=4
    $region2: #{generator_forward.1} parent=1 // loop_pre_header
      _
    $region3: #{generator_forward.1} parent=1 // loop_header
      %s12 = sphi 0, %s16
      %p13 = scmp.ge.s32.totalorder %s12, 4
      %s22 = sphi 0, %s24
      %s25 = sphi 0, %s22
      %s26 = sphi 0, %s25
      %s42 = sphi 0, %s26
      %s46 = sphi 0, %s46
      %s48 = sphi 0, %s46
      %s49 = sphi 0, %s48
      %s63 = sphi 0, %s49
      %s67 = sphi 0, %s67
      %s69 = sphi 0, %s67
      %s70 = sphi 0, %s69
      %s84 = sphi 0, %s70
      %s90 = sphi 0, %s92
      %s93 = sphi 0, %s90
      %s94 = sphi 0, %s93
      %s110 = sphi 0, %s94
    $region4: #{generator_forward.1} parent=1 // loop_header_branch
      %15 = sbr.rel (%p13) target = $region8
    $region5: #{generator_forward.1} parent=1 // loop_body
      %s17 = ssub.s32 %s12, 1
      %s18 = ssub.s32 %s12, 2
      %s19 = sadd.s32 %s12, 1
      %s20 = ssub.s32 %s12, %s19
      %p21 = scmp.eq.s32.totalorder %s20, 0
      %s23 = sadd.s32 %s22, 1
      %s24 = scalar_select %p21, %s22, %s23
      %p27 = pneg %p21
      %p28 = scmp.eq.s32.totalorder %s12, 1
      %p29 = por %p27, %p28
      %p30 = scmp.ne.s32.totalorder %s22, %s25
      %p31 = scmp.eq.s32.totalorder %s12, 0
      %p32 = por %p30, %p31
      %p33 = scmp.ne.s32.totalorder %s22, %s25
      %p34 = scmp.eq.s32.totalorder %s17, 1
      %p35 = por %p33, %p34
      %p36 = scmp.ne.s32.totalorder %s25, %s26
      %p37 = scmp.eq.s32.totalorder %s17, 0
      %p38 = por %p36, %p37
      %p39 = scmp.ne.s32.totalorder %s25, %s26
      %p40 = scmp.eq.s32.totalorder %s18, 1
      %p41 = por %p39, %p40
      %p43 = scmp.ne.s32.totalorder %s26, %s42
      %p44 = scmp.eq.s32.totalorder %s18, 0
      %p45 = por %p43, %p44
      %s47 = sadd.s32 %s46, 1
      %p50 = scmp.eq.s32.totalorder %s12, 1
      %p51 = scmp.ne.s32.totalorder %s46, %s48
      %p52 = scmp.eq.s32.totalorder %s12, 0
      %p53 = por %p51, %p52
      %p54 = scmp.ne.s32.totalorder %s46, %s48
      %p55 = scmp.eq.s32.totalorder %s17, 1
      %p56 = por %p54, %p55
      %p57 = scmp.ne.s32.totalorder %s48, %s49
      %p58 = scmp.eq.s32.totalorder %s17, 0
      %p59 = por %p57, %p58
      %p60 = scmp.ne.s32.totalorder %s48, %s49
      %p61 = scmp.eq.s32.totalorder %s18, 1
      %p62 = por %p60, %p61
      %p64 = scmp.ne.s32.totalorder %s49, %s63
      %p65 = scmp.eq.s32.totalorder %s18, 0
      %p66 = por %p64, %p65
      %s68 = sadd.s32 %s67, 1
      %p71 = scmp.eq.s32.totalorder %s12, 1
      %p72 = scmp.ne.s32.totalorder %s67, %s69
      %p73 = scmp.eq.s32.totalorder %s12, 0
      %p74 = por %p72, %p73
      %p75 = scmp.ne.s32.totalorder %s67, %s69
      %p76 = scmp.eq.s32.totalorder %s17, 1
      %p77 = por %p75, %p76
      %p78 = scmp.ne.s32.totalorder %s69, %s70
      %p79 = scmp.eq.s32.totalorder %s17, 0
      %p80 = por %p78, %p79
      %p81 = scmp.ne.s32.totalorder %s69, %s70
      %p82 = scmp.eq.s32.totalorder %s18, 1
      %p83 = por %p81, %p82
      %p85 = scmp.ne.s32.totalorder %s70, %s84
      %p86 = scmp.eq.s32.totalorder %s18, 0
      %p87 = por %p85, %p86
      %s88 = ssub.s32 %s12, %s19
      %p89 = scmp.eq.s32.totalorder %s88, 0
      %s91 = sadd.s32 %s90, 1
      %s92 = scalar_select %p89, %s90, %s91
      %p95 = pneg %p89
      %p96 = scmp.eq.s32.totalorder %s12, 1
      %p97 = por %p95, %p96
      %p98 = scmp.ne.s32.totalorder %s90, %s93
      %p99 = scmp.eq.s32.totalorder %s12, 0
      %p100 = por %p98, %p99
      %p101 = scmp.ne.s32.totalorder %s90, %s93
      %p102 = scmp.eq.s32.totalorder %s17, 1
      %p103 = por %p101, %p102
      %p104 = scmp.ne.s32.totalorder %s93, %s94
      %p105 = scmp.eq.s32.totalorder %s17, 0
      %p106 = por %p104, %p105
      %p107 = scmp.ne.s32.totalorder %s93, %s94
      %p108 = scmp.eq.s32.totalorder %s18, 1
      %p109 = por %p107, %p108
      %p111 = scmp.ne.s32.totalorder %s94, %s110
      %p112 = scmp.eq.s32.totalorder %s18, 0
      %p113 = por %p111, %p112
      %p114 = scmp.le.s32.totalorder 1, %s12
      %p115 = scmp.lt.s32.totalorder %s12, 3
      %p116 = pnand %p114, %p115
      %p117 = pneg %p116
      // Predicated region
      $region9: #{generator_forward.1} parent=5 // pred_check
        _
      $region10: #{generator_forward.1} parent=5 // pred_check_branch
        %119 = sbr.rel (%p116) target = $region12
      $region11: #{generator_forward.1} parent=5 // pred_region
        %s120 = ssub.s32 %s12, 1
        // Predicated region
        $region13: #{generator_forward.1} parent=11 // pred_check
          %p121 = pneg %p59
        $region14: #{generator_forward.1} parent=11 // pred_check_branch
          %123 = sbr.rel (%p121) target = $region16
        $region15: #{generator_forward.1} parent=11 // pred_region
          _
        $region16: #{generator_forward.1} parent=11 // pred_fallthru
          _
        // Predicated region
        $region17: #{generator_forward.1} parent=11 // pred_check
          %p124 = pneg %p80
        $region18: #{generator_forward.1} parent=11 // pred_check_branch
          %126 = sbr.rel (%p124) target = $region20
        $region19: #{generator_forward.1} parent=11 // pred_region
          _
        $region20: #{generator_forward.1} parent=11 // pred_fallthru
          _
      $region12: #{generator_forward.1} parent=5 // pred_fallthru
        _
      %p127 = scmp.lt.s32.totalorder %s12, 2
      // Predicated region
      $region21: #{generator_forward.1} parent=5 // pred_check
        %p128 = pneg %p127
      $region22: #{generator_forward.1} parent=5 // pred_check_branch
        %130 = sbr.rel (%p128) target = $region24
      $region23: #{generator_forward.1} parent=5 // pred_region
        // Predicated region
        $region25: #{generator_forward.1} parent=23 // pred_check
          %p131 = pneg %p32
        $region26: #{generator_forward.1} parent=23 // pred_check_branch
          %133 = sbr.rel (%p131) target = $region28
        $region27: #{generator_forward.1} parent=23 // pred_region
          %p134 = scmp.lt.s32.totalorder %s12, 1
          %s135 = scalar_select %p134, %s12, 1
          %s136 = smul.addr %s135, 8
          %s137 = smul.addr %s136, 8
          %s138 = scalar_lea.vmem %s0, %s137
        $region28: #{generator_forward.1} parent=23 // pred_fallthru
          _
      $region24: #{generator_forward.1} parent=5 // pred_fallthru
        _
      %p139 = scmp.le.s32.totalorder 1, %s12
      %p140 = scmp.lt.s32.totalorder %s12, 3
      %p141 = pnand %p139, %p140
      %p142 = pneg %p141
      // Predicated region
      $region29: #{generator_forward.1} parent=5 // pred_check
        _
      $region30: #{generator_forward.1} parent=5 // pred_check_branch
        %144 = sbr.rel (%p141) target = $region32
      $region31: #{generator_forward.1} parent=5 // pred_region
        %s145 = ssub.s32 %s12, 1
        %p146 = scmp.lt.s32.totalorder %s17, 1
        %s147 = scalar_select %p146, %s17, 1
        %s148 = smul.addr %s147, 8
        %s149 = smul.addr %s148, 8
        %s150 = scalar_lea.vmem %s0, %s149
        %p151 = pneg %p38
        %p152 = pneg %p35
        %p153 = pneg %p59
        %p154 = pneg %p56
        %p155 = pneg %p80
        %p156 = pneg %p77
        %p157 = pneg %p106
        %p158 = pneg %p103
        %s159 = sand.u32 %s93, 1
        %s160 = scalar_lea.sflag [#allocation5], %s159
        %s161 = sand.u32 %s93, 1
        %s162 = smul.addr %s161, 64
        %s163 = scalar_lea.vmem [#allocation4], %s162
        %p164 = scmp.lt.s32.totalorder %s17, 1
        %s165 = scalar_select %p164, %s17, 1
        %s166 = smul.addr %s165, 8
        %s167 = smul.addr %s166, 8
        %s168 = scalar_lea.vmem %s0, %s167
        %169 = vst [vmem:[#allocation2] sm:$0xff] 0.0
        %170 = vst [vmem:[#allocation2 + $0x8] sm:$0xff] 0.0
        %171 = vst [vmem:[#allocation2 + $0x10] sm:$0xff] 0.0
        %172 = vst [vmem:[#allocation2 + $0x18] sm:$0xff] 0.0
        %173 = vst [vmem:[#allocation2 + $0x20] sm:$0xff] 0.0
        %174 = vst [vmem:[#allocation2 + $0x28] sm:$0xff] 0.0
        %175 = vst [vmem:[#allocation2 + $0x30] sm:$0xff] 0.0
        %176 = vst [vmem:[#allocation2 + $0x38] sm:$0xff] 0.0
        %177 = vst [vmem:[#allocation2 + $0x40] sm:$0xff] 0.0
        %178 = vst [vmem:[#allocation2 + $0x48] sm:$0xff] 0.0
        %179 = vst [vmem:[#allocation2 + $0x50] sm:$0xff] 0.0
        %180 = vst [vmem:[#allocation2 + $0x58] sm:$0xff] 0.0
        %181 = vst [vmem:[#allocation2 + $0x60] sm:$0xff] 0.0
        %182 = vst [vmem:[#allocation2 + $0x68] sm:$0xff] 0.0
        %183 = vst [vmem:[#allocation2 + $0x70] sm:$0xff] 0.0
        %184 = vst [vmem:[#allocation2 + $0x78] sm:$0xff] 0.0
        %185 = vst [vmem:[#allocation2 + $0x80] sm:$0xff] 0.0
        %186 = vst [vmem:[#allocation2 + $0x88] sm:$0xff] 0.0
        %187 = vst [vmem:[#allocation2 + $0x90] sm:$0xff] 0.0
        %188 = vst [vmem:[#allocation2 + $0x98] sm:$0xff] 0.0
        %v189 = vld [vmem:[%s168] sm:$0xff]
        %v190 = vld [vmem:[%s168 + $0x8] sm:$0xff]
        %v191 = vld [vmem:[%s168 + $0x10] sm:$0xff]
        %v192 = vld [vmem:[%s168 + $0x18] sm:$0xff]
        %v193 = vld [vmem:[%s168 + $0x20] sm:$0xff]
        %v194 = vld [vmem:[%s168 + $0x28] sm:$0xff]
        %v195 = vld [vmem:[%s168 + $0x30] sm:$0xff]
        %v196 = vld [vmem:[%s168 + $0x38] sm:$0xff]
        %s197 = scalar_lea.vmem [#allocation2], 16
        %198 = vst [vmem:[%s197 + $0x1] sm:$0xff] %v189
        %199 = vst [vmem:[%s197 + $0x11] sm:$0xff] %v190
        %200 = vst [vmem:[%s197 + $0x21] sm:$0xff] %v191
        %201 = vst [vmem:[%s197 + $0x31] sm:$0xff] %v192
        %202 = vst [vmem:[%s197 + $0x41] sm:$0xff] %v193
        %203 = vst [vmem:[%s197 + $0x51] sm:$0xff] %v194
        %204 = vst [vmem:[%s197 + $0x61] sm:$0xff] %v195
        %205 = vst [vmem:[%s197 + $0x71] sm:$0xff] %v196
        %v206 = vld [vmem:[#allocation2] sm:$0xff]
        %v207 = vld [vmem:[#allocation2 + $0x10] sm:$0xff]
        %v208 = vld [vmem:[#allocation2 + $0x20] sm:$0xff]
        %v209 = vld [vmem:[#allocation2 + $0x30] sm:$0xff]
        %v210 = vld [vmem:[#allocation2 + $0x40] sm:$0xff]
        %v211 = vld [vmem:[#allocation2 + $0x50] sm:$0xff]
        %v212 = vld [vmem:[#allocation2 + $0x60] sm:$0xff]
        %v213 = vld [vmem:[#allocation2 + $0x70] sm:$0xff]
        %214 = vst [vmem:[#allocation3] sm:$0xff] %v206
        %215 = vst [vmem:[#allocation3 + $0x48] sm:$0xff] %v207
        %216 = vst [vmem:[#allocation3 + $0x90] sm:$0xff] %v208
        %217 = vst [vmem:[#allocation3 + $0xd8] sm:$0xff] %v209
        %218 = vst [vmem:[#allocation3 + $0x120] sm:$0xff] %v210
        %219 = vst [vmem:[#allocation3 + $0x168] sm:$0xff] %v211
        %220 = vst [vmem:[#allocation3 + $0x1b0] sm:$0xff] %v212
        %221 = vst [vmem:[#allocation3 + $0x1f8] sm:$0xff] %v213
        %v222 = vld [vmem:[#allocation2 + $0x1] sm:$0xff]
        %v223 = vld [vmem:[#allocation2 + $0x11] sm:$0xff]
        %v224 = vld [vmem:[#allocation2 + $0x21] sm:$0xff]
        %v225 = vld [vmem:[#allocation2 + $0x31] sm:$0xff]
        %v226 = vld [vmem:[#allocation2 + $0x41] sm:$0xff]
        %v227 = vld [vmem:[#allocation2 + $0x51] sm:$0xff]
        %v228 = vld [vmem:[#allocation2 + $0x61] sm:$0xff]
        %v229 = vld [vmem:[#allocation2 + $0x71] sm:$0xff]
        %230 = vst [vmem:[#allocation3 + $0x8] sm:$0xff] %v222
        %231 = vst [vmem:[#allocation3 + $0x50] sm:$0xff] %v223
        %232 = vst [vmem:[#allocation3 + $0x98] sm:$0xff] %v224
        %233 = vst [vmem:[#allocation3 + $0xe0] sm:$0xff] %v225
        %234 = vst [vmem:[#allocation3 + $0x128] sm:$0xff] %v226
        %235 = vst [vmem:[#allocation3 + $0x170] sm:$0xff] %v227
        %236 = vst [vmem:[#allocation3 + $0x1b8] sm:$0xff] %v228
        %237 = vst [vmem:[#allocation3 + $0x200] sm:$0xff] %v229
        %v238 = vld [vmem:[#allocation2 + $0x2] sm:$0xff]
        %v239 = vld [vmem:[#allocation2 + $0x12] sm:$0xff]
        %v240 = vld [vmem:[#allocation2 + $0x22] sm:$0xff]
        %v241 = vld [vmem:[#allocation2 + $0x32] sm:$0xff]
        %v242 = vld [vmem:[#allocation2 + $0x42] sm:$0xff]
        %v243 = vld [vmem:[#allocation2 + $0x52] sm:$0xff]
        %v244 = vld [vmem:[#allocation2 + $0x62] sm:$0xff]
        %v245 = vld [vmem:[#allocation2 + $0x72] sm:$0xff]
        %246 = vst [vmem:[#allocation3 + $0x10] sm:$0xff] %v238
        %247 = vst [vmem:[#allocation3 + $0x58] sm:$0xff] %v239
        %248 = vst [vmem:[#allocation3 + $0xa0] sm:$0xff] %v240
        %249 = vst [vmem:[#allocation3 + $0xe8] sm:$0xff] %v241
        %250 = vst [vmem:[#allocation3 + $0x130] sm:$0xff] %v242
        %251 = vst [vmem:[#allocation3 + $0x178] sm:$0xff] %v243
        %252 = vst [vmem:[#allocation3 + $0x1c0] sm:$0xff] %v244
        %253 = vst [vmem:[#allocation3 + $0x208] sm:$0xff] %v245
        %v254 = vld [vmem:[%s197] sm:$0xff]
        %v255 = vld [vmem:[%s197 + $0x10] sm:$0xff]
        %v256 = vld [vmem:[%s197 + $0x20] sm:$0xff]
        %v257 = vld [vmem:[%s197 + $0x30] sm:$0xff]
        %v258 = vld [vmem:[%s197 + $0x40] sm:$0xff]
        %v259 = vld [vmem:[%s197 + $0x50] sm:$0xff]
        %v260 = vld [vmem:[%s197 + $0x60] sm:$0xff]
        %v261 = vld [vmem:[%s197 + $0x70] sm:$0xff]
        %262 = vst [vmem:[#allocation3 + $0x18] sm:$0xff] %v254
        %263 = vst [vmem:[#allocation3 + $0x60] sm:$0xff] %v255
        %264 = vst [vmem:[#allocation3 + $0xa8] sm:$0xff] %v256
        %265 = vst [vmem:[#allocation3 + $0xf0] sm:$0xff] %v257
        %266 = vst [vmem:[#allocation3 + $0x138] sm:$0xff] %v258
        %267 = vst [vmem:[#allocation3 + $0x180] sm:$0xff] %v259
        %268 = vst [vmem:[#allocation3 + $0x1c8] sm:$0xff] %v260
        %269 = vst [vmem:[#allocation3 + $0x210] sm:$0xff] %v261
        %v270 = vld [vmem:[%s197 + $0x1] sm:$0xff]
        %v271 = vld [vmem:[%s197 + $0x11] sm:$0xff]
        %v272 = vld [vmem:[%s197 + $0x21] sm:$0xff]
        %v273 = vld [vmem:[%s197 + $0x31] sm:$0xff]
        %v274 = vld [vmem:[%s197 + $0x41] sm:$0xff]
        %v275 = vld [vmem:[%s197 + $0x51] sm:$0xff]
        %v276 = vld [vmem:[%s197 + $0x61] sm:$0xff]
        %v277 = vld [vmem:[%s197 + $0x71] sm:$0xff]
        %278 = vst [vmem:[#allocation3 + $0x20] sm:$0xff] %v270
        %279 = vst [vmem:[#allocation3 + $0x68] sm:$0xff] %v271
        %280 = vst [vmem:[#allocation3 + $0xb0] sm:$0xff] %v272
        %281 = vst [vmem:[#allocation3 + $0xf8] sm:$0xff] %v273
        %282 = vst [vmem:[#allocation3 + $0x140] sm:$0xff] %v274
        %283 = vst [vmem:[#allocation3 + $0x188] sm:$0xff] %v275
        %284 = vst [vmem:[#allocation3 + $0x1d0] sm:$0xff] %v276
        %285 = vst [vmem:[#allocation3 + $0x218] sm:$0xff] %v277
        %v286 = vld [vmem:[%s197 + $0x2] sm:$0xff]
        %v287 = vld [vmem:[%s197 + $0x12] sm:$0xff]
        %v288 = vld [vmem:[%s197 + $0x22] sm:$0xff]
        %v289 = vld [vmem:[%s197 + $0x32] sm:$0xff]
        %v290 = vld [vmem:[%s197 + $0x42] sm:$0xff]
        %v291 = vld [vmem:[%s197 + $0x52] sm:$0xff]
        %v292 = vld [vmem:[%s197 + $0x62] sm:$0xff]
        %v293 = vld [vmem:[%s197 + $0x72] sm:$0xff]
        %294 = vst [vmem:[#allocation3 + $0x28] sm:$0xff] %v286
        %295 = vst [vmem:[#allocation3 + $0x70] sm:$0xff] %v287
        %296 = vst [vmem:[#allocation3 + $0xb8] sm:$0xff] %v288
        %297 = vst [vmem:[#allocation3 + $0x100] sm:$0xff] %v289
        %298 = vst [vmem:[#allocation3 + $0x148] sm:$0xff] %v290
        %299 = vst [vmem:[#allocation3 + $0x190] sm:$0xff] %v291
        %300 = vst [vmem:[#allocation3 + $0x1d8] sm:$0xff] %v292
        %301 = vst [vmem:[#allocation3 + $0x220] sm:$0xff] %v293
        %s302 = scalar_lea.vmem [#allocation2], 32
        %v303 = vld [vmem:[%s302] sm:$0xff]
        %v304 = vld [vmem:[%s302 + $0x10] sm:$0xff]
        %v305 = vld [vmem:[%s302 + $0x20] sm:$0xff]
        %v306 = vld [vmem:[%s302 + $0x30] sm:$0xff]
        %v307 = vld [vmem:[%s302 + $0x40] sm:$0xff]
        %v308 = vld [vmem:[%s302 + $0x50] sm:$0xff]
        %v309 = vld [vmem:[%s302 + $0x60] sm:$0xff]
        %v310 = vld [vmem:[%s302 + $0x70] sm:$0xff]
        %311 = vst [vmem:[#allocation3 + $0x30] sm:$0xff] %v303
        %312 = vst [vmem:[#allocation3 + $0x78] sm:$0xff] %v304
        %313 = vst [vmem:[#allocation3 + $0xc0] sm:$0xff] %v305
        %314 = vst [vmem:[#allocation3 + $0x108] sm:$0xff] %v306
        %315 = vst [vmem:[#allocation3 + $0x150] sm:$0xff] %v307
        %316 = vst [vmem:[#allocation3 + $0x198] sm:$0xff] %v308
        %317 = vst [vmem:[#allocation3 + $0x1e0] sm:$0xff] %v309
        %318 = vst [vmem:[#allocation3 + $0x228] sm:$0xff] %v310
        %v319 = vld [vmem:[%s302 + $0x1] sm:$0xff]
        %v320 = vld [vmem:[%s302 + $0x11] sm:$0xff]
        %v321 = vld [vmem:[%s302 + $0x21] sm:$0xff]
        %v322 = vld [vmem:[%s302 + $0x31] sm:$0xff]
        %v323 = vld [vmem:[%s302 + $0x41] sm:$0xff]
        %v324 = vld [vmem:[%s302 + $0x51] sm:$0xff]
        %v325 = vld [vmem:[%s302 + $0x61] sm:$0xff]
        %v326 = vld [vmem:[%s302 + $0x71] sm:$0xff]
        %327 = vst [vmem:[#allocation3 + $0x38] sm:$0xff] %v319
        %328 = vst [vmem:[#allocation3 + $0x80] sm:$0xff] %v320
        %329 = vst [vmem:[#allocation3 + $0xc8] sm:$0xff] %v321
        %330 = vst [vmem:[#allocation3 + $0x110] sm:$0xff] %v322
        %331 = vst [vmem:[#allocation3 + $0x158] sm:$0xff] %v323
        %332 = vst [vmem:[#allocation3 + $0x1a0] sm:$0xff] %v324
        %333 = vst [vmem:[#allocation3 + $0x1e8] sm:$0xff] %v325
        %334 = vst [vmem:[#allocation3 + $0x230] sm:$0xff] %v326
        %v335 = vld [vmem:[%s302 + $0x2] sm:$0xff]
        %v336 = vld [vmem:[%s302 + $0x12] sm:$0xff]
        %v337 = vld [vmem:[%s302 + $0x22] sm:$0xff]
        %v338 = vld [vmem:[%s302 + $0x32] sm:$0xff]
        %v339 = vld [vmem:[%s302 + $0x42] sm:$0xff]
        %v340 = vld [vmem:[%s302 + $0x52] sm:$0xff]
        %v341 = vld [vmem:[%s302 + $0x62] sm:$0xff]
        %v342 = vld [vmem:[%s302 + $0x72] sm:$0xff]
        %343 = vst [vmem:[#allocation3 + $0x40] sm:$0xff] %v335
        %344 = vst [vmem:[#allocation3 + $0x88] sm:$0xff] %v336
        %345 = vst [vmem:[#allocation3 + $0xd0] sm:$0xff] %v337
        %346 = vst [vmem:[#allocation3 + $0x118] sm:$0xff] %v338
        %347 = vst [vmem:[#allocation3 + $0x160] sm:$0xff] %v339
        %348 = vst [vmem:[#allocation3 + $0x1a8] sm:$0xff] %v340
        %349 = vst [vmem:[#allocation3 + $0x1f0] sm:$0xff] %v341
        %350 = vst [vmem:[#allocation3 + $0x238] sm:$0xff] %v342
        %v351 = vld [vmem:[#allocation3] sm:$0xff]
        %v352 = vld [vmem:[#allocation3 + $0x8] sm:$0xff]
        %v353 = vld [vmem:[#allocation3 + $0x10] sm:$0xff]
        %v354 = vld [vmem:[#allocation3 + $0x18] sm:$0xff]
        %v355 = vld [vmem:[#allocation3 + $0x20] sm:$0xff]
        %v356 = vld [vmem:[#allocation3 + $0x28] sm:$0xff]
        %v357 = vld [vmem:[#allocation3 + $0x30] sm:$0xff]
        %v358 = vld [vmem:[#allocation3 + $0x38] sm:$0xff]
        %v359 = vld [vmem:[#allocation3 + $0x40] sm:$0xff]
        %v360 = vld [vmem:[#allocation3 + $0x48] sm:$0xff]
        %v361 = vld [vmem:[#allocation3 + $0x50] sm:$0xff]
        %v362 = vld [vmem:[#allocation3 + $0x58] sm:$0xff]
        %v363 = vld [vmem:[#allocation3 + $0x60] sm:$0xff]
        %v364 = vld [vmem:[#allocation3 + $0x68] sm:$0xff]
        %v365 = vld [vmem:[#allocation3 + $0x70] sm:$0xff]
        %v366 = vld [vmem:[#allocation3 + $0x78] sm:$0xff]
        %v367 = vld [vmem:[#allocation3 + $0x80] sm:$0xff]
        %v368 = vld [vmem:[#allocation3 + $0x88] sm:$0xff]
        %v369 = vld [vmem:[#allocation3 + $0x90] sm:$0xff]
        %v370 = vld [vmem:[#allocation3 + $0x98] sm:$0xff]
        %v371 = vld [vmem:[#allocation3 + $0xa0] sm:$0xff]
        %v372 = vld [vmem:[#allocation3 + $0xa8] sm:$0xff]
        %v373 = vld [vmem:[#allocation3 + $0xb0] sm:$0xff]
        %v374 = vld [vmem:[#allocation3 + $0xb8] sm:$0xff]
        %v375 = vld [vmem:[#allocation3 + $0xc0] sm:$0xff]
        %v376 = vld [vmem:[#allocation3 + $0xc8] sm:$0xff]
        %v377 = vld [vmem:[#allocation3 + $0xd0] sm:$0xff]
        %v378 = vld [vmem:[#allocation3 + $0xd8] sm:$0xff]
        %v379 = vld [vmem:[#allocation3 + $0xe0] sm:$0xff]
        %v380 = vld [vmem:[#allocation3 + $0xe8] sm:$0xff]
        %v381 = vld [vmem:[#allocation3 + $0xf0] sm:$0xff]
        %v382 = vld [vmem:[#allocation3 + $0xf8] sm:$0xff]
        %v383 = vld [vmem:[#allocation3 + $0x100] sm:$0xff]
        %v384 = vld [vmem:[#allocation3 + $0x108] sm:$0xff]
        %v385 = vld [vmem:[#allocation3 + $0x110] sm:$0xff]
        %v386 = vld [vmem:[#allocation3 + $0x118] sm:$0xff]
        %v387 = vld [vmem:[#allocation3 + $0x120] sm:$0xff]
        %v388 = vld [vmem:[#allocation3 + $0x128] sm:$0xff]
        %v389 = vld [vmem:[#allocation3 + $0x130] sm:$0xff]
        %v390 = vld [vmem:[#allocation3 + $0x138] sm:$0xff]
        %v391 = vld [vmem:[#allocation3 + $0x140] sm:$0xff]
        %v392 = vld [vmem:[#allocation3 + $0x148] sm:$0xff]
        %v393 = vld [vmem:[#allocation3 + $0x150] sm:$0xff]
        %v394 = vld [vmem:[#allocation3 + $0x158] sm:$0xff]
        %v395 = vld [vmem:[#allocation3 + $0x160] sm:$0xff]
        %v396 = vld [vmem:[#allocation3 + $0x168] sm:$0xff]
        %v397 = vld [vmem:[#allocation3 + $0x170] sm:$0xff]
        %v398 = vld [vmem:[#allocation3 + $0x178] sm:$0xff]
        %v399 = vld [vmem:[#allocation3 + $0x180] sm:$0xff]
        %v400 = vld [vmem:[#allocation3 + $0x188] sm:$0xff]
        %v401 = vld [vmem:[#allocation3 + $0x190] sm:$0xff]
        %v402 = vld [vmem:[#allocation3 + $0x198] sm:$0xff]
        %v403 = vld [vmem:[#allocation3 + $0x1a0] sm:$0xff]
        %v404 = vld [vmem:[#allocation3 + $0x1a8] sm:$0xff]
        %v405 = vld [vmem:[#allocation3 + $0x1b0] sm:$0xff]
        %v406 = vld [vmem:[#allocation3 + $0x1b8] sm:$0xff]
        %v407 = vld [vmem:[#allocation3 + $0x1c0] sm:$0xff]
        %v408 = vld [vmem:[#allocation3 + $0x1c8] sm:$0xff]
        %v409 = vld [vmem:[#allocation3 + $0x1d0] sm:$0xff]
        %v410 = vld [vmem:[#allocation3 + $0x1d8] sm:$0xff]
        %v411 = vld [vmem:[#allocation3 + $0x1e0] sm:$0xff]
        %v412 = vld [vmem:[#allocation3 + $0x1e8] sm:$0xff]
        %v413 = vld [vmem:[#allocation3 + $0x1f0] sm:$0xff]
        %v414 = vld [vmem:[#allocation3 + $0x1f8] sm:$0xff]
        %v415 = vld [vmem:[#allocation3 + $0x200] sm:$0xff]
        %v416 = vld [vmem:[#allocation3 + $0x208] sm:$0xff]
        %v417 = vld [vmem:[#allocation3 + $0x210] sm:$0xff]
        %v418 = vld [vmem:[#allocation3 + $0x218] sm:$0xff]
        %v419 = vld [vmem:[#allocation3 + $0x220] sm:$0xff]
        %v420 = vld [vmem:[#allocation3 + $0x228] sm:$0xff]
        %v421 = vld [vmem:[#allocation3 + $0x230] sm:$0xff]
        %v422 = vld [vmem:[#allocation3 + $0x238] sm:$0xff]
        %v423 = vld [vmem:[%s1] sm:$0xff]
        %v424 = vld [vmem:[%s1 + $0x8] sm:$0xff]
        %v425 = vld [vmem:[%s1 + $0x10] sm:$0xff]
        %v426 = vld [vmem:[%s1 + $0x18] sm:$0xff]
        %v427 = vld [vmem:[%s1 + $0x20] sm:$0xff]
        %v428 = vld [vmem:[%s1 + $0x28] sm:$0xff]
        %v429 = vld [vmem:[%s1 + $0x30] sm:$0xff]
        %v430 = vld [vmem:[%s1 + $0x38] sm:$0xff]
        %v431 = vld [vmem:[%s1 + $0x40] sm:$0xff]
        %v432 = vld [vmem:[%s1 + $0x48] sm:$0xff]
        %v433 = vld [vmem:[%s1 + $0x50] sm:$0xff]
        %v434 = vld [vmem:[%s1 + $0x58] sm:$0xff]
        %v435 = vld [vmem:[%s1 + $0x60] sm:$0xff]
        %v436 = vld [vmem:[%s1 + $0x68] sm:$0xff]
        %v437 = vld [vmem:[%s1 + $0x70] sm:$0xff]
        %v438 = vld [vmem:[%s1 + $0x78] sm:$0xff]
        %v439 = vld [vmem:[%s1 + $0x80] sm:$0xff]
        %v440 = vld [vmem:[%s1 + $0x88] sm:$0xff]
        %v441 = vld [vmem:[%s1 + $0x90] sm:$0xff]
        %v442 = vld [vmem:[%s1 + $0x98] sm:$0xff]
        %v443 = vld [vmem:[%s1 + $0xa0] sm:$0xff]
        %v444 = vld [vmem:[%s1 + $0xa8] sm:$0xff]
        %v445 = vld [vmem:[%s1 + $0xb0] sm:$0xff]
        %v446 = vld [vmem:[%s1 + $0xb8] sm:$0xff]
        %v447 = vld [vmem:[%s1 + $0xc0] sm:$0xff]
        %v448 = vld [vmem:[%s1 + $0xc8] sm:$0xff]
        %v449 = vld [vmem:[%s1 + $0xd0] sm:$0xff]
        %v450 = vld [vmem:[%s1 + $0xd8] sm:$0xff]
        %v451 = vld [vmem:[%s1 + $0xe0] sm:$0xff]
        %v452 = vld [vmem:[%s1 + $0xe8] sm:$0xff]
        %v453 = vld [vmem:[%s1 + $0xf0] sm:$0xff]
        %v454 = vld [vmem:[%s1 + $0xf8] sm:$0xff]
        %v455 = vld [vmem:[%s1 + $0x100] sm:$0xff]
        %v456 = vld [vmem:[%s1 + $0x108] sm:$0xff]
        %v457 = vld [vmem:[%s1 + $0x110] sm:$0xff]
        %v458 = vld [vmem:[%s1 + $0x118] sm:$0xff]
        %v459 = vld [vmem:[%s1 + $0x120] sm:$0xff]
        %v460 = vld [vmem:[%s1 + $0x128] sm:$0xff]
        %v461 = vld [vmem:[%s1 + $0x130] sm:$0xff]
        %v462 = vld [vmem:[%s1 + $0x138] sm:$0xff]
        %v463 = vld [vmem:[%s1 + $0x140] sm:$0xff]
        %v464 = vld [vmem:[%s1 + $0x148] sm:$0xff]
        %v465 = vld [vmem:[%s1 + $0x150] sm:$0xff]
        %v466 = vld [vmem:[%s1 + $0x158] sm:$0xff]
        %v467 = vld [vmem:[%s1 + $0x160] sm:$0xff]
        %v468 = vld [vmem:[%s1 + $0x168] sm:$0xff]
        %v469 = vld [vmem:[%s1 + $0x170] sm:$0xff]
        %v470 = vld [vmem:[%s1 + $0x178] sm:$0xff]
        %v471 = vld [vmem:[%s1 + $0x180] sm:$0xff]
        %v472 = vld [vmem:[%s1 + $0x188] sm:$0xff]
        %v473 = vld [vmem:[%s1 + $0x190] sm:$0xff]
        %v474 = vld [vmem:[%s1 + $0x198] sm:$0xff]
        %v475 = vld [vmem:[%s1 + $0x1a0] sm:$0xff]
        %v476 = vld [vmem:[%s1 + $0x1a8] sm:$0xff]
        %v477 = vld [vmem:[%s1 + $0x1b0] sm:$0xff]
        %v478 = vld [vmem:[%s1 + $0x1b8] sm:$0xff]
        %v479 = vld [vmem:[%s1 + $0x1c0] sm:$0xff]
        %v480 = vld [vmem:[%s1 + $0x1c8] sm:$0xff]
        %v481 = vld [vmem:[%s1 + $0x1d0] sm:$0xff]
        %v482 = vld [vmem:[%s1 + $0x1d8] sm:$0xff]
        %v483 = vld [vmem:[%s1 + $0x1e0] sm:$0xff]
        %v484 = vld [vmem:[%s1 + $0x1e8] sm:$0xff]
        %v485 = vld [vmem:[%s1 + $0x1f0] sm:$0xff]
        %v486 = vld [vmem:[%s1 + $0x1f8] sm:$0xff]
        %v487 = vld [vmem:[%s1 + $0x200] sm:$0xff]
        %v488 = vld [vmem:[%s1 + $0x208] sm:$0xff]
        %v489 = vld [vmem:[%s1 + $0x210] sm:$0xff]
        %v490 = vld [vmem:[%s1 + $0x218] sm:$0xff]
        %v491 = vld [vmem:[%s1 + $0x220] sm:$0xff]
        %v492 = vld [vmem:[%s1 + $0x228] sm:$0xff]
        %v493 = vld [vmem:[%s1 + $0x230] sm:$0xff]
        %v494 = vld [vmem:[%s1 + $0x238] sm:$0xff]
        %v495 = vld [vmem:[%s1 + $0x240] sm:$0xff]
        %v496 = vld [vmem:[%s1 + $0x248] sm:$0xff]
        %v497 = vld [vmem:[%s1 + $0x250] sm:$0xff]
        %v498 = vld [vmem:[%s1 + $0x258] sm:$0xff]
        %v499 = vld [vmem:[%s1 + $0x260] sm:$0xff]
        %v500 = vld [vmem:[%s1 + $0x268] sm:$0xff]
        %v501 = vld [vmem:[%s1 + $0x270] sm:$0xff]
        %v502 = vld [vmem:[%s1 + $0x278] sm:$0xff]
        %v503 = vld [vmem:[%s1 + $0x280] sm:$0xff]
        %v504 = vld [vmem:[%s1 + $0x288] sm:$0xff]
        %v505 = vld [vmem:[%s1 + $0x290] sm:$0xff]
        %v506 = vld [vmem:[%s1 + $0x298] sm:$0xff]
        %v507 = vld [vmem:[%s1 + $0x2a0] sm:$0xff]
        %v508 = vld [vmem:[%s1 + $0x2a8] sm:$0xff]
        %v509 = vld [vmem:[%s1 + $0x2b0] sm:$0xff]
        %v510 = vld [vmem:[%s1 + $0x2b8] sm:$0xff]
        %v511 = vld [vmem:[%s1 + $0x2c0] sm:$0xff]
        %v512 = vld [vmem:[%s1 + $0x2c8] sm:$0xff]
        %v513 = vld [vmem:[%s1 + $0x2d0] sm:$0xff]
        %v514 = vld [vmem:[%s1 + $0x2d8] sm:$0xff]
        %v515 = vld [vmem:[%s1 + $0x2e0] sm:$0xff]
        %v516 = vld [vmem:[%s1 + $0x2e8] sm:$0xff]
        %v517 = vld [vmem:[%s1 + $0x2f0] sm:$0xff]
        %v518 = vld [vmem:[%s1 + $0x2f8] sm:$0xff]
        %v519 = vld [vmem:[%s1 + $0x300] sm:$0xff]
        %v520 = vld [vmem:[%s1 + $0x308] sm:$0xff]
        %v521 = vld [vmem:[%s1 + $0x310] sm:$0xff]
        %v522 = vld [vmem:[%s1 + $0x318] sm:$0xff]
        %v523 = vld [vmem:[%s1 + $0x320] sm:$0xff]
        %v524 = vld [vmem:[%s1 + $0x328] sm:$0xff]
        %v525 = vld [vmem:[%s1 + $0x330] sm:$0xff]
        %v526 = vld [vmem:[%s1 + $0x338] sm:$0xff]
        %v527 = vld [vmem:[%s1 + $0x340] sm:$0xff]
        %v528 = vld [vmem:[%s1 + $0x348] sm:$0xff]
        %v529 = vld [vmem:[%s1 + $0x350] sm:$0xff]
        %v530 = vld [vmem:[%s1 + $0x358] sm:$0xff]
        %v531 = vld [vmem:[%s1 + $0x360] sm:$0xff]
        %v532 = vld [vmem:[%s1 + $0x368] sm:$0xff]
        %v533 = vld [vmem:[%s1 + $0x370] sm:$0xff]
        %v534 = vld [vmem:[%s1 + $0x378] sm:$0xff]
        %v535 = vld [vmem:[%s1 + $0x380] sm:$0xff]
        %v536 = vld [vmem:[%s1 + $0x388] sm:$0xff]
        %v537 = vld [vmem:[%s1 + $0x390] sm:$0xff]
        %v538 = vld [vmem:[%s1 + $0x398] sm:$0xff]
        %v539 = vld [vmem:[%s1 + $0x3a0] sm:$0xff]
        %v540 = vld [vmem:[%s1 + $0x3a8] sm:$0xff]
        %v541 = vld [vmem:[%s1 + $0x3b0] sm:$0xff]
        %v542 = vld [vmem:[%s1 + $0x3b8] sm:$0xff]
        %v543 = vld [vmem:[%s1 + $0x3c0] sm:$0xff]
        %v544 = vld [vmem:[%s1 + $0x3c8] sm:$0xff]
        %v545 = vld [vmem:[%s1 + $0x3d0] sm:$0xff]
        %v546 = vld [vmem:[%s1 + $0x3d8] sm:$0xff]
        %v547 = vld [vmem:[%s1 + $0x3e0] sm:$0xff]
        %v548 = vld [vmem:[%s1 + $0x3e8] sm:$0xff]
        %v549 = vld [vmem:[%s1 + $0x3f0] sm:$0xff]
        %v550 = vld [vmem:[%s1 + $0x3f8] sm:$0xff]
        %v551 = vld [vmem:[%s1 + $0x400] sm:$0xff]
        %v552 = vld [vmem:[%s1 + $0x408] sm:$0xff]
        %v553 = vld [vmem:[%s1 + $0x410] sm:$0xff]
        %v554 = vld [vmem:[%s1 + $0x418] sm:$0xff]
        %v555 = vld [vmem:[%s1 + $0x420] sm:$0xff]
        %v556 = vld [vmem:[%s1 + $0x428] sm:$0xff]
        %v557 = vld [vmem:[%s1 + $0x430] sm:$0xff]
        %v558 = vld [vmem:[%s1 + $0x438] sm:$0xff]
        %v559 = vld [vmem:[%s1 + $0x440] sm:$0xff]
        %v560 = vld [vmem:[%s1 + $0x448] sm:$0xff]
        %v561 = vld [vmem:[%s1 + $0x450] sm:$0xff]
        %v562 = vld [vmem:[%s1 + $0x458] sm:$0xff]
        %v563 = vld [vmem:[%s1 + $0x460] sm:$0xff]
        %v564 = vld [vmem:[%s1 + $0x468] sm:$0xff]
        %v565 = vld [vmem:[%s1 + $0x470] sm:$0xff]
        %v566 = vld [vmem:[%s1 + $0x478] sm:$0xff]
        %v567 = vld [vmem:[%s2] sm:$0x1]
        %v569 = vlaneseq
        %v570 = vshrl.u32 %v569, 7
        %v571 = vsub.s32 0, %v570
        %v572 = vrot.slane %v567, %v571
        %574 = vmatprep.subr.mxu0 0.0
        %575 = vmatpush1.msra.mxu0 %v423
        %576 = vmatprep.subr.mxu0 0.0
        %577 = vmatpush1.msra.mxu0 %v424
        %578 = vmatprep.subr.mxu0 0.0
        %579 = vmatpush1.msra.mxu0 %v425
        %580 = vmatprep.subr.mxu0 0.0
        %581 = vmatpush1.msra.mxu0 %v426
        %582 = vmatprep.subr.mxu0 0.0
        %583 = vmatpush1.msra.mxu0 %v427
        %584 = vmatprep.subr.mxu0 0.0
        %585 = vmatpush1.msra.mxu0 %v428
        %586 = vmatprep.subr.mxu0 0.0
        %587 = vmatpush1.msra.mxu0 %v429
        %588 = vmatprep.subr.mxu0 0.0
        %589 = vmatpush1.msra.mxu0 %v430
        %590 = vmatprep.subr.mxu0 0.0
        %591 = vmatpush1.msra.mxu0 %v431
        %592 = vmatprep.subr.mxu0 0.0
        %593 = vmatpush1.msra.mxu0 %v432
        %594 = vmatprep.subr.mxu0 0.0
        %595 = vmatpush1.msra.mxu0 %v433
        %596 = vmatprep.subr.mxu0 0.0
        %597 = vmatpush1.msra.mxu0 %v434
        %598 = vmatprep.subr.mxu0 0.0
        %599 = vmatpush1.msra.mxu0 %v435
        %600 = vmatprep.subr.mxu0 0.0
        %601 = vmatpush1.msra.mxu0 %v436
        %602 = vmatprep.subr.mxu0 0.0
        %603 = vmatpush1.msra.mxu0 %v437
        %604 = vmatprep.subr.mxu0 0.0
        %605 = vmatpush1.msra.mxu0 %v438
        %606 = vmatprep.subr.mxu0 0.0
        %607 = vmatpush1.msra.mxu0 %v439
        %608 = vmatprep.subr.mxu0 0.0
        %609 = vmatpush1.msra.mxu0 %v440
        %610 = vmatprep.subr.mxu0 0.0
        %611 = vmatpush1.msra.mxu0 %v441
        %612 = vmatprep.subr.mxu0 0.0
        %613 = vmatpush1.msra.mxu0 %v442
        %614 = vmatprep.subr.mxu0 0.0
        %615 = vmatpush1.msra.mxu0 %v443
        %616 = vmatprep.subr.mxu0 0.0
        %617 = vmatpush1.msra.mxu0 %v444
        %618 = vmatprep.subr.mxu0 0.0
        %619 = vmatpush1.msra.mxu0 %v445
        %620 = vmatprep.subr.mxu0 0.0
        %621 = vmatpush1.msra.mxu0 %v446
        %622 = vmatprep.subr.mxu0 0.0
        %623 = vmatpush1.msra.mxu0 %v447
        %624 = vmatprep.subr.mxu0 0.0
        %625 = vmatpush1.msra.mxu0 %v448
        %626 = vmatprep.subr.mxu0 0.0
        %627 = vmatpush1.msra.mxu0 %v449
        %628 = vmatprep.subr.mxu0 0.0
        %629 = vmatpush1.msra.mxu0 %v450
        %630 = vmatprep.subr.mxu0 0.0
        %631 = vmatpush1.msra.mxu0 %v451
        %632 = vmatprep.subr.mxu0 0.0
        %633 = vmatpush1.msra.mxu0 %v452
        %634 = vmatprep.subr.mxu0 0.0
        %635 = vmatpush1.msra.mxu0 %v453
        %636 = vmatprep.subr.mxu0 0.0
        %637 = vmatpush1.msra.mxu0 %v454
        %638 = vmatprep.mubr.f32.mxu0 %v352
        %639 = vmatmul.mubr.f32.gmra.mrb[0].mxu0 %v351
        %v640 = vpop.f32.mrb[0].mxu0
        %v641 = vadd.f32 %v572, %v640
        %v642 = vpop.f32.mrb[0].mxu0
        %643 = vmatprep.mubr.f32.mxu0 %v361
        %644 = vmatmul.mubr.f32.gmra.mrb[0].mxu0 %v360
        %v645 = vpop.f32.mrb[0].mxu0
        %v646 = vadd.f32 %v572, %v645
        %v647 = vpop.f32.mrb[0].mxu0
        %648 = vmatprep.mubr.f32.mxu0 %v370
        %649 = vmatmul.mubr.f32.gmra.mrb[0].mxu0 %v369
        %v650 = vpop.f32.mrb[0].mxu0
        %v651 = vadd.f32 %v572, %v650
        %v652 = vpop.f32.mrb[0].mxu0
        %653 = vmatprep.mubr.f32.mxu0 %v379
        %654 = vmatmul.mubr.f32.gmra.mrb[0].mxu0 %v378
        %v655 = vpop.f32.mrb[0].mxu0
        %v656 = vadd.f32 %v572, %v655
        %v657 = vpop.f32.mrb[0].mxu0
        %658 = vmatprep.mubr.f32.mxu0 %v388
        %659 = vmatmul.mubr.f32.gmra.mrb[0].mxu0 %v387
        %v660 = vpop.f32.mrb[0].mxu0
        %v661 = vadd.f32 %v572, %v660
        %v662 = vpop.f32.mrb[0].mxu0
        %663 = vmatprep.mubr.f32.mxu0 %v397
        %664 = vmatmul.mubr.f32.gmra.mrb[0].mxu0 %v396
        %v665 = vpop.f32.mrb[0].mxu0
        %v666 = vadd.f32 %v572, %v665
        %v667 = vpop.f32.mrb[0].mxu0
        %668 = vmatprep.mubr.f32.mxu0 %v406
        %669 = vmatmul.mubr.f32.gmra.mrb[0].mxu0 %v405
        %v670 = vpop.f32.mrb[0].mxu0
        %v671 = vadd.f32 %v572, %v670
        %v672 = vpop.f32.mrb[0].mxu0
        %673 = vmatprep.mubr.f32.mxu0 %v415
        %674 = vmatmul.mubr.f32.gmra.mrb[0].mxu0 %v414
        %v675 = vpop.f32.mrb[0].mxu0
        %v676 = vadd.f32 %v572, %v675
        %v677 = vpop.f32.mrb[0].mxu0
        %678 = vdwg.mxu0
        %679 = vmatprep.subr.mxu0 0.0
        %680 = vmatpush1.msra.mxu0 %v455
        %681 = vmatprep.subr.mxu0 0.0
        %682 = vmatpush1.msra.mxu0 %v456
        %683 = vmatprep.subr.mxu0 0.0
        %684 = vmatpush1.msra.mxu0 %v457
        %685 = vmatprep.subr.mxu0 0.0
        %686 = vmatpush1.msra.mxu0 %v458
        %687 = vmatprep.subr.mxu0 0.0
        %688 = vmatpush1.msra.mxu0 %v459
        %689 = vmatprep.subr.mxu0 0.0
        %690 = vmatpush1.msra.mxu0 %v460
        %691 = vmatprep.subr.mxu0 0.0
        %692 = vmatpush1.msra.mxu0 %v461
        %693 = vmatprep.subr.mxu0 0.0
        %694 = vmatpush1.msra.mxu0 %v462
        %695 = vmatprep.subr.mxu0 0.0
        %696 = vmatpush1.msra.mxu0 %v463
        %697 = vmatprep.subr.mxu0 0.0
        %698 = vmatpush1.msra.mxu0 %v464
        %699 = vmatprep.subr.mxu0 0.0
        %700 = vmatpush1.msra.mxu0 %v465
        %701 = vmatprep.subr.mxu0 0.0
        %702 = vmatpush1.msra.mxu0 %v466
        %703 = vmatprep.subr.mxu0 0.0
        %704 = vmatpush1.msra.mxu0 %v467
        %705 = vmatprep.subr.mxu0 0.0
        %706 = vmatpush1.msra.mxu0 %v468
        %707 = vmatprep.subr.mxu0 0.0
        %708 = vmatpush1.msra.mxu0 %v469
        %709 = vmatprep.subr.mxu0 0.0
        %710 = vmatpush1.msra.mxu0 %v470
        %711 = vmatprep.subr.mxu0 0.0
        %712 = vmatpush1.msra.mxu0 %v471
        %713 = vmatprep.subr.mxu0 0.0
        %714 = vmatpush1.msra.mxu0 %v472
        %715 = vmatprep.subr.mxu0 0.0
        %716 = vmatpush1.msra.mxu0 %v473
        %717 = vmatprep.subr.mxu0 0.0
        %718 = vmatpush1.msra.mxu0 %v474
        %719 = vmatprep.subr.mxu0 0.0
        %720 = vmatpush1.msra.mxu0 %v475
        %721 = vmatprep.subr.mxu0 0.0
        %722 = vmatpush1.msra.mxu0 %v476
        %723 = vmatprep.subr.mxu0 0.0
        %724 = vmatpush1.msra.mxu0 %v477
        %725 = vmatprep.subr.mxu0 0.0
        %726 = vmatpush1.msra.mxu0 %v478
        %727 = vmatprep.subr.mxu0 0.0
        %728 = vmatpush1.msra.mxu0 %v479
        %729 = vmatprep.subr.mxu0 0.0
        %730 = vmatpush1.msra.mxu0 %v480
        %731 = vmatprep.subr.mxu0 0.0
        %732 = vmatpush1.msra.mxu0 %v481
        %733 = vmatprep.subr.mxu0 0.0
        %734 = vmatpush1.msra.mxu0 %v482
        %735 = vmatprep.subr.mxu0 0.0
        %736 = vmatpush1.msra.mxu0 %v483
        %737 = vmatprep.subr.mxu0 0.0
        %738 = vmatpush1.msra.mxu0 %v484
        %739 = vmatprep.subr.mxu0 0.0
        %740 = vmatpush1.msra.mxu0 %v485
        %741 = vmatprep.subr.mxu0 0.0
        %742 = vmatpush1.msra.mxu0 %v486
        %743 = vmatprep.mubr.f32.mxu0 %v354
        %744 = vmatmul.mubr.f32.gmra.mrb[0].mxu0 %v353
        %v745 = vpop.f32.mrb[0].mxu0
        %v746 = vadd.f32 %v641, %v745
        %v747 = vpop.f32.mrb[0].mxu0
        %748 = vmatprep.mubr.f32.mxu0 %v363
        %749 = vmatmul.mubr.f32.gmra.mrb[0].mxu0 %v362
        %v750 = vpop.f32.mrb[0].mxu0
        %v751 = vadd.f32 %v646, %v750
        %v752 = vpop.f32.mrb[0].mxu0
        %753 = vmatprep.mubr.f32.mxu0 %v372
        %754 = vmatmul.mubr.f32.gmra.mrb[0].mxu0 %v371
        %v755 = vpop.f32.mrb[0].mxu0
        %v756 = vadd.f32 %v651, %v755
        %v757 = vpop.f32.mrb[0].mxu0
        %758 = vmatprep.mubr.f32.mxu0 %v381
        %759 = vmatmul.mubr.f32.gmra.mrb[0].mxu0 %v380
        %v760 = vpop.f32.mrb[0].mxu0
        %v761 = vadd.f32 %v656, %v760
        %v762 = vpop.f32.mrb[0].mxu0
        %763 = vmatprep.mubr.f32.mxu0 %v390
        %764 = vmatmul.mubr.f32.gmra.mrb[0].mxu0 %v389
        %v765 = vpop.f32.mrb[0].mxu0
        %v766 = vadd.f32 %v661, %v765
        %v767 = vpop.f32.mrb[0].mxu0
        %768 = vmatprep.mubr.f32.mxu0 %v399
        %769 = vmatmul.mubr.f32.gmra.mrb[0].mxu0 %v398
        %v770 = vpop.f32.mrb[0].mxu0
        %v771 = vadd.f32 %v666, %v770
        %v772 = vpop.f32.mrb[0].mxu0
        %773 = vmatprep.mubr.f32.mxu0 %v408
        %774 = vmatmul.mubr.f32.gmra.mrb[0].mxu0 %v407
        %v775 = vpop.f32.mrb[0].mxu0
        %v776 = vadd.f32 %v671, %v775
        %v777 = vpop.f32.mrb[0].mxu0
        %778 = vmatprep.mubr.f32.mxu0 %v417
        %779 = vmatmul.mubr.f32.gmra.mrb[0].mxu0 %v416
        %v780 = vpop.f32.mrb[0].mxu0
        %v781 = vadd.f32 %v676, %v780
        %v782 = vpop.f32.mrb[0].mxu0
        %783 = vdwg.mxu0
        %784 = vmatprep.subr.mxu0 0.0
        %785 = vmatpush1.msra.mxu0 %v487
        %786 = vmatprep.subr.mxu0 0.0
        %787 = vmatpush1.msra.mxu0 %v488
        %788 = vmatprep.subr.mxu0 0.0
        %789 = vmatpush1.msra.mxu0 %v489
        %790 = vmatprep.subr.mxu0 0.0
        %791 = vmatpush1.msra.mxu0 %v490
        %792 = vmatprep.subr.mxu0 0.0
        %793 = vmatpush1.msra.mxu0 %v491
        %794 = vmatprep.subr.mxu0 0.0
        %795 = vmatpush1.msra.mxu0 %v492
        %796 = vmatprep.subr.mxu0 0.0
        %797 = vmatpush1.msra.mxu0 %v493
        %798 = vmatprep.subr.mxu0 0.0
        %799 = vmatpush1.msra.mxu0 %v494
        %800 = vmatprep.subr.mxu0 0.0
        %801 = vmatpush1.msra.mxu0 %v495
        %802 = vmatprep.subr.mxu0 0.0
        %803 = vmatpush1.msra.mxu0 %v496
        %804 = vmatprep.subr.mxu0 0.0
        %805 = vmatpush1.msra.mxu0 %v497
        %806 = vmatprep.subr.mxu0 0.0
        %807 = vmatpush1.msra.mxu0 %v498
        %808 = vmatprep.subr.mxu0 0.0
        %809 = vmatpush1.msra.mxu0 %v499
        %810 = vmatprep.subr.mxu0 0.0
        %811 = vmatpush1.msra.mxu0 %v500
        %812 = vmatprep.subr.mxu0 0.0
        %813 = vmatpush1.msra.mxu0 %v501
        %814 = vmatprep.subr.mxu0 0.0
        %815 = vmatpush1.msra.mxu0 %v502
        %816 = vmatprep.subr.mxu0 0.0
        %817 = vmatpush1.msra.mxu0 %v503
        %818 = vmatprep.subr.mxu0 0.0
        %819 = vmatpush1.msra.mxu0 %v504
        %820 = vmatprep.subr.mxu0 0.0
        %821 = vmatpush1.msra.mxu0 %v505
        %822 = vmatprep.subr.mxu0 0.0
        %823 = vmatpush1.msra.mxu0 %v506
        %824 = vmatprep.subr.mxu0 0.0
        %825 = vmatpush1.msra.mxu0 %v507
        %826 = vmatprep.subr.mxu0 0.0
        %827 = vmatpush1.msra.mxu0 %v508
        %828 = vmatprep.subr.mxu0 0.0
        %829 = vmatpush1.msra.mxu0 %v509
        %830 = vmatprep.subr.mxu0 0.0
        %831 = vmatpush1.msra.mxu0 %v510
        %832 = vmatprep.subr.mxu0 0.0
        %833 = vmatpush1.msra.mxu0 %v511
        %834 = vmatprep.subr.mxu0 0.0
        %835 = vmatpush1.msra.mxu0 %v512
        %836 = vmatprep.subr.mxu0 0.0
        %837 = vmatpush1.msra.mxu0 %v513
        %838 = vmatprep.subr.mxu0 0.0
        %839 = vmatpush1.msra.mxu0 %v514
        %840 = vmatprep.subr.mxu0 0.0
        %841 = vmatpush1.msra.mxu0 %v515
        %842 = vmatprep.subr.mxu0 0.0
        %843 = vmatpush1.msra.mxu0 %v516
        %844 = vmatprep.subr.mxu0 0.0
        %845 = vmatpush1.msra.mxu0 %v517
        %846 = vmatprep.subr.mxu0 0.0
        %847 = vmatpush1.msra.mxu0 %v518
        %848 = vmatprep.mubr.f32.mxu0 %v356
        %849 = vmatmul.mubr.f32.gmra.mrb[0].mxu0 %v355
        %v850 = vpop.f32.mrb[0].mxu0
        %v851 = vadd.f32 %v746, %v850
        %v852 = vpop.f32.mrb[0].mxu0
        %853 = vmatprep.mubr.f32.mxu0 %v365
        %854 = vmatmul.mubr.f32.gmra.mrb[0].mxu0 %v364
        %v855 = vpop.f32.mrb[0].mxu0
        %v856 = vadd.f32 %v751, %v855
        %v857 = vpop.f32.mrb[0].mxu0
        %858 = vmatprep.mubr.f32.mxu0 %v374
        %859 = vmatmul.mubr.f32.gmra.mrb[0].mxu0 %v373
        %v860 = vpop.f32.mrb[0].mxu0
        %v861 = vadd.f32 %v756, %v860
        %v862 = vpop.f32.mrb[0].mxu0
        %863 = vmatprep.mubr.f32.mxu0 %v383
        %864 = vmatmul.mubr.f32.gmra.mrb[0].mxu0 %v382
        %v865 = vpop.f32.mrb[0].mxu0
        %v866 = vadd.f32 %v761, %v865
        %v867 = vpop.f32.mrb[0].mxu0
        %868 = vmatprep.mubr.f32.mxu0 %v392
        %869 = vmatmul.mubr.f32.gmra.mrb[0].mxu0 %v391
        %v870 = vpop.f32.mrb[0].mxu0
        %v871 = vadd.f32 %v766, %v870
        %v872 = vpop.f32.mrb[0].mxu0
        %873 = vmatprep.mubr.f32.mxu0 %v401
        %874 = vmatmul.mubr.f32.gmra.mrb[0].mxu0 %v400
        %v875 = vpop.f32.mrb[0].mxu0
        %v876 = vadd.f32 %v771, %v875
        %v877 = vpop.f32.mrb[0].mxu0
        %878 = vmatprep.mubr.f32.mxu0 %v410
        %879 = vmatmul.mubr.f32.gmra.mrb[0].mxu0 %v409
        %v880 = vpop.f32.mrb[0].mxu0
        %v881 = vadd.f32 %v776, %v880
        %v882 = vpop.f32.mrb[0].mxu0
        %883 = vmatprep.mubr.f32.mxu0 %v419
        %884 = vmatmul.mubr.f32.gmra.mrb[0].mxu0 %v418
        %v885 = vpop.f32.mrb[0].mxu0
        %v886 = vadd.f32 %v781, %v885
        %v887 = vpop.f32.mrb[0].mxu0
        %888 = vdwg.mxu0
        %889 = vmatprep.subr.mxu0 0.0
        %890 = vmatpush1.msra.mxu0 %v519
        %891 = vmatprep.subr.mxu0 0.0
        %892 = vmatpush1.msra.mxu0 %v520
        %893 = vmatprep.subr.mxu0 0.0
        %894 = vmatpush1.msra.mxu0 %v521
        %895 = vmatprep.subr.mxu0 0.0
        %896 = vmatpush1.msra.mxu0 %v522
        %897 = vmatprep.subr.mxu0 0.0
        %898 = vmatpush1.msra.mxu0 %v523
        %899 = vmatprep.subr.mxu0 0.0
        %900 = vmatpush1.msra.mxu0 %v524
        %901 = vmatprep.subr.mxu0 0.0
        %902 = vmatpush1.msra.mxu0 %v525
        %903 = vmatprep.subr.mxu0 0.0
        %904 = vmatpush1.msra.mxu0 %v526
        %905 = vmatprep.subr.mxu0 0.0
        %906 = vmatpush1.msra.mxu0 %v527
        %907 = vmatprep.subr.mxu0 0.0
        %908 = vmatpush1.msra.mxu0 %v528
        %909 = vmatprep.subr.mxu0 0.0
        %910 = vmatpush1.msra.mxu0 %v529
        %911 = vmatprep.subr.mxu0 0.0
        %912 = vmatpush1.msra.mxu0 %v530
        %913 = vmatprep.subr.mxu0 0.0
        %914 = vmatpush1.msra.mxu0 %v531
        %915 = vmatprep.subr.mxu0 0.0
        %916 = vmatpush1.msra.mxu0 %v532
        %917 = vmatprep.subr.mxu0 0.0
        %918 = vmatpush1.msra.mxu0 %v533
        %919 = vmatprep.subr.mxu0 0.0
        %920 = vmatpush1.msra.mxu0 %v534
        %921 = vmatprep.subr.mxu0 0.0
        %922 = vmatpush1.msra.mxu0 %v535
        %923 = vmatprep.subr.mxu0 0.0
        %924 = vmatpush1.msra.mxu0 %v536
        %925 = vmatprep.subr.mxu0 0.0
        %926 = vmatpush1.msra.mxu0 %v537
        %927 = vmatprep.subr.mxu0 0.0
        %928 = vmatpush1.msra.mxu0 %v538
        %929 = vmatprep.subr.mxu0 0.0
        %930 = vmatpush1.msra.mxu0 %v539
        %931 = vmatprep.subr.mxu0 0.0
        %932 = vmatpush1.msra.mxu0 %v540
        %933 = vmatprep.subr.mxu0 0.0
        %934 = vmatpush1.msra.mxu0 %v541
        %935 = vmatprep.subr.mxu0 0.0
        %936 = vmatpush1.msra.mxu0 %v542
        %937 = vmatprep.subr.mxu0 0.0
        %938 = vmatpush1.msra.mxu0 %v543
        %939 = vmatprep.subr.mxu0 0.0
        %940 = vmatpush1.msra.mxu0 %v544
        %941 = vmatprep.subr.mxu0 0.0
        %942 = vmatpush1.msra.mxu0 %v545
        %943 = vmatprep.subr.mxu0 0.0
        %944 = vmatpush1.msra.mxu0 %v546
        %945 = vmatprep.subr.mxu0 0.0
        %946 = vmatpush1.msra.mxu0 %v547
        %947 = vmatprep.subr.mxu0 0.0
        %948 = vmatpush1.msra.mxu0 %v548
        %949 = vmatprep.subr.mxu0 0.0
        %950 = vmatpush1.msra.mxu0 %v549
        %951 = vmatprep.subr.mxu0 0.0
        %952 = vmatpush1.msra.mxu0 %v550
        %953 = vmatprep.mubr.f32.mxu0 %v358
        %954 = vmatmul.mubr.f32.gmra.mrb[0].mxu0 %v357
        %v955 = vpop.f32.mrb[0].mxu0
        %v956 = vadd.f32 %v851, %v955
        %v957 = vpop.f32.mrb[0].mxu0
        %958 = vmatprep.mubr.f32.mxu0 %v367
        %959 = vmatmul.mubr.f32.gmra.mrb[0].mxu0 %v366
        %v960 = vpop.f32.mrb[0].mxu0
        %v961 = vadd.f32 %v856, %v960
        %v962 = vpop.f32.mrb[0].mxu0
        %963 = vmatprep.mubr.f32.mxu0 %v376
        %964 = vmatmul.mubr.f32.gmra.mrb[0].mxu0 %v375
        %v965 = vpop.f32.mrb[0].mxu0
        %v966 = vadd.f32 %v861, %v965
        %v967 = vpop.f32.mrb[0].mxu0
        %968 = vmatprep.mubr.f32.mxu0 %v385
        %969 = vmatmul.mubr.f32.gmra.mrb[0].mxu0 %v384
        %v970 = vpop.f32.mrb[0].mxu0
        %v971 = vadd.f32 %v866, %v970
        %v972 = vpop.f32.mrb[0].mxu0
        %973 = vmatprep.mubr.f32.mxu0 %v394
        %974 = vmatmul.mubr.f32.gmra.mrb[0].mxu0 %v393
        %v975 = vpop.f32.mrb[0].mxu0
        %v976 = vadd.f32 %v871, %v975
        %v977 = vpop.f32.mrb[0].mxu0
        %978 = vmatprep.mubr.f32.mxu0 %v403
        %979 = vmatmul.mubr.f32.gmra.mrb[0].mxu0 %v402
        %v980 = vpop.f32.mrb[0].mxu0
        %v981 = vadd.f32 %v876, %v980
        %v982 = vpop.f32.mrb[0].mxu0
        %983 = vmatprep.mubr.f32.mxu0 %v412
        %984 = vmatmul.mubr.f32.gmra.mrb[0].mxu0 %v411
        %v985 = vpop.f32.mrb[0].mxu0
        %v986 = vadd.f32 %v881, %v985
        %v987 = vpop.f32.mrb[0].mxu0
        %988 = vmatprep.mubr.f32.mxu0 %v421
        %989 = vmatmul.mubr.f32.gmra.mrb[0].mxu0 %v420
        %v990 = vpop.f32.mrb[0].mxu0
        %v991 = vadd.f32 %v886, %v990
        %v992 = vpop.f32.mrb[0].mxu0
        %993 = vdwg.mxu0
        %994 = vmatprep.subr.mxu0 0.0
        %995 = vmatpush1.msra.mxu0 %v551
        %996 = vmatprep.subr.mxu0 0.0
        %997 = vmatpush1.msra.mxu0 %v552
        %998 = vmatprep.subr.mxu0 0.0
        %999 = vmatpush1.msra.mxu0 %v553
        %1000 = vmatprep.subr.mxu0 0.0
        %1001 = vmatpush1.msra.mxu0 %v554
        %1002 = vmatprep.subr.mxu0 0.0
        %1003 = vmatpush1.msra.mxu0 %v555
        %1004 = vmatprep.subr.mxu0 0.0
        %1005 = vmatpush1.msra.mxu0 %v556
        %1006 = vmatprep.subr.mxu0 0.0
        %1007 = vmatpush1.msra.mxu0 %v557
        %1008 = vmatprep.subr.mxu0 0.0
        %1009 = vmatpush1.msra.mxu0 %v558
        %1010 = vmatprep.subr.mxu0 0.0
        %1011 = vmatpush1.msra.mxu0 %v559
        %1012 = vmatprep.subr.mxu0 0.0
        %1013 = vmatpush1.msra.mxu0 %v560
        %1014 = vmatprep.subr.mxu0 0.0
        %1015 = vmatpush1.msra.mxu0 %v561
        %1016 = vmatprep.subr.mxu0 0.0
        %1017 = vmatpush1.msra.mxu0 %v562
        %1018 = vmatprep.subr.mxu0 0.0
        %1019 = vmatpush1.msra.mxu0 %v563
        %1020 = vmatprep.subr.mxu0 0.0
        %1021 = vmatpush1.msra.mxu0 %v564
        %1022 = vmatprep.subr.mxu0 0.0
        %1023 = vmatpush1.msra.mxu0 %v565
        %1024 = vmatprep.subr.mxu0 0.0
        %1025 = vmatpush1.msra.mxu0 %v566
        %1026 = vmatprep.subr.mxu0 0.0
        %1027 = vmatpush1.msra.mxu0 0.0
        %1028 = vmatprep.subr.mxu0 0.0
        %1029 = vmatpush1.msra.mxu0 0.0
        %1030 = vmatprep.subr.mxu0 0.0
        %1031 = vmatpush1.msra.mxu0 0.0
        %1032 = vmatprep.subr.mxu0 0.0
        %1033 = vmatpush1.msra.mxu0 0.0
        %1034 = vmatprep.subr.mxu0 0.0
        %1035 = vmatpush1.msra.mxu0 0.0
        %1036 = vmatprep.subr.mxu0 0.0
        %1037 = vmatpush1.msra.mxu0 0.0
        %1038 = vmatprep.subr.mxu0 0.0
        %1039 = vmatpush1.msra.mxu0 0.0
        %1040 = vmatprep.subr.mxu0 0.0
        %1041 = vmatpush1.msra.mxu0 0.0
        %1042 = vmatprep.subr.mxu0 0.0
        %1043 = vmatpush1.msra.mxu0 0.0
        %1044 = vmatprep.subr.mxu0 0.0
        %1045 = vmatpush1.msra.mxu0 0.0
        %1046 = vmatprep.subr.mxu0 0.0
        %1047 = vmatpush1.msra.mxu0 0.0
        %1048 = vmatprep.subr.mxu0 0.0
        %1049 = vmatpush1.msra.mxu0 0.0
        %1050 = vmatprep.subr.mxu0 0.0
        %1051 = vmatpush1.msra.mxu0 0.0
        %1052 = vmatprep.subr.mxu0 0.0
        %1053 = vmatpush1.msra.mxu0 0.0
        %1054 = vmatprep.subr.mxu0 0.0
        %1055 = vmatpush1.msra.mxu0 0.0
        %1056 = vmatprep.subr.mxu0 0.0
        %1057 = vmatpush1.msra.mxu0 0.0
        %1058 = vmatprep.mubr.f32.mxu0 0.0
        %1059 = vmatmul.mubr.f32.gmra.mrb[0].mxu0 %v359
        %v1060 = vpop.f32.mrb[0].mxu0
        %v1061 = vadd.f32 %v956, %v1060
        %v1062 = vpop.f32.mrb[0].mxu0
        %1063 = vmatprep.mubr.f32.mxu0 0.0
        %1064 = vmatmul.mubr.f32.gmra.mrb[0].mxu0 %v368
        %v1065 = vpop.f32.mrb[0].mxu0
        %v1066 = vadd.f32 %v961, %v1065
        %v1067 = vpop.f32.mrb[0].mxu0
        %1068 = vmatprep.mubr.f32.mxu0 0.0
        %1069 = vmatmul.mubr.f32.gmra.mrb[0].mxu0 %v377
        %v1070 = vpop.f32.mrb[0].mxu0
        %v1071 = vadd.f32 %v966, %v1070
        %v1072 = vpop.f32.mrb[0].mxu0
        %1073 = vmatprep.mubr.f32.mxu0 0.0
        %1074 = vmatmul.mubr.f32.gmra.mrb[0].mxu0 %v386
        %v1075 = vpop.f32.mrb[0].mxu0
        %v1076 = vadd.f32 %v971, %v1075
        %v1077 = vpop.f32.mrb[0].mxu0
        %1078 = vmatprep.mubr.f32.mxu0 0.0
        %1079 = vmatmul.mubr.f32.gmra.mrb[0].mxu0 %v395
        %v1080 = vpop.f32.mrb[0].mxu0
        %v1081 = vadd.f32 %v976, %v1080
        %v1082 = vpop.f32.mrb[0].mxu0
        %1083 = vmatprep.mubr.f32.mxu0 0.0
        %1084 = vmatmul.mubr.f32.gmra.mrb[0].mxu0 %v404
        %v1085 = vpop.f32.mrb[0].mxu0
        %v1086 = vadd.f32 %v981, %v1085
        %v1087 = vpop.f32.mrb[0].mxu0
        %1088 = vmatprep.mubr.f32.mxu0 0.0
        %1089 = vmatmul.mubr.f32.gmra.mrb[0].mxu0 %v413
        %v1090 = vpop.f32.mrb[0].mxu0
        %v1091 = vadd.f32 %v986, %v1090
        %v1092 = vpop.f32.mrb[0].mxu0
        %1093 = vmatprep.mubr.f32.mxu0 0.0
        %1094 = vmatmul.mubr.f32.gmra.mrb[0].mxu0 %v422
        %v1095 = vpop.f32.mrb[0].mxu0
        %v1096 = vadd.f32 %v991, %v1095
        %v1097 = vpop.f32.mrb[0].mxu0
        %1098 = vdwg.mxu0
        %vm1099 = vcmp.gt.f32.partialorder %v1061, 0.0
        %vm1100 = vcmp.gt.f32.partialorder %v1066, 0.0
        %vm1101 = vcmp.gt.f32.partialorder %v1071, 0.0
        %vm1102 = vcmp.gt.f32.partialorder %v1076, 0.0
        %vm1103 = vcmp.gt.f32.partialorder %v1081, 0.0
        %vm1104 = vcmp.gt.f32.partialorder %v1086, 0.0
        %vm1105 = vcmp.gt.f32.partialorder %v1091, 0.0
        %vm1106 = vcmp.gt.f32.partialorder %v1096, 0.0
        %v1107 = vmul.f32 %v1061, 0.2
        %v1108 = vmul.f32 %v1066, 0.2
        %v1109 = vmul.f32 %v1071, 0.2
        %v1110 = vmul.f32 %v1076, 0.2
        %v1111 = vmul.f32 %v1081, 0.2
        %v1112 = vmul.f32 %v1086, 0.2
        %v1113 = vmul.f32 %v1091, 0.2
        %v1114 = vmul.f32 %v1096, 0.2
        %v1115 = vsel %vm1099, %v1061, %v1107
        %v1116 = vsel %vm1100, %v1066, %v1108
        %v1117 = vsel %vm1101, %v1071, %v1109
        %v1118 = vsel %vm1102, %v1076, %v1110
        %v1119 = vsel %vm1103, %v1081, %v1111
        %v1120 = vsel %vm1104, %v1086, %v1112
        %v1121 = vsel %vm1105, %v1091, %v1113
        %v1122 = vsel %vm1106, %v1096, %v1114
        %1123 = vst [vmem:[%s197 + $0x1] sm:$0xff] %v1115
        %1124 = vst [vmem:[%s197 + $0x11] sm:$0xff] %v1116
        %1125 = vst [vmem:[%s197 + $0x21] sm:$0xff] %v1117
        %1126 = vst [vmem:[%s197 + $0x31] sm:$0xff] %v1118
        %1127 = vst [vmem:[%s197 + $0x41] sm:$0xff] %v1119
        %1128 = vst [vmem:[%s197 + $0x51] sm:$0xff] %v1120
        %1129 = vst [vmem:[%s197 + $0x61] sm:$0xff] %v1121
        %1130 = vst [vmem:[%s197 + $0x71] sm:$0xff] %v1122
        %v1131 = vld [vmem:[#allocation2] sm:$0xff]
        %v1132 = vld [vmem:[#allocation2 + $0x10] sm:$0xff]
        %v1133 = vld [vmem:[#allocation2 + $0x20] sm:$0xff]
        %v1134 = vld [vmem:[#allocation2 + $0x30] sm:$0xff]
        %v1135 = vld [vmem:[#allocation2 + $0x40] sm:$0xff]
        %v1136 = vld [vmem:[#allocation2 + $0x50] sm:$0xff]
        %v1137 = vld [vmem:[#allocation2 + $0x60] sm:$0xff]
        %v1138 = vld [vmem:[#allocation2 + $0x70] sm:$0xff]
        %1139 = vst [vmem:[#allocation3] sm:$0xff] %v1131
        %1140 = vst [vmem:[#allocation3 + $0x48] sm:$0xff] %v1132
        %1141 = vst [vmem:[#allocation3 + $0x90] sm:$0xff] %v1133
        %1142 = vst [vmem:[#allocation3 + $0xd8] sm:$0xff] %v1134
        %1143 = vst [vmem:[#allocation3 + $0x120] sm:$0xff] %v1135
        %1144 = vst [vmem:[#allocation3 + $0x168] sm:$0xff] %v1136
        %1145 = vst [vmem:[#allocation3 + $0x1b0] sm:$0xff] %v1137
        %1146 = vst [vmem:[#allocation3 + $0x1f8] sm:$0xff] %v1138
        %v1147 = vld [vmem:[#allocation2 + $0x1] sm:$0xff]
        %v1148 = vld [vmem:[#allocation2 + $0x11] sm:$0xff]
        %v1149 = vld [vmem:[#allocation2 + $0x21] sm:$0xff]
        %v1150 = vld [vmem:[#allocation2 + $0x31] sm:$0xff]
        %v1151 = vld [vmem:[#allocation2 + $0x41] sm:$0xff]
        %v1152 = vld [vmem:[#allocation2 + $0x51] sm:$0xff]
        %v1153 = vld [vmem:[#allocation2 + $0x61] sm:$0xff]
        %v1154 = vld [vmem:[#allocation2 + $0x71] sm:$0xff]
        %1155 = vst [vmem:[#allocation3 + $0x8] sm:$0xff] %v1147
        %1156 = vst [vmem:[#allocation3 + $0x50] sm:$0xff] %v1148
        %1157 = vst [vmem:[#allocation3 + $0x98] sm:$0xff] %v1149
        %1158 = vst [vmem:[#allocation3 + $0xe0] sm:$0xff] %v1150
        %1159 = vst [vmem:[#allocation3 + $0x128] sm:$0xff] %v1151
        %1160 = vst [vmem:[#allocation3 + $0x170] sm:$0xff] %v1152
        %1161 = vst [vmem:[#allocation3 + $0x1b8] sm:$0xff] %v1153
        %1162 = vst [vmem:[#allocation3 + $0x200] sm:$0xff] %v1154
        %v1163 = vld [vmem:[#allocation2 + $0x2] sm:$0xff]
        %v1164 = vld [vmem:[#allocation2 + $0x12] sm:$0xff]
        %v1165 = vld [vmem:[#allocation2 + $0x22] sm:$0xff]
        %v1166 = vld [vmem:[#allocation2 + $0x32] sm:$0xff]
        %v1167 = vld [vmem:[#allocation2 + $0x42] sm:$0xff]
        %v1168 = vld [vmem:[#allocation2 + $0x52] sm:$0xff]
        %v1169 = vld [vmem:[#allocation2 + $0x62] sm:$0xff]
        %v1170 = vld [vmem:[#allocation2 + $0x72] sm:$0xff]
        %1171 = vst [vmem:[#allocation3 + $0x10] sm:$0xff] %v1163
        %1172 = vst [vmem:[#allocation3 + $0x58] sm:$0xff] %v1164
        %1173 = vst [vmem:[#allocation3 + $0xa0] sm:$0xff] %v1165
        %1174 = vst [vmem:[#allocation3 + $0xe8] sm:$0xff] %v1166
        %1175 = vst [vmem:[#allocation3 + $0x130] sm:$0xff] %v1167
        %1176 = vst [vmem:[#allocation3 + $0x178] sm:$0xff] %v1168
        %1177 = vst [vmem:[#allocation3 + $0x1c0] sm:$0xff] %v1169
        %1178 = vst [vmem:[#allocation3 + $0x208] sm:$0xff] %v1170
        %v1179 = vld [vmem:[%s197] sm:$0xff]
        %v1180 = vld [vmem:[%s197 + $0x10] sm:$0xff]
        %v1181 = vld [vmem:[%s197 + $0x20] sm:$0xff]
        %v1182 = vld [vmem:[%s197 + $0x30] sm:$0xff]
        %v1183 = vld [vmem:[%s197 + $0x40] sm:$0xff]
        %v1184 = vld [vmem:[%s197 + $0x50] sm:$0xff]
        %v1185 = vld [vmem:[%s197 + $0x60] sm:$0xff]
        %v1186 = vld [vmem:[%s197 + $0x70] sm:$0xff]
        %1187 = vst [vmem:[#allocation3 + $0x18] sm:$0xff] %v1179
        %1188 = vst [vmem:[#allocation3 + $0x60] sm:$0xff] %v1180
        %1189 = vst [vmem:[#allocation3 + $0xa8] sm:$0xff] %v1181
        %1190 = vst [vmem:[#allocation3 + $0xf0] sm:$0xff] %v1182
        %1191 = vst [vmem:[#allocation3 + $0x138] sm:$0xff] %v1183
        %1192 = vst [vmem:[#allocation3 + $0x180] sm:$0xff] %v1184
        %1193 = vst [vmem:[#allocation3 + $0x1c8] sm:$0xff] %v1185
        %1194 = vst [vmem:[#allocation3 + $0x210] sm:$0xff] %v1186
        %v1195 = vld [vmem:[%s197 + $0x1] sm:$0xff]
        %v1196 = vld [vmem:[%s197 + $0x11] sm:$0xff]
        %v1197 = vld [vmem:[%s197 + $0x21] sm:$0xff]
        %v1198 = vld [vmem:[%s197 + $0x31] sm:$0xff]
        %v1199 = vld [vmem:[%s197 + $0x41] sm:$0xff]
        %v1200 = vld [vmem:[%s197 + $0x51] sm:$0xff]
        %v1201 = vld [vmem:[%s197 + $0x61] sm:$0xff]
        %v1202 = vld [vmem:[%s197 + $0x71] sm:$0xff]
        %1203 = vst [vmem:[#allocation3 + $0x20] sm:$0xff] %v1195
        %1204 = vst [vmem:[#allocation3 + $0x68] sm:$0xff] %v1196
        %1205 = vst [vmem:[#allocation3 + $0xb0] sm:$0xff] %v1197
        %1206 = vst [vmem:[#allocation3 + $0xf8] sm:$0xff] %v1198
        %1207 = vst [vmem:[#allocation3 + $0x140] sm:$0xff] %v1199
        %1208 = vst [vmem:[#allocation3 + $0x188] sm:$0xff] %v1200
        %1209 = vst [vmem:[#allocation3 + $0x1d0] sm:$0xff] %v1201
        %1210 = vst [vmem:[#allocation3 + $0x218] sm:$0xff] %v1202
        %v1211 = vld [vmem:[%s197 + $0x2] sm:$0xff]
        %v1212 = vld [vmem:[%s197 + $0x12] sm:$0xff]
        %v1213 = vld [vmem:[%s197 + $0x22] sm:$0xff]
        %v1214 = vld [vmem:[%s197 + $0x32] sm:$0xff]
        %v1215 = vld [vmem:[%s197 + $0x42] sm:$0xff]
        %v1216 = vld [vmem:[%s197 + $0x52] sm:$0xff]
        %v1217 = vld [vmem:[%s197 + $0x62] sm:$0xff]
        %v1218 = vld [vmem:[%s197 + $0x72] sm:$0xff]
        %1219 = vst [vmem:[#allocation3 + $0x28] sm:$0xff] %v1211
        %1220 = vst [vmem:[#allocation3 + $0x70] sm:$0xff] %v1212
        %1221 = vst [vmem:[#allocation3 + $0xb8] sm:$0xff] %v1213
        %1222 = vst [vmem:[#allocation3 + $0x100] sm:$0xff] %v1214
        %1223 = vst [vmem:[#allocation3 + $0x148] sm:$0xff] %v1215
        %1224 = vst [vmem:[#allocation3 + $0x190] sm:$0xff] %v1216
        %1225 = vst [vmem:[#allocation3 + $0x1d8] sm:$0xff] %v1217
        %1226 = vst [vmem:[#allocation3 + $0x220] sm:$0xff] %v1218
        %v1227 = vld [vmem:[%s302] sm:$0xff]
        %v1228 = vld [vmem:[%s302 + $0x10] sm:$0xff]
        %v1229 = vld [vmem:[%s302 + $0x20] sm:$0xff]
        %v1230 = vld [vmem:[%s302 + $0x30] sm:$0xff]
        %v1231 = vld [vmem:[%s302 + $0x40] sm:$0xff]
        %v1232 = vld [vmem:[%s302 + $0x50] sm:$0xff]
        %v1233 = vld [vmem:[%s302 + $0x60] sm:$0xff]
        %v1234 = vld [vmem:[%s302 + $0x70] sm:$0xff]
        %1235 = vst [vmem:[#allocation3 + $0x30] sm:$0xff] %v1227
        %1236 = vst [vmem:[#allocation3 + $0x78] sm:$0xff] %v1228
        %1237 = vst [vmem:[#allocation3 + $0xc0] sm:$0xff] %v1229
        %1238 = vst [vmem:[#allocation3 + $0x108] sm:$0xff] %v1230
        %1239 = vst [vmem:[#allocation3 + $0x150] sm:$0xff] %v1231
        %1240 = vst [vmem:[#allocation3 + $0x198] sm:$0xff] %v1232
        %1241 = vst [vmem:[#allocation3 + $0x1e0] sm:$0xff] %v1233
        %1242 = vst [vmem:[#allocation3 + $0x228] sm:$0xff] %v1234
        %v1243 = vld [vmem:[%s302 + $0x1] sm:$0xff]
        %v1244 = vld [vmem:[%s302 + $0x11] sm:$0xff]
        %v1245 = vld [vmem:[%s302 + $0x21] sm:$0xff]
        %v1246 = vld [vmem:[%s302 + $0x31] sm:$0xff]
        %v1247 = vld [vmem:[%s302 + $0x41] sm:$0xff]
        %v1248 = vld [vmem:[%s302 + $0x51] sm:$0xff]
        %v1249 = vld [vmem:[%s302 + $0x61] sm:$0xff]
        %v1250 = vld [vmem:[%s302 + $0x71] sm:$0xff]
        %1251 = vst [vmem:[#allocation3 + $0x38] sm:$0xff] %v1243
        %1252 = vst [vmem:[#allocation3 + $0x80] sm:$0xff] %v1244
        %1253 = vst [vmem:[#allocation3 + $0xc8] sm:$0xff] %v1245
        %1254 = vst [vmem:[#allocation3 + $0x110] sm:$0xff] %v1246
        %1255 = vst [vmem:[#allocation3 + $0x158] sm:$0xff] %v1247
        %1256 = vst [vmem:[#allocation3 + $0x1a0] sm:$0xff] %v1248
        %1257 = vst [vmem:[#allocation3 + $0x1e8] sm:$0xff] %v1249
        %1258 = vst [vmem:[#allocation3 + $0x230] sm:$0xff] %v1250
        %v1259 = vld [vmem:[%s302 + $0x2] sm:$0xff]
        %v1260 = vld [vmem:[%s302 + $0x12] sm:$0xff]
        %v1261 = vld [vmem:[%s302 + $0x22] sm:$0xff]
        %v1262 = vld [vmem:[%s302 + $0x32] sm:$0xff]
        %v1263 = vld [vmem:[%s302 + $0x42] sm:$0xff]
        %v1264 = vld [vmem:[%s302 + $0x52] sm:$0xff]
        %v1265 = vld [vmem:[%s302 + $0x62] sm:$0xff]
        %v1266 = vld [vmem:[%s302 + $0x72] sm:$0xff]
        %1267 = vst [vmem:[#allocation3 + $0x40] sm:$0xff] %v1259
        %1268 = vst [vmem:[#allocation3 + $0x88] sm:$0xff] %v1260
        %1269 = vst [vmem:[#allocation3 + $0xd0] sm:$0xff] %v1261
        %1270 = vst [vmem:[#allocation3 + $0x118] sm:$0xff] %v1262
        %1271 = vst [vmem:[#allocation3 + $0x160] sm:$0xff] %v1263
        %1272 = vst [vmem:[#allocation3 + $0x1a8] sm:$0xff] %v1264
        %1273 = vst [vmem:[#allocation3 + $0x1f0] sm:$0xff] %v1265
        %1274 = vst [vmem:[#allocation3 + $0x238] sm:$0xff] %v1266
        %v1275 = vld [vmem:[#allocation3] sm:$0xff]
        %v1276 = vld [vmem:[#allocation3 + $0x8] sm:$0xff]
        %v1277 = vld [vmem:[#allocation3 + $0x10] sm:$0xff]
        %v1278 = vld [vmem:[#allocation3 + $0x18] sm:$0xff]
        %v1279 = vld [vmem:[#allocation3 + $0x20] sm:$0xff]
        %v1280 = vld [vmem:[#allocation3 + $0x28] sm:$0xff]
        %v1281 = vld [vmem:[#allocation3 + $0x30] sm:$0xff]
        %v1282 = vld [vmem:[#allocation3 + $0x38] sm:$0xff]
        %v1283 = vld [vmem:[#allocation3 + $0x40] sm:$0xff]
        %v1284 = vld [vmem:[#allocation3 + $0x48] sm:$0xff]
        %v1285 = vld [vmem:[#allocation3 + $0x50] sm:$0xff]
        %v1286 = vld [vmem:[#allocation3 + $0x58] sm:$0xff]
        %v1287 = vld [vmem:[#allocation3 + $0x60] sm:$0xff]
        %v1288 = vld [vmem:[#allocation3 + $0x68] sm:$0xff]
        %v1289 = vld [vmem:[#allocation3 + $0x70] sm:$0xff]
        %v1290 = vld [vmem:[#allocation3 + $0x78] sm:$0xff]
        %v1291 = vld [vmem:[#allocation3 + $0x80] sm:$0xff]
        %v1292 = vld [vmem:[#allocation3 + $0x88] sm:$0xff]
        %v1293 = vld [vmem:[#allocation3 + $0x90] sm:$0xff]
        %v1294 = vld [vmem:[#allocation3 + $0x98] sm:$0xff]
        %v1295 = vld [vmem:[#allocation3 + $0xa0] sm:$0xff]
        %v1296 = vld [vmem:[#allocation3 + $0xa8] sm:$0xff]
        %v1297 = vld [vmem:[#allocation3 + $0xb0] sm:$0xff]
        %v1298 = vld [vmem:[#allocation3 + $0xb8] sm:$0xff]
        %v1299 = vld [vmem:[#allocation3 + $0xc0] sm:$0xff]
        %v1300 = vld [vmem:[#allocation3 + $0xc8] sm:$0xff]
        %v1301 = vld [vmem:[#allocation3 + $0xd0] sm:$0xff]
        %v1302 = vld [vmem:[#allocation3 + $0xd8] sm:$0xff]
        %v1303 = vld [vmem:[#allocation3 + $0xe0] sm:$0xff]
        %v1304 = vld [vmem:[#allocation3 + $0xe8] sm:$0xff]
        %v1305 = vld [vmem:[#allocation3 + $0xf0] sm:$0xff]
        %v1306 = vld [vmem:[#allocation3 + $0xf8] sm:$0xff]
        %v1307 = vld [vmem:[#allocation3 + $0x100] sm:$0xff]
        %v1308 = vld [vmem:[#allocation3 + $0x108] sm:$0xff]
        %v1309 = vld [vmem:[#allocation3 + $0x110] sm:$0xff]
        %v1310 = vld [vmem:[#allocation3 + $0x118] sm:$0xff]
        %v1311 = vld [vmem:[#allocation3 + $0x120] sm:$0xff]
        %v1312 = vld [vmem:[#allocation3 + $0x128] sm:$0xff]
        %v1313 = vld [vmem:[#allocation3 + $0x130] sm:$0xff]
        %v1314 = vld [vmem:[#allocation3 + $0x138] sm:$0xff]
        %v1315 = vld [vmem:[#allocation3 + $0x140] sm:$0xff]
        %v1316 = vld [vmem:[#allocation3 + $0x148] sm:$0xff]
        %v1317 = vld [vmem:[#allocation3 + $0x150] sm:$0xff]
        %v1318 = vld [vmem:[#allocation3 + $0x158] sm:$0xff]
        %v1319 = vld [vmem:[#allocation3 + $0x160] sm:$0xff]
        %v1320 = vld [vmem:[#allocation3 + $0x168] sm:$0xff]
        %v1321 = vld [vmem:[#allocation3 + $0x170] sm:$0xff]
        %v1322 = vld [vmem:[#allocation3 + $0x178] sm:$0xff]
        %v1323 = vld [vmem:[#allocation3 + $0x180] sm:$0xff]
        %v1324 = vld [vmem:[#allocation3 + $0x188] sm:$0xff]
        %v1325 = vld [vmem:[#allocation3 + $0x190] sm:$0xff]
        %v1326 = vld [vmem:[#allocation3 + $0x198] sm:$0xff]
        %v1327 = vld [vmem:[#allocation3 + $0x1a0] sm:$0xff]
        %v1328 = vld [vmem:[#allocation3 + $0x1a8] sm:$0xff]
        %v1329 = vld [vmem:[#allocation3 + $0x1b0] sm:$0xff]
        %v1330 = vld [vmem:[#allocation3 + $0x1b8] sm:$0xff]
        %v1331 = vld [vmem:[#allocation3 + $0x1c0] sm:$0xff]
        %v1332 = vld [vmem:[#allocation3 + $0x1c8] sm:$0xff]
        %v1333 = vld [vmem:[#allocation3 + $0x1d0] sm:$0xff]
        %v1334 = vld [vmem:[#allocation3 + $0x1d8] sm:$0xff]
        %v1335 = vld [vmem:[#allocation3 + $0x1e0] sm:$0xff]
        %v1336 = vld [vmem:[#allocation3 + $0x1e8] sm:$0xff]
        %v1337 = vld [vmem:[#allocation3 + $0x1f0] sm:$0xff]
        %v1338 = vld [vmem:[#allocation3 + $0x1f8] sm:$0xff]
        %v1339 = vld [vmem:[#allocation3 + $0x200] sm:$0xff]
        %v1340 = vld [vmem:[#allocation3 + $0x208] sm:$0xff]
        %v1341 = vld [vmem:[#allocation3 + $0x210] sm:$0xff]
        %v1342 = vld [vmem:[#allocation3 + $0x218] sm:$0xff]
        %v1343 = vld [vmem:[#allocation3 + $0x220] sm:$0xff]
        %v1344 = vld [vmem:[#allocation3 + $0x228] sm:$0xff]
        %v1345 = vld [vmem:[#allocation3 + $0x230] sm:$0xff]
        %v1346 = vld [vmem:[#allocation3 + $0x238] sm:$0xff]
        %s1347 = scalar_lea.vmem %s1, 1152
        %v1348 = vld [vmem:[%s1347] sm:$0xff]
        %v1349 = vld [vmem:[%s1347 + $0x8] sm:$0xff]
        %v1350 = vld [vmem:[%s1347 + $0x10] sm:$0xff]
        %v1351 = vld [vmem:[%s1347 + $0x18] sm:$0xff]
        %v1352 = vld [vmem:[%s1347 + $0x20] sm:$0xff]
        %v1353 = vld [vmem:[%s1347 + $0x28] sm:$0xff]
        %v1354 = vld [vmem:[%s1347 + $0x30] sm:$0xff]
        %v1355 = vld [vmem:[%s1347 + $0x38] sm:$0xff]
        %v1356 = vld [vmem:[%s1347 + $0x40] sm:$0xff]
        %v1357 = vld [vmem:[%s1347 + $0x48] sm:$0xff]
        %v1358 = vld [vmem:[%s1347 + $0x50] sm:$0xff]
        %v1359 = vld [vmem:[%s1347 + $0x58] sm:$0xff]
        %v1360 = vld [vmem:[%s1347 + $0x60] sm:$0xff]
        %v1361 = vld [vmem:[%s1347 + $0x68] sm:$0xff]
        %v1362 = vld [vmem:[%s1347 + $0x70] sm:$0xff]
        %v1363 = vld [vmem:[%s1347 + $0x78] sm:$0xff]
        %v1364 = vld [vmem:[%s1347 + $0x80] sm:$0xff]
        %v1365 = vld [vmem:[%s1347 + $0x88] sm:$0xff]
        %v1366 = vld [vmem:[%s1347 + $0x90] sm:$0xff]
        %v1367 = vld [vmem:[%s1347 + $0x98] sm:$0xff]
        %v1368 = vld [vmem:[%s1347 + $0xa0] sm:$0xff]
        %v1369 = vld [vmem:[%s1347 + $0xa8] sm:$0xff]
        %v1370 = vld [vmem:[%s1347 + $0xb0] sm:$0xff]
        %v1371 = vld [vmem:[%s1347 + $0xb8] sm:$0xff]
        %v1372 = vld [vmem:[%s1347 + $0xc0] sm:$0xff]
        %v1373 = vld [vmem:[%s1347 + $0xc8] sm:$0xff]
        %v1374 = vld [vmem:[%s1347 + $0xd0] sm:$0xff]
        %v1375 = vld [vmem:[%s1347 + $0xd8] sm:$0xff]
        %v1376 = vld [vmem:[%s1347 + $0xe0] sm:$0xff]
        %v1377 = vld [vmem:[%s1347 + $0xe8] sm:$0xff]
        %v1378 = vld [vmem:[%s1347 + $0xf0] sm:$0xff]
        %v1379 = vld [vmem:[%s1347 + $0xf8] sm:$0xff]
        %v1380 = vld [vmem:[%s1347 + $0x100] sm:$0xff]
        %v1381 = vld [vmem:[%s1347 + $0x108] sm:$0xff]
        %v1382 = vld [vmem:[%s1347 + $0x110] sm:$0xff]
        %v1383 = vld [vmem:[%s1347 + $0x118] sm:$0xff]
        %v1384 = vld [vmem:[%s1347 + $0x120] sm:$0xff]
        %v1385 = vld [vmem:[%s1347 + $0x128] sm:$0xff]
        %v1386 = vld [vmem:[%s1347 + $0x130] sm:$0xff]
        %v1387 = vld [vmem:[%s1347 + $0x138] sm:$0xff]
        %v1388 = vld [vmem:[%s1347 + $0x140] sm:$0xff]
        %v1389 = vld [vmem:[%s1347 + $0x148] sm:$0xff]
        %v1390 = vld [vmem:[%s1347 + $0x150] sm:$0xff]
        %v1391 = vld [vmem:[%s1347 + $0x158] sm:$0xff]
        %v1392 = vld [vmem:[%s1347 + $0x160] sm:$0xff]
        %v1393 = vld [vmem:[%s1347 + $0x168] sm:$0xff]
        %v1394 = vld [vmem:[%s1347 + $0x170] sm:$0xff]
        %v1395 = vld [vmem:[%s1347 + $0x178] sm:$0xff]
        %v1396 = vld [vmem:[%s1347 + $0x180] sm:$0xff]
        %v1397 = vld [vmem:[%s1347 + $0x188] sm:$0xff]
        %v1398 = vld [vmem:[%s1347 + $0x190] sm:$0xff]
        %v1399 = vld [vmem:[%s1347 + $0x198] sm:$0xff]
        %v1400 = vld [vmem:[%s1347 + $0x1a0] sm:$0xff]
        %v1401 = vld [vmem:[%s1347 + $0x1a8] sm:$0xff]
        %v1402 = vld [vmem:[%s1347 + $0x1b0] sm:$0xff]
        %v1403 = vld [vmem:[%s1347 + $0x1b8] sm:$0xff]
        %v1404 = vld [vmem:[%s1347 + $0x1c0] sm:$0xff]
        %v1405 = vld [vmem:[%s1347 + $0x1c8] sm:$0xff]
        %v1406 = vld [vmem:[%s1347 + $0x1d0] sm:$0xff]
        %v1407 = vld [vmem:[%s1347 + $0x1d8] sm:$0xff]
        %v1408 = vld [vmem:[%s1347 + $0x1e0] sm:$0xff]
        %v1409 = vld [vmem:[%s1347 + $0x1e8] sm:$0xff]
        %v1410 = vld [vmem:[%s1347 + $0x1f0] sm:$0xff]
        %v1411 = vld [vmem:[%s1347 + $0x1f8] sm:$0xff]
        %v1412 = vld [vmem:[%s1347 + $0x200] sm:$0xff]
        %v1413 = vld [vmem:[%s1347 + $0x208] sm:$0xff]
        %v1414 = vld [vmem:[%s1347 + $0x210] sm:$0xff]
        %v1415 = vld [vmem:[%s1347 + $0x218] sm:$0xff]
        %v1416 = vld [vmem:[%s1347 + $0x220] sm:$0xff]
        %v1417 = vld [vmem:[%s1347 + $0x228] sm:$0xff]
        %v1418 = vld [vmem:[%s1347 + $0x230] sm:$0xff]
        %v1419 = vld [vmem:[%s1347 + $0x238] sm:$0xff]
        %v1420 = vld [vmem:[%s1347 + $0x240] sm:$0xff]
        %v1421 = vld [vmem:[%s1347 + $0x248] sm:$0xff]
        %v1422 = vld [vmem:[%s1347 + $0x250] sm:$0xff]
        %v1423 = vld [vmem:[%s1347 + $0x258] sm:$0xff]
        %v1424 = vld [vmem:[%s1347 + $0x260] sm:$0xff]
        %v1425 = vld [vmem:[%s1347 + $0x268] sm:$0xff]
        %v1426 = vld [vmem:[%s1347 + $0x270] sm:$0xff]
        %v1427 = vld [vmem:[%s1347 + $0x278] sm:$0xff]
        %v1428 = vld [vmem:[%s1347 + $0x280] sm:$0xff]
        %v1429 = vld [vmem:[%s1347 + $0x288] sm:$0xff]
        %v1430 = vld [vmem:[%s1347 + $0x290] sm:$0xff]
        %v1431 = vld [vmem:[%s1347 + $0x298] sm:$0xff]
        %v1432 = vld [vmem:[%s1347 + $0x2a0] sm:$0xff]
        %v1433 = vld [vmem:[%s1347 + $0x2a8] sm:$0xff]
        %v1434 = vld [vmem:[%s1347 + $0x2b0] sm:$0xff]
        %v1435 = vld [vmem:[%s1347 + $0x2b8] sm:$0xff]
        %v1436 = vld [vmem:[%s1347 + $0x2c0] sm:$0xff]
        %v1437 = vld [vmem:[%s1347 + $0x2c8] sm:$0xff]
        %v1438 = vld [vmem:[%s1347 + $0x2d0] sm:$0xff]
        %v1439 = vld [vmem:[%s1347 + $0x2d8] sm:$0xff]
        %v1440 = vld [vmem:[%s1347 + $0x2e0] sm:$0xff]
        %v1441 = vld [vmem:[%s1347 + $0x2e8] sm:$0xff]
        %v1442 = vld [vmem:[%s1347 + $0x2f0] sm:$0xff]
        %v1443 = vld [vmem:[%s1347 + $0x2f8] sm:$0xff]
        %v1444 = vld [vmem:[%s1347 + $0x300] sm:$0xff]
        %v1445 = vld [vmem:[%s1347 + $0x308] sm:$0xff]
        %v1446 = vld [vmem:[%s1347 + $0x310] sm:$0xff]
        %v1447 = vld [vmem:[%s1347 + $0x318] sm:$0xff]
        %v1448 = vld [vmem:[%s1347 + $0x320] sm:$0xff]
        %v1449 = vld [vmem:[%s1347 + $0x328] sm:$0xff]
        %v1450 = vld [vmem:[%s1347 + $0x330] sm:$0xff]
        %v1451 = vld [vmem:[%s1347 + $0x338] sm:$0xff]
        %v1452 = vld [vmem:[%s1347 + $0x340] sm:$0xff]
        %v1453 = vld [vmem:[%s1347 + $0x348] sm:$0xff]
        %v1454 = vld [vmem:[%s1347 + $0x350] sm:$0xff]
        %v1455 = vld [vmem:[%s1347 + $0x358] sm:$0xff]
        %v1456 = vld [vmem:[%s1347 + $0x360] sm:$0xff]
        %v1457 = vld [vmem:[%s1347 + $0x368] sm:$0xff]
        %v1458 = vld [vmem:[%s1347 + $0x370] sm:$0xff]
        %v1459 = vld [vmem:[%s1347 + $0x378] sm:$0xff]
        %v1460 = vld [vmem:[%s1347 + $0x380] sm:$0xff]
        %v1461 = vld [vmem:[%s1347 + $0x388] sm:$0xff]
        %v1462 = vld [vmem:[%s1347 + $0x390] sm:$0xff]
        %v1463 = vld [vmem:[%s1347 + $0x398] sm:$0xff]
        %v1464 = vld [vmem:[%s1347 + $0x3a0] sm:$0xff]
        %v1465 = vld [vmem:[%s1347 + $0x3a8] sm:$0xff]
        %v1466 = vld [vmem:[%s1347 + $0x3b0] sm:$0xff]
        %v1467 = vld [vmem:[%s1347 + $0x3b8] sm:$0xff]
        %v1468 = vld [vmem:[%s1347 + $0x3c0] sm:$0xff]
        %v1469 = vld [vmem:[%s1347 + $0x3c8] sm:$0xff]
        %v1470 = vld [vmem:[%s1347 + $0x3d0] sm:$0xff]
        %v1471 = vld [vmem:[%s1347 + $0x3d8] sm:$0xff]
        %v1472 = vld [vmem:[%s1347 + $0x3e0] sm:$0xff]
        %v1473 = vld [vmem:[%s1347 + $0x3e8] sm:$0xff]
        %v1474 = vld [vmem:[%s1347 + $0x3f0] sm:$0xff]
        %v1475 = vld [vmem:[%s1347 + $0x3f8] sm:$0xff]
        %v1476 = vld [vmem:[%s1347 + $0x400] sm:$0xff]
        %v1477 = vld [vmem:[%s1347 + $0x408] sm:$0xff]
        %v1478 = vld [vmem:[%s1347 + $0x410] sm:$0xff]
        %v1479 = vld [vmem:[%s1347 + $0x418] sm:$0xff]
        %v1480 = vld [vmem:[%s1347 + $0x420] sm:$0xff]
        %v1481 = vld [vmem:[%s1347 + $0x428] sm:$0xff]
        %v1482 = vld [vmem:[%s1347 + $0x430] sm:$0xff]
        %v1483 = vld [vmem:[%s1347 + $0x438] sm:$0xff]
        %v1484 = vld [vmem:[%s1347 + $0x440] sm:$0xff]
        %v1485 = vld [vmem:[%s1347 + $0x448] sm:$0xff]
        %v1486 = vld [vmem:[%s1347 + $0x450] sm:$0xff]
        %v1487 = vld [vmem:[%s1347 + $0x458] sm:$0xff]
        %v1488 = vld [vmem:[%s1347 + $0x460] sm:$0xff]
        %v1489 = vld [vmem:[%s1347 + $0x468] sm:$0xff]
        %v1490 = vld [vmem:[%s1347 + $0x470] sm:$0xff]
        %v1491 = vld [vmem:[%s1347 + $0x478] sm:$0xff]
        %s1492 = scalar_lea.vmem %s2, 1
        %v1493 = vld [vmem:[%s1492] sm:$0x1]
        %v1495 = vlaneseq
        %v1496 = vshrl.u32 %v1495, 7
        %v1497 = vsub.s32 0, %v1496
        %v1498 = vrot.slane %v1493, %v1497
        %1500 = vmatprep.subr.mxu0 0.0
        %1501 = vmatpush1.msra.mxu0 %v1348
        %1502 = vmatprep.subr.mxu0 0.0
        %1503 = vmatpush1.msra.mxu0 %v1349
        %1504 = vmatprep.subr.mxu0 0.0
        %1505 = vmatpush1.msra.mxu0 %v1350
        %1506 = vmatprep.subr.mxu0 0.0
        %1507 = vmatpush1.msra.mxu0 %v1351
        %1508 = vmatprep.subr.mxu0 0.0
        %1509 = vmatpush1.msra.mxu0 %v1352
        %1510 = vmatprep.subr.mxu0 0.0
        %1511 = vmatpush1.msra.mxu0 %v1353
        %1512 = vmatprep.subr.mxu0 0.0
        %1513 = vmatpush1.msra.mxu0 %v1354
        %1514 = vmatprep.subr.mxu0 0.0
        %1515 = vmatpush1.msra.mxu0 %v1355
        %1516 = vmatprep.subr.mxu0 0.0
        %1517 = vmatpush1.msra.mxu0 %v1356
        %1518 = vmatprep.subr.mxu0 0.0
        %1519 = vmatpush1.msra.mxu0 %v1357
        %1520 = vmatprep.subr.mxu0 0.0
        %1521 = vmatpush1.msra.mxu0 %v1358
        %1522 = vmatprep.subr.mxu0 0.0
        %1523 = vmatpush1.msra.mxu0 %v1359
        %1524 = vmatprep.subr.mxu0 0.0
        %1525 = vmatpush1.msra.mxu0 %v1360
        %1526 = vmatprep.subr.mxu0 0.0
        %1527 = vmatpush1.msra.mxu0 %v1361
        %1528 = vmatprep.subr.mxu0 0.0
        %1529 = vmatpush1.msra.mxu0 %v1362
        %1530 = vmatprep.subr.mxu0 0.0
        %1531 = vmatpush1.msra.mxu0 %v1363
        %1532 = vmatprep.subr.mxu0 0.0
        %1533 = vmatpush1.msra.mxu0 %v1364
        %1534 = vmatprep.subr.mxu0 0.0
        %1535 = vmatpush1.msra.mxu0 %v1365
        %1536 = vmatprep.subr.mxu0 0.0
        %1537 = vmatpush1.msra.mxu0 %v1366
        %1538 = vmatprep.subr.mxu0 0.0
        %1539 = vmatpush1.msra.mxu0 %v1367
        %1540 = vmatprep.subr.mxu0 0.0
        %1541 = vmatpush1.msra.mxu0 %v1368
        %1542 = vmatprep.subr.mxu0 0.0
        %1543 = vmatpush1.msra.mxu0 %v1369
        %1544 = vmatprep.subr.mxu0 0.0
        %1545 = vmatpush1.msra.mxu0 %v1370
        %1546 = vmatprep.subr.mxu0 0.0
        %1547 = vmatpush1.msra.mxu0 %v1371
        %1548 = vmatprep.subr.mxu0 0.0
        %1549 = vmatpush1.msra.mxu0 %v1372
        %1550 = vmatprep.subr.mxu0 0.0
        %1551 = vmatpush1.msra.mxu0 %v1373
        %1552 = vmatprep.subr.mxu0 0.0
        %1553 = vmatpush1.msra.mxu0 %v1374
        %1554 = vmatprep.subr.mxu0 0.0
        %1555 = vmatpush1.msra.mxu0 %v1375
        %1556 = vmatprep.subr.mxu0 0.0
        %1557 = vmatpush1.msra.mxu0 %v1376
        %1558 = vmatprep.subr.mxu0 0.0
        %1559 = vmatpush1.msra.mxu0 %v1377
        %1560 = vmatprep.subr.mxu0 0.0
        %1561 = vmatpush1.msra.mxu0 %v1378
        %1562 = vmatprep.subr.mxu0 0.0
        %1563 = vmatpush1.msra.mxu0 %v1379
        %1564 = vmatprep.mubr.f32.mxu0 %v1276
        %1565 = vmatmul.mubr.f32.gmra.mrb[0].mxu0 %v1275
        %v1566 = vpop.f32.mrb[0].mxu0
        %v1567 = vadd.f32 %v1498, %v1566
        %v1568 = vpop.f32.mrb[0].mxu0
        %1569 = vmatprep.mubr.f32.mxu0 %v1285
        %1570 = vmatmul.mubr.f32.gmra.mrb[0].mxu0 %v1284
        %v1571 = vpop.f32.mrb[0].mxu0
        %v1572 = vadd.f32 %v1498, %v1571
        %v1573 = vpop.f32.mrb[0].mxu0
        %1574 = vmatprep.mubr.f32.mxu0 %v1294
        %1575 = vmatmul.mubr.f32.gmra.mrb[0].mxu0 %v1293
        %v1576 = vpop.f32.mrb[0].mxu0
        %v1577 = vadd.f32 %v1498, %v1576
        %v1578 = vpop.f32.mrb[0].mxu0
        %1579 = vmatprep.mubr.f32.mxu0 %v1303
        %1580 = vmatmul.mubr.f32.gmra.mrb[0].mxu0 %v1302
        %v1581 = vpop.f32.mrb[0].mxu0
        %v1582 = vadd.f32 %v1498, %v1581
        %v1583 = vpop.f32.mrb[0].mxu0
        %1584 = vmatprep.mubr.f32.mxu0 %v1312
        %1585 = vmatmul.mubr.f32.gmra.mrb[0].mxu0 %v1311
        %v1586 = vpop.f32.mrb[0].mxu0
        %v1587 = vadd.f32 %v1498, %v1586
        %v1588 = vpop.f32.mrb[0].mxu0
        %1589 = vmatprep.mubr.f32.mxu0 %v1321
        %1590 = vmatmul.mubr.f32.gmra.mrb[0].mxu0 %v1320
        %v1591 = vpop.f32.mrb[0].mxu0
        %v1592 = vadd.f32 %v1498, %v1591
        %v1593 = vpop.f32.mrb[0].mxu0
        %1594 = vmatprep.mubr.f32.mxu0 %v1330
        %1595 = vmatmul.mubr.f32.gmra.mrb[0].mxu0 %v1329
        %v1596 = vpop.f32.mrb[0].mxu0
        %v1597 = vadd.f32 %v1498, %v1596
        %v1598 = vpop.f32.mrb[0].mxu0
        %1599 = vmatprep.mubr.f32.mxu0 %v1339
        %1600 = vmatmul.mubr.f32.gmra.mrb[0].mxu0 %v1338
        %v1601 = vpop.f32.mrb[0].mxu0
        %v1602 = vadd.f32 %v1498, %v1601
        %v1603 = vpop.f32.mrb[0].mxu0
        %1604 = vdwg.mxu0
        %1605 = vmatprep.subr.mxu0 0.0
        %1606 = vmatpush1.msra.mxu0 %v1380
        %1607 = vmatprep.subr.mxu0 0.0
        %1608 = vmatpush1.msra.mxu0 %v1381
        %1609 = vmatprep.subr.mxu0 0.0
        %1610 = vmatpush1.msra.mxu0 %v1382
        %1611 = vmatprep.subr.mxu0 0.0
        %1612 = vmatpush1.msra.mxu0 %v1383
        %1613 = vmatprep.subr.mxu0 0.0
        %1614 = vmatpush1.msra.mxu0 %v1384
        %1615 = vmatprep.subr.mxu0 0.0
        %1616 = vmatpush1.msra.mxu0 %v1385
        %1617 = vmatprep.subr.mxu0 0.0
        %1618 = vmatpush1.msra.mxu0 %v1386
        %1619 = vmatprep.subr.mxu0 0.0
        %1620 = vmatpush1.msra.mxu0 %v1387
        %1621 = vmatprep.subr.mxu0 0.0
        %1622 = vmatpush1.msra.mxu0 %v1388
        %1623 = vmatprep.subr.mxu0 0.0
        %1624 = vmatpush1.msra.mxu0 %v1389
        %1625 = vmatprep.subr.mxu0 0.0
        %1626 = vmatpush1.msra.mxu0 %v1390
        %1627 = vmatprep.subr.mxu0 0.0
        %1628 = vmatpush1.msra.mxu0 %v1391
        %1629 = vmatprep.subr.mxu0 0.0
        %1630 = vmatpush1.msra.mxu0 %v1392
        %1631 = vmatprep.subr.mxu0 0.0
        %1632 = vmatpush1.msra.mxu0 %v1393
        %1633 = vmatprep.subr.mxu0 0.0
        %1634 = vmatpush1.msra.mxu0 %v1394
        %1635 = vmatprep.subr.mxu0 0.0
        %1636 = vmatpush1.msra.mxu0 %v1395
        %1637 = vmatprep.subr.mxu0 0.0
        %1638 = vmatpush1.msra.mxu0 %v1396
        %1639 = vmatprep.subr.mxu0 0.0
        %1640 = vmatpush1.msra.mxu0 %v1397
        %1641 = vmatprep.subr.mxu0 0.0
        %1642 = vmatpush1.msra.mxu0 %v1398
        %1643 = vmatprep.subr.mxu0 0.0
        %1644 = vmatpush1.msra.mxu0 %v1399
        %1645 = vmatprep.subr.mxu0 0.0
        %1646 = vmatpush1.msra.mxu0 %v1400
        %1647 = vmatprep.subr.mxu0 0.0
        %1648 = vmatpush1.msra.mxu0 %v1401
        %1649 = vmatprep.subr.mxu0 0.0
        %1650 = vmatpush1.msra.mxu0 %v1402
        %1651 = vmatprep.subr.mxu0 0.0
        %1652 = vmatpush1.msra.mxu0 %v1403
        %1653 = vmatprep.subr.mxu0 0.0
        %1654 = vmatpush1.msra.mxu0 %v1404
        %1655 = vmatprep.subr.mxu0 0.0
        %1656 = vmatpush1.msra.mxu0 %v1405
        %1657 = vmatprep.subr.mxu0 0.0
        %1658 = vmatpush1.msra.mxu0 %v1406
        %1659 = vmatprep.subr.mxu0 0.0
        %1660 = vmatpush1.msra.mxu0 %v1407
        %1661 = vmatprep.subr.mxu0 0.0
        %1662 = vmatpush1.msra.mxu0 %v1408
        %1663 = vmatprep.subr.mxu0 0.0
        %1664 = vmatpush1.msra.mxu0 %v1409
        %1665 = vmatprep.subr.mxu0 0.0
        %1666 = vmatpush1.msra.mxu0 %v1410
        %1667 = vmatprep.subr.mxu0 0.0
        %1668 = vmatpush1.msra.mxu0 %v1411
        %1669 = vmatprep.mubr.f32.mxu0 %v1278
        %1670 = vmatmul.mubr.f32.gmra.mrb[0].mxu0 %v1277
        %v1671 = vpop.f32.mrb[0].mxu0
        %v1672 = vadd.f32 %v1567, %v1671
        %v1673 = vpop.f32.mrb[0].mxu0
        %1674 = vmatprep.mubr.f32.mxu0 %v1287
        %1675 = vmatmul.mubr.f32.gmra.mrb[0].mxu0 %v1286
        %v1676 = vpop.f32.mrb[0].mxu0
        %v1677 = vadd.f32 %v1572, %v1676
        %v1678 = vpop.f32.mrb[0].mxu0
        %1679 = vmatprep.mubr.f32.mxu0 %v1296
        %1680 = vmatmul.mubr.f32.gmra.mrb[0].mxu0 %v1295
        %v1681 = vpop.f32.mrb[0].mxu0
        %v1682 = vadd.f32 %v1577, %v1681
        %v1683 = vpop.f32.mrb[0].mxu0
        %1684 = vmatprep.mubr.f32.mxu0 %v1305
        %1685 = vmatmul.mubr.f32.gmra.mrb[0].mxu0 %v1304
        %v1686 = vpop.f32.mrb[0].mxu0
        %v1687 = vadd.f32 %v1582, %v1686
        %v1688 = vpop.f32.mrb[0].mxu0
        %1689 = vmatprep.mubr.f32.mxu0 %v1314
        %1690 = vmatmul.mubr.f32.gmra.mrb[0].mxu0 %v1313
        %v1691 = vpop.f32.mrb[0].mxu0
        %v1692 = vadd.f32 %v1587, %v1691
        %v1693 = vpop.f32.mrb[0].mxu0
        %1694 = vmatprep.mubr.f32.mxu0 %v1323
        %1695 = vmatmul.mubr.f32.gmra.mrb[0].mxu0 %v1322
        %v1696 = vpop.f32.mrb[0].mxu0
        %v1697 = vadd.f32 %v1592, %v1696
        %v1698 = vpop.f32.mrb[0].mxu0
        %1699 = vmatprep.mubr.f32.mxu0 %v1332
        %1700 = vmatmul.mubr.f32.gmra.mrb[0].mxu0 %v1331
        %v1701 = vpop.f32.mrb[0].mxu0
        %v1702 = vadd.f32 %v1597, %v1701
        %v1703 = vpop.f32.mrb[0].mxu0
        %1704 = vmatprep.mubr.f32.mxu0 %v1341
        %1705 = vmatmul.mubr.f32.gmra.mrb[0].mxu0 %v1340
        %v1706 = vpop.f32.mrb[0].mxu0
        %v1707 = vadd.f32 %v1602, %v1706
        %v1708 = vpop.f32.mrb[0].mxu0
        %1709 = vdwg.mxu0
        %1710 = vmatprep.subr.mxu0 0.0
        %1711 = vmatpush1.msra.mxu0 %v1412
        %1712 = vmatprep.subr.mxu0 0.0
        %1713 = vmatpush1.msra.mxu0 %v1413
        %1714 = vmatprep.subr.mxu0 0.0
        %1715 = vmatpush1.msra.mxu0 %v1414
        %1716 = vmatprep.subr.mxu0 0.0
        %1717 = vmatpush1.msra.mxu0 %v1415
        %1718 = vmatprep.subr.mxu0 0.0
        %1719 = vmatpush1.msra.mxu0 %v1416
        %1720 = vmatprep.subr.mxu0 0.0
        %1721 = vmatpush1.msra.mxu0 %v1417
        %1722 = vmatprep.subr.mxu0 0.0
        %1723 = vmatpush1.msra.mxu0 %v1418
        %1724 = vmatprep.subr.mxu0 0.0
        %1725 = vmatpush1.msra.mxu0 %v1419
        %1726 = vmatprep.subr.mxu0 0.0
        %1727 = vmatpush1.msra.mxu0 %v1420
        %1728 = vmatprep.subr.mxu0 0.0
        %1729 = vmatpush1.msra.mxu0 %v1421
        %1730 = vmatprep.subr.mxu0 0.0
        %1731 = vmatpush1.msra.mxu0 %v1422
        %1732 = vmatprep.subr.mxu0 0.0
        %1733 = vmatpush1.msra.mxu0 %v1423
        %1734 = vmatprep.subr.mxu0 0.0
        %1735 = vmatpush1.msra.mxu0 %v1424
        %1736 = vmatprep.subr.mxu0 0.0
        %1737 = vmatpush1.msra.mxu0 %v1425
        %1738 = vmatprep.subr.mxu0 0.0
        %1739 = vmatpush1.msra.mxu0 %v1426
        %1740 = vmatprep.subr.mxu0 0.0
        %1741 = vmatpush1.msra.mxu0 %v1427
        %1742 = vmatprep.subr.mxu0 0.0
        %1743 = vmatpush1.msra.mxu0 %v1428
        %1744 = vmatprep.subr.mxu0 0.0
        %1745 = vmatpush1.msra.mxu0 %v1429
        %1746 = vmatprep.subr.mxu0 0.0
        %1747 = vmatpush1.msra.mxu0 %v1430
        %1748 = vmatprep.subr.mxu0 0.0
        %1749 = vmatpush1.msra.mxu0 %v1431
        %1750 = vmatprep.subr.mxu0 0.0
        %1751 = vmatpush1.msra.mxu0 %v1432
        %1752 = vmatprep.subr.mxu0 0.0
        %1753 = vmatpush1.msra.mxu0 %v1433
        %1754 = vmatprep.subr.mxu0 0.0
        %1755 = vmatpush1.msra.mxu0 %v1434
        %1756 = vmatprep.subr.mxu0 0.0
        %1757 = vmatpush1.msra.mxu0 %v1435
        %1758 = vmatprep.subr.mxu0 0.0
        %1759 = vmatpush1.msra.mxu0 %v1436
        %1760 = vmatprep.subr.mxu0 0.0
        %1761 = vmatpush1.msra.mxu0 %v1437
        %1762 = vmatprep.subr.mxu0 0.0
        %1763 = vmatpush1.msra.mxu0 %v1438
        %1764 = vmatprep.subr.mxu0 0.0
        %1765 = vmatpush1.msra.mxu0 %v1439
        %1766 = vmatprep.subr.mxu0 0.0
        %1767 = vmatpush1.msra.mxu0 %v1440
        %1768 = vmatprep.subr.mxu0 0.0
        %1769 = vmatpush1.msra.mxu0 %v1441
        %1770 = vmatprep.subr.mxu0 0.0
        %1771 = vmatpush1.msra.mxu0 %v1442
        %1772 = vmatprep.subr.mxu0 0.0
        %1773 = vmatpush1.msra.mxu0 %v1443
        %1774 = vmatprep.mubr.f32.mxu0 %v1280
        %1775 = vmatmul.mubr.f32.gmra.mrb[0].mxu0 %v1279
        %v1776 = vpop.f32.mrb[0].mxu0
        %v1777 = vadd.f32 %v1672, %v1776
        %v1778 = vpop.f32.mrb[0].mxu0
        %1779 = vmatprep.mubr.f32.mxu0 %v1289
        %1780 = vmatmul.mubr.f32.gmra.mrb[0].mxu0 %v1288
        %v1781 = vpop.f32.mrb[0].mxu0
        %v1782 = vadd.f32 %v1677, %v1781
        %v1783 = vpop.f32.mrb[0].mxu0
        %1784 = vmatprep.mubr.f32.mxu0 %v1298
        %1785 = vmatmul.mubr.f32.gmra.mrb[0].mxu0 %v1297
        %v1786 = vpop.f32.mrb[0].mxu0
        %v1787 = vadd.f32 %v1682, %v1786
        %v1788 = vpop.f32.mrb[0].mxu0
        %1789 = vmatprep.mubr.f32.mxu0 %v1307
        %1790 = vmatmul.mubr.f32.gmra.mrb[0].mxu0 %v1306
        %v1791 = vpop.f32.mrb[0].mxu0
        %v1792 = vadd.f32 %v1687, %v1791
        %v1793 = vpop.f32.mrb[0].mxu0
        %1794 = vmatprep.mubr.f32.mxu0 %v1316
        %1795 = vmatmul.mubr.f32.gmra.mrb[0].mxu0 %v1315
        %v1796 = vpop.f32.mrb[0].mxu0
        %v1797 = vadd.f32 %v1692, %v1796
        %v1798 = vpop.f32.mrb[0].mxu0
        %1799 = vmatprep.mubr.f32.mxu0 %v1325
        %1800 = vmatmul.mubr.f32.gmra.mrb[0].mxu0 %v1324
        %v1801 = vpop.f32.mrb[0].mxu0
        %v1802 = vadd.f32 %v1697, %v1801
        %v1803 = vpop.f32.mrb[0].mxu0
        %1804 = vmatprep.mubr.f32.mxu0 %v1334
        %1805 = vmatmul.mubr.f32.gmra.mrb[0].mxu0 %v1333
        %v1806 = vpop.f32.mrb[0].mxu0
        %v1807 = vadd.f32 %v1702, %v1806
        %v1808 = vpop.f32.mrb[0].mxu0
        %1809 = vmatprep.mubr.f32.mxu0 %v1343
        %1810 = vmatmul.mubr.f32.gmra.mrb[0].mxu0 %v1342
        %v1811 = vpop.f32.mrb[0].mxu0
        %v1812 = vadd.f32 %v1707, %v1811
        %v1813 = vpop.f32.mrb[0].mxu0
        %1814 = vdwg.mxu0
        %1815 = vmatprep.subr.mxu0 0.0
        %1816 = vmatpush1.msra.mxu0 %v1444
        %1817 = vmatprep.subr.mxu0 0.0
        %1818 = vmatpush1.msra.mxu0 %v1445
        %1819 = vmatprep.subr.mxu0 0.0
        %1820 = vmatpush1.msra.mxu0 %v1446
        %1821 = vmatprep.subr.mxu0 0.0
        %1822 = vmatpush1.msra.mxu0 %v1447
        %1823 = vmatprep.subr.mxu0 0.0
        %1824 = vmatpush1.msra.mxu0 %v1448
        %1825 = vmatprep.subr.mxu0 0.0
        %1826 = vmatpush1.msra.mxu0 %v1449
        %1827 = vmatprep.subr.mxu0 0.0
        %1828 = vmatpush1.msra.mxu0 %v1450
        %1829 = vmatprep.subr.mxu0 0.0
        %1830 = vmatpush1.msra.mxu0 %v1451
        %1831 = vmatprep.subr.mxu0 0.0
        %1832 = vmatpush1.msra.mxu0 %v1452
        %1833 = vmatprep.subr.mxu0 0.0
        %1834 = vmatpush1.msra.mxu0 %v1453
        %1835 = vmatprep.subr.mxu0 0.0
        %1836 = vmatpush1.msra.mxu0 %v1454
        %1837 = vmatprep.subr.mxu0 0.0
        %1838 = vmatpush1.msra.mxu0 %v1455
        %1839 = vmatprep.subr.mxu0 0.0
        %1840 = vmatpush1.msra.mxu0 %v1456
        %1841 = vmatprep.subr.mxu0 0.0
        %1842 = vmatpush1.msra.mxu0 %v1457
        %1843 = vmatprep.subr.mxu0 0.0
        %1844 = vmatpush1.msra.mxu0 %v1458
        %1845 = vmatprep.subr.mxu0 0.0
        %1846 = vmatpush1.msra.mxu0 %v1459
        %1847 = vmatprep.subr.mxu0 0.0
        %1848 = vmatpush1.msra.mxu0 %v1460
        %1849 = vmatprep.subr.mxu0 0.0
        %1850 = vmatpush1.msra.mxu0 %v1461
        %1851 = vmatprep.subr.mxu0 0.0
        %1852 = vmatpush1.msra.mxu0 %v1462
        %1853 = vmatprep.subr.mxu0 0.0
        %1854 = vmatpush1.msra.mxu0 %v1463
        %1855 = vmatprep.subr.mxu0 0.0
        %1856 = vmatpush1.msra.mxu0 %v1464
        %1857 = vmatprep.subr.mxu0 0.0
        %1858 = vmatpush1.msra.mxu0 %v1465
        %1859 = vmatprep.subr.mxu0 0.0
        %1860 = vmatpush1.msra.mxu0 %v1466
        %1861 = vmatprep.subr.mxu0 0.0
        %1862 = vmatpush1.msra.mxu0 %v1467
        %1863 = vmatprep.subr.mxu0 0.0
        %1864 = vmatpush1.msra.mxu0 %v1468
        %1865 = vmatprep.subr.mxu0 0.0
        %1866 = vmatpush1.msra.mxu0 %v1469
        %1867 = vmatprep.subr.mxu0 0.0
        %1868 = vmatpush1.msra.mxu0 %v1470
        %1869 = vmatprep.subr.mxu0 0.0
        %1870 = vmatpush1.msra.mxu0 %v1471
        %1871 = vmatprep.subr.mxu0 0.0
        %1872 = vmatpush1.msra.mxu0 %v1472
        %1873 = vmatprep.subr.mxu0 0.0
        %1874 = vmatpush1.msra.mxu0 %v1473
        %1875 = vmatprep.subr.mxu0 0.0
        %1876 = vmatpush1.msra.mxu0 %v1474
        %1877 = vmatprep.subr.mxu0 0.0
        %1878 = vmatpush1.msra.mxu0 %v1475
        %1879 = vmatprep.mubr.f32.mxu0 %v1282
        %1880 = vmatmul.mubr.f32.gmra.mrb[0].mxu0 %v1281
        %v1881 = vpop.f32.mrb[0].mxu0
        %v1882 = vadd.f32 %v1777, %v1881
        %v1883 = vpop.f32.mrb[0].mxu0
        %1884 = vmatprep.mubr.f32.mxu0 %v1291
        %1885 = vmatmul.mubr.f32.gmra.mrb[0].mxu0 %v1290
        %v1886 = vpop.f32.mrb[0].mxu0
        %v1887 = vadd.f32 %v1782, %v1886
        %v1888 = vpop.f32.mrb[0].mxu0
        %1889 = vmatprep.mubr.f32.mxu0 %v1300
        %1890 = vmatmul.mubr.f32.gmra.mrb[0].mxu0 %v1299
        %v1891 = vpop.f32.mrb[0].mxu0
        %v1892 = vadd.f32 %v1787, %v1891
        %v1893 = vpop.f32.mrb[0].mxu0
        %1894 = vmatprep.mubr.f32.mxu0 %v1309
        %1895 = vmatmul.mubr.f32.gmra.mrb[0].mxu0 %v1308
        %v1896 = vpop.f32.mrb[0].mxu0
        %v1897 = vadd.f32 %v1792, %v1896
        %v1898 = vpop.f32.mrb[0].mxu0
        %1899 = vmatprep.mubr.f32.mxu0 %v1318
        %1900 = vmatmul.mubr.f32.gmra.mrb[0].mxu0 %v1317
        %v1901 = vpop.f32.mrb[0].mxu0
        %v1902 = vadd.f32 %v1797, %v1901
        %v1903 = vpop.f32.mrb[0].mxu0
        %1904 = vmatprep.mubr.f32.mxu0 %v1327
        %1905 = vmatmul.mubr.f32.gmra.mrb[0].mxu0 %v1326
        %v1906 = vpop.f32.mrb[0].mxu0
        %v1907 = vadd.f32 %v1802, %v1906
        %v1908 = vpop.f32.mrb[0].mxu0
        %1909 = vmatprep.mubr.f32.mxu0 %v1336
        %1910 = vmatmul.mubr.f32.gmra.mrb[0].mxu0 %v1335
        %v1911 = vpop.f32.mrb[0].mxu0
        %v1912 = vadd.f32 %v1807, %v1911
        %v1913 = vpop.f32.mrb[0].mxu0
        %1914 = vmatprep.mubr.f32.mxu0 %v1345
        %1915 = vmatmul.mubr.f32.gmra.mrb[0].mxu0 %v1344
        %v1916 = vpop.f32.mrb[0].mxu0
        %v1917 = vadd.f32 %v1812, %v1916
        %v1918 = vpop.f32.mrb[0].mxu0
        %1919 = vdwg.mxu0
        %1920 = vmatprep.subr.mxu0 0.0
        %1921 = vmatpush1.msra.mxu0 %v1476
        %1922 = vmatprep.subr.mxu0 0.0
        %1923 = vmatpush1.msra.mxu0 %v1477
        %1924 = vmatprep.subr.mxu0 0.0
        %1925 = vmatpush1.msra.mxu0 %v1478
        %1926 = vmatprep.subr.mxu0 0.0
        %1927 = vmatpush1.msra.mxu0 %v1479
        %1928 = vmatprep.subr.mxu0 0.0
        %1929 = vmatpush1.msra.mxu0 %v1480
        %1930 = vmatprep.subr.mxu0 0.0
        %1931 = vmatpush1.msra.mxu0 %v1481
        %1932 = vmatprep.subr.mxu0 0.0
        %1933 = vmatpush1.msra.mxu0 %v1482
        %1934 = vmatprep.subr.mxu0 0.0
        %1935 = vmatpush1.msra.mxu0 %v1483
        %1936 = vmatprep.subr.mxu0 0.0
        %1937 = vmatpush1.msra.mxu0 %v1484
        %1938 = vmatprep.subr.mxu0 0.0
        %1939 = vmatpush1.msra.mxu0 %v1485
        %1940 = vmatprep.subr.mxu0 0.0
        %1941 = vmatpush1.msra.mxu0 %v1486
        %1942 = vmatprep.subr.mxu0 0.0
        %1943 = vmatpush1.msra.mxu0 %v1487
        %1944 = vmatprep.subr.mxu0 0.0
        %1945 = vmatpush1.msra.mxu0 %v1488
        %1946 = vmatprep.subr.mxu0 0.0
        %1947 = vmatpush1.msra.mxu0 %v1489
        %1948 = vmatprep.subr.mxu0 0.0
        %1949 = vmatpush1.msra.mxu0 %v1490
        %1950 = vmatprep.subr.mxu0 0.0
        %1951 = vmatpush1.msra.mxu0 %v1491
        %1952 = vmatprep.subr.mxu0 0.0
        %1953 = vmatpush1.msra.mxu0 0.0
        %1954 = vmatprep.subr.mxu0 0.0
        %1955 = vmatpush1.msra.mxu0 0.0
        %1956 = vmatprep.subr.mxu0 0.0
        %1957 = vmatpush1.msra.mxu0 0.0
        %1958 = vmatprep.subr.mxu0 0.0
        %1959 = vmatpush1.msra.mxu0 0.0
        %1960 = vmatprep.subr.mxu0 0.0
        %1961 = vmatpush1.msra.mxu0 0.0
        %1962 = vmatprep.subr.mxu0 0.0
        %1963 = vmatpush1.msra.mxu0 0.0
        %1964 = vmatprep.subr.mxu0 0.0
        %1965 = vmatpush1.msra.mxu0 0.0
        %1966 = vmatprep.subr.mxu0 0.0
        %1967 = vmatpush1.msra.mxu0 0.0
        %1968 = vmatprep.subr.mxu0 0.0
        %1969 = vmatpush1.msra.mxu0 0.0
        %1970 = vmatprep.subr.mxu0 0.0
        %1971 = vmatpush1.msra.mxu0 0.0
        %1972 = vmatprep.subr.mxu0 0.0
        %1973 = vmatpush1.msra.mxu0 0.0
        %1974 = vmatprep.subr.mxu0 0.0
        %1975 = vmatpush1.msra.mxu0 0.0
        %1976 = vmatprep.subr.mxu0 0.0
        %1977 = vmatpush1.msra.mxu0 0.0
        %1978 = vmatprep.subr.mxu0 0.0
        %1979 = vmatpush1.msra.mxu0 0.0
        %1980 = vmatprep.subr.mxu0 0.0
        %1981 = vmatpush1.msra.mxu0 0.0
        %1982 = vmatprep.subr.mxu0 0.0
        %1983 = vmatpush1.msra.mxu0 0.0
        %1984 = vmatprep.mubr.f32.mxu0 0.0
        %1985 = vmatmul.mubr.f32.gmra.mrb[0].mxu0 %v1283
        %v1986 = vpop.f32.mrb[0].mxu0
        %v1987 = vadd.f32 %v1882, %v1986
        %v1988 = vpop.f32.mrb[0].mxu0
        %1989 = vmatprep.mubr.f32.mxu0 0.0
        %1990 = vmatmul.mubr.f32.gmra.mrb[0].mxu0 %v1292
        %v1991 = vpop.f32.mrb[0].mxu0
        %v1992 = vadd.f32 %v1887, %v1991
        %v1993 = vpop.f32.mrb[0].mxu0
        %1994 = vmatprep.mubr.f32.mxu0 0.0
        %1995 = vmatmul.mubr.f32.gmra.mrb[0].mxu0 %v1301
        %v1996 = vpop.f32.mrb[0].mxu0
        %v1997 = vadd.f32 %v1892, %v1996
        %v1998 = vpop.f32.mrb[0].mxu0
        %1999 = vmatprep.mubr.f32.mxu0 0.0
        %2000 = vmatmul.mubr.f32.gmra.mrb[0].mxu0 %v1310
        %v2001 = vpop.f32.mrb[0].mxu0
        %v2002 = vadd.f32 %v1897, %v2001
        %v2003 = vpop.f32.mrb[0].mxu0
        %2004 = vmatprep.mubr.f32.mxu0 0.0
        %2005 = vmatmul.mubr.f32.gmra.mrb[0].mxu0 %v1319
        %v2006 = vpop.f32.mrb[0].mxu0
        %v2007 = vadd.f32 %v1902, %v2006
        %v2008 = vpop.f32.mrb[0].mxu0
        %2009 = vmatprep.mubr.f32.mxu0 0.0
        %2010 = vmatmul.mubr.f32.gmra.mrb[0].mxu0 %v1328
        %v2011 = vpop.f32.mrb[0].mxu0
        %v2012 = vadd.f32 %v1907, %v2011
        %v2013 = vpop.f32.mrb[0].mxu0
        %2014 = vmatprep.mubr.f32.mxu0 0.0
        %2015 = vmatmul.mubr.f32.gmra.mrb[0].mxu0 %v1337
        %v2016 = vpop.f32.mrb[0].mxu0
        %v2017 = vadd.f32 %v1912, %v2016
        %v2018 = vpop.f32.mrb[0].mxu0
        %2019 = vmatprep.mubr.f32.mxu0 0.0
        %2020 = vmatmul.mubr.f32.gmra.mrb[0].mxu0 %v1346
        %v2021 = vpop.f32.mrb[0].mxu0
        %v2022 = vadd.f32 %v1917, %v2021
        %v2023 = vpop.f32.mrb[0].mxu0
        %2024 = vdwg.mxu0
        %vm2025 = vcmp.gt.f32.partialorder %v1987, 0.0
        %vm2026 = vcmp.gt.f32.partialorder %v1992, 0.0
        %vm2027 = vcmp.gt.f32.partialorder %v1997, 0.0
        %vm2028 = vcmp.gt.f32.partialorder %v2002, 0.0
        %vm2029 = vcmp.gt.f32.partialorder %v2007, 0.0
        %vm2030 = vcmp.gt.f32.partialorder %v2012, 0.0
        %vm2031 = vcmp.gt.f32.partialorder %v2017, 0.0
        %vm2032 = vcmp.gt.f32.partialorder %v2022, 0.0
        %v2033 = vmul.f32 %v1987, 0.2
        %v2034 = vmul.f32 %v1992, 0.2
        %v2035 = vmul.f32 %v1997, 0.2
        %v2036 = vmul.f32 %v2002, 0.2
        %v2037 = vmul.f32 %v2007, 0.2
        %v2038 = vmul.f32 %v2012, 0.2
        %v2039 = vmul.f32 %v2017, 0.2
        %v2040 = vmul.f32 %v2022, 0.2
        %v2041 = vsel %vm2025, %v1987, %v2033
        %v2042 = vsel %vm2026, %v1992, %v2034
        %v2043 = vsel %vm2027, %v1997, %v2035
        %v2044 = vsel %vm2028, %v2002, %v2036
        %v2045 = vsel %vm2029, %v2007, %v2037
        %v2046 = vsel %vm2030, %v2012, %v2038
        %v2047 = vsel %vm2031, %v2017, %v2039
        %v2048 = vsel %vm2032, %v2022, %v2040
        %v2049 = vadd.f32 %v2041, %v189
        %v2050 = vadd.f32 %v2042, %v190
        %v2051 = vadd.f32 %v2043, %v191
        %v2052 = vadd.f32 %v2044, %v192
        %v2053 = vadd.f32 %v2045, %v193
        %v2054 = vadd.f32 %v2046, %v194
        %v2055 = vadd.f32 %v2047, %v195
        %v2056 = vadd.f32 %v2048, %v196
        %2057 = vst [vmem:[%s197 + $0x1] sm:$0xff] %v2049
        %2058 = vst [vmem:[%s197 + $0x11] sm:$0xff] %v2050
        %2059 = vst [vmem:[%s197 + $0x21] sm:$0xff] %v2051
        %2060 = vst [vmem:[%s197 + $0x31] sm:$0xff] %v2052
        %2061 = vst [vmem:[%s197 + $0x41] sm:$0xff] %v2053
        %2062 = vst [vmem:[%s197 + $0x51] sm:$0xff] %v2054
        %2063 = vst [vmem:[%s197 + $0x61] sm:$0xff] %v2055
        %2064 = vst [vmem:[%s197 + $0x71] sm:$0xff] %v2056
        %v2065 = vld [vmem:[#allocation2] sm:$0xff]
        %v2066 = vld [vmem:[#allocation2 + $0x10] sm:$0xff]
        %v2067 = vld [vmem:[#allocation2 + $0x20] sm:$0xff]
        %v2068 = vld [vmem:[#allocation2 + $0x30] sm:$0xff]
        %v2069 = vld [vmem:[#allocation2 + $0x40] sm:$0xff]
        %v2070 = vld [vmem:[#allocation2 + $0x50] sm:$0xff]
        %v2071 = vld [vmem:[#allocation2 + $0x60] sm:$0xff]
        %v2072 = vld [vmem:[#allocation2 + $0x70] sm:$0xff]
        %2073 = vst [vmem:[#allocation3] sm:$0xff] %v2065
        %2074 = vst [vmem:[#allocation3 + $0x48] sm:$0xff] %v2066
        %2075 = vst [vmem:[#allocation3 + $0x90] sm:$0xff] %v2067
        %2076 = vst [vmem:[#allocation3 + $0xd8] sm:$0xff] %v2068
        %2077 = vst [vmem:[#allocation3 + $0x120] sm:$0xff] %v2069
        %2078 = vst [vmem:[#allocation3 + $0x168] sm:$0xff] %v2070
        %2079 = vst [vmem:[#allocation3 + $0x1b0] sm:$0xff] %v2071
        %2080 = vst [vmem:[#allocation3 + $0x1f8] sm:$0xff] %v2072
        %v2081 = vld [vmem:[#allocation2 + $0x1] sm:$0xff]
        %v2082 = vld [vmem:[#allocation2 + $0x11] sm:$0xff]
        %v2083 = vld [vmem:[#allocation2 + $0x21] sm:$0xff]
        %v2084 = vld [vmem:[#allocation2 + $0x31] sm:$0xff]
        %v2085 = vld [vmem:[#allocation2 + $0x41] sm:$0xff]
        %v2086 = vld [vmem:[#allocation2 + $0x51] sm:$0xff]
        %v2087 = vld [vmem:[#allocation2 + $0x61] sm:$0xff]
        %v2088 = vld [vmem:[#allocation2 + $0x71] sm:$0xff]
        %2089 = vst [vmem:[#allocation3 + $0x8] sm:$0xff] %v2081
        %2090 = vst [vmem:[#allocation3 + $0x50] sm:$0xff] %v2082
        %2091 = vst [vmem:[#allocation3 + $0x98] sm:$0xff] %v2083
        %2092 = vst [vmem:[#allocation3 + $0xe0] sm:$0xff] %v2084
        %2093 = vst [vmem:[#allocation3 + $0x128] sm:$0xff] %v2085
        %2094 = vst [vmem:[#allocation3 + $0x170] sm:$0xff] %v2086
        %2095 = vst [vmem:[#allocation3 + $0x1b8] sm:$0xff] %v2087
        %2096 = vst [vmem:[#allocation3 + $0x200] sm:$0xff] %v2088
        %v2097 = vld [vmem:[#allocation2 + $0x2] sm:$0xff]
        %v2098 = vld [vmem:[#allocation2 + $0x12] sm:$0xff]
        %v2099 = vld [vmem:[#allocation2 + $0x22] sm:$0xff]
        %v2100 = vld [vmem:[#allocation2 + $0x32] sm:$0xff]
        %v2101 = vld [vmem:[#allocation2 + $0x42] sm:$0xff]
        %v2102 = vld [vmem:[#allocation2 + $0x52] sm:$0xff]
        %v2103 = vld [vmem:[#allocation2 + $0x62] sm:$0xff]
        %v2104 = vld [vmem:[#allocation2 + $0x72] sm:$0xff]
        %2105 = vst [vmem:[#allocation3 + $0x10] sm:$0xff] %v2097
        %2106 = vst [vmem:[#allocation3 + $0x58] sm:$0xff] %v2098
        %2107 = vst [vmem:[#allocation3 + $0xa0] sm:$0xff] %v2099
        %2108 = vst [vmem:[#allocation3 + $0xe8] sm:$0xff] %v2100
        %2109 = vst [vmem:[#allocation3 + $0x130] sm:$0xff] %v2101
        %2110 = vst [vmem:[#allocation3 + $0x178] sm:$0xff] %v2102
        %2111 = vst [vmem:[#allocation3 + $0x1c0] sm:$0xff] %v2103
        %2112 = vst [vmem:[#allocation3 + $0x208] sm:$0xff] %v2104
        %v2113 = vld [vmem:[%s197] sm:$0xff]
        %v2114 = vld [vmem:[%s197 + $0x10] sm:$0xff]
        %v2115 = vld [vmem:[%s197 + $0x20] sm:$0xff]
        %v2116 = vld [vmem:[%s197 + $0x30] sm:$0xff]
        %v2117 = vld [vmem:[%s197 + $0x40] sm:$0xff]
        %v2118 = vld [vmem:[%s197 + $0x50] sm:$0xff]
        %v2119 = vld [vmem:[%s197 + $0x60] sm:$0xff]
        %v2120 = vld [vmem:[%s197 + $0x70] sm:$0xff]
        %2121 = vst [vmem:[#allocation3 + $0x18] sm:$0xff] %v2113
        %2122 = vst [vmem:[#allocation3 + $0x60] sm:$0xff] %v2114
        %2123 = vst [vmem:[#allocation3 + $0xa8] sm:$0xff] %v2115
        %2124 = vst [vmem:[#allocation3 + $0xf0] sm:$0xff] %v2116
        %2125 = vst [vmem:[#allocation3 + $0x138] sm:$0xff] %v2117
        %2126 = vst [vmem:[#allocation3 + $0x180] sm:$0xff] %v2118
        %2127 = vst [vmem:[#allocation3 + $0x1c8] sm:$0xff] %v2119
        %2128 = vst [vmem:[#allocation3 + $0x210] sm:$0xff] %v2120
        %v2129 = vld [vmem:[%s197 + $0x1] sm:$0xff]
        %v2130 = vld [vmem:[%s197 + $0x11] sm:$0xff]
        %v2131 = vld [vmem:[%s197 + $0x21] sm:$0xff]
        %v2132 = vld [vmem:[%s197 + $0x31] sm:$0xff]
        %v2133 = vld [vmem:[%s197 + $0x41] sm:$0xff]
        %v2134 = vld [vmem:[%s197 + $0x51] sm:$0xff]
        %v2135 = vld [vmem:[%s197 + $0x61] sm:$0xff]
        %v2136 = vld [vmem:[%s197 + $0x71] sm:$0xff]
        %2137 = vst [vmem:[#allocation3 + $0x20] sm:$0xff] %v2129
        %2138 = vst [vmem:[#allocation3 + $0x68] sm:$0xff] %v2130
        %2139 = vst [vmem:[#allocation3 + $0xb0] sm:$0xff] %v2131
        %2140 = vst [vmem:[#allocation3 + $0xf8] sm:$0xff] %v2132
        %2141 = vst [vmem:[#allocation3 + $0x140] sm:$0xff] %v2133
        %2142 = vst [vmem:[#allocation3 + $0x188] sm:$0xff] %v2134
        %2143 = vst [vmem:[#allocation3 + $0x1d0] sm:$0xff] %v2135
        %2144 = vst [vmem:[#allocation3 + $0x218] sm:$0xff] %v2136
        %v2145 = vld [vmem:[%s197 + $0x2] sm:$0xff]
        %v2146 = vld [vmem:[%s197 + $0x12] sm:$0xff]
        %v2147 = vld [vmem:[%s197 + $0x22] sm:$0xff]
        %v2148 = vld [vmem:[%s197 + $0x32] sm:$0xff]
        %v2149 = vld [vmem:[%s197 + $0x42] sm:$0xff]
        %v2150 = vld [vmem:[%s197 + $0x52] sm:$0xff]
        %v2151 = vld [vmem:[%s197 + $0x62] sm:$0xff]
        %v2152 = vld [vmem:[%s197 + $0x72] sm:$0xff]
        %2153 = vst [vmem:[#allocation3 + $0x28] sm:$0xff] %v2145
        %2154 = vst [vmem:[#allocation3 + $0x70] sm:$0xff] %v2146
        %2155 = vst [vmem:[#allocation3 + $0xb8] sm:$0xff] %v2147
        %2156 = vst [vmem:[#allocation3 + $0x100] sm:$0xff] %v2148
        %2157 = vst [vmem:[#allocation3 + $0x148] sm:$0xff] %v2149
        %2158 = vst [vmem:[#allocation3 + $0x190] sm:$0xff] %v2150
        %2159 = vst [vmem:[#allocation3 + $0x1d8] sm:$0xff] %v2151
        %2160 = vst [vmem:[#allocation3 + $0x220] sm:$0xff] %v2152
        %v2161 = vld [vmem:[%s302] sm:$0xff]
        %v2162 = vld [vmem:[%s302 + $0x10] sm:$0xff]
        %v2163 = vld [vmem:[%s302 + $0x20] sm:$0xff]
        %v2164 = vld [vmem:[%s302 + $0x30] sm:$0xff]
        %v2165 = vld [vmem:[%s302 + $0x40] sm:$0xff]
        %v2166 = vld [vmem:[%s302 + $0x50] sm:$0xff]
        %v2167 = vld [vmem:[%s302 + $0x60] sm:$0xff]
        %v2168 = vld [vmem:[%s302 + $0x70] sm:$0xff]
        %2169 = vst [vmem:[#allocation3 + $0x30] sm:$0xff] %v2161
        %2170 = vst [vmem:[#allocation3 + $0x78] sm:$0xff] %v2162
        %2171 = vst [vmem:[#allocation3 + $0xc0] sm:$0xff] %v2163
        %2172 = vst [vmem:[#allocation3 + $0x108] sm:$0xff] %v2164
        %2173 = vst [vmem:[#allocation3 + $0x150] sm:$0xff] %v2165
        %2174 = vst [vmem:[#allocation3 + $0x198] sm:$0xff] %v2166
        %2175 = vst [vmem:[#allocation3 + $0x1e0] sm:$0xff] %v2167
        %2176 = vst [vmem:[#allocation3 + $0x228] sm:$0xff] %v2168
        %v2177 = vld [vmem:[%s302 + $0x1] sm:$0xff]
        %v2178 = vld [vmem:[%s302 + $0x11] sm:$0xff]
        %v2179 = vld [vmem:[%s302 + $0x21] sm:$0xff]
        %v2180 = vld [vmem:[%s302 + $0x31] sm:$0xff]
        %v2181 = vld [vmem:[%s302 + $0x41] sm:$0xff]
        %v2182 = vld [vmem:[%s302 + $0x51] sm:$0xff]
        %v2183 = vld [vmem:[%s302 + $0x61] sm:$0xff]
        %v2184 = vld [vmem:[%s302 + $0x71] sm:$0xff]
        %2185 = vst [vmem:[#allocation3 + $0x38] sm:$0xff] %v2177
        %2186 = vst [vmem:[#allocation3 + $0x80] sm:$0xff] %v2178
        %2187 = vst [vmem:[#allocation3 + $0xc8] sm:$0xff] %v2179
        %2188 = vst [vmem:[#allocation3 + $0x110] sm:$0xff] %v2180
        %2189 = vst [vmem:[#allocation3 + $0x158] sm:$0xff] %v2181
        %2190 = vst [vmem:[#allocation3 + $0x1a0] sm:$0xff] %v2182
        %2191 = vst [vmem:[#allocation3 + $0x1e8] sm:$0xff] %v2183
        %2192 = vst [vmem:[#allocation3 + $0x230] sm:$0xff] %v2184
        %v2193 = vld [vmem:[%s302 + $0x2] sm:$0xff]
        %v2194 = vld [vmem:[%s302 + $0x12] sm:$0xff]
        %v2195 = vld [vmem:[%s302 + $0x22] sm:$0xff]
        %v2196 = vld [vmem:[%s302 + $0x32] sm:$0xff]
        %v2197 = vld [vmem:[%s302 + $0x42] sm:$0xff]
        %v2198 = vld [vmem:[%s302 + $0x52] sm:$0xff]
        %v2199 = vld [vmem:[%s302 + $0x62] sm:$0xff]
        %v2200 = vld [vmem:[%s302 + $0x72] sm:$0xff]
        %2201 = vst [vmem:[#allocation3 + $0x40] sm:$0xff] %v2193
        %2202 = vst [vmem:[#allocation3 + $0x88] sm:$0xff] %v2194
        %2203 = vst [vmem:[#allocation3 + $0xd0] sm:$0xff] %v2195
        %2204 = vst [vmem:[#allocation3 + $0x118] sm:$0xff] %v2196
        %2205 = vst [vmem:[#allocation3 + $0x160] sm:$0xff] %v2197
        %2206 = vst [vmem:[#allocation3 + $0x1a8] sm:$0xff] %v2198
        %2207 = vst [vmem:[#allocation3 + $0x1f0] sm:$0xff] %v2199
        %2208 = vst [vmem:[#allocation3 + $0x238] sm:$0xff] %v2200
        %v2209 = vld [vmem:[#allocation3] sm:$0xff]
        %v2210 = vld [vmem:[#allocation3 + $0x8] sm:$0xff]
        %v2211 = vld [vmem:[#allocation3 + $0x10] sm:$0xff]
        %v2212 = vld [vmem:[#allocation3 + $0x18] sm:$0xff]
        %v2213 = vld [vmem:[#allocation3 + $0x20] sm:$0xff]
        %v2214 = vld [vmem:[#allocation3 + $0x28] sm:$0xff]
        %v2215 = vld [vmem:[#allocation3 + $0x30] sm:$0xff]
        %v2216 = vld [vmem:[#allocation3 + $0x38] sm:$0xff]
        %v2217 = vld [vmem:[#allocation3 + $0x40] sm:$0xff]
        %v2218 = vld [vmem:[#allocation3 + $0x48] sm:$0xff]
        %v2219 = vld [vmem:[#allocation3 + $0x50] sm:$0xff]
        %v2220 = vld [vmem:[#allocation3 + $0x58] sm:$0xff]
        %v2221 = vld [vmem:[#allocation3 + $0x60] sm:$0xff]
        %v2222 = vld [vmem:[#allocation3 + $0x68] sm:$0xff]
        %v2223 = vld [vmem:[#allocation3 + $0x70] sm:$0xff]
        %v2224 = vld [vmem:[#allocation3 + $0x78] sm:$0xff]
        %v2225 = vld [vmem:[#allocation3 + $0x80] sm:$0xff]
        %v2226 = vld [vmem:[#allocation3 + $0x88] sm:$0xff]
        %v2227 = vld [vmem:[#allocation3 + $0x90] sm:$0xff]
        %v2228 = vld [vmem:[#allocation3 + $0x98] sm:$0xff]
        %v2229 = vld [vmem:[#allocation3 + $0xa0] sm:$0xff]
        %v2230 = vld [vmem:[#allocation3 + $0xa8] sm:$0xff]
        %v2231 = vld [vmem:[#allocation3 + $0xb0] sm:$0xff]
        %v2232 = vld [vmem:[#allocation3 + $0xb8] sm:$0xff]
        %v2233 = vld [vmem:[#allocation3 + $0xc0] sm:$0xff]
        %v2234 = vld [vmem:[#allocation3 + $0xc8] sm:$0xff]
        %v2235 = vld [vmem:[#allocation3 + $0xd0] sm:$0xff]
        %v2236 = vld [vmem:[#allocation3 + $0xd8] sm:$0xff]
        %v2237 = vld [vmem:[#allocation3 + $0xe0] sm:$0xff]
        %v2238 = vld [vmem:[#allocation3 + $0xe8] sm:$0xff]
        %v2239 = vld [vmem:[#allocation3 + $0xf0] sm:$0xff]
        %v2240 = vld [vmem:[#allocation3 + $0xf8] sm:$0xff]
        %v2241 = vld [vmem:[#allocation3 + $0x100] sm:$0xff]
        %v2242 = vld [vmem:[#allocation3 + $0x108] sm:$0xff]
        %v2243 = vld [vmem:[#allocation3 + $0x110] sm:$0xff]
        %v2244 = vld [vmem:[#allocation3 + $0x118] sm:$0xff]
        %v2245 = vld [vmem:[#allocation3 + $0x120] sm:$0xff]
        %v2246 = vld [vmem:[#allocation3 + $0x128] sm:$0xff]
        %v2247 = vld [vmem:[#allocation3 + $0x130] sm:$0xff]
        %v2248 = vld [vmem:[#allocation3 + $0x138] sm:$0xff]
        %v2249 = vld [vmem:[#allocation3 + $0x140] sm:$0xff]
        %v2250 = vld [vmem:[#allocation3 + $0x148] sm:$0xff]
        %v2251 = vld [vmem:[#allocation3 + $0x150] sm:$0xff]
        %v2252 = vld [vmem:[#allocation3 + $0x158] sm:$0xff]
        %v2253 = vld [vmem:[#allocation3 + $0x160] sm:$0xff]
        %v2254 = vld [vmem:[#allocation3 + $0x168] sm:$0xff]
        %v2255 = vld [vmem:[#allocation3 + $0x170] sm:$0xff]
        %v2256 = vld [vmem:[#allocation3 + $0x178] sm:$0xff]
        %v2257 = vld [vmem:[#allocation3 + $0x180] sm:$0xff]
        %v2258 = vld [vmem:[#allocation3 + $0x188] sm:$0xff]
        %v2259 = vld [vmem:[#allocation3 + $0x190] sm:$0xff]
        %v2260 = vld [vmem:[#allocation3 + $0x198] sm:$0xff]
        %v2261 = vld [vmem:[#allocation3 + $0x1a0] sm:$0xff]
        %v2262 = vld [vmem:[#allocation3 + $0x1a8] sm:$0xff]
        %v2263 = vld [vmem:[#allocation3 + $0x1b0] sm:$0xff]
        %v2264 = vld [vmem:[#allocation3 + $0x1b8] sm:$0xff]
        %v2265 = vld [vmem:[#allocation3 + $0x1c0] sm:$0xff]
        %v2266 = vld [vmem:[#allocation3 + $0x1c8] sm:$0xff]
        %v2267 = vld [vmem:[#allocation3 + $0x1d0] sm:$0xff]
        %v2268 = vld [vmem:[#allocation3 + $0x1d8] sm:$0xff]
        %v2269 = vld [vmem:[#allocation3 + $0x1e0] sm:$0xff]
        %v2270 = vld [vmem:[#allocation3 + $0x1e8] sm:$0xff]
        %v2271 = vld [vmem:[#allocation3 + $0x1f0] sm:$0xff]
        %v2272 = vld [vmem:[#allocation3 + $0x1f8] sm:$0xff]
        %v2273 = vld [vmem:[#allocation3 + $0x200] sm:$0xff]
        %v2274 = vld [vmem:[#allocation3 + $0x208] sm:$0xff]
        %v2275 = vld [vmem:[#allocation3 + $0x210] sm:$0xff]
        %v2276 = vld [vmem:[#allocation3 + $0x218] sm:$0xff]
        %v2277 = vld [vmem:[#allocation3 + $0x220] sm:$0xff]
        %v2278 = vld [vmem:[#allocation3 + $0x228] sm:$0xff]
        %v2279 = vld [vmem:[#allocation3 + $0x230] sm:$0xff]
        %v2280 = vld [vmem:[#allocation3 + $0x238] sm:$0xff]
        %s2281 = scalar_lea.vmem %s1, 2304
        %v2282 = vld [vmem:[%s2281] sm:$0xff]
        %v2283 = vld [vmem:[%s2281 + $0x8] sm:$0xff]
        %v2284 = vld [vmem:[%s2281 + $0x10] sm:$0xff]
        %v2285 = vld [vmem:[%s2281 + $0x18] sm:$0xff]
        %v2286 = vld [vmem:[%s2281 + $0x20] sm:$0xff]
        %v2287 = vld [vmem:[%s2281 + $0x28] sm:$0xff]
        %v2288 = vld [vmem:[%s2281 + $0x30] sm:$0xff]
        %v2289 = vld [vmem:[%s2281 + $0x38] sm:$0xff]
        %v2290 = vld [vmem:[%s2281 + $0x40] sm:$0xff]
        %v2291 = vld [vmem:[%s2281 + $0x48] sm:$0xff]
        %v2292 = vld [vmem:[%s2281 + $0x50] sm:$0xff]
        %v2293 = vld [vmem:[%s2281 + $0x58] sm:$0xff]
        %v2294 = vld [vmem:[%s2281 + $0x60] sm:$0xff]
        %v2295 = vld [vmem:[%s2281 + $0x68] sm:$0xff]
        %v2296 = vld [vmem:[%s2281 + $0x70] sm:$0xff]
        %v2297 = vld [vmem:[%s2281 + $0x78] sm:$0xff]
        %v2298 = vld [vmem:[%s2281 + $0x80] sm:$0xff]
        %v2299 = vld [vmem:[%s2281 + $0x88] sm:$0xff]
        %v2300 = vld [vmem:[%s2281 + $0x90] sm:$0xff]
        %v2301 = vld [vmem:[%s2281 + $0x98] sm:$0xff]
        %v2302 = vld [vmem:[%s2281 + $0xa0] sm:$0xff]
        %v2303 = vld [vmem:[%s2281 + $0xa8] sm:$0xff]
        %v2304 = vld [vmem:[%s2281 + $0xb0] sm:$0xff]
        %v2305 = vld [vmem:[%s2281 + $0xb8] sm:$0xff]
        %v2306 = vld [vmem:[%s2281 + $0xc0] sm:$0xff]
        %v2307 = vld [vmem:[%s2281 + $0xc8] sm:$0xff]
        %v2308 = vld [vmem:[%s2281 + $0xd0] sm:$0xff]
        %v2309 = vld [vmem:[%s2281 + $0xd8] sm:$0xff]
        %v2310 = vld [vmem:[%s2281 + $0xe0] sm:$0xff]
        %v2311 = vld [vmem:[%s2281 + $0xe8] sm:$0xff]
        %v2312 = vld [vmem:[%s2281 + $0xf0] sm:$0xff]
        %v2313 = vld [vmem:[%s2281 + $0xf8] sm:$0xff]
        %v2314 = vld [vmem:[%s2281 + $0x100] sm:$0xff]
        %v2315 = vld [vmem:[%s2281 + $0x108] sm:$0xff]
        %v2316 = vld [vmem:[%s2281 + $0x110] sm:$0xff]
        %v2317 = vld [vmem:[%s2281 + $0x118] sm:$0xff]
        %v2318 = vld [vmem:[%s2281 + $0x120] sm:$0xff]
        %v2319 = vld [vmem:[%s2281 + $0x128] sm:$0xff]
        %v2320 = vld [vmem:[%s2281 + $0x130] sm:$0xff]
        %v2321 = vld [vmem:[%s2281 + $0x138] sm:$0xff]
        %v2322 = vld [vmem:[%s2281 + $0x140] sm:$0xff]
        %v2323 = vld [vmem:[%s2281 + $0x148] sm:$0xff]
        %v2324 = vld [vmem:[%s2281 + $0x150] sm:$0xff]
        %v2325 = vld [vmem:[%s2281 + $0x158] sm:$0xff]
        %v2326 = vld [vmem:[%s2281 + $0x160] sm:$0xff]
        %v2327 = vld [vmem:[%s2281 + $0x168] sm:$0xff]
        %v2328 = vld [vmem:[%s2281 + $0x170] sm:$0xff]
        %v2329 = vld [vmem:[%s2281 + $0x178] sm:$0xff]
        %v2330 = vld [vmem:[%s2281 + $0x180] sm:$0xff]
        %v2331 = vld [vmem:[%s2281 + $0x188] sm:$0xff]
        %v2332 = vld [vmem:[%s2281 + $0x190] sm:$0xff]
        %v2333 = vld [vmem:[%s2281 + $0x198] sm:$0xff]
        %v2334 = vld [vmem:[%s2281 + $0x1a0] sm:$0xff]
        %v2335 = vld [vmem:[%s2281 + $0x1a8] sm:$0xff]
        %v2336 = vld [vmem:[%s2281 + $0x1b0] sm:$0xff]
        %v2337 = vld [vmem:[%s2281 + $0x1b8] sm:$0xff]
        %v2338 = vld [vmem:[%s2281 + $0x1c0] sm:$0xff]
        %v2339 = vld [vmem:[%s2281 + $0x1c8] sm:$0xff]
        %v2340 = vld [vmem:[%s2281 + $0x1d0] sm:$0xff]
        %v2341 = vld [vmem:[%s2281 + $0x1d8] sm:$0xff]
        %v2342 = vld [vmem:[%s2281 + $0x1e0] sm:$0xff]
        %v2343 = vld [vmem:[%s2281 + $0x1e8] sm:$0xff]
        %v2344 = vld [vmem:[%s2281 + $0x1f0] sm:$0xff]
        %v2345 = vld [vmem:[%s2281 + $0x1f8] sm:$0xff]
        %v2346 = vld [vmem:[%s2281 + $0x200] sm:$0xff]
        %v2347 = vld [vmem:[%s2281 + $0x208] sm:$0xff]
        %v2348 = vld [vmem:[%s2281 + $0x210] sm:$0xff]
        %v2349 = vld [vmem:[%s2281 + $0x218] sm:$0xff]
        %v2350 = vld [vmem:[%s2281 + $0x220] sm:$0xff]
        %v2351 = vld [vmem:[%s2281 + $0x228] sm:$0xff]
        %v2352 = vld [vmem:[%s2281 + $0x230] sm:$0xff]
        %v2353 = vld [vmem:[%s2281 + $0x238] sm:$0xff]
        %v2354 = vld [vmem:[%s2281 + $0x240] sm:$0xff]
        %v2355 = vld [vmem:[%s2281 + $0x248] sm:$0xff]
        %v2356 = vld [vmem:[%s2281 + $0x250] sm:$0xff]
        %v2357 = vld [vmem:[%s2281 + $0x258] sm:$0xff]
        %v2358 = vld [vmem:[%s2281 + $0x260] sm:$0xff]
        %v2359 = vld [vmem:[%s2281 + $0x268] sm:$0xff]
        %v2360 = vld [vmem:[%s2281 + $0x270] sm:$0xff]
        %v2361 = vld [vmem:[%s2281 + $0x278] sm:$0xff]
        %v2362 = vld [vmem:[%s2281 + $0x280] sm:$0xff]
        %v2363 = vld [vmem:[%s2281 + $0x288] sm:$0xff]
        %v2364 = vld [vmem:[%s2281 + $0x290] sm:$0xff]
        %v2365 = vld [vmem:[%s2281 + $0x298] sm:$0xff]
        %v2366 = vld [vmem:[%s2281 + $0x2a0] sm:$0xff]
        %v2367 = vld [vmem:[%s2281 + $0x2a8] sm:$0xff]
        %v2368 = vld [vmem:[%s2281 + $0x2b0] sm:$0xff]
        %v2369 = vld [vmem:[%s2281 + $0x2b8] sm:$0xff]
        %v2370 = vld [vmem:[%s2281 + $0x2c0] sm:$0xff]
        %v2371 = vld [vmem:[%s2281 + $0x2c8] sm:$0xff]
        %v2372 = vld [vmem:[%s2281 + $0x2d0] sm:$0xff]
        %v2373 = vld [vmem:[%s2281 + $0x2d8] sm:$0xff]
        %v2374 = vld [vmem:[%s2281 + $0x2e0] sm:$0xff]
        %v2375 = vld [vmem:[%s2281 + $0x2e8] sm:$0xff]
        %v2376 = vld [vmem:[%s2281 + $0x2f0] sm:$0xff]
        %v2377 = vld [vmem:[%s2281 + $0x2f8] sm:$0xff]
        %v2378 = vld [vmem:[%s2281 + $0x300] sm:$0xff]
        %v2379 = vld [vmem:[%s2281 + $0x308] sm:$0xff]
        %v2380 = vld [vmem:[%s2281 + $0x310] sm:$0xff]
        %v2381 = vld [vmem:[%s2281 + $0x318] sm:$0xff]
        %v2382 = vld [vmem:[%s2281 + $0x320] sm:$0xff]
        %v2383 = vld [vmem:[%s2281 + $0x328] sm:$0xff]
        %v2384 = vld [vmem:[%s2281 + $0x330] sm:$0xff]
        %v2385 = vld [vmem:[%s2281 + $0x338] sm:$0xff]
        %v2386 = vld [vmem:[%s2281 + $0x340] sm:$0xff]
        %v2387 = vld [vmem:[%s2281 + $0x348] sm:$0xff]
        %v2388 = vld [vmem:[%s2281 + $0x350] sm:$0xff]
        %v2389 = vld [vmem:[%s2281 + $0x358] sm:$0xff]
        %v2390 = vld [vmem:[%s2281 + $0x360] sm:$0xff]
        %v2391 = vld [vmem:[%s2281 + $0x368] sm:$0xff]
        %v2392 = vld [vmem:[%s2281 + $0x370] sm:$0xff]
        %v2393 = vld [vmem:[%s2281 + $0x378] sm:$0xff]
        %v2394 = vld [vmem:[%s2281 + $0x380] sm:$0xff]
        %v2395 = vld [vmem:[%s2281 + $0x388] sm:$0xff]
        %v2396 = vld [vmem:[%s2281 + $0x390] sm:$0xff]
        %v2397 = vld [vmem:[%s2281 + $0x398] sm:$0xff]
        %v2398 = vld [vmem:[%s2281 + $0x3a0] sm:$0xff]
        %v2399 = vld [vmem:[%s2281 + $0x3a8] sm:$0xff]
        %v2400 = vld [vmem:[%s2281 + $0x3b0] sm:$0xff]
        %v2401 = vld [vmem:[%s2281 + $0x3b8] sm:$0xff]
        %v2402 = vld [vmem:[%s2281 + $0x3c0] sm:$0xff]
        %v2403 = vld [vmem:[%s2281 + $0x3c8] sm:$0xff]
        %v2404 = vld [vmem:[%s2281 + $0x3d0] sm:$0xff]
        %v2405 = vld [vmem:[%s2281 + $0x3d8] sm:$0xff]
        %v2406 = vld [vmem:[%s2281 + $0x3e0] sm:$0xff]
        %v2407 = vld [vmem:[%s2281 + $0x3e8] sm:$0xff]
        %v2408 = vld [vmem:[%s2281 + $0x3f0] sm:$0xff]
        %v2409 = vld [vmem:[%s2281 + $0x3f8] sm:$0xff]
        %v2410 = vld [vmem:[%s2281 + $0x400] sm:$0xff]
        %v2411 = vld [vmem:[%s2281 + $0x408] sm:$0xff]
        %v2412 = vld [vmem:[%s2281 + $0x410] sm:$0xff]
        %v2413 = vld [vmem:[%s2281 + $0x418] sm:$0xff]
        %v2414 = vld [vmem:[%s2281 + $0x420] sm:$0xff]
        %v2415 = vld [vmem:[%s2281 + $0x428] sm:$0xff]
        %v2416 = vld [vmem:[%s2281 + $0x430] sm:$0xff]
        %v2417 = vld [vmem:[%s2281 + $0x438] sm:$0xff]
        %v2418 = vld [vmem:[%s2281 + $0x440] sm:$0xff]
        %v2419 = vld [vmem:[%s2281 + $0x448] sm:$0xff]
        %v2420 = vld [vmem:[%s2281 + $0x450] sm:$0xff]
        %v2421 = vld [vmem:[%s2281 + $0x458] sm:$0xff]
        %v2422 = vld [vmem:[%s2281 + $0x460] sm:$0xff]
        %v2423 = vld [vmem:[%s2281 + $0x468] sm:$0xff]
        %v2424 = vld [vmem:[%s2281 + $0x470] sm:$0xff]
        %v2425 = vld [vmem:[%s2281 + $0x478] sm:$0xff]
        %s2426 = scalar_lea.vmem %s2, 2
        %v2427 = vld [vmem:[%s2426] sm:$0x1]
        %v2429 = vlaneseq
        %v2430 = vshrl.u32 %v2429, 7
        %v2431 = vsub.s32 0, %v2430
        %v2432 = vrot.slane %v2427, %v2431
        %2434 = vmatprep.subr.mxu0 0.0
        %2435 = vmatpush1.msra.mxu0 %v2282
        %2436 = vmatprep.subr.mxu0 0.0
        %2437 = vmatpush1.msra.mxu0 %v2283
        %2438 = vmatprep.subr.mxu0 0.0
        %2439 = vmatpush1.msra.mxu0 %v2284
        %2440 = vmatprep.subr.mxu0 0.0
        %2441 = vmatpush1.msra.mxu0 %v2285
        %2442 = vmatprep.subr.mxu0 0.0
        %2443 = vmatpush1.msra.mxu0 %v2286
        %2444 = vmatprep.subr.mxu0 0.0
        %2445 = vmatpush1.msra.mxu0 %v2287
        %2446 = vmatprep.subr.mxu0 0.0
        %2447 = vmatpush1.msra.mxu0 %v2288
        %2448 = vmatprep.subr.mxu0 0.0
        %2449 = vmatpush1.msra.mxu0 %v2289
        %2450 = vmatprep.subr.mxu0 0.0
        %2451 = vmatpush1.msra.mxu0 %v2290
        %2452 = vmatprep.subr.mxu0 0.0
        %2453 = vmatpush1.msra.mxu0 %v2291
        %2454 = vmatprep.subr.mxu0 0.0
        %2455 = vmatpush1.msra.mxu0 %v2292
        %2456 = vmatprep.subr.mxu0 0.0
        %2457 = vmatpush1.msra.mxu0 %v2293
        %2458 = vmatprep.subr.mxu0 0.0
        %2459 = vmatpush1.msra.mxu0 %v2294
        %2460 = vmatprep.subr.mxu0 0.0
        %2461 = vmatpush1.msra.mxu0 %v2295
        %2462 = vmatprep.subr.mxu0 0.0
        %2463 = vmatpush1.msra.mxu0 %v2296
        %2464 = vmatprep.subr.mxu0 0.0
        %2465 = vmatpush1.msra.mxu0 %v2297
        %2466 = vmatprep.subr.mxu0 0.0
        %2467 = vmatpush1.msra.mxu0 %v2298
        %2468 = vmatprep.subr.mxu0 0.0
        %2469 = vmatpush1.msra.mxu0 %v2299
        %2470 = vmatprep.subr.mxu0 0.0
        %2471 = vmatpush1.msra.mxu0 %v2300
        %2472 = vmatprep.subr.mxu0 0.0
        %2473 = vmatpush1.msra.mxu0 %v2301
        %2474 = vmatprep.subr.mxu0 0.0
        %2475 = vmatpush1.msra.mxu0 %v2302
        %2476 = vmatprep.subr.mxu0 0.0
        %2477 = vmatpush1.msra.mxu0 %v2303
        %2478 = vmatprep.subr.mxu0 0.0
        %2479 = vmatpush1.msra.mxu0 %v2304
        %2480 = vmatprep.subr.mxu0 0.0
        %2481 = vmatpush1.msra.mxu0 %v2305
        %2482 = vmatprep.subr.mxu0 0.0
        %2483 = vmatpush1.msra.mxu0 %v2306
        %2484 = vmatprep.subr.mxu0 0.0
        %2485 = vmatpush1.msra.mxu0 %v2307
        %2486 = vmatprep.subr.mxu0 0.0
        %2487 = vmatpush1.msra.mxu0 %v2308
        %2488 = vmatprep.subr.mxu0 0.0
        %2489 = vmatpush1.msra.mxu0 %v2309
        %2490 = vmatprep.subr.mxu0 0.0
        %2491 = vmatpush1.msra.mxu0 %v2310
        %2492 = vmatprep.subr.mxu0 0.0
        %2493 = vmatpush1.msra.mxu0 %v2311
        %2494 = vmatprep.subr.mxu0 0.0
        %2495 = vmatpush1.msra.mxu0 %v2312
        %2496 = vmatprep.subr.mxu0 0.0
        %2497 = vmatpush1.msra.mxu0 %v2313
        %2498 = vmatprep.mubr.f32.mxu0 %v2210
        %2499 = vmatmul.mubr.f32.gmra.mrb[0].mxu0 %v2209
        %v2500 = vpop.f32.mrb[0].mxu0
        %v2501 = vadd.f32 %v2432, %v2500
        %v2502 = vpop.f32.mrb[0].mxu0
        %2503 = vmatprep.mubr.f32.mxu0 %v2219
        %2504 = vmatmul.mubr.f32.gmra.mrb[0].mxu0 %v2218
        %v2505 = vpop.f32.mrb[0].mxu0
        %v2506 = vadd.f32 %v2432, %v2505
        %v2507 = vpop.f32.mrb[0].mxu0
        %2508 = vmatprep.mubr.f32.mxu0 %v2228
        %2509 = vmatmul.mubr.f32.gmra.mrb[0].mxu0 %v2227
        %v2510 = vpop.f32.mrb[0].mxu0
        %v2511 = vadd.f32 %v2432, %v2510
        %v2512 = vpop.f32.mrb[0].mxu0
        %2513 = vmatprep.mubr.f32.mxu0 %v2237
        %2514 = vmatmul.mubr.f32.gmra.mrb[0].mxu0 %v2236
        %v2515 = vpop.f32.mrb[0].mxu0
        %v2516 = vadd.f32 %v2432, %v2515
        %v2517 = vpop.f32.mrb[0].mxu0
        %2518 = vmatprep.mubr.f32.mxu0 %v2246
        %2519 = vmatmul.mubr.f32.gmra.mrb[0].mxu0 %v2245
        %v2520 = vpop.f32.mrb[0].mxu0
        %v2521 = vadd.f32 %v2432, %v2520
        %v2522 = vpop.f32.mrb[0].mxu0
        %2523 = vmatprep.mubr.f32.mxu0 %v2255
        %2524 = vmatmul.mubr.f32.gmra.mrb[0].mxu0 %v2254
        %v2525 = vpop.f32.mrb[0].mxu0
        %v2526 = vadd.f32 %v2432, %v2525
        %v2527 = vpop.f32.mrb[0].mxu0
        %2528 = vmatprep.mubr.f32.mxu0 %v2264
        %2529 = vmatmul.mubr.f32.gmra.mrb[0].mxu0 %v2263
        %v2530 = vpop.f32.mrb[0].mxu0
        %v2531 = vadd.f32 %v2432, %v2530
        %v2532 = vpop.f32.mrb[0].mxu0
        %2533 = vmatprep.mubr.f32.mxu0 %v2273
        %2534 = vmatmul.mubr.f32.gmra.mrb[0].mxu0 %v2272
        %v2535 = vpop.f32.mrb[0].mxu0
        %v2536 = vadd.f32 %v2432, %v2535
        %v2537 = vpop.f32.mrb[0].mxu0
        %2538 = vdwg.mxu0
        %2539 = vmatprep.subr.mxu0 0.0
        %2540 = vmatpush1.msra.mxu0 %v2314
        %2541 = vmatprep.subr.mxu0 0.0
        %2542 = vmatpush1.msra.mxu0 %v2315
        %2543 = vmatprep.subr.mxu0 0.0
        %2544 = vmatpush1.msra.mxu0 %v2316
        %2545 = vmatprep.subr.mxu0 0.0
        %2546 = vmatpush1.msra.mxu0 %v2317
        %2547 = vmatprep.subr.mxu0 0.0
        %2548 = vmatpush1.msra.mxu0 %v2318
        %2549 = vmatprep.subr.mxu0 0.0
        %2550 = vmatpush1.msra.mxu0 %v2319
        %2551 = vmatprep.subr.mxu0 0.0
        %2552 = vmatpush1.msra.mxu0 %v2320
        %2553 = vmatprep.subr.mxu0 0.0
        %2554 = vmatpush1.msra.mxu0 %v2321
        %2555 = vmatprep.subr.mxu0 0.0
        %2556 = vmatpush1.msra.mxu0 %v2322
        %2557 = vmatprep.subr.mxu0 0.0
        %2558 = vmatpush1.msra.mxu0 %v2323
        %2559 = vmatprep.subr.mxu0 0.0
        %2560 = vmatpush1.msra.mxu0 %v2324
        %2561 = vmatprep.subr.mxu0 0.0
        %2562 = vmatpush1.msra.mxu0 %v2325
        %2563 = vmatprep.subr.mxu0 0.0
        %2564 = vmatpush1.msra.mxu0 %v2326
        %2565 = vmatprep.subr.mxu0 0.0
        %2566 = vmatpush1.msra.mxu0 %v2327
        %2567 = vmatprep.subr.mxu0 0.0
        %2568 = vmatpush1.msra.mxu0 %v2328
        %2569 = vmatprep.subr.mxu0 0.0
        %2570 = vmatpush1.msra.mxu0 %v2329
        %2571 = vmatprep.subr.mxu0 0.0
        %2572 = vmatpush1.msra.mxu0 %v2330
        %2573 = vmatprep.subr.mxu0 0.0
        %2574 = vmatpush1.msra.mxu0 %v2331
        %2575 = vmatprep.subr.mxu0 0.0
        %2576 = vmatpush1.msra.mxu0 %v2332
        %2577 = vmatprep.subr.mxu0 0.0
        %2578 = vmatpush1.msra.mxu0 %v2333
        %2579 = vmatprep.subr.mxu0 0.0
        %2580 = vmatpush1.msra.mxu0 %v2334
        %2581 = vmatprep.subr.mxu0 0.0
        %2582 = vmatpush1.msra.mxu0 %v2335
        %2583 = vmatprep.subr.mxu0 0.0
        %2584 = vmatpush1.msra.mxu0 %v2336
        %2585 = vmatprep.subr.mxu0 0.0
        %2586 = vmatpush1.msra.mxu0 %v2337
        %2587 = vmatprep.subr.mxu0 0.0
        %2588 = vmatpush1.msra.mxu0 %v2338
        %2589 = vmatprep.subr.mxu0 0.0
        %2590 = vmatpush1.msra.mxu0 %v2339
        %2591 = vmatprep.subr.mxu0 0.0
        %2592 = vmatpush1.msra.mxu0 %v2340
        %2593 = vmatprep.subr.mxu0 0.0
        %2594 = vmatpush1.msra.mxu0 %v2341
        %2595 = vmatprep.subr.mxu0 0.0
        %2596 = vmatpush1.msra.mxu0 %v2342
        %2597 = vmatprep.subr.mxu0 0.0
        %2598 = vmatpush1.msra.mxu0 %v2343
        %2599 = vmatprep.subr.mxu0 0.0
        %2600 = vmatpush1.msra.mxu0 %v2344
        %2601 = vmatprep.subr.mxu0 0.0
        %2602 = vmatpush1.msra.mxu0 %v2345
        %2603 = vmatprep.mubr.f32.mxu0 %v2212
        %2604 = vmatmul.mubr.f32.gmra.mrb[0].mxu0 %v2211
        %v2605 = vpop.f32.mrb[0].mxu0
        %v2606 = vadd.f32 %v2501, %v2605
        %v2607 = vpop.f32.mrb[0].mxu0
        %2608 = vmatprep.mubr.f32.mxu0 %v2221
        %2609 = vmatmul.mubr.f32.gmra.mrb[0].mxu0 %v2220
        %v2610 = vpop.f32.mrb[0].mxu0
        %v2611 = vadd.f32 %v2506, %v2610
        %v2612 = vpop.f32.mrb[0].mxu0
        %2613 = vmatprep.mubr.f32.mxu0 %v2230
        %2614 = vmatmul.mubr.f32.gmra.mrb[0].mxu0 %v2229
        %v2615 = vpop.f32.mrb[0].mxu0
        %v2616 = vadd.f32 %v2511, %v2615
        %v2617 = vpop.f32.mrb[0].mxu0
        %2618 = vmatprep.mubr.f32.mxu0 %v2239
        %2619 = vmatmul.mubr.f32.gmra.mrb[0].mxu0 %v2238
        %v2620 = vpop.f32.mrb[0].mxu0
        %v2621 = vadd.f32 %v2516, %v2620
        %v2622 = vpop.f32.mrb[0].mxu0
        %2623 = vmatprep.mubr.f32.mxu0 %v2248
        %2624 = vmatmul.mubr.f32.gmra.mrb[0].mxu0 %v2247
        %v2625 = vpop.f32.mrb[0].mxu0
        %v2626 = vadd.f32 %v2521, %v2625
        %v2627 = vpop.f32.mrb[0].mxu0
        %2628 = vmatprep.mubr.f32.mxu0 %v2257
        %2629 = vmatmul.mubr.f32.gmra.mrb[0].mxu0 %v2256
        %v2630 = vpop.f32.mrb[0].mxu0
        %v2631 = vadd.f32 %v2526, %v2630
        %v2632 = vpop.f32.mrb[0].mxu0
        %2633 = vmatprep.mubr.f32.mxu0 %v2266
        %2634 = vmatmul.mubr.f32.gmra.mrb[0].mxu0 %v2265
        %v2635 = vpop.f32.mrb[0].mxu0
        %v2636 = vadd.f32 %v2531, %v2635
        %v2637 = vpop.f32.mrb[0].mxu0
        %2638 = vmatprep.mubr.f32.mxu0 %v2275
        %2639 = vmatmul.mubr.f32.gmra.mrb[0].mxu0 %v2274
        %v2640 = vpop.f32.mrb[0].mxu0
        %v2641 = vadd.f32 %v2536, %v2640
        %v2642 = vpop.f32.mrb[0].mxu0
        %2643 = vdwg.mxu0
        %2644 = vmatprep.subr.mxu0 0.0
        %2645 = vmatpush1.msra.mxu0 %v2346
        %2646 = vmatprep.subr.mxu0 0.0
        %2647 = vmatpush1.msra.mxu0 %v2347
        %2648 = vmatprep.subr.mxu0 0.0
        %2649 = vmatpush1.msra.mxu0 %v2348
        %2650 = vmatprep.subr.mxu0 0.0
        %2651 = vmatpush1.msra.mxu0 %v2349
        %2652 = vmatprep.subr.mxu0 0.0
        %2653 = vmatpush1.msra.mxu0 %v2350
        %2654 = vmatprep.subr.mxu0 0.0
        %2655 = vmatpush1.msra.mxu0 %v2351
        %2656 = vmatprep.subr.mxu0 0.0
        %2657 = vmatpush1.msra.mxu0 %v2352
        %2658 = vmatprep.subr.mxu0 0.0
        %2659 = vmatpush1.msra.mxu0 %v2353
        %2660 = vmatprep.subr.mxu0 0.0
        %2661 = vmatpush1.msra.mxu0 %v2354
        %2662 = vmatprep.subr.mxu0 0.0
        %2663 = vmatpush1.msra.mxu0 %v2355
        %2664 = vmatprep.subr.mxu0 0.0
        %2665 = vmatpush1.msra.mxu0 %v2356
        %2666 = vmatprep.subr.mxu0 0.0
        %2667 = vmatpush1.msra.mxu0 %v2357
        %2668 = vmatprep.subr.mxu0 0.0
        %2669 = vmatpush1.msra.mxu0 %v2358
        %2670 = vmatprep.subr.mxu0 0.0
        %2671 = vmatpush1.msra.mxu0 %v2359
        %2672 = vmatprep.subr.mxu0 0.0
        %2673 = vmatpush1.msra.mxu0 %v2360
        %2674 = vmatprep.subr.mxu0 0.0
        %2675 = vmatpush1.msra.mxu0 %v2361
        %2676 = vmatprep.subr.mxu0 0.0
        %2677 = vmatpush1.msra.mxu0 %v2362
        %2678 = vmatprep.subr.mxu0 0.0
        %2679 = vmatpush1.msra.mxu0 %v2363
        %2680 = vmatprep.subr.mxu0 0.0
        %2681 = vmatpush1.msra.mxu0 %v2364
        %2682 = vmatprep.subr.mxu0 0.0
        %2683 = vmatpush1.msra.mxu0 %v2365
        %2684 = vmatprep.subr.mxu0 0.0
        %2685 = vmatpush1.msra.mxu0 %v2366
        %2686 = vmatprep.subr.mxu0 0.0
        %2687 = vmatpush1.msra.mxu0 %v2367
        %2688 = vmatprep.subr.mxu0 0.0
        %2689 = vmatpush1.msra.mxu0 %v2368
        %2690 = vmatprep.subr.mxu0 0.0
        %2691 = vmatpush1.msra.mxu0 %v2369
        %2692 = vmatprep.subr.mxu0 0.0
        %2693 = vmatpush1.msra.mxu0 %v2370
        %2694 = vmatprep.subr.mxu0 0.0
        %2695 = vmatpush1.msra.mxu0 %v2371
        %2696 = vmatprep.subr.mxu0 0.0
        %2697 = vmatpush1.msra.mxu0 %v2372
        %2698 = vmatprep.subr.mxu0 0.0
        %2699 = vmatpush1.msra.mxu0 %v2373
        %2700 = vmatprep.subr.mxu0 0.0
        %2701 = vmatpush1.msra.mxu0 %v2374
        %2702 = vmatprep.subr.mxu0 0.0
        %2703 = vmatpush1.msra.mxu0 %v2375
        %2704 = vmatprep.subr.mxu0 0.0
        %2705 = vmatpush1.msra.mxu0 %v2376
        %2706 = vmatprep.subr.mxu0 0.0
        %2707 = vmatpush1.msra.mxu0 %v2377
        %2708 = vmatprep.mubr.f32.mxu0 %v2214
        %2709 = vmatmul.mubr.f32.gmra.mrb[0].mxu0 %v2213
        %v2710 = vpop.f32.mrb[0].mxu0
        %v2711 = vadd.f32 %v2606, %v2710
        %v2712 = vpop.f32.mrb[0].mxu0
        %2713 = vmatprep.mubr.f32.mxu0 %v2223
        %2714 = vmatmul.mubr.f32.gmra.mrb[0].mxu0 %v2222
        %v2715 = vpop.f32.mrb[0].mxu0
        %v2716 = vadd.f32 %v2611, %v2715
        %v2717 = vpop.f32.mrb[0].mxu0
        %2718 = vmatprep.mubr.f32.mxu0 %v2232
        %2719 = vmatmul.mubr.f32.gmra.mrb[0].mxu0 %v2231
        %v2720 = vpop.f32.mrb[0].mxu0
        %v2721 = vadd.f32 %v2616, %v2720
        %v2722 = vpop.f32.mrb[0].mxu0
        %2723 = vmatprep.mubr.f32.mxu0 %v2241
        %2724 = vmatmul.mubr.f32.gmra.mrb[0].mxu0 %v2240
        %v2725 = vpop.f32.mrb[0].mxu0
        %v2726 = vadd.f32 %v2621, %v2725
        %v2727 = vpop.f32.mrb[0].mxu0
        %2728 = vmatprep.mubr.f32.mxu0 %v2250
        %2729 = vmatmul.mubr.f32.gmra.mrb[0].mxu0 %v2249
        %v2730 = vpop.f32.mrb[0].mxu0
        %v2731 = vadd.f32 %v2626, %v2730
        %v2732 = vpop.f32.mrb[0].mxu0
        %2733 = vmatprep.mubr.f32.mxu0 %v2259
        %2734 = vmatmul.mubr.f32.gmra.mrb[0].mxu0 %v2258
        %v2735 = vpop.f32.mrb[0].mxu0
        %v2736 = vadd.f32 %v2631, %v2735
        %v2737 = vpop.f32.mrb[0].mxu0
        %2738 = vmatprep.mubr.f32.mxu0 %v2268
        %2739 = vmatmul.mubr.f32.gmra.mrb[0].mxu0 %v2267
        %v2740 = vpop.f32.mrb[0].mxu0
        %v2741 = vadd.f32 %v2636, %v2740
        %v2742 = vpop.f32.mrb[0].mxu0
        %2743 = vmatprep.mubr.f32.mxu0 %v2277
        %2744 = vmatmul.mubr.f32.gmra.mrb[0].mxu0 %v2276
        %v2745 = vpop.f32.mrb[0].mxu0
        %v2746 = vadd.f32 %v2641, %v2745
        %v2747 = vpop.f32.mrb[0].mxu0
        %2748 = vdwg.mxu0
        %2749 = vmatprep.subr.mxu0 0.0
        %2750 = vmatpush1.msra.mxu0 %v2378
        %2751 = vmatprep.subr.mxu0 0.0
        %2752 = vmatpush1.msra.mxu0 %v2379
        %2753 = vmatprep.subr.mxu0 0.0
        %2754 = vmatpush1.msra.mxu0 %v2380
        %2755 = vmatprep.subr.mxu0 0.0
        %2756 = vmatpush1.msra.mxu0 %v2381
        %2757 = vmatprep.subr.mxu0 0.0
        %2758 = vmatpush1.msra.mxu0 %v2382
        %2759 = vmatprep.subr.mxu0 0.0
        %2760 = vmatpush1.msra.mxu0 %v2383
        %2761 = vmatprep.subr.mxu0 0.0
        %2762 = vmatpush1.msra.mxu0 %v2384
        %2763 = vmatprep.subr.mxu0 0.0
        %2764 = vmatpush1.msra.mxu0 %v2385
        %2765 = vmatprep.subr.mxu0 0.0
        %2766 = vmatpush1.msra.mxu0 %v2386
        %2767 = vmatprep.subr.mxu0 0.0
        %2768 = vmatpush1.msra.mxu0 %v2387
        %2769 = vmatprep.subr.mxu0 0.0
        %2770 = vmatpush1.msra.mxu0 %v2388
        %2771 = vmatprep.subr.mxu0 0.0
        %2772 = vmatpush1.msra.mxu0 %v2389
        %2773 = vmatprep.subr.mxu0 0.0
        %2774 = vmatpush1.msra.mxu0 %v2390
        %2775 = vmatprep.subr.mxu0 0.0
        %2776 = vmatpush1.msra.mxu0 %v2391
        %2777 = vmatprep.subr.mxu0 0.0
        %2778 = vmatpush1.msra.mxu0 %v2392
        %2779 = vmatprep.subr.mxu0 0.0
        %2780 = vmatpush1.msra.mxu0 %v2393
        %2781 = vmatprep.subr.mxu0 0.0
        %2782 = vmatpush1.msra.mxu0 %v2394
        %2783 = vmatprep.subr.mxu0 0.0
        %2784 = vmatpush1.msra.mxu0 %v2395
        %2785 = vmatprep.subr.mxu0 0.0
        %2786 = vmatpush1.msra.mxu0 %v2396
        %2787 = vmatprep.subr.mxu0 0.0
        %2788 = vmatpush1.msra.mxu0 %v2397
        %2789 = vmatprep.subr.mxu0 0.0
        %2790 = vmatpush1.msra.mxu0 %v2398
        %2791 = vmatprep.subr.mxu0 0.0
        %2792 = vmatpush1.msra.mxu0 %v2399
        %2793 = vmatprep.subr.mxu0 0.0
        %2794 = vmatpush1.msra.mxu0 %v2400
        %2795 = vmatprep.subr.mxu0 0.0
        %2796 = vmatpush1.msra.mxu0 %v2401
        %2797 = vmatprep.subr.mxu0 0.0
        %2798 = vmatpush1.msra.mxu0 %v2402
        %2799 = vmatprep.subr.mxu0 0.0
        %2800 = vmatpush1.msra.mxu0 %v2403
        %2801 = vmatprep.subr.mxu0 0.0
        %2802 = vmatpush1.msra.mxu0 %v2404
        %2803 = vmatprep.subr.mxu0 0.0
        %2804 = vmatpush1.msra.mxu0 %v2405
        %2805 = vmatprep.subr.mxu0 0.0
        %2806 = vmatpush1.msra.mxu0 %v2406
        %2807 = vmatprep.subr.mxu0 0.0
        %2808 = vmatpush1.msra.mxu0 %v2407
        %2809 = vmatprep.subr.mxu0 0.0
        %2810 = vmatpush1.msra.mxu0 %v2408
        %2811 = vmatprep.subr.mxu0 0.0
        %2812 = vmatpush1.msra.mxu0 %v2409
        %2813 = vmatprep.mubr.f32.mxu0 %v2216
        %2814 = vmatmul.mubr.f32.gmra.mrb[0].mxu0 %v2215
        %v2815 = vpop.f32.mrb[0].mxu0
        %v2816 = vadd.f32 %v2711, %v2815
        %v2817 = vpop.f32.mrb[0].mxu0
        %2818 = vmatprep.mubr.f32.mxu0 %v2225
        %2819 = vmatmul.mubr.f32.gmra.mrb[0].mxu0 %v2224
        %v2820 = vpop.f32.mrb[0].mxu0
        %v2821 = vadd.f32 %v2716, %v2820
        %v2822 = vpop.f32.mrb[0].mxu0
        %2823 = vmatprep.mubr.f32.mxu0 %v2234
        %2824 = vmatmul.mubr.f32.gmra.mrb[0].mxu0 %v2233
        %v2825 = vpop.f32.mrb[0].mxu0
        %v2826 = vadd.f32 %v2721, %v2825
        %v2827 = vpop.f32.mrb[0].mxu0
        %2828 = vmatprep.mubr.f32.mxu0 %v2243
        %2829 = vmatmul.mubr.f32.gmra.mrb[0].mxu0 %v2242
        %v2830 = vpop.f32.mrb[0].mxu0
        %v2831 = vadd.f32 %v2726, %v2830
        %v2832 = vpop.f32.mrb[0].mxu0
        %2833 = vmatprep.mubr.f32.mxu0 %v2252
        %2834 = vmatmul.mubr.f32.gmra.mrb[0].mxu0 %v2251
        %v2835 = vpop.f32.mrb[0].mxu0
        %v2836 = vadd.f32 %v2731, %v2835
        %v2837 = vpop.f32.mrb[0].mxu0
        %2838 = vmatprep.mubr.f32.mxu0 %v2261
        %2839 = vmatmul.mubr.f32.gmra.mrb[0].mxu0 %v2260
        %v2840 = vpop.f32.mrb[0].mxu0
        %v2841 = vadd.f32 %v2736, %v2840
        %v2842 = vpop.f32.mrb[0].mxu0
        %2843 = vmatprep.mubr.f32.mxu0 %v2270
        %2844 = vmatmul.mubr.f32.gmra.mrb[0].mxu0 %v2269
        %v2845 = vpop.f32.mrb[0].mxu0
        %v2846 = vadd.f32 %v2741, %v2845
        %v2847 = vpop.f32.mrb[0].mxu0
        %2848 = vmatprep.mubr.f32.mxu0 %v2279
        %2849 = vmatmul.mubr.f32.gmra.mrb[0].mxu0 %v2278
        %v2850 = vpop.f32.mrb[0].mxu0
        %v2851 = vadd.f32 %v2746, %v2850
        %v2852 = vpop.f32.mrb[0].mxu0
        %2853 = vdwg.mxu0
        %2854 = vmatprep.subr.mxu0 0.0
        %2855 = vmatpush1.msra.mxu0 %v2410
        %2856 = vmatprep.subr.mxu0 0.0
        %2857 = vmatpush1.msra.mxu0 %v2411
        %2858 = vmatprep.subr.mxu0 0.0
        %2859 = vmatpush1.msra.mxu0 %v2412
        %2860 = vmatprep.subr.mxu0 0.0
        %2861 = vmatpush1.msra.mxu0 %v2413
        %2862 = vmatprep.subr.mxu0 0.0
        %2863 = vmatpush1.msra.mxu0 %v2414
        %2864 = vmatprep.subr.mxu0 0.0
        %2865 = vmatpush1.msra.mxu0 %v2415
        %2866 = vmatprep.subr.mxu0 0.0
        %2867 = vmatpush1.msra.mxu0 %v2416
        %2868 = vmatprep.subr.mxu0 0.0
        %2869 = vmatpush1.msra.mxu0 %v2417
        %2870 = vmatprep.subr.mxu0 0.0
        %2871 = vmatpush1.msra.mxu0 %v2418
        %2872 = vmatprep.subr.mxu0 0.0
        %2873 = vmatpush1.msra.mxu0 %v2419
        %2874 = vmatprep.subr.mxu0 0.0
        %2875 = vmatpush1.msra.mxu0 %v2420
        %2876 = vmatprep.subr.mxu0 0.0
        %2877 = vmatpush1.msra.mxu0 %v2421
        %2878 = vmatprep.subr.mxu0 0.0
        %2879 = vmatpush1.msra.mxu0 %v2422
        %2880 = vmatprep.subr.mxu0 0.0
        %2881 = vmatpush1.msra.mxu0 %v2423
        %2882 = vmatprep.subr.mxu0 0.0
        %2883 = vmatpush1.msra.mxu0 %v2424
        %2884 = vmatprep.subr.mxu0 0.0
        %2885 = vmatpush1.msra.mxu0 %v2425
        %2886 = vmatprep.subr.mxu0 0.0
        %2887 = vmatpush1.msra.mxu0 0.0
        %2888 = vmatprep.subr.mxu0 0.0
        %2889 = vmatpush1.msra.mxu0 0.0
        %2890 = vmatprep.subr.mxu0 0.0
        %2891 = vmatpush1.msra.mxu0 0.0
        %2892 = vmatprep.subr.mxu0 0.0
        %2893 = vmatpush1.msra.mxu0 0.0
        %2894 = vmatprep.subr.mxu0 0.0
        %2895 = vmatpush1.msra.mxu0 0.0
        %2896 = vmatprep.subr.mxu0 0.0
        %2897 = vmatpush1.msra.mxu0 0.0
        %2898 = vmatprep.subr.mxu0 0.0
        %2899 = vmatpush1.msra.mxu0 0.0
        %2900 = vmatprep.subr.mxu0 0.0
        %2901 = vmatpush1.msra.mxu0 0.0
        %2902 = vmatprep.subr.mxu0 0.0
        %2903 = vmatpush1.msra.mxu0 0.0
        %2904 = vmatprep.subr.mxu0 0.0
        %2905 = vmatpush1.msra.mxu0 0.0
        %2906 = vmatprep.subr.mxu0 0.0
        %2907 = vmatpush1.msra.mxu0 0.0
        %2908 = vmatprep.subr.mxu0 0.0
        %2909 = vmatpush1.msra.mxu0 0.0
        %2910 = vmatprep.subr.mxu0 0.0
        %2911 = vmatpush1.msra.mxu0 0.0
        %2912 = vmatprep.subr.mxu0 0.0
        %2913 = vmatpush1.msra.mxu0 0.0
        %2914 = vmatprep.subr.mxu0 0.0
        %2915 = vmatpush1.msra.mxu0 0.0
        %2916 = vmatprep.subr.mxu0 0.0
        %2917 = vmatpush1.msra.mxu0 0.0
        %2918 = vmatprep.mubr.f32.mxu0 0.0
        %2919 = vmatmul.mubr.f32.gmra.mrb[0].mxu0 %v2217
        %v2920 = vpop.f32.mrb[0].mxu0
        %v2921 = vadd.f32 %v2816, %v2920
        %v2922 = vpop.f32.mrb[0].mxu0
        %2923 = vmatprep.mubr.f32.mxu0 0.0
        %2924 = vmatmul.mubr.f32.gmra.mrb[0].mxu0 %v2226
        %v2925 = vpop.f32.mrb[0].mxu0
        %v2926 = vadd.f32 %v2821, %v2925
        %v2927 = vpop.f32.mrb[0].mxu0
        %2928 = vmatprep.mubr.f32.mxu0 0.0
        %2929 = vmatmul.mubr.f32.gmra.mrb[0].mxu0 %v2235
        %v2930 = vpop.f32.mrb[0].mxu0
        %v2931 = vadd.f32 %v2826, %v2930
        %v2932 = vpop.f32.mrb[0].mxu0
        %2933 = vmatprep.mubr.f32.mxu0 0.0
        %2934 = vmatmul.mubr.f32.gmra.mrb[0].mxu0 %v2244
        %v2935 = vpop.f32.mrb[0].mxu0
        %v2936 = vadd.f32 %v2831, %v2935
        %v2937 = vpop.f32.mrb[0].mxu0
        %2938 = vmatprep.mubr.f32.mxu0 0.0
        %2939 = vmatmul.mubr.f32.gmra.mrb[0].mxu0 %v2253
        %v2940 = vpop.f32.mrb[0].mxu0
        %v2941 = vadd.f32 %v2836, %v2940
        %v2942 = vpop.f32.mrb[0].mxu0
        %2943 = vmatprep.mubr.f32.mxu0 0.0
        %2944 = vmatmul.mubr.f32.gmra.mrb[0].mxu0 %v2262
        %v2945 = vpop.f32.mrb[0].mxu0
        %v2946 = vadd.f32 %v2841, %v2945
        %v2947 = vpop.f32.mrb[0].mxu0
        %2948 = vmatprep.mubr.f32.mxu0 0.0
        %2949 = vmatmul.mubr.f32.gmra.mrb[0].mxu0 %v2271
        %v2950 = vpop.f32.mrb[0].mxu0
        %v2951 = vadd.f32 %v2846, %v2950
        %v2952 = vpop.f32.mrb[0].mxu0
        %2953 = vmatprep.mubr.f32.mxu0 0.0
        %2954 = vmatmul.mubr.f32.gmra.mrb[0].mxu0 %v2280
        %v2955 = vpop.f32.mrb[0].mxu0
        %v2956 = vadd.f32 %v2851, %v2955
        %v2957 = vpop.f32.mrb[0].mxu0
        %2958 = vdwg.mxu0
        %vm2959 = vcmp.gt.f32.partialorder %v2921, 0.0
        %vm2960 = vcmp.gt.f32.partialorder %v2926, 0.0
        %vm2961 = vcmp.gt.f32.partialorder %v2931, 0.0
        %vm2962 = vcmp.gt.f32.partialorder %v2936, 0.0
        %vm2963 = vcmp.gt.f32.partialorder %v2941, 0.0
        %vm2964 = vcmp.gt.f32.partialorder %v2946, 0.0
        %vm2965 = vcmp.gt.f32.partialorder %v2951, 0.0
        %vm2966 = vcmp.gt.f32.partialorder %v2956, 0.0
        %v2967 = vmul.f32 %v2921, 0.2
        %v2968 = vmul.f32 %v2926, 0.2
        %v2969 = vmul.f32 %v2931, 0.2
        %v2970 = vmul.f32 %v2936, 0.2
        %v2971 = vmul.f32 %v2941, 0.2
        %v2972 = vmul.f32 %v2946, 0.2
        %v2973 = vmul.f32 %v2951, 0.2
        %v2974 = vmul.f32 %v2956, 0.2
        %v2975 = vsel %vm2959, %v2921, %v2967
        %v2976 = vsel %vm2960, %v2926, %v2968
        %v2977 = vsel %vm2961, %v2931, %v2969
        %v2978 = vsel %vm2962, %v2936, %v2970
        %v2979 = vsel %vm2963, %v2941, %v2971
        %v2980 = vsel %vm2964, %v2946, %v2972
        %v2981 = vsel %vm2965, %v2951, %v2973
        %v2982 = vsel %vm2966, %v2956, %v2974
        %2983 = vst [vmem:[%s197 + $0x1] sm:$0xff] %v2975
        %2984 = vst [vmem:[%s197 + $0x11] sm:$0xff] %v2976
        %2985 = vst [vmem:[%s197 + $0x21] sm:$0xff] %v2977
        %2986 = vst [vmem:[%s197 + $0x31] sm:$0xff] %v2978
        %2987 = vst [vmem:[%s197 + $0x41] sm:$0xff] %v2979
        %2988 = vst [vmem:[%s197 + $0x51] sm:$0xff] %v2980
        %2989 = vst [vmem:[%s197 + $0x61] sm:$0xff] %v2981
        %2990 = vst [vmem:[%s197 + $0x71] sm:$0xff] %v2982
        %v2991 = vld [vmem:[#allocation2] sm:$0xff]
        %v2992 = vld [vmem:[#allocation2 + $0x10] sm:$0xff]
        %v2993 = vld [vmem:[#allocation2 + $0x20] sm:$0xff]
        %v2994 = vld [vmem:[#allocation2 + $0x30] sm:$0xff]
        %v2995 = vld [vmem:[#allocation2 + $0x40] sm:$0xff]
        %v2996 = vld [vmem:[#allocation2 + $0x50] sm:$0xff]
        %v2997 = vld [vmem:[#allocation2 + $0x60] sm:$0xff]
        %v2998 = vld [vmem:[#allocation2 + $0x70] sm:$0xff]
        %2999 = vst [vmem:[#allocation3] sm:$0xff] %v2991
        %3000 = vst [vmem:[#allocation3 + $0x48] sm:$0xff] %v2992
        %3001 = vst [vmem:[#allocation3 + $0x90] sm:$0xff] %v2993
        %3002 = vst [vmem:[#allocation3 + $0xd8] sm:$0xff] %v2994
        %3003 = vst [vmem:[#allocation3 + $0x120] sm:$0xff] %v2995
        %3004 = vst [vmem:[#allocation3 + $0x168] sm:$0xff] %v2996
        %3005 = vst [vmem:[#allocation3 + $0x1b0] sm:$0xff] %v2997
        %3006 = vst [vmem:[#allocation3 + $0x1f8] sm:$0xff] %v2998
        %v3007 = vld [vmem:[#allocation2 + $0x1] sm:$0xff]
        %v3008 = vld [vmem:[#allocation2 + $0x11] sm:$0xff]
        %v3009 = vld [vmem:[#allocation2 + $0x21] sm:$0xff]
        %v3010 = vld [vmem:[#allocation2 + $0x31] sm:$0xff]
        %v3011 = vld [vmem:[#allocation2 + $0x41] sm:$0xff]
        %v3012 = vld [vmem:[#allocation2 + $0x51] sm:$0xff]
        %v3013 = vld [vmem:[#allocation2 + $0x61] sm:$0xff]
        %v3014 = vld [vmem:[#allocation2 + $0x71] sm:$0xff]
        %3015 = vst [vmem:[#allocation3 + $0x8] sm:$0xff] %v3007
        %3016 = vst [vmem:[#allocation3 + $0x50] sm:$0xff] %v3008
        %3017 = vst [vmem:[#allocation3 + $0x98] sm:$0xff] %v3009
        %3018 = vst [vmem:[#allocation3 + $0xe0] sm:$0xff] %v3010
        %3019 = vst [vmem:[#allocation3 + $0x128] sm:$0xff] %v3011
        %3020 = vst [vmem:[#allocation3 + $0x170] sm:$0xff] %v3012
        %3021 = vst [vmem:[#allocation3 + $0x1b8] sm:$0xff] %v3013
        %3022 = vst [vmem:[#allocation3 + $0x200] sm:$0xff] %v3014
        %v3023 = vld [vmem:[#allocation2 + $0x2] sm:$0xff]
        %v3024 = vld [vmem:[#allocation2 + $0x12] sm:$0xff]
        %v3025 = vld [vmem:[#allocation2 + $0x22] sm:$0xff]
        %v3026 = vld [vmem:[#allocation2 + $0x32] sm:$0xff]
        %v3027 = vld [vmem:[#allocation2 + $0x42] sm:$0xff]
        %v3028 = vld [vmem:[#allocation2 + $0x52] sm:$0xff]
        %v3029 = vld [vmem:[#allocation2 + $0x62] sm:$0xff]
        %v3030 = vld [vmem:[#allocation2 + $0x72] sm:$0xff]
        %3031 = vst [vmem:[#allocation3 + $0x10] sm:$0xff] %v3023
        %3032 = vst [vmem:[#allocation3 + $0x58] sm:$0xff] %v3024
        %3033 = vst [vmem:[#allocation3 + $0xa0] sm:$0xff] %v3025
        %3034 = vst [vmem:[#allocation3 + $0xe8] sm:$0xff] %v3026
        %3035 = vst [vmem:[#allocation3 + $0x130] sm:$0xff] %v3027
        %3036 = vst [vmem:[#allocation3 + $0x178] sm:$0xff] %v3028
        %3037 = vst [vmem:[#allocation3 + $0x1c0] sm:$0xff] %v3029
        %3038 = vst [vmem:[#allocation3 + $0x208] sm:$0xff] %v3030
        %v3039 = vld [vmem:[%s197] sm:$0xff]
        %v3040 = vld [vmem:[%s197 + $0x10] sm:$0xff]
        %v3041 = vld [vmem:[%s197 + $0x20] sm:$0xff]
        %v3042 = vld [vmem:[%s197 + $0x30] sm:$0xff]
        %v3043 = vld [vmem:[%s197 + $0x40] sm:$0xff]
        %v3044 = vld [vmem:[%s197 + $0x50] sm:$0xff]
        %v3045 = vld [vmem:[%s197 + $0x60] sm:$0xff]
        %v3046 = vld [vmem:[%s197 + $0x70] sm:$0xff]
        %3047 = vst [vmem:[#allocation3 + $0x18] sm:$0xff] %v3039
        %3048 = vst [vmem:[#allocation3 + $0x60] sm:$0xff] %v3040
        %3049 = vst [vmem:[#allocation3 + $0xa8] sm:$0xff] %v3041
        %3050 = vst [vmem:[#allocation3 + $0xf0] sm:$0xff] %v3042
        %3051 = vst [vmem:[#allocation3 + $0x138] sm:$0xff] %v3043
        %3052 = vst [vmem:[#allocation3 + $0x180] sm:$0xff] %v3044
        %3053 = vst [vmem:[#allocation3 + $0x1c8] sm:$0xff] %v3045
        %3054 = vst [vmem:[#allocation3 + $0x210] sm:$0xff] %v3046
        %v3055 = vld [vmem:[%s197 + $0x1] sm:$0xff]
        %v3056 = vld [vmem:[%s197 + $0x11] sm:$0xff]
        %v3057 = vld [vmem:[%s197 + $0x21] sm:$0xff]
        %v3058 = vld [vmem:[%s197 + $0x31] sm:$0xff]
        %v3059 = vld [vmem:[%s197 + $0x41] sm:$0xff]
        %v3060 = vld [vmem:[%s197 + $0x51] sm:$0xff]
        %v3061 = vld [vmem:[%s197 + $0x61] sm:$0xff]
        %v3062 = vld [vmem:[%s197 + $0x71] sm:$0xff]
        %3063 = vst [vmem:[#allocation3 + $0x20] sm:$0xff] %v3055
        %3064 = vst [vmem:[#allocation3 + $0x68] sm:$0xff] %v3056
        %3065 = vst [vmem:[#allocation3 + $0xb0] sm:$0xff] %v3057
        %3066 = vst [vmem:[#allocation3 + $0xf8] sm:$0xff] %v3058
        %3067 = vst [vmem:[#allocation3 + $0x140] sm:$0xff] %v3059
        %3068 = vst [vmem:[#allocation3 + $0x188] sm:$0xff] %v3060
        %3069 = vst [vmem:[#allocation3 + $0x1d0] sm:$0xff] %v3061
        %3070 = vst [vmem:[#allocation3 + $0x218] sm:$0xff] %v3062
        %v3071 = vld [vmem:[%s197 + $0x2] sm:$0xff]
        %v3072 = vld [vmem:[%s197 + $0x12] sm:$0xff]
        %v3073 = vld [vmem:[%s197 + $0x22] sm:$0xff]
        %v3074 = vld [vmem:[%s197 + $0x32] sm:$0xff]
        %v3075 = vld [vmem:[%s197 + $0x42] sm:$0xff]
        %v3076 = vld [vmem:[%s197 + $0x52] sm:$0xff]
        %v3077 = vld [vmem:[%s197 + $0x62] sm:$0xff]
        %v3078 = vld [vmem:[%s197 + $0x72] sm:$0xff]
        %3079 = vst [vmem:[#allocation3 + $0x28] sm:$0xff] %v3071
        %3080 = vst [vmem:[#allocation3 + $0x70] sm:$0xff] %v3072
        %3081 = vst [vmem:[#allocation3 + $0xb8] sm:$0xff] %v3073
        %3082 = vst [vmem:[#allocation3 + $0x100] sm:$0xff] %v3074
        %3083 = vst [vmem:[#allocation3 + $0x148] sm:$0xff] %v3075
        %3084 = vst [vmem:[#allocation3 + $0x190] sm:$0xff] %v3076
        %3085 = vst [vmem:[#allocation3 + $0x1d8] sm:$0xff] %v3077
        %3086 = vst [vmem:[#allocation3 + $0x220] sm:$0xff] %v3078
        %v3087 = vld [vmem:[%s302] sm:$0xff]
        %v3088 = vld [vmem:[%s302 + $0x10] sm:$0xff]
        %v3089 = vld [vmem:[%s302 + $0x20] sm:$0xff]
        %v3090 = vld [vmem:[%s302 + $0x30] sm:$0xff]
        %v3091 = vld [vmem:[%s302 + $0x40] sm:$0xff]
        %v3092 = vld [vmem:[%s302 + $0x50] sm:$0xff]
        %v3093 = vld [vmem:[%s302 + $0x60] sm:$0xff]
        %v3094 = vld [vmem:[%s302 + $0x70] sm:$0xff]
        %3095 = vst [vmem:[#allocation3 + $0x30] sm:$0xff] %v3087
        %3096 = vst [vmem:[#allocation3 + $0x78] sm:$0xff] %v3088
        %3097 = vst [vmem:[#allocation3 + $0xc0] sm:$0xff] %v3089
        %3098 = vst [vmem:[#allocation3 + $0x108] sm:$0xff] %v3090
        %3099 = vst [vmem:[#allocation3 + $0x150] sm:$0xff] %v3091
        %3100 = vst [vmem:[#allocation3 + $0x198] sm:$0xff] %v3092
        %3101 = vst [vmem:[#allocation3 + $0x1e0] sm:$0xff] %v3093
        %3102 = vst [vmem:[#allocation3 + $0x228] sm:$0xff] %v3094
        %v3103 = vld [vmem:[%s302 + $0x1] sm:$0xff]
        %v3104 = vld [vmem:[%s302 + $0x11] sm:$0xff]
        %v3105 = vld [vmem:[%s302 + $0x21] sm:$0xff]
        %v3106 = vld [vmem:[%s302 + $0x31] sm:$0xff]
        %v3107 = vld [vmem:[%s302 + $0x41] sm:$0xff]
        %v3108 = vld [vmem:[%s302 + $0x51] sm:$0xff]
        %v3109 = vld [vmem:[%s302 + $0x61] sm:$0xff]
        %v3110 = vld [vmem:[%s302 + $0x71] sm:$0xff]
        %3111 = vst [vmem:[#allocation3 + $0x38] sm:$0xff] %v3103
        %3112 = vst [vmem:[#allocation3 + $0x80] sm:$0xff] %v3104
        %3113 = vst [vmem:[#allocation3 + $0xc8] sm:$0xff] %v3105
        %3114 = vst [vmem:[#allocation3 + $0x110] sm:$0xff] %v3106
        %3115 = vst [vmem:[#allocation3 + $0x158] sm:$0xff] %v3107
        %3116 = vst [vmem:[#allocation3 + $0x1a0] sm:$0xff] %v3108
        %3117 = vst [vmem:[#allocation3 + $0x1e8] sm:$0xff] %v3109
        %3118 = vst [vmem:[#allocation3 + $0x230] sm:$0xff] %v3110
        %v3119 = vld [vmem:[%s302 + $0x2] sm:$0xff]
        %v3120 = vld [vmem:[%s302 + $0x12] sm:$0xff]
        %v3121 = vld [vmem:[%s302 + $0x22] sm:$0xff]
        %v3122 = vld [vmem:[%s302 + $0x32] sm:$0xff]
        %v3123 = vld [vmem:[%s302 + $0x42] sm:$0xff]
        %v3124 = vld [vmem:[%s302 + $0x52] sm:$0xff]
        %v3125 = vld [vmem:[%s302 + $0x62] sm:$0xff]
        %v3126 = vld [vmem:[%s302 + $0x72] sm:$0xff]
        %3127 = vst [vmem:[#allocation3 + $0x40] sm:$0xff] %v3119
        %3128 = vst [vmem:[#allocation3 + $0x88] sm:$0xff] %v3120
        %3129 = vst [vmem:[#allocation3 + $0xd0] sm:$0xff] %v3121
        %3130 = vst [vmem:[#allocation3 + $0x118] sm:$0xff] %v3122
        %3131 = vst [vmem:[#allocation3 + $0x160] sm:$0xff] %v3123
        %3132 = vst [vmem:[#allocation3 + $0x1a8] sm:$0xff] %v3124
        %3133 = vst [vmem:[#allocation3 + $0x1f0] sm:$0xff] %v3125
        %3134 = vst [vmem:[#allocation3 + $0x238] sm:$0xff] %v3126
        %v3135 = vld [vmem:[#allocation3] sm:$0xff]
        %v3136 = vld [vmem:[#allocation3 + $0x8] sm:$0xff]
        %v3137 = vld [vmem:[#allocation3 + $0x10] sm:$0xff]
        %v3138 = vld [vmem:[#allocation3 + $0x18] sm:$0xff]
        %v3139 = vld [vmem:[#allocation3 + $0x20] sm:$0xff]
        %v3140 = vld [vmem:[#allocation3 + $0x28] sm:$0xff]
        %v3141 = vld [vmem:[#allocation3 + $0x30] sm:$0xff]
        %v3142 = vld [vmem:[#allocation3 + $0x38] sm:$0xff]
        %v3143 = vld [vmem:[#allocation3 + $0x40] sm:$0xff]
        %v3144 = vld [vmem:[#allocation3 + $0x48] sm:$0xff]
        %v3145 = vld [vmem:[#allocation3 + $0x50] sm:$0xff]
        %v3146 = vld [vmem:[#allocation3 + $0x58] sm:$0xff]
        %v3147 = vld [vmem:[#allocation3 + $0x60] sm:$0xff]
        %v3148 = vld [vmem:[#allocation3 + $0x68] sm:$0xff]
        %v3149 = vld [vmem:[#allocation3 + $0x70] sm:$0xff]
        %v3150 = vld [vmem:[#allocation3 + $0x78] sm:$0xff]
        %v3151 = vld [vmem:[#allocation3 + $0x80] sm:$0xff]
        %v3152 = vld [vmem:[#allocation3 + $0x88] sm:$0xff]
        %v3153 = vld [vmem:[#allocation3 + $0x90] sm:$0xff]
        %v3154 = vld [vmem:[#allocation3 + $0x98] sm:$0xff]
        %v3155 = vld [vmem:[#allocation3 + $0xa0] sm:$0xff]
        %v3156 = vld [vmem:[#allocation3 + $0xa8] sm:$0xff]
        %v3157 = vld [vmem:[#allocation3 + $0xb0] sm:$0xff]
        %v3158 = vld [vmem:[#allocation3 + $0xb8] sm:$0xff]
        %v3159 = vld [vmem:[#allocation3 + $0xc0] sm:$0xff]
        %v3160 = vld [vmem:[#allocation3 + $0xc8] sm:$0xff]
        %v3161 = vld [vmem:[#allocation3 + $0xd0] sm:$0xff]
        %v3162 = vld [vmem:[#allocation3 + $0xd8] sm:$0xff]
        %v3163 = vld [vmem:[#allocation3 + $0xe0] sm:$0xff]
        %v3164 = vld [vmem:[#allocation3 + $0xe8] sm:$0xff]
        %v3165 = vld [vmem:[#allocation3 + $0xf0] sm:$0xff]
        %v3166 = vld [vmem:[#allocation3 + $0xf8] sm:$0xff]
        %v3167 = vld [vmem:[#allocation3 + $0x100] sm:$0xff]
        %v3168 = vld [vmem:[#allocation3 + $0x108] sm:$0xff]
        %v3169 = vld [vmem:[#allocation3 + $0x110] sm:$0xff]
        %v3170 = vld [vmem:[#allocation3 + $0x118] sm:$0xff]
        %v3171 = vld [vmem:[#allocation3 + $0x120] sm:$0xff]
        %v3172 = vld [vmem:[#allocation3 + $0x128] sm:$0xff]
        %v3173 = vld [vmem:[#allocation3 + $0x130] sm:$0xff]
        %v3174 = vld [vmem:[#allocation3 + $0x138] sm:$0xff]
        %v3175 = vld [vmem:[#allocation3 + $0x140] sm:$0xff]
        %v3176 = vld [vmem:[#allocation3 + $0x148] sm:$0xff]
        %v3177 = vld [vmem:[#allocation3 + $0x150] sm:$0xff]
        %v3178 = vld [vmem:[#allocation3 + $0x158] sm:$0xff]
        %v3179 = vld [vmem:[#allocation3 + $0x160] sm:$0xff]
        %v3180 = vld [vmem:[#allocation3 + $0x168] sm:$0xff]
        %v3181 = vld [vmem:[#allocation3 + $0x170] sm:$0xff]
        %v3182 = vld [vmem:[#allocation3 + $0x178] sm:$0xff]
        %v3183 = vld [vmem:[#allocation3 + $0x180] sm:$0xff]
        %v3184 = vld [vmem:[#allocation3 + $0x188] sm:$0xff]
        %v3185 = vld [vmem:[#allocation3 + $0x190] sm:$0xff]
        %v3186 = vld [vmem:[#allocation3 + $0x198] sm:$0xff]
        %v3187 = vld [vmem:[#allocation3 + $0x1a0] sm:$0xff]
        %v3188 = vld [vmem:[#allocation3 + $0x1a8] sm:$0xff]
        %v3189 = vld [vmem:[#allocation3 + $0x1b0] sm:$0xff]
        %v3190 = vld [vmem:[#allocation3 + $0x1b8] sm:$0xff]
        %v3191 = vld [vmem:[#allocation3 + $0x1c0] sm:$0xff]
        %v3192 = vld [vmem:[#allocation3 + $0x1c8] sm:$0xff]
        %v3193 = vld [vmem:[#allocation3 + $0x1d0] sm:$0xff]
        %v3194 = vld [vmem:[#allocation3 + $0x1d8] sm:$0xff]
        %v3195 = vld [vmem:[#allocation3 + $0x1e0] sm:$0xff]
        %v3196 = vld [vmem:[#allocation3 + $0x1e8] sm:$0xff]
        %v3197 = vld [vmem:[#allocation3 + $0x1f0] sm:$0xff]
        %v3198 = vld [vmem:[#allocation3 + $0x1f8] sm:$0xff]
        %v3199 = vld [vmem:[#allocation3 + $0x200] sm:$0xff]
        %v3200 = vld [vmem:[#allocation3 + $0x208] sm:$0xff]
        %v3201 = vld [vmem:[#allocation3 + $0x210] sm:$0xff]
        %v3202 = vld [vmem:[#allocation3 + $0x218] sm:$0xff]
        %v3203 = vld [vmem:[#allocation3 + $0x220] sm:$0xff]
        %v3204 = vld [vmem:[#allocation3 + $0x228] sm:$0xff]
        %v3205 = vld [vmem:[#allocation3 + $0x230] sm:$0xff]
        %v3206 = vld [vmem:[#allocation3 + $0x238] sm:$0xff]
        %s3207 = scalar_lea.vmem %s1, 3456
        %v3208 = vld [vmem:[%s3207] sm:$0xff]
        %v3209 = vld [vmem:[%s3207 + $0x8] sm:$0xff]
        %v3210 = vld [vmem:[%s3207 + $0x10] sm:$0xff]
        %v3211 = vld [vmem:[%s3207 + $0x18] sm:$0xff]
        %v3212 = vld [vmem:[%s3207 + $0x20] sm:$0xff]
        %v3213 = vld [vmem:[%s3207 + $0x28] sm:$0xff]
        %v3214 = vld [vmem:[%s3207 + $0x30] sm:$0xff]
        %v3215 = vld [vmem:[%s3207 + $0x38] sm:$0xff]
        %v3216 = vld [vmem:[%s3207 + $0x40] sm:$0xff]
        %v3217 = vld [vmem:[%s3207 + $0x48] sm:$0xff]
        %v3218 = vld [vmem:[%s3207 + $0x50] sm:$0xff]
        %v3219 = vld [vmem:[%s3207 + $0x58] sm:$0xff]
        %v3220 = vld [vmem:[%s3207 + $0x60] sm:$0xff]
        %v3221 = vld [vmem:[%s3207 + $0x68] sm:$0xff]
        %v3222 = vld [vmem:[%s3207 + $0x70] sm:$0xff]
        %v3223 = vld [vmem:[%s3207 + $0x78] sm:$0xff]
        %v3224 = vld [vmem:[%s3207 + $0x80] sm:$0xff]
        %v3225 = vld [vmem:[%s3207 + $0x88] sm:$0xff]
        %v3226 = vld [vmem:[%s3207 + $0x90] sm:$0xff]
        %v3227 = vld [vmem:[%s3207 + $0x98] sm:$0xff]
        %v3228 = vld [vmem:[%s3207 + $0xa0] sm:$0xff]
        %v3229 = vld [vmem:[%s3207 + $0xa8] sm:$0xff]
        %v3230 = vld [vmem:[%s3207 + $0xb0] sm:$0xff]
        %v3231 = vld [vmem:[%s3207 + $0xb8] sm:$0xff]
        %v3232 = vld [vmem:[%s3207 + $0xc0] sm:$0xff]
        %v3233 = vld [vmem:[%s3207 + $0xc8] sm:$0xff]
        %v3234 = vld [vmem:[%s3207 + $0xd0] sm:$0xff]
        %v3235 = vld [vmem:[%s3207 + $0xd8] sm:$0xff]
        %v3236 = vld [vmem:[%s3207 + $0xe0] sm:$0xff]
        %v3237 = vld [vmem:[%s3207 + $0xe8] sm:$0xff]
        %v3238 = vld [vmem:[%s3207 + $0xf0] sm:$0xff]
        %v3239 = vld [vmem:[%s3207 + $0xf8] sm:$0xff]
        %v3240 = vld [vmem:[%s3207 + $0x100] sm:$0xff]
        %v3241 = vld [vmem:[%s3207 + $0x108] sm:$0xff]
        %v3242 = vld [vmem:[%s3207 + $0x110] sm:$0xff]
        %v3243 = vld [vmem:[%s3207 + $0x118] sm:$0xff]
        %v3244 = vld [vmem:[%s3207 + $0x120] sm:$0xff]
        %v3245 = vld [vmem:[%s3207 + $0x128] sm:$0xff]
        %v3246 = vld [vmem:[%s3207 + $0x130] sm:$0xff]
        %v3247 = vld [vmem:[%s3207 + $0x138] sm:$0xff]
        %v3248 = vld [vmem:[%s3207 + $0x140] sm:$0xff]
        %v3249 = vld [vmem:[%s3207 + $0x148] sm:$0xff]
        %v3250 = vld [vmem:[%s3207 + $0x150] sm:$0xff]
        %v3251 = vld [vmem:[%s3207 + $0x158] sm:$0xff]
        %v3252 = vld [vmem:[%s3207 + $0x160] sm:$0xff]
        %v3253 = vld [vmem:[%s3207 + $0x168] sm:$0xff]
        %v3254 = vld [vmem:[%s3207 + $0x170] sm:$0xff]
        %v3255 = vld [vmem:[%s3207 + $0x178] sm:$0xff]
        %v3256 = vld [vmem:[%s3207 + $0x180] sm:$0xff]
        %v3257 = vld [vmem:[%s3207 + $0x188] sm:$0xff]
        %v3258 = vld [vmem:[%s3207 + $0x190] sm:$0xff]
        %v3259 = vld [vmem:[%s3207 + $0x198] sm:$0xff]
        %v3260 = vld [vmem:[%s3207 + $0x1a0] sm:$0xff]
        %v3261 = vld [vmem:[%s3207 + $0x1a8] sm:$0xff]
        %v3262 = vld [vmem:[%s3207 + $0x1b0] sm:$0xff]
        %v3263 = vld [vmem:[%s3207 + $0x1b8] sm:$0xff]
        %v3264 = vld [vmem:[%s3207 + $0x1c0] sm:$0xff]
        %v3265 = vld [vmem:[%s3207 + $0x1c8] sm:$0xff]
        %v3266 = vld [vmem:[%s3207 + $0x1d0] sm:$0xff]
        %v3267 = vld [vmem:[%s3207 + $0x1d8] sm:$0xff]
        %v3268 = vld [vmem:[%s3207 + $0x1e0] sm:$0xff]
        %v3269 = vld [vmem:[%s3207 + $0x1e8] sm:$0xff]
        %v3270 = vld [vmem:[%s3207 + $0x1f0] sm:$0xff]
        %v3271 = vld [vmem:[%s3207 + $0x1f8] sm:$0xff]
        %v3272 = vld [vmem:[%s3207 + $0x200] sm:$0xff]
        %v3273 = vld [vmem:[%s3207 + $0x208] sm:$0xff]
        %v3274 = vld [vmem:[%s3207 + $0x210] sm:$0xff]
        %v3275 = vld [vmem:[%s3207 + $0x218] sm:$0xff]
        %v3276 = vld [vmem:[%s3207 + $0x220] sm:$0xff]
        %v3277 = vld [vmem:[%s3207 + $0x228] sm:$0xff]
        %v3278 = vld [vmem:[%s3207 + $0x230] sm:$0xff]
        %v3279 = vld [vmem:[%s3207 + $0x238] sm:$0xff]
        %v3280 = vld [vmem:[%s3207 + $0x240] sm:$0xff]
        %v3281 = vld [vmem:[%s3207 + $0x248] sm:$0xff]
        %v3282 = vld [vmem:[%s3207 + $0x250] sm:$0xff]
        %v3283 = vld [vmem:[%s3207 + $0x258] sm:$0xff]
        %v3284 = vld [vmem:[%s3207 + $0x260] sm:$0xff]
        %v3285 = vld [vmem:[%s3207 + $0x268] sm:$0xff]
        %v3286 = vld [vmem:[%s3207 + $0x270] sm:$0xff]
        %v3287 = vld [vmem:[%s3207 + $0x278] sm:$0xff]
        %v3288 = vld [vmem:[%s3207 + $0x280] sm:$0xff]
        %v3289 = vld [vmem:[%s3207 + $0x288] sm:$0xff]
        %v3290 = vld [vmem:[%s3207 + $0x290] sm:$0xff]
        %v3291 = vld [vmem:[%s3207 + $0x298] sm:$0xff]
        %v3292 = vld [vmem:[%s3207 + $0x2a0] sm:$0xff]
        %v3293 = vld [vmem:[%s3207 + $0x2a8] sm:$0xff]
        %v3294 = vld [vmem:[%s3207 + $0x2b0] sm:$0xff]
        %v3295 = vld [vmem:[%s3207 + $0x2b8] sm:$0xff]
        %v3296 = vld [vmem:[%s3207 + $0x2c0] sm:$0xff]
        %v3297 = vld [vmem:[%s3207 + $0x2c8] sm:$0xff]
        %v3298 = vld [vmem:[%s3207 + $0x2d0] sm:$0xff]
        %v3299 = vld [vmem:[%s3207 + $0x2d8] sm:$0xff]
        %v3300 = vld [vmem:[%s3207 + $0x2e0] sm:$0xff]
        %v3301 = vld [vmem:[%s3207 + $0x2e8] sm:$0xff]
        %v3302 = vld [vmem:[%s3207 + $0x2f0] sm:$0xff]
        %v3303 = vld [vmem:[%s3207 + $0x2f8] sm:$0xff]
        %v3304 = vld [vmem:[%s3207 + $0x300] sm:$0xff]
        %v3305 = vld [vmem:[%s3207 + $0x308] sm:$0xff]
        %v3306 = vld [vmem:[%s3207 + $0x310] sm:$0xff]
        %v3307 = vld [vmem:[%s3207 + $0x318] sm:$0xff]
        %v3308 = vld [vmem:[%s3207 + $0x320] sm:$0xff]
        %v3309 = vld [vmem:[%s3207 + $0x328] sm:$0xff]
        %v3310 = vld [vmem:[%s3207 + $0x330] sm:$0xff]
        %v3311 = vld [vmem:[%s3207 + $0x338] sm:$0xff]
        %v3312 = vld [vmem:[%s3207 + $0x340] sm:$0xff]
        %v3313 = vld [vmem:[%s3207 + $0x348] sm:$0xff]
        %v3314 = vld [vmem:[%s3207 + $0x350] sm:$0xff]
        %v3315 = vld [vmem:[%s3207 + $0x358] sm:$0xff]
        %v3316 = vld [vmem:[%s3207 + $0x360] sm:$0xff]
        %v3317 = vld [vmem:[%s3207 + $0x368] sm:$0xff]
        %v3318 = vld [vmem:[%s3207 + $0x370] sm:$0xff]
        %v3319 = vld [vmem:[%s3207 + $0x378] sm:$0xff]
        %v3320 = vld [vmem:[%s3207 + $0x380] sm:$0xff]
        %v3321 = vld [vmem:[%s3207 + $0x388] sm:$0xff]
        %v3322 = vld [vmem:[%s3207 + $0x390] sm:$0xff]
        %v3323 = vld [vmem:[%s3207 + $0x398] sm:$0xff]
        %v3324 = vld [vmem:[%s3207 + $0x3a0] sm:$0xff]
        %v3325 = vld [vmem:[%s3207 + $0x3a8] sm:$0xff]
        %v3326 = vld [vmem:[%s3207 + $0x3b0] sm:$0xff]
        %v3327 = vld [vmem:[%s3207 + $0x3b8] sm:$0xff]
        %v3328 = vld [vmem:[%s3207 + $0x3c0] sm:$0xff]
        %v3329 = vld [vmem:[%s3207 + $0x3c8] sm:$0xff]
        %v3330 = vld [vmem:[%s3207 + $0x3d0] sm:$0xff]
        %v3331 = vld [vmem:[%s3207 + $0x3d8] sm:$0xff]
        %v3332 = vld [vmem:[%s3207 + $0x3e0] sm:$0xff]
        %v3333 = vld [vmem:[%s3207 + $0x3e8] sm:$0xff]
        %v3334 = vld [vmem:[%s3207 + $0x3f0] sm:$0xff]
        %v3335 = vld [vmem:[%s3207 + $0x3f8] sm:$0xff]
        %v3336 = vld [vmem:[%s3207 + $0x400] sm:$0xff]
        %v3337 = vld [vmem:[%s3207 + $0x408] sm:$0xff]
        %v3338 = vld [vmem:[%s3207 + $0x410] sm:$0xff]
        %v3339 = vld [vmem:[%s3207 + $0x418] sm:$0xff]
        %v3340 = vld [vmem:[%s3207 + $0x420] sm:$0xff]
        %v3341 = vld [vmem:[%s3207 + $0x428] sm:$0xff]
        %v3342 = vld [vmem:[%s3207 + $0x430] sm:$0xff]
        %v3343 = vld [vmem:[%s3207 + $0x438] sm:$0xff]
        %v3344 = vld [vmem:[%s3207 + $0x440] sm:$0xff]
        %v3345 = vld [vmem:[%s3207 + $0x448] sm:$0xff]
        %v3346 = vld [vmem:[%s3207 + $0x450] sm:$0xff]
        %v3347 = vld [vmem:[%s3207 + $0x458] sm:$0xff]
        %v3348 = vld [vmem:[%s3207 + $0x460] sm:$0xff]
        %v3349 = vld [vmem:[%s3207 + $0x468] sm:$0xff]
        %v3350 = vld [vmem:[%s3207 + $0x470] sm:$0xff]
        %v3351 = vld [vmem:[%s3207 + $0x478] sm:$0xff]
        %s3352 = scalar_lea.vmem %s2, 3
        %v3353 = vld [vmem:[%s3352] sm:$0x1]
        %v3355 = vlaneseq
        %v3356 = vshrl.u32 %v3355, 7
        %v3357 = vsub.s32 0, %v3356
        %v3358 = vrot.slane %v3353, %v3357
        %3360 = vmatprep.subr.mxu0 0.0
        %3361 = vmatpush1.msra.mxu0 %v3208
        %3362 = vmatprep.subr.mxu0 0.0
        %3363 = vmatpush1.msra.mxu0 %v3209
        %3364 = vmatprep.subr.mxu0 0.0
        %3365 = vmatpush1.msra.mxu0 %v3210
        %3366 = vmatprep.subr.mxu0 0.0
        %3367 = vmatpush1.msra.mxu0 %v3211
        %3368 = vmatprep.subr.mxu0 0.0
        %3369 = vmatpush1.msra.mxu0 %v3212
        %3370 = vmatprep.subr.mxu0 0.0
        %3371 = vmatpush1.msra.mxu0 %v3213
        %3372 = vmatprep.subr.mxu0 0.0
        %3373 = vmatpush1.msra.mxu0 %v3214
        %3374 = vmatprep.subr.mxu0 0.0
        %3375 = vmatpush1.msra.mxu0 %v3215
        %3376 = vmatprep.subr.mxu0 0.0
        %3377 = vmatpush1.msra.mxu0 %v3216
        %3378 = vmatprep.subr.mxu0 0.0
        %3379 = vmatpush1.msra.mxu0 %v3217
        %3380 = vmatprep.subr.mxu0 0.0
        %3381 = vmatpush1.msra.mxu0 %v3218
        %3382 = vmatprep.subr.mxu0 0.0
        %3383 = vmatpush1.msra.mxu0 %v3219
        %3384 = vmatprep.subr.mxu0 0.0
        %3385 = vmatpush1.msra.mxu0 %v3220
        %3386 = vmatprep.subr.mxu0 0.0
        %3387 = vmatpush1.msra.mxu0 %v3221
        %3388 = vmatprep.subr.mxu0 0.0
        %3389 = vmatpush1.msra.mxu0 %v3222
        %3390 = vmatprep.subr.mxu0 0.0
        %3391 = vmatpush1.msra.mxu0 %v3223
        %3392 = vmatprep.subr.mxu0 0.0
        %3393 = vmatpush1.msra.mxu0 %v3224
        %3394 = vmatprep.subr.mxu0 0.0
        %3395 = vmatpush1.msra.mxu0 %v3225
        %3396 = vmatprep.subr.mxu0 0.0
        %3397 = vmatpush1.msra.mxu0 %v3226
        %3398 = vmatprep.subr.mxu0 0.0
        %3399 = vmatpush1.msra.mxu0 %v3227
        %3400 = vmatprep.subr.mxu0 0.0
        %3401 = vmatpush1.msra.mxu0 %v3228
        %3402 = vmatprep.subr.mxu0 0.0
        %3403 = vmatpush1.msra.mxu0 %v3229
        %3404 = vmatprep.subr.mxu0 0.0
        %3405 = vmatpush1.msra.mxu0 %v3230
        %3406 = vmatprep.subr.mxu0 0.0
        %3407 = vmatpush1.msra.mxu0 %v3231
        %3408 = vmatprep.subr.mxu0 0.0
        %3409 = vmatpush1.msra.mxu0 %v3232
        %3410 = vmatprep.subr.mxu0 0.0
        %3411 = vmatpush1.msra.mxu0 %v3233
        %3412 = vmatprep.subr.mxu0 0.0
        %3413 = vmatpush1.msra.mxu0 %v3234
        %3414 = vmatprep.subr.mxu0 0.0
        %3415 = vmatpush1.msra.mxu0 %v3235
        %3416 = vmatprep.subr.mxu0 0.0
        %3417 = vmatpush1.msra.mxu0 %v3236
        %3418 = vmatprep.subr.mxu0 0.0
        %3419 = vmatpush1.msra.mxu0 %v3237
        %3420 = vmatprep.subr.mxu0 0.0
        %3421 = vmatpush1.msra.mxu0 %v3238
        %3422 = vmatprep.subr.mxu0 0.0
        %3423 = vmatpush1.msra.mxu0 %v3239
        %3424 = vmatprep.mubr.f32.mxu0 %v3136
        %3425 = vmatmul.mubr.f32.gmra.mrb[0].mxu0 %v3135
        %v3426 = vpop.f32.mrb[0].mxu0
        %v3427 = vadd.f32 %v3358, %v3426
        %v3428 = vpop.f32.mrb[0].mxu0
        %3429 = vmatprep.mubr.f32.mxu0 %v3145
        %3430 = vmatmul.mubr.f32.gmra.mrb[0].mxu0 %v3144
        %v3431 = vpop.f32.mrb[0].mxu0
        %v3432 = vadd.f32 %v3358, %v3431
        %v3433 = vpop.f32.mrb[0].mxu0
        %3434 = vmatprep.mubr.f32.mxu0 %v3154
        %3435 = vmatmul.mubr.f32.gmra.mrb[0].mxu0 %v3153
        %v3436 = vpop.f32.mrb[0].mxu0
        %v3437 = vadd.f32 %v3358, %v3436
        %v3438 = vpop.f32.mrb[0].mxu0
        %3439 = vmatprep.mubr.f32.mxu0 %v3163
        %3440 = vmatmul.mubr.f32.gmra.mrb[0].mxu0 %v3162
        %v3441 = vpop.f32.mrb[0].mxu0
        %v3442 = vadd.f32 %v3358, %v3441
        %v3443 = vpop.f32.mrb[0].mxu0
        %3444 = vmatprep.mubr.f32.mxu0 %v3172
        %3445 = vmatmul.mubr.f32.gmra.mrb[0].mxu0 %v3171
        %v3446 = vpop.f32.mrb[0].mxu0
        %v3447 = vadd.f32 %v3358, %v3446
        %v3448 = vpop.f32.mrb[0].mxu0
        %3449 = vmatprep.mubr.f32.mxu0 %v3181
        %3450 = vmatmul.mubr.f32.gmra.mrb[0].mxu0 %v3180
        %v3451 = vpop.f32.mrb[0].mxu0
        %v3452 = vadd.f32 %v3358, %v3451
        %v3453 = vpop.f32.mrb[0].mxu0
        %3454 = vmatprep.mubr.f32.mxu0 %v3190
        %3455 = vmatmul.mubr.f32.gmra.mrb[0].mxu0 %v3189
        %v3456 = vpop.f32.mrb[0].mxu0
        %v3457 = vadd.f32 %v3358, %v3456
        %v3458 = vpop.f32.mrb[0].mxu0
        %3459 = vmatprep.mubr.f32.mxu0 %v3199
        %3460 = vmatmul.mubr.f32.gmra.mrb[0].mxu0 %v3198
        %v3461 = vpop.f32.mrb[0].mxu0
        %v3462 = vadd.f32 %v3358, %v3461
        %v3463 = vpop.f32.mrb[0].mxu0
        %3464 = vdwg.mxu0
        %3465 = vmatprep.subr.mxu0 0.0
        %3466 = vmatpush1.msra.mxu0 %v3240
        %3467 = vmatprep.subr.mxu0 0.0
        %3468 = vmatpush1.msra.mxu0 %v3241
        %3469 = vmatprep.subr.mxu0 0.0
        %3470 = vmatpush1.msra.mxu0 %v3242
        %3471 = vmatprep.subr.mxu0 0.0
        %3472 = vmatpush1.msra.mxu0 %v3243
        %3473 = vmatprep.subr.mxu0 0.0
        %3474 = vmatpush1.msra.mxu0 %v3244
        %3475 = vmatprep.subr.mxu0 0.0
        %3476 = vmatpush1.msra.mxu0 %v3245
        %3477 = vmatprep.subr.mxu0 0.0
        %3478 = vmatpush1.msra.mxu0 %v3246
        %3479 = vmatprep.subr.mxu0 0.0
        %3480 = vmatpush1.msra.mxu0 %v3247
        %3481 = vmatprep.subr.mxu0 0.0
        %3482 = vmatpush1.msra.mxu0 %v3248
        %3483 = vmatprep.subr.mxu0 0.0
        %3484 = vmatpush1.msra.mxu0 %v3249
        %3485 = vmatprep.subr.mxu0 0.0
        %3486 = vmatpush1.msra.mxu0 %v3250
        %3487 = vmatprep.subr.mxu0 0.0
        %3488 = vmatpush1.msra.mxu0 %v3251
        %3489 = vmatprep.subr.mxu0 0.0
        %3490 = vmatpush1.msra.mxu0 %v3252
        %3491 = vmatprep.subr.mxu0 0.0
        %3492 = vmatpush1.msra.mxu0 %v3253
        %3493 = vmatprep.subr.mxu0 0.0
        %3494 = vmatpush1.msra.mxu0 %v3254
        %3495 = vmatprep.subr.mxu0 0.0
        %3496 = vmatpush1.msra.mxu0 %v3255
        %3497 = vmatprep.subr.mxu0 0.0
        %3498 = vmatpush1.msra.mxu0 %v3256
        %3499 = vmatprep.subr.mxu0 0.0
        %3500 = vmatpush1.msra.mxu0 %v3257
        %3501 = vmatprep.subr.mxu0 0.0
        %3502 = vmatpush1.msra.mxu0 %v3258
        %3503 = vmatprep.subr.mxu0 0.0
        %3504 = vmatpush1.msra.mxu0 %v3259
        %3505 = vmatprep.subr.mxu0 0.0
        %3506 = vmatpush1.msra.mxu0 %v3260
        %3507 = vmatprep.subr.mxu0 0.0
        %3508 = vmatpush1.msra.mxu0 %v3261
        %3509 = vmatprep.subr.mxu0 0.0
        %3510 = vmatpush1.msra.mxu0 %v3262
        %3511 = vmatprep.subr.mxu0 0.0
        %3512 = vmatpush1.msra.mxu0 %v3263
        %3513 = vmatprep.subr.mxu0 0.0
        %3514 = vmatpush1.msra.mxu0 %v3264
        %3515 = vmatprep.subr.mxu0 0.0
        %3516 = vmatpush1.msra.mxu0 %v3265
        %3517 = vmatprep.subr.mxu0 0.0
        %3518 = vmatpush1.msra.mxu0 %v3266
        %3519 = vmatprep.subr.mxu0 0.0
        %3520 = vmatpush1.msra.mxu0 %v3267
        %3521 = vmatprep.subr.mxu0 0.0
        %3522 = vmatpush1.msra.mxu0 %v3268
        %3523 = vmatprep.subr.mxu0 0.0
        %3524 = vmatpush1.msra.mxu0 %v3269
        %3525 = vmatprep.subr.mxu0 0.0
        %3526 = vmatpush1.msra.mxu0 %v3270
        %3527 = vmatprep.subr.mxu0 0.0
        %3528 = vmatpush1.msra.mxu0 %v3271
        %3529 = vmatprep.mubr.f32.mxu0 %v3138
        %3530 = vmatmul.mubr.f32.gmra.mrb[0].mxu0 %v3137
        %v3531 = vpop.f32.mrb[0].mxu0
        %v3532 = vadd.f32 %v3427, %v3531
        %v3533 = vpop.f32.mrb[0].mxu0
        %3534 = vmatprep.mubr.f32.mxu0 %v3147
        %3535 = vmatmul.mubr.f32.gmra.mrb[0].mxu0 %v3146
        %v3536 = vpop.f32.mrb[0].mxu0
        %v3537 = vadd.f32 %v3432, %v3536
        %v3538 = vpop.f32.mrb[0].mxu0
        %3539 = vmatprep.mubr.f32.mxu0 %v3156
        %3540 = vmatmul.mubr.f32.gmra.mrb[0].mxu0 %v3155
        %v3541 = vpop.f32.mrb[0].mxu0
        %v3542 = vadd.f32 %v3437, %v3541
        %v3543 = vpop.f32.mrb[0].mxu0
        %3544 = vmatprep.mubr.f32.mxu0 %v3165
        %3545 = vmatmul.mubr.f32.gmra.mrb[0].mxu0 %v3164
        %v3546 = vpop.f32.mrb[0].mxu0
        %v3547 = vadd.f32 %v3442, %v3546
        %v3548 = vpop.f32.mrb[0].mxu0
        %3549 = vmatprep.mubr.f32.mxu0 %v3174
        %3550 = vmatmul.mubr.f32.gmra.mrb[0].mxu0 %v3173
        %v3551 = vpop.f32.mrb[0].mxu0
        %v3552 = vadd.f32 %v3447, %v3551
        %v3553 = vpop.f32.mrb[0].mxu0
        %3554 = vmatprep.mubr.f32.mxu0 %v3183
        %3555 = vmatmul.mubr.f32.gmra.mrb[0].mxu0 %v3182
        %v3556 = vpop.f32.mrb[0].mxu0
        %v3557 = vadd.f32 %v3452, %v3556
        %v3558 = vpop.f32.mrb[0].mxu0
        %3559 = vmatprep.mubr.f32.mxu0 %v3192
        %3560 = vmatmul.mubr.f32.gmra.mrb[0].mxu0 %v3191
        %v3561 = vpop.f32.mrb[0].mxu0
        %v3562 = vadd.f32 %v3457, %v3561
        %v3563 = vpop.f32.mrb[0].mxu0
        %3564 = vmatprep.mubr.f32.mxu0 %v3201
        %3565 = vmatmul.mubr.f32.gmra.mrb[0].mxu0 %v3200
        %v3566 = vpop.f32.mrb[0].mxu0
        %v3567 = vadd.f32 %v3462, %v3566
        %v3568 = vpop.f32.mrb[0].mxu0
        %3569 = vdwg.mxu0
        %3570 = vmatprep.subr.mxu0 0.0
        %3571 = vmatpush1.msra.mxu0 %v3272
        %3572 = vmatprep.subr.mxu0 0.0
        %3573 = vmatpush1.msra.mxu0 %v3273
        %3574 = vmatprep.subr.mxu0 0.0
        %3575 = vmatpush1.msra.mxu0 %v3274
        %3576 = vmatprep.subr.mxu0 0.0
        %3577 = vmatpush1.msra.mxu0 %v3275
        %3578 = vmatprep.subr.mxu0 0.0
        %3579 = vmatpush1.msra.mxu0 %v3276
        %3580 = vmatprep.subr.mxu0 0.0
        %3581 = vmatpush1.msra.mxu0 %v3277
        %3582 = vmatprep.subr.mxu0 0.0
        %3583 = vmatpush1.msra.mxu0 %v3278
        %3584 = vmatprep.subr.mxu0 0.0
        %3585 = vmatpush1.msra.mxu0 %v3279
        %3586 = vmatprep.subr.mxu0 0.0
        %3587 = vmatpush1.msra.mxu0 %v3280
        %3588 = vmatprep.subr.mxu0 0.0
        %3589 = vmatpush1.msra.mxu0 %v3281
        %3590 = vmatprep.subr.mxu0 0.0
        %3591 = vmatpush1.msra.mxu0 %v3282
        %3592 = vmatprep.subr.mxu0 0.0
        %3593 = vmatpush1.msra.mxu0 %v3283
        %3594 = vmatprep.subr.mxu0 0.0
        %3595 = vmatpush1.msra.mxu0 %v3284
        %3596 = vmatprep.subr.mxu0 0.0
        %3597 = vmatpush1.msra.mxu0 %v3285
        %3598 = vmatprep.subr.mxu0 0.0
        %3599 = vmatpush1.msra.mxu0 %v3286
        %3600 = vmatprep.subr.mxu0 0.0
        %3601 = vmatpush1.msra.mxu0 %v3287
        %3602 = vmatprep.subr.mxu0 0.0
        %3603 = vmatpush1.msra.mxu0 %v3288
        %3604 = vmatprep.subr.mxu0 0.0
        %3605 = vmatpush1.msra.mxu0 %v3289
        %3606 = vmatprep.subr.mxu0 0.0
        %3607 = vmatpush1.msra.mxu0 %v3290
        %3608 = vmatprep.subr.mxu0 0.0
        %3609 = vmatpush1.msra.mxu0 %v3291
        %3610 = vmatprep.subr.mxu0 0.0
        %3611 = vmatpush1.msra.mxu0 %v3292
        %3612 = vmatprep.subr.mxu0 0.0
        %3613 = vmatpush1.msra.mxu0 %v3293
        %3614 = vmatprep.subr.mxu0 0.0
        %3615 = vmatpush1.msra.mxu0 %v3294
        %3616 = vmatprep.subr.mxu0 0.0
        %3617 = vmatpush1.msra.mxu0 %v3295
        %3618 = vmatprep.subr.mxu0 0.0
        %3619 = vmatpush1.msra.mxu0 %v3296
        %3620 = vmatprep.subr.mxu0 0.0
        %3621 = vmatpush1.msra.mxu0 %v3297
        %3622 = vmatprep.subr.mxu0 0.0
        %3623 = vmatpush1.msra.mxu0 %v3298
        %3624 = vmatprep.subr.mxu0 0.0
        %3625 = vmatpush1.msra.mxu0 %v3299
        %3626 = vmatprep.subr.mxu0 0.0
        %3627 = vmatpush1.msra.mxu0 %v3300
        %3628 = vmatprep.subr.mxu0 0.0
        %3629 = vmatpush1.msra.mxu0 %v3301
        %3630 = vmatprep.subr.mxu0 0.0
        %3631 = vmatpush1.msra.mxu0 %v3302
        %3632 = vmatprep.subr.mxu0 0.0
        %3633 = vmatpush1.msra.mxu0 %v3303
        %3634 = vmatprep.mubr.f32.mxu0 %v3140
        %3635 = vmatmul.mubr.f32.gmra.mrb[0].mxu0 %v3139
        %v3636 = vpop.f32.mrb[0].mxu0
        %v3637 = vadd.f32 %v3532, %v3636
        %v3638 = vpop.f32.mrb[0].mxu0
        %3639 = vmatprep.mubr.f32.mxu0 %v3149
        %3640 = vmatmul.mubr.f32.gmra.mrb[0].mxu0 %v3148
        %v3641 = vpop.f32.mrb[0].mxu0
        %v3642 = vadd.f32 %v3537, %v3641
        %v3643 = vpop.f32.mrb[0].mxu0
        %3644 = vmatprep.mubr.f32.mxu0 %v3158
        %3645 = vmatmul.mubr.f32.gmra.mrb[0].mxu0 %v3157
        %v3646 = vpop.f32.mrb[0].mxu0
        %v3647 = vadd.f32 %v3542, %v3646
        %v3648 = vpop.f32.mrb[0].mxu0
        %3649 = vmatprep.mubr.f32.mxu0 %v3167
        %3650 = vmatmul.mubr.f32.gmra.mrb[0].mxu0 %v3166
        %v3651 = vpop.f32.mrb[0].mxu0
        %v3652 = vadd.f32 %v3547, %v3651
        %v3653 = vpop.f32.mrb[0].mxu0
        %3654 = vmatprep.mubr.f32.mxu0 %v3176
        %3655 = vmatmul.mubr.f32.gmra.mrb[0].mxu0 %v3175
        %v3656 = vpop.f32.mrb[0].mxu0
        %v3657 = vadd.f32 %v3552, %v3656
        %v3658 = vpop.f32.mrb[0].mxu0
        %3659 = vmatprep.mubr.f32.mxu0 %v3185
        %3660 = vmatmul.mubr.f32.gmra.mrb[0].mxu0 %v3184
        %v3661 = vpop.f32.mrb[0].mxu0
        %v3662 = vadd.f32 %v3557, %v3661
        %v3663 = vpop.f32.mrb[0].mxu0
        %3664 = vmatprep.mubr.f32.mxu0 %v3194
        %3665 = vmatmul.mubr.f32.gmra.mrb[0].mxu0 %v3193
        %v3666 = vpop.f32.mrb[0].mxu0
        %v3667 = vadd.f32 %v3562, %v3666
        %v3668 = vpop.f32.mrb[0].mxu0
        %3669 = vmatprep.mubr.f32.mxu0 %v3203
        %3670 = vmatmul.mubr.f32.gmra.mrb[0].mxu0 %v3202
        %v3671 = vpop.f32.mrb[0].mxu0
        %v3672 = vadd.f32 %v3567, %v3671
        %v3673 = vpop.f32.mrb[0].mxu0
        %3674 = vdwg.mxu0
        %3675 = vmatprep.subr.mxu0 0.0
        %3676 = vmatpush1.msra.mxu0 %v3304
        %3677 = vmatprep.subr.mxu0 0.0
        %3678 = vmatpush1.msra.mxu0 %v3305
        %3679 = vmatprep.subr.mxu0 0.0
        %3680 = vmatpush1.msra.mxu0 %v3306
        %3681 = vmatprep.subr.mxu0 0.0
        %3682 = vmatpush1.msra.mxu0 %v3307
        %3683 = vmatprep.subr.mxu0 0.0
        %3684 = vmatpush1.msra.mxu0 %v3308
        %3685 = vmatprep.subr.mxu0 0.0
        %3686 = vmatpush1.msra.mxu0 %v3309
        %3687 = vmatprep.subr.mxu0 0.0
        %3688 = vmatpush1.msra.mxu0 %v3310
        %3689 = vmatprep.subr.mxu0 0.0
        %3690 = vmatpush1.msra.mxu0 %v3311
        %3691 = vmatprep.subr.mxu0 0.0
        %3692 = vmatpush1.msra.mxu0 %v3312
        %3693 = vmatprep.subr.mxu0 0.0
        %3694 = vmatpush1.msra.mxu0 %v3313
        %3695 = vmatprep.subr.mxu0 0.0
        %3696 = vmatpush1.msra.mxu0 %v3314
        %3697 = vmatprep.subr.mxu0 0.0
        %3698 = vmatpush1.msra.mxu0 %v3315
        %3699 = vmatprep.subr.mxu0 0.0
        %3700 = vmatpush1.msra.mxu0 %v3316
        %3701 = vmatprep.subr.mxu0 0.0
        %3702 = vmatpush1.msra.mxu0 %v3317
        %3703 = vmatprep.subr.mxu0 0.0
        %3704 = vmatpush1.msra.mxu0 %v3318
        %3705 = vmatprep.subr.mxu0 0.0
        %3706 = vmatpush1.msra.mxu0 %v3319
        %3707 = vmatprep.subr.mxu0 0.0
        %3708 = vmatpush1.msra.mxu0 %v3320
        %3709 = vmatprep.subr.mxu0 0.0
        %3710 = vmatpush1.msra.mxu0 %v3321
        %3711 = vmatprep.subr.mxu0 0.0
        %3712 = vmatpush1.msra.mxu0 %v3322
        %3713 = vmatprep.subr.mxu0 0.0
        %3714 = vmatpush1.msra.mxu0 %v3323
        %3715 = vmatprep.subr.mxu0 0.0
        %3716 = vmatpush1.msra.mxu0 %v3324
        %3717 = vmatprep.subr.mxu0 0.0
        %3718 = vmatpush1.msra.mxu0 %v3325
        %3719 = vmatprep.subr.mxu0 0.0
        %3720 = vmatpush1.msra.mxu0 %v3326
        %3721 = vmatprep.subr.mxu0 0.0
        %3722 = vmatpush1.msra.mxu0 %v3327
        %3723 = vmatprep.subr.mxu0 0.0
        %3724 = vmatpush1.msra.mxu0 %v3328
        %3725 = vmatprep.subr.mxu0 0.0
        %3726 = vmatpush1.msra.mxu0 %v3329
        %3727 = vmatprep.subr.mxu0 0.0
        %3728 = vmatpush1.msra.mxu0 %v3330
        %3729 = vmatprep.subr.mxu0 0.0
        %3730 = vmatpush1.msra.mxu0 %v3331
        %3731 = vmatprep.subr.mxu0 0.0
        %3732 = vmatpush1.msra.mxu0 %v3332
        %3733 = vmatprep.subr.mxu0 0.0
        %3734 = vmatpush1.msra.mxu0 %v3333
        %3735 = vmatprep.subr.mxu0 0.0
        %3736 = vmatpush1.msra.mxu0 %v3334
        %3737 = vmatprep.subr.mxu0 0.0
        %3738 = vmatpush1.msra.mxu0 %v3335
        %3739 = vmatprep.mubr.f32.mxu0 %v3142
        %3740 = vmatmul.mubr.f32.gmra.mrb[0].mxu0 %v3141
        %v3741 = vpop.f32.mrb[0].mxu0
        %v3742 = vadd.f32 %v3637, %v3741
        %v3743 = vpop.f32.mrb[0].mxu0
        %3744 = vmatprep.mubr.f32.mxu0 %v3151
        %3745 = vmatmul.mubr.f32.gmra.mrb[0].mxu0 %v3150
        %v3746 = vpop.f32.mrb[0].mxu0
        %v3747 = vadd.f32 %v3642, %v3746
        %v3748 = vpop.f32.mrb[0].mxu0
        %3749 = vmatprep.mubr.f32.mxu0 %v3160
        %3750 = vmatmul.mubr.f32.gmra.mrb[0].mxu0 %v3159
        %v3751 = vpop.f32.mrb[0].mxu0
        %v3752 = vadd.f32 %v3647, %v3751
        %v3753 = vpop.f32.mrb[0].mxu0
        %3754 = vmatprep.mubr.f32.mxu0 %v3169
        %3755 = vmatmul.mubr.f32.gmra.mrb[0].mxu0 %v3168
        %v3756 = vpop.f32.mrb[0].mxu0
        %v3757 = vadd.f32 %v3652, %v3756
        %v3758 = vpop.f32.mrb[0].mxu0
        %3759 = vmatprep.mubr.f32.mxu0 %v3178
        %3760 = vmatmul.mubr.f32.gmra.mrb[0].mxu0 %v3177
        %v3761 = vpop.f32.mrb[0].mxu0
        %v3762 = vadd.f32 %v3657, %v3761
        %v3763 = vpop.f32.mrb[0].mxu0
        %3764 = vmatprep.mubr.f32.mxu0 %v3187
        %3765 = vmatmul.mubr.f32.gmra.mrb[0].mxu0 %v3186
        %v3766 = vpop.f32.mrb[0].mxu0
        %v3767 = vadd.f32 %v3662, %v3766
        %v3768 = vpop.f32.mrb[0].mxu0
        %3769 = vmatprep.mubr.f32.mxu0 %v3196
        %3770 = vmatmul.mubr.f32.gmra.mrb[0].mxu0 %v3195
        %v3771 = vpop.f32.mrb[0].mxu0
        %v3772 = vadd.f32 %v3667, %v3771
        %v3773 = vpop.f32.mrb[0].mxu0
        %3774 = vmatprep.mubr.f32.mxu0 %v3205
        %3775 = vmatmul.mubr.f32.gmra.mrb[0].mxu0 %v3204
        %v3776 = vpop.f32.mrb[0].mxu0
        %v3777 = vadd.f32 %v3672, %v3776
        %v3778 = vpop.f32.mrb[0].mxu0
        %3779 = vdwg.mxu0
        %3780 = vmatprep.subr.mxu0 0.0
        %3781 = vmatpush1.msra.mxu0 %v3336
        %3782 = vmatprep.subr.mxu0 0.0
        %3783 = vmatpush1.msra.mxu0 %v3337
        %3784 = vmatprep.subr.mxu0 0.0
        %3785 = vmatpush1.msra.mxu0 %v3338
        %3786 = vmatprep.subr.mxu0 0.0
        %3787 = vmatpush1.msra.mxu0 %v3339
        %3788 = vmatprep.subr.mxu0 0.0
        %3789 = vmatpush1.msra.mxu0 %v3340
        %3790 = vmatprep.subr.mxu0 0.0
        %3791 = vmatpush1.msra.mxu0 %v3341
        %3792 = vmatprep.subr.mxu0 0.0
        %3793 = vmatpush1.msra.mxu0 %v3342
        %3794 = vmatprep.subr.mxu0 0.0
        %3795 = vmatpush1.msra.mxu0 %v3343
        %3796 = vmatprep.subr.mxu0 0.0
        %3797 = vmatpush1.msra.mxu0 %v3344
        %3798 = vmatprep.subr.mxu0 0.0
        %3799 = vmatpush1.msra.mxu0 %v3345
        %3800 = vmatprep.subr.mxu0 0.0
        %3801 = vmatpush1.msra.mxu0 %v3346
        %3802 = vmatprep.subr.mxu0 0.0
        %3803 = vmatpush1.msra.mxu0 %v3347
        %3804 = vmatprep.subr.mxu0 0.0
        %3805 = vmatpush1.msra.mxu0 %v3348
        %3806 = vmatprep.subr.mxu0 0.0
        %3807 = vmatpush1.msra.mxu0 %v3349
        %3808 = vmatprep.subr.mxu0 0.0
        %3809 = vmatpush1.msra.mxu0 %v3350
        %3810 = vmatprep.subr.mxu0 0.0
        %3811 = vmatpush1.msra.mxu0 %v3351
        %3812 = vmatprep.subr.mxu0 0.0
        %3813 = vmatpush1.msra.mxu0 0.0
        %3814 = vmatprep.subr.mxu0 0.0
        %3815 = vmatpush1.msra.mxu0 0.0
        %3816 = vmatprep.subr.mxu0 0.0
        %3817 = vmatpush1.msra.mxu0 0.0
        %3818 = vmatprep.subr.mxu0 0.0
        %3819 = vmatpush1.msra.mxu0 0.0
        %3820 = vmatprep.subr.mxu0 0.0
        %3821 = vmatpush1.msra.mxu0 0.0
        %3822 = vmatprep.subr.mxu0 0.0
        %3823 = vmatpush1.msra.mxu0 0.0
        %3824 = vmatprep.subr.mxu0 0.0
        %3825 = vmatpush1.msra.mxu0 0.0
        %3826 = vmatprep.subr.mxu0 0.0
        %3827 = vmatpush1.msra.mxu0 0.0
        %3828 = vmatprep.subr.mxu0 0.0
        %3829 = vmatpush1.msra.mxu0 0.0
        %3830 = vmatprep.subr.mxu0 0.0
        %3831 = vmatpush1.msra.mxu0 0.0
        %3832 = vmatprep.subr.mxu0 0.0
        %3833 = vmatpush1.msra.mxu0 0.0
        %3834 = vmatprep.subr.mxu0 0.0
        %3835 = vmatpush1.msra.mxu0 0.0
        %3836 = vmatprep.subr.mxu0 0.0
        %3837 = vmatpush1.msra.mxu0 0.0
        %3838 = vmatprep.subr.mxu0 0.0
        %3839 = vmatpush1.msra.mxu0 0.0
        %3840 = vmatprep.subr.mxu0 0.0
        %3841 = vmatpush1.msra.mxu0 0.0
        %3842 = vmatprep.subr.mxu0 0.0
        %3843 = vmatpush1.msra.mxu0 0.0
        %3844 = vmatprep.mubr.f32.mxu0 0.0
        %3845 = vmatmul.mubr.f32.gmra.mrb[0].mxu0 %v3143
        %v3846 = vpop.f32.mrb[0].mxu0
        %v3847 = vadd.f32 %v3742, %v3846
        %v3848 = vpop.f32.mrb[0].mxu0
        %3849 = vmatprep.mubr.f32.mxu0 0.0
        %3850 = vmatmul.mubr.f32.gmra.mrb[0].mxu0 %v3152
        %v3851 = vpop.f32.mrb[0].mxu0
        %v3852 = vadd.f32 %v3747, %v3851
        %v3853 = vpop.f32.mrb[0].mxu0
        %3854 = vmatprep.mubr.f32.mxu0 0.0
        %3855 = vmatmul.mubr.f32.gmra.mrb[0].mxu0 %v3161
        %v3856 = vpop.f32.mrb[0].mxu0
        %v3857 = vadd.f32 %v3752, %v3856
        %v3858 = vpop.f32.mrb[0].mxu0
        %3859 = vmatprep.mubr.f32.mxu0 0.0
        %3860 = vmatmul.mubr.f32.gmra.mrb[0].mxu0 %v3170
        %v3861 = vpop.f32.mrb[0].mxu0
        %v3862 = vadd.f32 %v3757, %v3861
        %v3863 = vpop.f32.mrb[0].mxu0
        %3864 = vmatprep.mubr.f32.mxu0 0.0
        %3865 = vmatmul.mubr.f32.gmra.mrb[0].mxu0 %v3179
        %v3866 = vpop.f32.mrb[0].mxu0
        %v3867 = vadd.f32 %v3762, %v3866
        %v3868 = vpop.f32.mrb[0].mxu0
        %3869 = vmatprep.mubr.f32.mxu0 0.0
        %3870 = vmatmul.mubr.f32.gmra.mrb[0].mxu0 %v3188
        %v3871 = vpop.f32.mrb[0].mxu0
        %v3872 = vadd.f32 %v3767, %v3871
        %v3873 = vpop.f32.mrb[0].mxu0
        %3874 = vmatprep.mubr.f32.mxu0 0.0
        %3875 = vmatmul.mubr.f32.gmra.mrb[0].mxu0 %v3197
        %v3876 = vpop.f32.mrb[0].mxu0
        %v3877 = vadd.f32 %v3772, %v3876
        %v3878 = vpop.f32.mrb[0].mxu0
        %3879 = vmatprep.mubr.f32.mxu0 0.0
        %3880 = vmatmul.mubr.f32.gmra.mrb[0].mxu0 %v3206
        %v3881 = vpop.f32.mrb[0].mxu0
        %v3882 = vadd.f32 %v3777, %v3881
        %v3883 = vpop.f32.mrb[0].mxu0
        %3884 = vdwg.mxu0
        %vm3885 = vcmp.gt.f32.partialorder %v3847, 0.0
        %vm3886 = vcmp.gt.f32.partialorder %v3852, 0.0
        %vm3887 = vcmp.gt.f32.partialorder %v3857, 0.0
        %vm3888 = vcmp.gt.f32.partialorder %v3862, 0.0
        %vm3889 = vcmp.gt.f32.partialorder %v3867, 0.0
        %vm3890 = vcmp.gt.f32.partialorder %v3872, 0.0
        %vm3891 = vcmp.gt.f32.partialorder %v3877, 0.0
        %vm3892 = vcmp.gt.f32.partialorder %v3882, 0.0
        %v3893 = vmul.f32 %v3847, 0.2
        %v3894 = vmul.f32 %v3852, 0.2
        %v3895 = vmul.f32 %v3857, 0.2
        %v3896 = vmul.f32 %v3862, 0.2
        %v3897 = vmul.f32 %v3867, 0.2
        %v3898 = vmul.f32 %v3872, 0.2
        %v3899 = vmul.f32 %v3877, 0.2
        %v3900 = vmul.f32 %v3882, 0.2
        %v3901 = vsel %vm3885, %v3847, %v3893
        %v3902 = vsel %vm3886, %v3852, %v3894
        %v3903 = vsel %vm3887, %v3857, %v3895
        %v3904 = vsel %vm3888, %v3862, %v3896
        %v3905 = vsel %vm3889, %v3867, %v3897
        %v3906 = vsel %vm3890, %v3872, %v3898
        %v3907 = vsel %vm3891, %v3877, %v3899
        %v3908 = vsel %vm3892, %v3882, %v3900
        %v3909 = vadd.f32 %v3901, %v2049
        %v3910 = vadd.f32 %v3902, %v2050
        %v3911 = vadd.f32 %v3903, %v2051
        %v3912 = vadd.f32 %v3904, %v2052
        %v3913 = vadd.f32 %v3905, %v2053
        %v3914 = vadd.f32 %v3906, %v2054
        %v3915 = vadd.f32 %v3907, %v2055
        %v3916 = vadd.f32 %v3908, %v2056
        %3917 = vst [vmem:[%s197 + $0x1] sm:$0xff] %v3909
        %3918 = vst [vmem:[%s197 + $0x11] sm:$0xff] %v3910
        %3919 = vst [vmem:[%s197 + $0x21] sm:$0xff] %v3911
        %3920 = vst [vmem:[%s197 + $0x31] sm:$0xff] %v3912
        %3921 = vst [vmem:[%s197 + $0x41] sm:$0xff] %v3913
        %3922 = vst [vmem:[%s197 + $0x51] sm:$0xff] %v3914
        %3923 = vst [vmem:[%s197 + $0x61] sm:$0xff] %v3915
        %3924 = vst [vmem:[%s197 + $0x71] sm:$0xff] %v3916
        %v3925 = vld [vmem:[#allocation2] sm:$0xff]
        %v3926 = vld [vmem:[#allocation2 + $0x10] sm:$0xff]
        %v3927 = vld [vmem:[#allocation2 + $0x20] sm:$0xff]
        %v3928 = vld [vmem:[#allocation2 + $0x30] sm:$0xff]
        %v3929 = vld [vmem:[#allocation2 + $0x40] sm:$0xff]
        %v3930 = vld [vmem:[#allocation2 + $0x50] sm:$0xff]
        %v3931 = vld [vmem:[#allocation2 + $0x60] sm:$0xff]
        %v3932 = vld [vmem:[#allocation2 + $0x70] sm:$0xff]
        %3933 = vst [vmem:[#allocation3] sm:$0xff] %v3925
        %3934 = vst [vmem:[#allocation3 + $0x48] sm:$0xff] %v3926
        %3935 = vst [vmem:[#allocation3 + $0x90] sm:$0xff] %v3927
        %3936 = vst [vmem:[#allocation3 + $0xd8] sm:$0xff] %v3928
        %3937 = vst [vmem:[#allocation3 + $0x120] sm:$0xff] %v3929
        %3938 = vst [vmem:[#allocation3 + $0x168] sm:$0xff] %v3930
        %3939 = vst [vmem:[#allocation3 + $0x1b0] sm:$0xff] %v3931
        %3940 = vst [vmem:[#allocation3 + $0x1f8] sm:$0xff] %v3932
        %v3941 = vld [vmem:[#allocation2 + $0x1] sm:$0xff]
        %v3942 = vld [vmem:[#allocation2 + $0x11] sm:$0xff]
        %v3943 = vld [vmem:[#allocation2 + $0x21] sm:$0xff]
        %v3944 = vld [vmem:[#allocation2 + $0x31] sm:$0xff]
        %v3945 = vld [vmem:[#allocation2 + $0x41] sm:$0xff]
        %v3946 = vld [vmem:[#allocation2 + $0x51] sm:$0xff]
        %v3947 = vld [vmem:[#allocation2 + $0x61] sm:$0xff]
        %v3948 = vld [vmem:[#allocation2 + $0x71] sm:$0xff]
        %3949 = vst [vmem:[#allocation3 + $0x8] sm:$0xff] %v3941
        %3950 = vst [vmem:[#allocation3 + $0x50] sm:$0xff] %v3942
        %3951 = vst [vmem:[#allocation3 + $0x98] sm:$0xff] %v3943
        %3952 = vst [vmem:[#allocation3 + $0xe0] sm:$0xff] %v3944
        %3953 = vst [vmem:[#allocation3 + $0x128] sm:$0xff] %v3945
        %3954 = vst [vmem:[#allocation3 + $0x170] sm:$0xff] %v3946
        %3955 = vst [vmem:[#allocation3 + $0x1b8] sm:$0xff] %v3947
        %3956 = vst [vmem:[#allocation3 + $0x200] sm:$0xff] %v3948
        %v3957 = vld [vmem:[#allocation2 + $0x2] sm:$0xff]
        %v3958 = vld [vmem:[#allocation2 + $0x12] sm:$0xff]
        %v3959 = vld [vmem:[#allocation2 + $0x22] sm:$0xff]
        %v3960 = vld [vmem:[#allocation2 + $0x32] sm:$0xff]
        %v3961 = vld [vmem:[#allocation2 + $0x42] sm:$0xff]
        %v3962 = vld [vmem:[#allocation2 + $0x52] sm:$0xff]
        %v3963 = vld [vmem:[#allocation2 + $0x62] sm:$0xff]
        %v3964 = vld [vmem:[#allocation2 + $0x72] sm:$0xff]
        %3965 = vst [vmem:[#allocation3 + $0x10] sm:$0xff] %v3957
        %3966 = vst [vmem:[#allocation3 + $0x58] sm:$0xff] %v3958
        %3967 = vst [vmem:[#allocation3 + $0xa0] sm:$0xff] %v3959
        %3968 = vst [vmem:[#allocation3 + $0xe8] sm:$0xff] %v3960
        %3969 = vst [vmem:[#allocation3 + $0x130] sm:$0xff] %v3961
        %3970 = vst [vmem:[#allocation3 + $0x178] sm:$0xff] %v3962
        %3971 = vst [vmem:[#allocation3 + $0x1c0] sm:$0xff] %v3963
        %3972 = vst [vmem:[#allocation3 + $0x208] sm:$0xff] %v3964
        %v3973 = vld [vmem:[%s197] sm:$0xff]
        %v3974 = vld [vmem:[%s197 + $0x10] sm:$0xff]
        %v3975 = vld [vmem:[%s197 + $0x20] sm:$0xff]
        %v3976 = vld [vmem:[%s197 + $0x30] sm:$0xff]
        %v3977 = vld [vmem:[%s197 + $0x40] sm:$0xff]
        %v3978 = vld [vmem:[%s197 + $0x50] sm:$0xff]
        %v3979 = vld [vmem:[%s197 + $0x60] sm:$0xff]
        %v3980 = vld [vmem:[%s197 + $0x70] sm:$0xff]
        %3981 = vst [vmem:[#allocation3 + $0x18] sm:$0xff] %v3973
        %3982 = vst [vmem:[#allocation3 + $0x60] sm:$0xff] %v3974
        %3983 = vst [vmem:[#allocation3 + $0xa8] sm:$0xff] %v3975
        %3984 = vst [vmem:[#allocation3 + $0xf0] sm:$0xff] %v3976
        %3985 = vst [vmem:[#allocation3 + $0x138] sm:$0xff] %v3977
        %3986 = vst [vmem:[#allocation3 + $0x180] sm:$0xff] %v3978
        %3987 = vst [vmem:[#allocation3 + $0x1c8] sm:$0xff] %v3979
        %3988 = vst [vmem:[#allocation3 + $0x210] sm:$0xff] %v3980
        %v3989 = vld [vmem:[%s197 + $0x1] sm:$0xff]
        %v3990 = vld [vmem:[%s197 + $0x11] sm:$0xff]
        %v3991 = vld [vmem:[%s197 + $0x21] sm:$0xff]
        %v3992 = vld [vmem:[%s197 + $0x31] sm:$0xff]
        %v3993 = vld [vmem:[%s197 + $0x41] sm:$0xff]
        %v3994 = vld [vmem:[%s197 + $0x51] sm:$0xff]
        %v3995 = vld [vmem:[%s197 + $0x61] sm:$0xff]
        %v3996 = vld [vmem:[%s197 + $0x71] sm:$0xff]
        %3997 = vst [vmem:[#allocation3 + $0x20] sm:$0xff] %v3989
        %3998 = vst [vmem:[#allocation3 + $0x68] sm:$0xff] %v3990
        %3999 = vst [vmem:[#allocation3 + $0xb0] sm:$0xff] %v3991
        %4000 = vst [vmem:[#allocation3 + $0xf8] sm:$0xff] %v3992
        %4001 = vst [vmem:[#allocation3 + $0x140] sm:$0xff] %v3993
        %4002 = vst [vmem:[#allocation3 + $0x188] sm:$0xff] %v3994
        %4003 = vst [vmem:[#allocation3 + $0x1d0] sm:$0xff] %v3995
        %4004 = vst [vmem:[#allocation3 + $0x218] sm:$0xff] %v3996
        %v4005 = vld [vmem:[%s197 + $0x2] sm:$0xff]
        %v4006 = vld [vmem:[%s197 + $0x12] sm:$0xff]
        %v4007 = vld [vmem:[%s197 + $0x22] sm:$0xff]
        %v4008 = vld [vmem:[%s197 + $0x32] sm:$0xff]
        %v4009 = vld [vmem:[%s197 + $0x42] sm:$0xff]
        %v4010 = vld [vmem:[%s197 + $0x52] sm:$0xff]
        %v4011 = vld [vmem:[%s197 + $0x62] sm:$0xff]
        %v4012 = vld [vmem:[%s197 + $0x72] sm:$0xff]
        %4013 = vst [vmem:[#allocation3 + $0x28] sm:$0xff] %v4005
        %4014 = vst [vmem:[#allocation3 + $0x70] sm:$0xff] %v4006
        %4015 = vst [vmem:[#allocation3 + $0xb8] sm:$0xff] %v4007
        %4016 = vst [vmem:[#allocation3 + $0x100] sm:$0xff] %v4008
        %4017 = vst [vmem:[#allocation3 + $0x148] sm:$0xff] %v4009
        %4018 = vst [vmem:[#allocation3 + $0x190] sm:$0xff] %v4010
        %4019 = vst [vmem:[#allocation3 + $0x1d8] sm:$0xff] %v4011
        %4020 = vst [vmem:[#allocation3 + $0x220] sm:$0xff] %v4012
        %v4021 = vld [vmem:[%s302] sm:$0xff]
        %v4022 = vld [vmem:[%s302 + $0x10] sm:$0xff]
        %v4023 = vld [vmem:[%s302 + $0x20] sm:$0xff]
        %v4024 = vld [vmem:[%s302 + $0x30] sm:$0xff]
        %v4025 = vld [vmem:[%s302 + $0x40] sm:$0xff]
        %v4026 = vld [vmem:[%s302 + $0x50] sm:$0xff]
        %v4027 = vld [vmem:[%s302 + $0x60] sm:$0xff]
        %v4028 = vld [vmem:[%s302 + $0x70] sm:$0xff]
        %4029 = vst [vmem:[#allocation3 + $0x30] sm:$0xff] %v4021
        %4030 = vst [vmem:[#allocation3 + $0x78] sm:$0xff] %v4022
        %4031 = vst [vmem:[#allocation3 + $0xc0] sm:$0xff] %v4023
        %4032 = vst [vmem:[#allocation3 + $0x108] sm:$0xff] %v4024
        %4033 = vst [vmem:[#allocation3 + $0x150] sm:$0xff] %v4025
        %4034 = vst [vmem:[#allocation3 + $0x198] sm:$0xff] %v4026
        %4035 = vst [vmem:[#allocation3 + $0x1e0] sm:$0xff] %v4027
        %4036 = vst [vmem:[#allocation3 + $0x228] sm:$0xff] %v4028
        %v4037 = vld [vmem:[%s302 + $0x1] sm:$0xff]
        %v4038 = vld [vmem:[%s302 + $0x11] sm:$0xff]
        %v4039 = vld [vmem:[%s302 + $0x21] sm:$0xff]
        %v4040 = vld [vmem:[%s302 + $0x31] sm:$0xff]
        %v4041 = vld [vmem:[%s302 + $0x41] sm:$0xff]
        %v4042 = vld [vmem:[%s302 + $0x51] sm:$0xff]
        %v4043 = vld [vmem:[%s302 + $0x61] sm:$0xff]
        %v4044 = vld [vmem:[%s302 + $0x71] sm:$0xff]
        %4045 = vst [vmem:[#allocation3 + $0x38] sm:$0xff] %v4037
        %4046 = vst [vmem:[#allocation3 + $0x80] sm:$0xff] %v4038
        %4047 = vst [vmem:[#allocation3 + $0xc8] sm:$0xff] %v4039
        %4048 = vst [vmem:[#allocation3 + $0x110] sm:$0xff] %v4040
        %4049 = vst [vmem:[#allocation3 + $0x158] sm:$0xff] %v4041
        %4050 = vst [vmem:[#allocation3 + $0x1a0] sm:$0xff] %v4042
        %4051 = vst [vmem:[#allocation3 + $0x1e8] sm:$0xff] %v4043
        %4052 = vst [vmem:[#allocation3 + $0x230] sm:$0xff] %v4044
        %v4053 = vld [vmem:[%s302 + $0x2] sm:$0xff]
        %v4054 = vld [vmem:[%s302 + $0x12] sm:$0xff]
        %v4055 = vld [vmem:[%s302 + $0x22] sm:$0xff]
        %v4056 = vld [vmem:[%s302 + $0x32] sm:$0xff]
        %v4057 = vld [vmem:[%s302 + $0x42] sm:$0xff]
        %v4058 = vld [vmem:[%s302 + $0x52] sm:$0xff]
        %v4059 = vld [vmem:[%s302 + $0x62] sm:$0xff]
        %v4060 = vld [vmem:[%s302 + $0x72] sm:$0xff]
        %4061 = vst [vmem:[#allocation3 + $0x40] sm:$0xff] %v4053
        %4062 = vst [vmem:[#allocation3 + $0x88] sm:$0xff] %v4054
        %4063 = vst [vmem:[#allocation3 + $0xd0] sm:$0xff] %v4055
        %4064 = vst [vmem:[#allocation3 + $0x118] sm:$0xff] %v4056
        %4065 = vst [vmem:[#allocation3 + $0x160] sm:$0xff] %v4057
        %4066 = vst [vmem:[#allocation3 + $0x1a8] sm:$0xff] %v4058
        %4067 = vst [vmem:[#allocation3 + $0x1f0] sm:$0xff] %v4059
        %4068 = vst [vmem:[#allocation3 + $0x238] sm:$0xff] %v4060
        %v4069 = vld [vmem:[#allocation3] sm:$0xff]
        %v4070 = vld [vmem:[#allocation3 + $0x8] sm:$0xff]
        %v4071 = vld [vmem:[#allocation3 + $0x10] sm:$0xff]
        %v4072 = vld [vmem:[#allocation3 + $0x18] sm:$0xff]
        %v4073 = vld [vmem:[#allocation3 + $0x20] sm:$0xff]
        %v4074 = vld [vmem:[#allocation3 + $0x28] sm:$0xff]
        %v4075 = vld [vmem:[#allocation3 + $0x30] sm:$0xff]
        %v4076 = vld [vmem:[#allocation3 + $0x38] sm:$0xff]
        %v4077 = vld [vmem:[#allocation3 + $0x40] sm:$0xff]
        %v4078 = vld [vmem:[#allocation3 + $0x48] sm:$0xff]
        %v4079 = vld [vmem:[#allocation3 + $0x50] sm:$0xff]
        %v4080 = vld [vmem:[#allocation3 + $0x58] sm:$0xff]
        %v4081 = vld [vmem:[#allocation3 + $0x60] sm:$0xff]
        %v4082 = vld [vmem:[#allocation3 + $0x68] sm:$0xff]
        %v4083 = vld [vmem:[#allocation3 + $0x70] sm:$0xff]
        %v4084 = vld [vmem:[#allocation3 + $0x78] sm:$0xff]
        %v4085 = vld [vmem:[#allocation3 + $0x80] sm:$0xff]
        %v4086 = vld [vmem:[#allocation3 + $0x88] sm:$0xff]
        %v4087 = vld [vmem:[#allocation3 + $0x90] sm:$0xff]
        %v4088 = vld [vmem:[#allocation3 + $0x98] sm:$0xff]
        %v4089 = vld [vmem:[#allocation3 + $0xa0] sm:$0xff]
        %v4090 = vld [vmem:[#allocation3 + $0xa8] sm:$0xff]
        %v4091 = vld [vmem:[#allocation3 + $0xb0] sm:$0xff]
        %v4092 = vld [vmem:[#allocation3 + $0xb8] sm:$0xff]
        %v4093 = vld [vmem:[#allocation3 + $0xc0] sm:$0xff]
        %v4094 = vld [vmem:[#allocation3 + $0xc8] sm:$0xff]
        %v4095 = vld [vmem:[#allocation3 + $0xd0] sm:$0xff]
        %v4096 = vld [vmem:[#allocation3 + $0xd8] sm:$0xff]
        %v4097 = vld [vmem:[#allocation3 + $0xe0] sm:$0xff]
        %v4098 = vld [vmem:[#allocation3 + $0xe8] sm:$0xff]
        %v4099 = vld [vmem:[#allocation3 + $0xf0] sm:$0xff]
        %v4100 = vld [vmem:[#allocation3 + $0xf8] sm:$0xff]
        %v4101 = vld [vmem:[#allocation3 + $0x100] sm:$0xff]
        %v4102 = vld [vmem:[#allocation3 + $0x108] sm:$0xff]
        %v4103 = vld [vmem:[#allocation3 + $0x110] sm:$0xff]
        %v4104 = vld [vmem:[#allocation3 + $0x118] sm:$0xff]
        %v4105 = vld [vmem:[#allocation3 + $0x120] sm:$0xff]
        %v4106 = vld [vmem:[#allocation3 + $0x128] sm:$0xff]
        %v4107 = vld [vmem:[#allocation3 + $0x130] sm:$0xff]
        %v4108 = vld [vmem:[#allocation3 + $0x138] sm:$0xff]
        %v4109 = vld [vmem:[#allocation3 + $0x140] sm:$0xff]
        %v4110 = vld [vmem:[#allocation3 + $0x148] sm:$0xff]
        %v4111 = vld [vmem:[#allocation3 + $0x150] sm:$0xff]
        %v4112 = vld [vmem:[#allocation3 + $0x158] sm:$0xff]
        %v4113 = vld [vmem:[#allocation3 + $0x160] sm:$0xff]
        %v4114 = vld [vmem:[#allocation3 + $0x168] sm:$0xff]
        %v4115 = vld [vmem:[#allocation3 + $0x170] sm:$0xff]
        %v4116 = vld [vmem:[#allocation3 + $0x178] sm:$0xff]
        %v4117 = vld [vmem:[#allocation3 + $0x180] sm:$0xff]
        %v4118 = vld [vmem:[#allocation3 + $0x188] sm:$0xff]
        %v4119 = vld [vmem:[#allocation3 + $0x190] sm:$0xff]
        %v4120 = vld [vmem:[#allocation3 + $0x198] sm:$0xff]
        %v4121 = vld [vmem:[#allocation3 + $0x1a0] sm:$0xff]
        %v4122 = vld [vmem:[#allocation3 + $0x1a8] sm:$0xff]
        %v4123 = vld [vmem:[#allocation3 + $0x1b0] sm:$0xff]
        %v4124 = vld [vmem:[#allocation3 + $0x1b8] sm:$0xff]
        %v4125 = vld [vmem:[#allocation3 + $0x1c0] sm:$0xff]
        %v4126 = vld [vmem:[#allocation3 + $0x1c8] sm:$0xff]
        %v4127 = vld [vmem:[#allocation3 + $0x1d0] sm:$0xff]
        %v4128 = vld [vmem:[#allocation3 + $0x1d8] sm:$0xff]
        %v4129 = vld [vmem:[#allocation3 + $0x1e0] sm:$0xff]
        %v4130 = vld [vmem:[#allocation3 + $0x1e8] sm:$0xff]
        %v4131 = vld [vmem:[#allocation3 + $0x1f0] sm:$0xff]
        %v4132 = vld [vmem:[#allocation3 + $0x1f8] sm:$0xff]
        %v4133 = vld [vmem:[#allocation3 + $0x200] sm:$0xff]
        %v4134 = vld [vmem:[#allocation3 + $0x208] sm:$0xff]
        %v4135 = vld [vmem:[#allocation3 + $0x210] sm:$0xff]
        %v4136 = vld [vmem:[#allocation3 + $0x218] sm:$0xff]
        %v4137 = vld [vmem:[#allocation3 + $0x220] sm:$0xff]
        %v4138 = vld [vmem:[#allocation3 + $0x228] sm:$0xff]
        %v4139 = vld [vmem:[#allocation3 + $0x230] sm:$0xff]
        %v4140 = vld [vmem:[#allocation3 + $0x238] sm:$0xff]
        %s4141 = scalar_lea.vmem %s1, 4608
        %v4142 = vld [vmem:[%s4141] sm:$0xff]
        %v4143 = vld [vmem:[%s4141 + $0x8] sm:$0xff]
        %v4144 = vld [vmem:[%s4141 + $0x10] sm:$0xff]
        %v4145 = vld [vmem:[%s4141 + $0x18] sm:$0xff]
        %v4146 = vld [vmem:[%s4141 + $0x20] sm:$0xff]
        %v4147 = vld [vmem:[%s4141 + $0x28] sm:$0xff]
        %v4148 = vld [vmem:[%s4141 + $0x30] sm:$0xff]
        %v4149 = vld [vmem:[%s4141 + $0x38] sm:$0xff]
        %v4150 = vld [vmem:[%s4141 + $0x40] sm:$0xff]
        %v4151 = vld [vmem:[%s4141 + $0x48] sm:$0xff]
        %v4152 = vld [vmem:[%s4141 + $0x50] sm:$0xff]
        %v4153 = vld [vmem:[%s4141 + $0x58] sm:$0xff]
        %v4154 = vld [vmem:[%s4141 + $0x60] sm:$0xff]
        %v4155 = vld [vmem:[%s4141 + $0x68] sm:$0xff]
        %v4156 = vld [vmem:[%s4141 + $0x70] sm:$0xff]
        %v4157 = vld [vmem:[%s4141 + $0x78] sm:$0xff]
        %v4158 = vld [vmem:[%s4141 + $0x80] sm:$0xff]
        %v4159 = vld [vmem:[%s4141 + $0x88] sm:$0xff]
        %v4160 = vld [vmem:[%s4141 + $0x90] sm:$0xff]
        %v4161 = vld [vmem:[%s4141 + $0x98] sm:$0xff]
        %v4162 = vld [vmem:[%s4141 + $0xa0] sm:$0xff]
        %v4163 = vld [vmem:[%s4141 + $0xa8] sm:$0xff]
        %v4164 = vld [vmem:[%s4141 + $0xb0] sm:$0xff]
        %v4165 = vld [vmem:[%s4141 + $0xb8] sm:$0xff]
        %v4166 = vld [vmem:[%s4141 + $0xc0] sm:$0xff]
        %v4167 = vld [vmem:[%s4141 + $0xc8] sm:$0xff]
        %v4168 = vld [vmem:[%s4141 + $0xd0] sm:$0xff]
        %v4169 = vld [vmem:[%s4141 + $0xd8] sm:$0xff]
        %v4170 = vld [vmem:[%s4141 + $0xe0] sm:$0xff]
        %v4171 = vld [vmem:[%s4141 + $0xe8] sm:$0xff]
        %v4172 = vld [vmem:[%s4141 + $0xf0] sm:$0xff]
        %v4173 = vld [vmem:[%s4141 + $0xf8] sm:$0xff]
        %v4174 = vld [vmem:[%s4141 + $0x100] sm:$0xff]
        %v4175 = vld [vmem:[%s4141 + $0x108] sm:$0xff]
        %v4176 = vld [vmem:[%s4141 + $0x110] sm:$0xff]
        %v4177 = vld [vmem:[%s4141 + $0x118] sm:$0xff]
        %v4178 = vld [vmem:[%s4141 + $0x120] sm:$0xff]
        %v4179 = vld [vmem:[%s4141 + $0x128] sm:$0xff]
        %v4180 = vld [vmem:[%s4141 + $0x130] sm:$0xff]
        %v4181 = vld [vmem:[%s4141 + $0x138] sm:$0xff]
        %v4182 = vld [vmem:[%s4141 + $0x140] sm:$0xff]
        %v4183 = vld [vmem:[%s4141 + $0x148] sm:$0xff]
        %v4184 = vld [vmem:[%s4141 + $0x150] sm:$0xff]
        %v4185 = vld [vmem:[%s4141 + $0x158] sm:$0xff]
        %v4186 = vld [vmem:[%s4141 + $0x160] sm:$0xff]
        %v4187 = vld [vmem:[%s4141 + $0x168] sm:$0xff]
        %v4188 = vld [vmem:[%s4141 + $0x170] sm:$0xff]
        %v4189 = vld [vmem:[%s4141 + $0x178] sm:$0xff]
        %v4190 = vld [vmem:[%s4141 + $0x180] sm:$0xff]
        %v4191 = vld [vmem:[%s4141 + $0x188] sm:$0xff]
        %v4192 = vld [vmem:[%s4141 + $0x190] sm:$0xff]
        %v4193 = vld [vmem:[%s4141 + $0x198] sm:$0xff]
        %v4194 = vld [vmem:[%s4141 + $0x1a0] sm:$0xff]
        %v4195 = vld [vmem:[%s4141 + $0x1a8] sm:$0xff]
        %v4196 = vld [vmem:[%s4141 + $0x1b0] sm:$0xff]
        %v4197 = vld [vmem:[%s4141 + $0x1b8] sm:$0xff]
        %v4198 = vld [vmem:[%s4141 + $0x1c0] sm:$0xff]
        %v4199 = vld [vmem:[%s4141 + $0x1c8] sm:$0xff]
        %v4200 = vld [vmem:[%s4141 + $0x1d0] sm:$0xff]
        %v4201 = vld [vmem:[%s4141 + $0x1d8] sm:$0xff]
        %v4202 = vld [vmem:[%s4141 + $0x1e0] sm:$0xff]
        %v4203 = vld [vmem:[%s4141 + $0x1e8] sm:$0xff]
        %v4204 = vld [vmem:[%s4141 + $0x1f0] sm:$0xff]
        %v4205 = vld [vmem:[%s4141 + $0x1f8] sm:$0xff]
        %v4206 = vld [vmem:[%s4141 + $0x200] sm:$0xff]
        %v4207 = vld [vmem:[%s4141 + $0x208] sm:$0xff]
        %v4208 = vld [vmem:[%s4141 + $0x210] sm:$0xff]
        %v4209 = vld [vmem:[%s4141 + $0x218] sm:$0xff]
        %v4210 = vld [vmem:[%s4141 + $0x220] sm:$0xff]
        %v4211 = vld [vmem:[%s4141 + $0x228] sm:$0xff]
        %v4212 = vld [vmem:[%s4141 + $0x230] sm:$0xff]
        %v4213 = vld [vmem:[%s4141 + $0x238] sm:$0xff]
        %v4214 = vld [vmem:[%s4141 + $0x240] sm:$0xff]
        %v4215 = vld [vmem:[%s4141 + $0x248] sm:$0xff]
        %v4216 = vld [vmem:[%s4141 + $0x250] sm:$0xff]
        %v4217 = vld [vmem:[%s4141 + $0x258] sm:$0xff]
        %v4218 = vld [vmem:[%s4141 + $0x260] sm:$0xff]
        %v4219 = vld [vmem:[%s4141 + $0x268] sm:$0xff]
        %v4220 = vld [vmem:[%s4141 + $0x270] sm:$0xff]
        %v4221 = vld [vmem:[%s4141 + $0x278] sm:$0xff]
        %v4222 = vld [vmem:[%s4141 + $0x280] sm:$0xff]
        %v4223 = vld [vmem:[%s4141 + $0x288] sm:$0xff]
        %v4224 = vld [vmem:[%s4141 + $0x290] sm:$0xff]
        %v4225 = vld [vmem:[%s4141 + $0x298] sm:$0xff]
        %v4226 = vld [vmem:[%s4141 + $0x2a0] sm:$0xff]
        %v4227 = vld [vmem:[%s4141 + $0x2a8] sm:$0xff]
        %v4228 = vld [vmem:[%s4141 + $0x2b0] sm:$0xff]
        %v4229 = vld [vmem:[%s4141 + $0x2b8] sm:$0xff]
        %v4230 = vld [vmem:[%s4141 + $0x2c0] sm:$0xff]
        %v4231 = vld [vmem:[%s4141 + $0x2c8] sm:$0xff]
        %v4232 = vld [vmem:[%s4141 + $0x2d0] sm:$0xff]
        %v4233 = vld [vmem:[%s4141 + $0x2d8] sm:$0xff]
        %v4234 = vld [vmem:[%s4141 + $0x2e0] sm:$0xff]
        %v4235 = vld [vmem:[%s4141 + $0x2e8] sm:$0xff]
        %v4236 = vld [vmem:[%s4141 + $0x2f0] sm:$0xff]
        %v4237 = vld [vmem:[%s4141 + $0x2f8] sm:$0xff]
        %v4238 = vld [vmem:[%s4141 + $0x300] sm:$0xff]
        %v4239 = vld [vmem:[%s4141 + $0x308] sm:$0xff]
        %v4240 = vld [vmem:[%s4141 + $0x310] sm:$0xff]
        %v4241 = vld [vmem:[%s4141 + $0x318] sm:$0xff]
        %v4242 = vld [vmem:[%s4141 + $0x320] sm:$0xff]
        %v4243 = vld [vmem:[%s4141 + $0x328] sm:$0xff]
        %v4244 = vld [vmem:[%s4141 + $0x330] sm:$0xff]
        %v4245 = vld [vmem:[%s4141 + $0x338] sm:$0xff]
        %v4246 = vld [vmem:[%s4141 + $0x340] sm:$0xff]
        %v4247 = vld [vmem:[%s4141 + $0x348] sm:$0xff]
        %v4248 = vld [vmem:[%s4141 + $0x350] sm:$0xff]
        %v4249 = vld [vmem:[%s4141 + $0x358] sm:$0xff]
        %v4250 = vld [vmem:[%s4141 + $0x360] sm:$0xff]
        %v4251 = vld [vmem:[%s4141 + $0x368] sm:$0xff]
        %v4252 = vld [vmem:[%s4141 + $0x370] sm:$0xff]
        %v4253 = vld [vmem:[%s4141 + $0x378] sm:$0xff]
        %v4254 = vld [vmem:[%s4141 + $0x380] sm:$0xff]
        %v4255 = vld [vmem:[%s4141 + $0x388] sm:$0xff]
        %v4256 = vld [vmem:[%s4141 + $0x390] sm:$0xff]
        %v4257 = vld [vmem:[%s4141 + $0x398] sm:$0xff]
        %v4258 = vld [vmem:[%s4141 + $0x3a0] sm:$0xff]
        %v4259 = vld [vmem:[%s4141 + $0x3a8] sm:$0xff]
        %v4260 = vld [vmem:[%s4141 + $0x3b0] sm:$0xff]
        %v4261 = vld [vmem:[%s4141 + $0x3b8] sm:$0xff]
        %v4262 = vld [vmem:[%s4141 + $0x3c0] sm:$0xff]
        %v4263 = vld [vmem:[%s4141 + $0x3c8] sm:$0xff]
        %v4264 = vld [vmem:[%s4141 + $0x3d0] sm:$0xff]
        %v4265 = vld [vmem:[%s4141 + $0x3d8] sm:$0xff]
        %v4266 = vld [vmem:[%s4141 + $0x3e0] sm:$0xff]
        %v4267 = vld [vmem:[%s4141 + $0x3e8] sm:$0xff]
        %v4268 = vld [vmem:[%s4141 + $0x3f0] sm:$0xff]
        %v4269 = vld [vmem:[%s4141 + $0x3f8] sm:$0xff]
        %v4270 = vld [vmem:[%s4141 + $0x400] sm:$0xff]
        %v4271 = vld [vmem:[%s4141 + $0x408] sm:$0xff]
        %v4272 = vld [vmem:[%s4141 + $0x410] sm:$0xff]
        %v4273 = vld [vmem:[%s4141 + $0x418] sm:$0xff]
        %v4274 = vld [vmem:[%s4141 + $0x420] sm:$0xff]
        %v4275 = vld [vmem:[%s4141 + $0x428] sm:$0xff]
        %v4276 = vld [vmem:[%s4141 + $0x430] sm:$0xff]
        %v4277 = vld [vmem:[%s4141 + $0x438] sm:$0xff]
        %v4278 = vld [vmem:[%s4141 + $0x440] sm:$0xff]
        %v4279 = vld [vmem:[%s4141 + $0x448] sm:$0xff]
        %v4280 = vld [vmem:[%s4141 + $0x450] sm:$0xff]
        %v4281 = vld [vmem:[%s4141 + $0x458] sm:$0xff]
        %v4282 = vld [vmem:[%s4141 + $0x460] sm:$0xff]
        %v4283 = vld [vmem:[%s4141 + $0x468] sm:$0xff]
        %v4284 = vld [vmem:[%s4141 + $0x470] sm:$0xff]
        %v4285 = vld [vmem:[%s4141 + $0x478] sm:$0xff]
        %s4286 = scalar_lea.vmem %s2, 4
        %v4287 = vld [vmem:[%s4286] sm:$0x1]
        %v4289 = vlaneseq
        %v4290 = vshrl.u32 %v4289, 7
        %v4291 = vsub.s32 0, %v4290
        %v4292 = vrot.slane %v4287, %v4291
        %4294 = vmatprep.subr.mxu0 0.0
        %4295 = vmatpush1.msra.mxu0 %v4142
        %4296 = vmatprep.subr.mxu0 0.0
        %4297 = vmatpush1.msra.mxu0 %v4143
        %4298 = vmatprep.subr.mxu0 0.0
        %4299 = vmatpush1.msra.mxu0 %v4144
        %4300 = vmatprep.subr.mxu0 0.0
        %4301 = vmatpush1.msra.mxu0 %v4145
        %4302 = vmatprep.subr.mxu0 0.0
        %4303 = vmatpush1.msra.mxu0 %v4146
        %4304 = vmatprep.subr.mxu0 0.0
        %4305 = vmatpush1.msra.mxu0 %v4147
        %4306 = vmatprep.subr.mxu0 0.0
        %4307 = vmatpush1.msra.mxu0 %v4148
        %4308 = vmatprep.subr.mxu0 0.0
        %4309 = vmatpush1.msra.mxu0 %v4149
        %4310 = vmatprep.subr.mxu0 0.0
        %4311 = vmatpush1.msra.mxu0 %v4150
        %4312 = vmatprep.subr.mxu0 0.0
        %4313 = vmatpush1.msra.mxu0 %v4151
        %4314 = vmatprep.subr.mxu0 0.0
        %4315 = vmatpush1.msra.mxu0 %v4152
        %4316 = vmatprep.subr.mxu0 0.0
        %4317 = vmatpush1.msra.mxu0 %v4153
        %4318 = vmatprep.subr.mxu0 0.0
        %4319 = vmatpush1.msra.mxu0 %v4154
        %4320 = vmatprep.subr.mxu0 0.0
        %4321 = vmatpush1.msra.mxu0 %v4155
        %4322 = vmatprep.subr.mxu0 0.0
        %4323 = vmatpush1.msra.mxu0 %v4156
        %4324 = vmatprep.subr.mxu0 0.0
        %4325 = vmatpush1.msra.mxu0 %v4157
        %4326 = vmatprep.subr.mxu0 0.0
        %4327 = vmatpush1.msra.mxu0 %v4158
        %4328 = vmatprep.subr.mxu0 0.0
        %4329 = vmatpush1.msra.mxu0 %v4159
        %4330 = vmatprep.subr.mxu0 0.0
        %4331 = vmatpush1.msra.mxu0 %v4160
        %4332 = vmatprep.subr.mxu0 0.0
        %4333 = vmatpush1.msra.mxu0 %v4161
        %4334 = vmatprep.subr.mxu0 0.0
        %4335 = vmatpush1.msra.mxu0 %v4162
        %4336 = vmatprep.subr.mxu0 0.0
        %4337 = vmatpush1.msra.mxu0 %v4163
        %4338 = vmatprep.subr.mxu0 0.0
        %4339 = vmatpush1.msra.mxu0 %v4164
        %4340 = vmatprep.subr.mxu0 0.0
        %4341 = vmatpush1.msra.mxu0 %v4165
        %4342 = vmatprep.subr.mxu0 0.0
        %4343 = vmatpush1.msra.mxu0 %v4166
        %4344 = vmatprep.subr.mxu0 0.0
        %4345 = vmatpush1.msra.mxu0 %v4167
        %4346 = vmatprep.subr.mxu0 0.0
        %4347 = vmatpush1.msra.mxu0 %v4168
        %4348 = vmatprep.subr.mxu0 0.0
        %4349 = vmatpush1.msra.mxu0 %v4169
        %4350 = vmatprep.subr.mxu0 0.0
        %4351 = vmatpush1.msra.mxu0 %v4170
        %4352 = vmatprep.subr.mxu0 0.0
        %4353 = vmatpush1.msra.mxu0 %v4171
        %4354 = vmatprep.subr.mxu0 0.0
        %4355 = vmatpush1.msra.mxu0 %v4172
        %4356 = vmatprep.subr.mxu0 0.0
        %4357 = vmatpush1.msra.mxu0 %v4173
        %4358 = vmatprep.mubr.f32.mxu0 %v4070
        %4359 = vmatmul.mubr.f32.gmra.mrb[0].mxu0 %v4069
        %v4360 = vpop.f32.mrb[0].mxu0
        %v4361 = vadd.f32 %v4292, %v4360
        %v4362 = vpop.f32.mrb[0].mxu0
        %4363 = vmatprep.mubr.f32.mxu0 %v4079
        %4364 = vmatmul.mubr.f32.gmra.mrb[0].mxu0 %v4078
        %v4365 = vpop.f32.mrb[0].mxu0
        %v4366 = vadd.f32 %v4292, %v4365
        %v4367 = vpop.f32.mrb[0].mxu0
        %4368 = vmatprep.mubr.f32.mxu0 %v4088
        %4369 = vmatmul.mubr.f32.gmra.mrb[0].mxu0 %v4087
        %v4370 = vpop.f32.mrb[0].mxu0
        %v4371 = vadd.f32 %v4292, %v4370
        %v4372 = vpop.f32.mrb[0].mxu0
        %4373 = vmatprep.mubr.f32.mxu0 %v4097
        %4374 = vmatmul.mubr.f32.gmra.mrb[0].mxu0 %v4096
        %v4375 = vpop.f32.mrb[0].mxu0
        %v4376 = vadd.f32 %v4292, %v4375
        %v4377 = vpop.f32.mrb[0].mxu0
        %4378 = vmatprep.mubr.f32.mxu0 %v4106
        %4379 = vmatmul.mubr.f32.gmra.mrb[0].mxu0 %v4105
        %v4380 = vpop.f32.mrb[0].mxu0
        %v4381 = vadd.f32 %v4292, %v4380
        %v4382 = vpop.f32.mrb[0].mxu0
        %4383 = vmatprep.mubr.f32.mxu0 %v4115
        %4384 = vmatmul.mubr.f32.gmra.mrb[0].mxu0 %v4114
        %v4385 = vpop.f32.mrb[0].mxu0
        %v4386 = vadd.f32 %v4292, %v4385
        %v4387 = vpop.f32.mrb[0].mxu0
        %4388 = vmatprep.mubr.f32.mxu0 %v4124
        %4389 = vmatmul.mubr.f32.gmra.mrb[0].mxu0 %v4123
        %v4390 = vpop.f32.mrb[0].mxu0
        %v4391 = vadd.f32 %v4292, %v4390
        %v4392 = vpop.f32.mrb[0].mxu0
        %4393 = vmatprep.mubr.f32.mxu0 %v4133
        %4394 = vmatmul.mubr.f32.gmra.mrb[0].mxu0 %v4132
        %v4395 = vpop.f32.mrb[0].mxu0
        %v4396 = vadd.f32 %v4292, %v4395
        %v4397 = vpop.f32.mrb[0].mxu0
        %4398 = vdwg.mxu0
        %4399 = vmatprep.subr.mxu0 0.0
        %4400 = vmatpush1.msra.mxu0 %v4174
        %4401 = vmatprep.subr.mxu0 0.0
        %4402 = vmatpush1.msra.mxu0 %v4175
        %4403 = vmatprep.subr.mxu0 0.0
        %4404 = vmatpush1.msra.mxu0 %v4176
        %4405 = vmatprep.subr.mxu0 0.0
        %4406 = vmatpush1.msra.mxu0 %v4177
        %4407 = vmatprep.subr.mxu0 0.0
        %4408 = vmatpush1.msra.mxu0 %v4178
        %4409 = vmatprep.subr.mxu0 0.0
        %4410 = vmatpush1.msra.mxu0 %v4179
        %4411 = vmatprep.subr.mxu0 0.0
        %4412 = vmatpush1.msra.mxu0 %v4180
        %4413 = vmatprep.subr.mxu0 0.0
        %4414 = vmatpush1.msra.mxu0 %v4181
        %4415 = vmatprep.subr.mxu0 0.0
        %4416 = vmatpush1.msra.mxu0 %v4182
        %4417 = vmatprep.subr.mxu0 0.0
        %4418 = vmatpush1.msra.mxu0 %v4183
        %4419 = vmatprep.subr.mxu0 0.0
        %4420 = vmatpush1.msra.mxu0 %v4184
        %4421 = vmatprep.subr.mxu0 0.0
        %4422 = vmatpush1.msra.mxu0 %v4185
        %4423 = vmatprep.subr.mxu0 0.0
        %4424 = vmatpush1.msra.mxu0 %v4186
        %4425 = vmatprep.subr.mxu0 0.0
        %4426 = vmatpush1.msra.mxu0 %v4187
        %4427 = vmatprep.subr.mxu0 0.0
        %4428 = vmatpush1.msra.mxu0 %v4188
        %4429 = vmatprep.subr.mxu0 0.0
        %4430 = vmatpush1.msra.mxu0 %v4189
        %4431 = vmatprep.subr.mxu0 0.0
        %4432 = vmatpush1.msra.mxu0 %v4190
        %4433 = vmatprep.subr.mxu0 0.0
        %4434 = vmatpush1.msra.mxu0 %v4191
        %4435 = vmatprep.subr.mxu0 0.0
        %4436 = vmatpush1.msra.mxu0 %v4192
        %4437 = vmatprep.subr.mxu0 0.0
        %4438 = vmatpush1.msra.mxu0 %v4193
        %4439 = vmatprep.subr.mxu0 0.0
        %4440 = vmatpush1.msra.mxu0 %v4194
        %4441 = vmatprep.subr.mxu0 0.0
        %4442 = vmatpush1.msra.mxu0 %v4195
        %4443 = vmatprep.subr.mxu0 0.0
        %4444 = vmatpush1.msra.mxu0 %v4196
        %4445 = vmatprep.subr.mxu0 0.0
        %4446 = vmatpush1.msra.mxu0 %v4197
        %4447 = vmatprep.subr.mxu0 0.0
        %4448 = vmatpush1.msra.mxu0 %v4198
        %4449 = vmatprep.subr.mxu0 0.0
        %4450 = vmatpush1.msra.mxu0 %v4199
        %4451 = vmatprep.subr.mxu0 0.0
        %4452 = vmatpush1.msra.mxu0 %v4200
        %4453 = vmatprep.subr.mxu0 0.0
        %4454 = vmatpush1.msra.mxu0 %v4201
        %4455 = vmatprep.subr.mxu0 0.0
        %4456 = vmatpush1.msra.mxu0 %v4202
        %4457 = vmatprep.subr.mxu0 0.0
        %4458 = vmatpush1.msra.mxu0 %v4203
        %4459 = vmatprep.subr.mxu0 0.0
        %4460 = vmatpush1.msra.mxu0 %v4204
        %4461 = vmatprep.subr.mxu0 0.0
        %4462 = vmatpush1.msra.mxu0 %v4205
        %4463 = vmatprep.mubr.f32.mxu0 %v4072
        %4464 = vmatmul.mubr.f32.gmra.mrb[0].mxu0 %v4071
        %v4465 = vpop.f32.mrb[0].mxu0
        %v4466 = vadd.f32 %v4361, %v4465
        %v4467 = vpop.f32.mrb[0].mxu0
        %4468 = vmatprep.mubr.f32.mxu0 %v4081
        %4469 = vmatmul.mubr.f32.gmra.mrb[0].mxu0 %v4080
        %v4470 = vpop.f32.mrb[0].mxu0
        %v4471 = vadd.f32 %v4366, %v4470
        %v4472 = vpop.f32.mrb[0].mxu0
        %4473 = vmatprep.mubr.f32.mxu0 %v4090
        %4474 = vmatmul.mubr.f32.gmra.mrb[0].mxu0 %v4089
        %v4475 = vpop.f32.mrb[0].mxu0
        %v4476 = vadd.f32 %v4371, %v4475
        %v4477 = vpop.f32.mrb[0].mxu0
        %4478 = vmatprep.mubr.f32.mxu0 %v4099
        %4479 = vmatmul.mubr.f32.gmra.mrb[0].mxu0 %v4098
        %v4480 = vpop.f32.mrb[0].mxu0
        %v4481 = vadd.f32 %v4376, %v4480
        %v4482 = vpop.f32.mrb[0].mxu0
        %4483 = vmatprep.mubr.f32.mxu0 %v4108
        %4484 = vmatmul.mubr.f32.gmra.mrb[0].mxu0 %v4107
        %v4485 = vpop.f32.mrb[0].mxu0
        %v4486 = vadd.f32 %v4381, %v4485
        %v4487 = vpop.f32.mrb[0].mxu0
        %4488 = vmatprep.mubr.f32.mxu0 %v4117
        %4489 = vmatmul.mubr.f32.gmra.mrb[0].mxu0 %v4116
        %v4490 = vpop.f32.mrb[0].mxu0
        %v4491 = vadd.f32 %v4386, %v4490
        %v4492 = vpop.f32.mrb[0].mxu0
        %4493 = vmatprep.mubr.f32.mxu0 %v4126
        %4494 = vmatmul.mubr.f32.gmra.mrb[0].mxu0 %v4125
        %v4495 = vpop.f32.mrb[0].mxu0
        %v4496 = vadd.f32 %v4391, %v4495
        %v4497 = vpop.f32.mrb[0].mxu0
        %4498 = vmatprep.mubr.f32.mxu0 %v4135
        %4499 = vmatmul.mubr.f32.gmra.mrb[0].mxu0 %v4134
        %v4500 = vpop.f32.mrb[0].mxu0
        %v4501 = vadd.f32 %v4396, %v4500
        %v4502 = vpop.f32.mrb[0].mxu0
        %4503 = vdwg.mxu0
        %4504 = vmatprep.subr.mxu0 0.0
        %4505 = vmatpush1.msra.mxu0 %v4206
        %4506 = vmatprep.subr.mxu0 0.0
        %4507 = vmatpush1.msra.mxu0 %v4207
        %4508 = vmatprep.subr.mxu0 0.0
        %4509 = vmatpush1.msra.mxu0 %v4208
        %4510 = vmatprep.subr.mxu0 0.0
        %4511 = vmatpush1.msra.mxu0 %v4209
        %4512 = vmatprep.subr.mxu0 0.0
        %4513 = vmatpush1.msra.mxu0 %v4210
        %4514 = vmatprep.subr.mxu0 0.0
        %4515 = vmatpush1.msra.mxu0 %v4211
        %4516 = vmatprep.subr.mxu0 0.0
        %4517 = vmatpush1.msra.mxu0 %v4212
        %4518 = vmatprep.subr.mxu0 0.0
        %4519 = vmatpush1.msra.mxu0 %v4213
        %4520 = vmatprep.subr.mxu0 0.0
        %4521 = vmatpush1.msra.mxu0 %v4214
        %4522 = vmatprep.subr.mxu0 0.0
        %4523 = vmatpush1.msra.mxu0 %v4215
        %4524 = vmatprep.subr.mxu0 0.0
        %4525 = vmatpush1.msra.mxu0 %v4216
        %4526 = vmatprep.subr.mxu0 0.0
        %4527 = vmatpush1.msra.mxu0 %v4217
        %4528 = vmatprep.subr.mxu0 0.0
        %4529 = vmatpush1.msra.mxu0 %v4218
        %4530 = vmatprep.subr.mxu0 0.0
        %4531 = vmatpush1.msra.mxu0 %v4219
        %4532 = vmatprep.subr.mxu0 0.0
        %4533 = vmatpush1.msra.mxu0 %v4220
        %4534 = vmatprep.subr.mxu0 0.0
        %4535 = vmatpush1.msra.mxu0 %v4221
        %4536 = vmatprep.subr.mxu0 0.0
        %4537 = vmatpush1.msra.mxu0 %v4222
        %4538 = vmatprep.subr.mxu0 0.0
        %4539 = vmatpush1.msra.mxu0 %v4223
        %4540 = vmatprep.subr.mxu0 0.0
        %4541 = vmatpush1.msra.mxu0 %v4224
        %4542 = vmatprep.subr.mxu0 0.0
        %4543 = vmatpush1.msra.mxu0 %v4225
        %4544 = vmatprep.subr.mxu0 0.0
        %4545 = vmatpush1.msra.mxu0 %v4226
        %4546 = vmatprep.subr.mxu0 0.0
        %4547 = vmatpush1.msra.mxu0 %v4227
        %4548 = vmatprep.subr.mxu0 0.0
        %4549 = vmatpush1.msra.mxu0 %v4228
        %4550 = vmatprep.subr.mxu0 0.0
        %4551 = vmatpush1.msra.mxu0 %v4229
        %4552 = vmatprep.subr.mxu0 0.0
        %4553 = vmatpush1.msra.mxu0 %v4230
        %4554 = vmatprep.subr.mxu0 0.0
        %4555 = vmatpush1.msra.mxu0 %v4231
        %4556 = vmatprep.subr.mxu0 0.0
        %4557 = vmatpush1.msra.mxu0 %v4232
        %4558 = vmatprep.subr.mxu0 0.0
        %4559 = vmatpush1.msra.mxu0 %v4233
        %4560 = vmatprep.subr.mxu0 0.0
        %4561 = vmatpush1.msra.mxu0 %v4234
        %4562 = vmatprep.subr.mxu0 0.0
        %4563 = vmatpush1.msra.mxu0 %v4235
        %4564 = vmatprep.subr.mxu0 0.0
        %4565 = vmatpush1.msra.mxu0 %v4236
        %4566 = vmatprep.subr.mxu0 0.0
        %4567 = vmatpush1.msra.mxu0 %v4237
        %4568 = vmatprep.mubr.f32.mxu0 %v4074
        %4569 = vmatmul.mubr.f32.gmra.mrb[0].mxu0 %v4073
        %v4570 = vpop.f32.mrb[0].mxu0
        %v4571 = vadd.f32 %v4466, %v4570
        %v4572 = vpop.f32.mrb[0].mxu0
        %4573 = vmatprep.mubr.f32.mxu0 %v4083
        %4574 = vmatmul.mubr.f32.gmra.mrb[0].mxu0 %v4082
        %v4575 = vpop.f32.mrb[0].mxu0
        %v4576 = vadd.f32 %v4471, %v4575
        %v4577 = vpop.f32.mrb[0].mxu0
        %4578 = vmatprep.mubr.f32.mxu0 %v4092
        %4579 = vmatmul.mubr.f32.gmra.mrb[0].mxu0 %v4091
        %v4580 = vpop.f32.mrb[0].mxu0
        %v4581 = vadd.f32 %v4476, %v4580
        %v4582 = vpop.f32.mrb[0].mxu0
        %4583 = vmatprep.mubr.f32.mxu0 %v4101
        %4584 = vmatmul.mubr.f32.gmra.mrb[0].mxu0 %v4100
        %v4585 = vpop.f32.mrb[0].mxu0
        %v4586 = vadd.f32 %v4481, %v4585
        %v4587 = vpop.f32.mrb[0].mxu0
        %4588 = vmatprep.mubr.f32.mxu0 %v4110
        %4589 = vmatmul.mubr.f32.gmra.mrb[0].mxu0 %v4109
        %v4590 = vpop.f32.mrb[0].mxu0
        %v4591 = vadd.f32 %v4486, %v4590
        %v4592 = vpop.f32.mrb[0].mxu0
        %4593 = vmatprep.mubr.f32.mxu0 %v4119
        %4594 = vmatmul.mubr.f32.gmra.mrb[0].mxu0 %v4118
        %v4595 = vpop.f32.mrb[0].mxu0
        %v4596 = vadd.f32 %v4491, %v4595
        %v4597 = vpop.f32.mrb[0].mxu0
        %4598 = vmatprep.mubr.f32.mxu0 %v4128
        %4599 = vmatmul.mubr.f32.gmra.mrb[0].mxu0 %v4127
        %v4600 = vpop.f32.mrb[0].mxu0
        %v4601 = vadd.f32 %v4496, %v4600
        %v4602 = vpop.f32.mrb[0].mxu0
        %4603 = vmatprep.mubr.f32.mxu0 %v4137
        %4604 = vmatmul.mubr.f32.gmra.mrb[0].mxu0 %v4136
        %v4605 = vpop.f32.mrb[0].mxu0
        %v4606 = vadd.f32 %v4501, %v4605
        %v4607 = vpop.f32.mrb[0].mxu0
        %4608 = vdwg.mxu0
        %4609 = vmatprep.subr.mxu0 0.0
        %4610 = vmatpush1.msra.mxu0 %v4238
        %4611 = vmatprep.subr.mxu0 0.0
        %4612 = vmatpush1.msra.mxu0 %v4239
        %4613 = vmatprep.subr.mxu0 0.0
        %4614 = vmatpush1.msra.mxu0 %v4240
        %4615 = vmatprep.subr.mxu0 0.0
        %4616 = vmatpush1.msra.mxu0 %v4241
        %4617 = vmatprep.subr.mxu0 0.0
        %4618 = vmatpush1.msra.mxu0 %v4242
        %4619 = vmatprep.subr.mxu0 0.0
        %4620 = vmatpush1.msra.mxu0 %v4243
        %4621 = vmatprep.subr.mxu0 0.0
        %4622 = vmatpush1.msra.mxu0 %v4244
        %4623 = vmatprep.subr.mxu0 0.0
        %4624 = vmatpush1.msra.mxu0 %v4245
        %4625 = vmatprep.subr.mxu0 0.0
        %4626 = vmatpush1.msra.mxu0 %v4246
        %4627 = vmatprep.subr.mxu0 0.0
        %4628 = vmatpush1.msra.mxu0 %v4247
        %4629 = vmatprep.subr.mxu0 0.0
        %4630 = vmatpush1.msra.mxu0 %v4248
        %4631 = vmatprep.subr.mxu0 0.0
        %4632 = vmatpush1.msra.mxu0 %v4249
        %4633 = vmatprep.subr.mxu0 0.0
        %4634 = vmatpush1.msra.mxu0 %v4250
        %4635 = vmatprep.subr.mxu0 0.0
        %4636 = vmatpush1.msra.mxu0 %v4251
        %4637 = vmatprep.subr.mxu0 0.0
        %4638 = vmatpush1.msra.mxu0 %v4252
        %4639 = vmatprep.subr.mxu0 0.0
        %4640 = vmatpush1.msra.mxu0 %v4253
        %4641 = vmatprep.subr.mxu0 0.0
        %4642 = vmatpush1.msra.mxu0 %v4254
        %4643 = vmatprep.subr.mxu0 0.0
        %4644 = vmatpush1.msra.mxu0 %v4255
        %4645 = vmatprep.subr.mxu0 0.0
        %4646 = vmatpush1.msra.mxu0 %v4256
        %4647 = vmatprep.subr.mxu0 0.0
        %4648 = vmatpush1.msra.mxu0 %v4257
        %4649 = vmatprep.subr.mxu0 0.0
        %4650 = vmatpush1.msra.mxu0 %v4258
        %4651 = vmatprep.subr.mxu0 0.0
        %4652 = vmatpush1.msra.mxu0 %v4259
        %4653 = vmatprep.subr.mxu0 0.0
        %4654 = vmatpush1.msra.mxu0 %v4260
        %4655 = vmatprep.subr.mxu0 0.0
        %4656 = vmatpush1.msra.mxu0 %v4261
        %4657 = vmatprep.subr.mxu0 0.0
        %4658 = vmatpush1.msra.mxu0 %v4262
        %4659 = vmatprep.subr.mxu0 0.0
        %4660 = vmatpush1.msra.mxu0 %v4263
        %4661 = vmatprep.subr.mxu0 0.0
        %4662 = vmatpush1.msra.mxu0 %v4264
        %4663 = vmatprep.subr.mxu0 0.0
        %4664 = vmatpush1.msra.mxu0 %v4265
        %4665 = vmatprep.subr.mxu0 0.0
        %4666 = vmatpush1.msra.mxu0 %v4266
        %4667 = vmatprep.subr.mxu0 0.0
        %4668 = vmatpush1.msra.mxu0 %v4267
        %4669 = vmatprep.subr.mxu0 0.0
        %4670 = vmatpush1.msra.mxu0 %v4268
        %4671 = vmatprep.subr.mxu0 0.0
        %4672 = vmatpush1.msra.mxu0 %v4269
        %4673 = vmatprep.mubr.f32.mxu0 %v4076
        %4674 = vmatmul.mubr.f32.gmra.mrb[0].mxu0 %v4075
        %v4675 = vpop.f32.mrb[0].mxu0
        %v4676 = vadd.f32 %v4571, %v4675
        %v4677 = vpop.f32.mrb[0].mxu0
        %4678 = vmatprep.mubr.f32.mxu0 %v4085
        %4679 = vmatmul.mubr.f32.gmra.mrb[0].mxu0 %v4084
        %v4680 = vpop.f32.mrb[0].mxu0
        %v4681 = vadd.f32 %v4576, %v4680
        %v4682 = vpop.f32.mrb[0].mxu0
        %4683 = vmatprep.mubr.f32.mxu0 %v4094
        %4684 = vmatmul.mubr.f32.gmra.mrb[0].mxu0 %v4093
        %v4685 = vpop.f32.mrb[0].mxu0
        %v4686 = vadd.f32 %v4581, %v4685
        %v4687 = vpop.f32.mrb[0].mxu0
        %4688 = vmatprep.mubr.f32.mxu0 %v4103
        %4689 = vmatmul.mubr.f32.gmra.mrb[0].mxu0 %v4102
        %v4690 = vpop.f32.mrb[0].mxu0
        %v4691 = vadd.f32 %v4586, %v4690
        %v4692 = vpop.f32.mrb[0].mxu0
        %4693 = vmatprep.mubr.f32.mxu0 %v4112
        %4694 = vmatmul.mubr.f32.gmra.mrb[0].mxu0 %v4111
        %v4695 = vpop.f32.mrb[0].mxu0
        %v4696 = vadd.f32 %v4591, %v4695
        %v4697 = vpop.f32.mrb[0].mxu0
        %4698 = vmatprep.mubr.f32.mxu0 %v4121
        %4699 = vmatmul.mubr.f32.gmra.mrb[0].mxu0 %v4120
        %v4700 = vpop.f32.mrb[0].mxu0
        %v4701 = vadd.f32 %v4596, %v4700
        %v4702 = vpop.f32.mrb[0].mxu0
        %4703 = vmatprep.mubr.f32.mxu0 %v4130
        %4704 = vmatmul.mubr.f32.gmra.mrb[0].mxu0 %v4129
        %v4705 = vpop.f32.mrb[0].mxu0
        %v4706 = vadd.f32 %v4601, %v4705
        %v4707 = vpop.f32.mrb[0].mxu0
        %4708 = vmatprep.mubr.f32.mxu0 %v4139
        %4709 = vmatmul.mubr.f32.gmra.mrb[0].mxu0 %v4138
        %v4710 = vpop.f32.mrb[0].mxu0
        %v4711 = vadd.f32 %v4606, %v4710
        %v4712 = vpop.f32.mrb[0].mxu0
        %4713 = vdwg.mxu0
        %4714 = vmatprep.subr.mxu0 0.0
        %4715 = vmatpush1.msra.mxu0 %v4270
        %4716 = vmatprep.subr.mxu0 0.0
        %4717 = vmatpush1.msra.mxu0 %v4271
        %4718 = vmatprep.subr.mxu0 0.0
        %4719 = vmatpush1.msra.mxu0 %v4272
        %4720 = vmatprep.subr.mxu0 0.0
        %4721 = vmatpush1.msra.mxu0 %v4273
        %4722 = vmatprep.subr.mxu0 0.0
        %4723 = vmatpush1.msra.mxu0 %v4274
        %4724 = vmatprep.subr.mxu0 0.0
        %4725 = vmatpush1.msra.mxu0 %v4275
        %4726 = vmatprep.subr.mxu0 0.0
        %4727 = vmatpush1.msra.mxu0 %v4276
        %4728 = vmatprep.subr.mxu0 0.0
        %4729 = vmatpush1.msra.mxu0 %v4277
        %4730 = vmatprep.subr.mxu0 0.0
        %4731 = vmatpush1.msra.mxu0 %v4278
        %4732 = vmatprep.subr.mxu0 0.0
        %4733 = vmatpush1.msra.mxu0 %v4279
        %4734 = vmatprep.subr.mxu0 0.0
        %4735 = vmatpush1.msra.mxu0 %v4280
        %4736 = vmatprep.subr.mxu0 0.0
        %4737 = vmatpush1.msra.mxu0 %v4281
        %4738 = vmatprep.subr.mxu0 0.0
        %4739 = vmatpush1.msra.mxu0 %v4282
        %4740 = vmatprep.subr.mxu0 0.0
        %4741 = vmatpush1.msra.mxu0 %v4283
        %4742 = vmatprep.subr.mxu0 0.0
        %4743 = vmatpush1.msra.mxu0 %v4284
        %4744 = vmatprep.subr.mxu0 0.0
        %4745 = vmatpush1.msra.mxu0 %v4285
        %4746 = vmatprep.subr.mxu0 0.0
        %4747 = vmatpush1.msra.mxu0 0.0
        %4748 = vmatprep.subr.mxu0 0.0
        %4749 = vmatpush1.msra.mxu0 0.0
        %4750 = vmatprep.subr.mxu0 0.0
        %4751 = vmatpush1.msra.mxu0 0.0
        %4752 = vmatprep.subr.mxu0 0.0
        %4753 = vmatpush1.msra.mxu0 0.0
        %4754 = vmatprep.subr.mxu0 0.0
        %4755 = vmatpush1.msra.mxu0 0.0
        %4756 = vmatprep.subr.mxu0 0.0
        %4757 = vmatpush1.msra.mxu0 0.0
        %4758 = vmatprep.subr.mxu0 0.0
        %4759 = vmatpush1.msra.mxu0 0.0
        %4760 = vmatprep.subr.mxu0 0.0
        %4761 = vmatpush1.msra.mxu0 0.0
        %4762 = vmatprep.subr.mxu0 0.0
        %4763 = vmatpush1.msra.mxu0 0.0
        %4764 = vmatprep.subr.mxu0 0.0
        %4765 = vmatpush1.msra.mxu0 0.0
        %4766 = vmatprep.subr.mxu0 0.0
        %4767 = vmatpush1.msra.mxu0 0.0
        %4768 = vmatprep.subr.mxu0 0.0
        %4769 = vmatpush1.msra.mxu0 0.0
        %4770 = vmatprep.subr.mxu0 0.0
        %4771 = vmatpush1.msra.mxu0 0.0
        %4772 = vmatprep.subr.mxu0 0.0
        %4773 = vmatpush1.msra.mxu0 0.0
        %4774 = vmatprep.subr.mxu0 0.0
        %4775 = vmatpush1.msra.mxu0 0.0
        %4776 = vmatprep.subr.mxu0 0.0
        %4777 = vmatpush1.msra.mxu0 0.0
        %4778 = vmatprep.mubr.f32.mxu0 0.0
        %4779 = vmatmul.mubr.f32.gmra.mrb[0].mxu0 %v4077
        %v4780 = vpop.f32.mrb[0].mxu0
        %v4781 = vadd.f32 %v4676, %v4780
        %v4782 = vpop.f32.mrb[0].mxu0
        %4783 = vmatprep.mubr.f32.mxu0 0.0
        %4784 = vmatmul.mubr.f32.gmra.mrb[0].mxu0 %v4086
        %v4785 = vpop.f32.mrb[0].mxu0
        %v4786 = vadd.f32 %v4681, %v4785
        %v4787 = vpop.f32.mrb[0].mxu0
        %4788 = vmatprep.mubr.f32.mxu0 0.0
        %4789 = vmatmul.mubr.f32.gmra.mrb[0].mxu0 %v4095
        %v4790 = vpop.f32.mrb[0].mxu0
        %v4791 = vadd.f32 %v4686, %v4790
        %v4792 = vpop.f32.mrb[0].mxu0
        %4793 = vmatprep.mubr.f32.mxu0 0.0
        %4794 = vmatmul.mubr.f32.gmra.mrb[0].mxu0 %v4104
        %v4795 = vpop.f32.mrb[0].mxu0
        %v4796 = vadd.f32 %v4691, %v4795
        %v4797 = vpop.f32.mrb[0].mxu0
        %4798 = vmatprep.mubr.f32.mxu0 0.0
        %4799 = vmatmul.mubr.f32.gmra.mrb[0].mxu0 %v4113
        %v4800 = vpop.f32.mrb[0].mxu0
        %v4801 = vadd.f32 %v4696, %v4800
        %v4802 = vpop.f32.mrb[0].mxu0
        %4803 = vmatprep.mubr.f32.mxu0 0.0
        %4804 = vmatmul.mubr.f32.gmra.mrb[0].mxu0 %v4122
        %v4805 = vpop.f32.mrb[0].mxu0
        %v4806 = vadd.f32 %v4701, %v4805
        %v4807 = vpop.f32.mrb[0].mxu0
        %4808 = vmatprep.mubr.f32.mxu0 0.0
        %4809 = vmatmul.mubr.f32.gmra.mrb[0].mxu0 %v4131
        %v4810 = vpop.f32.mrb[0].mxu0
        %v4811 = vadd.f32 %v4706, %v4810
        %v4812 = vpop.f32.mrb[0].mxu0
        %4813 = vmatprep.mubr.f32.mxu0 0.0
        %4814 = vmatmul.mubr.f32.gmra.mrb[0].mxu0 %v4140
        %v4815 = vpop.f32.mrb[0].mxu0
        %v4816 = vadd.f32 %v4711, %v4815
        %v4817 = vpop.f32.mrb[0].mxu0
        %4818 = vdwg.mxu0
        %vm4819 = vcmp.gt.f32.partialorder %v4781, 0.0
        %vm4820 = vcmp.gt.f32.partialorder %v4786, 0.0
        %vm4821 = vcmp.gt.f32.partialorder %v4791, 0.0
        %vm4822 = vcmp.gt.f32.partialorder %v4796, 0.0
        %vm4823 = vcmp.gt.f32.partialorder %v4801, 0.0
        %vm4824 = vcmp.gt.f32.partialorder %v4806, 0.0
        %vm4825 = vcmp.gt.f32.partialorder %v4811, 0.0
        %vm4826 = vcmp.gt.f32.partialorder %v4816, 0.0
        %v4827 = vmul.f32 %v4781, 0.2
        %v4828 = vmul.f32 %v4786, 0.2
        %v4829 = vmul.f32 %v4791, 0.2
        %v4830 = vmul.f32 %v4796, 0.2
        %v4831 = vmul.f32 %v4801, 0.2
        %v4832 = vmul.f32 %v4806, 0.2
        %v4833 = vmul.f32 %v4811, 0.2
        %v4834 = vmul.f32 %v4816, 0.2
        %v4835 = vsel %vm4819, %v4781, %v4827
        %v4836 = vsel %vm4820, %v4786, %v4828
        %v4837 = vsel %vm4821, %v4791, %v4829
        %v4838 = vsel %vm4822, %v4796, %v4830
        %v4839 = vsel %vm4823, %v4801, %v4831
        %v4840 = vsel %vm4824, %v4806, %v4832
        %v4841 = vsel %vm4825, %v4811, %v4833
        %v4842 = vsel %vm4826, %v4816, %v4834
        %4843 = vst [vmem:[%s197 + $0x1] sm:$0xff] %v4835
        %4844 = vst [vmem:[%s197 + $0x11] sm:$0xff] %v4836
        %4845 = vst [vmem:[%s197 + $0x21] sm:$0xff] %v4837
        %4846 = vst [vmem:[%s197 + $0x31] sm:$0xff] %v4838
        %4847 = vst [vmem:[%s197 + $0x41] sm:$0xff] %v4839
        %4848 = vst [vmem:[%s197 + $0x51] sm:$0xff] %v4840
        %4849 = vst [vmem:[%s197 + $0x61] sm:$0xff] %v4841
        %4850 = vst [vmem:[%s197 + $0x71] sm:$0xff] %v4842
        %v4851 = vld [vmem:[#allocation2] sm:$0xff]
        %v4852 = vld [vmem:[#allocation2 + $0x10] sm:$0xff]
        %v4853 = vld [vmem:[#allocation2 + $0x20] sm:$0xff]
        %v4854 = vld [vmem:[#allocation2 + $0x30] sm:$0xff]
        %v4855 = vld [vmem:[#allocation2 + $0x40] sm:$0xff]
        %v4856 = vld [vmem:[#allocation2 + $0x50] sm:$0xff]
        %v4857 = vld [vmem:[#allocation2 + $0x60] sm:$0xff]
        %v4858 = vld [vmem:[#allocation2 + $0x70] sm:$0xff]
        %4859 = vst [vmem:[#allocation3] sm:$0xff] %v4851
        %4860 = vst [vmem:[#allocation3 + $0x48] sm:$0xff] %v4852
        %4861 = vst [vmem:[#allocation3 + $0x90] sm:$0xff] %v4853
        %4862 = vst [vmem:[#allocation3 + $0xd8] sm:$0xff] %v4854
        %4863 = vst [vmem:[#allocation3 + $0x120] sm:$0xff] %v4855
        %4864 = vst [vmem:[#allocation3 + $0x168] sm:$0xff] %v4856
        %4865 = vst [vmem:[#allocation3 + $0x1b0] sm:$0xff] %v4857
        %4866 = vst [vmem:[#allocation3 + $0x1f8] sm:$0xff] %v4858
        %v4867 = vld [vmem:[#allocation2 + $0x1] sm:$0xff]
        %v4868 = vld [vmem:[#allocation2 + $0x11] sm:$0xff]
        %v4869 = vld [vmem:[#allocation2 + $0x21] sm:$0xff]
        %v4870 = vld [vmem:[#allocation2 + $0x31] sm:$0xff]
        %v4871 = vld [vmem:[#allocation2 + $0x41] sm:$0xff]
        %v4872 = vld [vmem:[#allocation2 + $0x51] sm:$0xff]
        %v4873 = vld [vmem:[#allocation2 + $0x61] sm:$0xff]
        %v4874 = vld [vmem:[#allocation2 + $0x71] sm:$0xff]
        %4875 = vst [vmem:[#allocation3 + $0x8] sm:$0xff] %v4867
        %4876 = vst [vmem:[#allocation3 + $0x50] sm:$0xff] %v4868
        %4877 = vst [vmem:[#allocation3 + $0x98] sm:$0xff] %v4869
        %4878 = vst [vmem:[#allocation3 + $0xe0] sm:$0xff] %v4870
        %4879 = vst [vmem:[#allocation3 + $0x128] sm:$0xff] %v4871
        %4880 = vst [vmem:[#allocation3 + $0x170] sm:$0xff] %v4872
        %4881 = vst [vmem:[#allocation3 + $0x1b8] sm:$0xff] %v4873
        %4882 = vst [vmem:[#allocation3 + $0x200] sm:$0xff] %v4874
        %v4883 = vld [vmem:[#allocation2 + $0x2] sm:$0xff]
        %v4884 = vld [vmem:[#allocation2 + $0x12] sm:$0xff]
        %v4885 = vld [vmem:[#allocation2 + $0x22] sm:$0xff]
        %v4886 = vld [vmem:[#allocation2 + $0x32] sm:$0xff]
        %v4887 = vld [vmem:[#allocation2 + $0x42] sm:$0xff]
        %v4888 = vld [vmem:[#allocation2 + $0x52] sm:$0xff]
        %v4889 = vld [vmem:[#allocation2 + $0x62] sm:$0xff]
        %v4890 = vld [vmem:[#allocation2 + $0x72] sm:$0xff]
        %4891 = vst [vmem:[#allocation3 + $0x10] sm:$0xff] %v4883
        %4892 = vst [vmem:[#allocation3 + $0x58] sm:$0xff] %v4884
        %4893 = vst [vmem:[#allocation3 + $0xa0] sm:$0xff] %v4885
        %4894 = vst [vmem:[#allocation3 + $0xe8] sm:$0xff] %v4886
        %4895 = vst [vmem:[#allocation3 + $0x130] sm:$0xff] %v4887
        %4896 = vst [vmem:[#allocation3 + $0x178] sm:$0xff] %v4888
        %4897 = vst [vmem:[#allocation3 + $0x1c0] sm:$0xff] %v4889
        %4898 = vst [vmem:[#allocation3 + $0x208] sm:$0xff] %v4890
        %v4899 = vld [vmem:[%s197] sm:$0xff]
        %v4900 = vld [vmem:[%s197 + $0x10] sm:$0xff]
        %v4901 = vld [vmem:[%s197 + $0x20] sm:$0xff]
        %v4902 = vld [vmem:[%s197 + $0x30] sm:$0xff]
        %v4903 = vld [vmem:[%s197 + $0x40] sm:$0xff]
        %v4904 = vld [vmem:[%s197 + $0x50] sm:$0xff]
        %v4905 = vld [vmem:[%s197 + $0x60] sm:$0xff]
        %v4906 = vld [vmem:[%s197 + $0x70] sm:$0xff]
        %4907 = vst [vmem:[#allocation3 + $0x18] sm:$0xff] %v4899
        %4908 = vst [vmem:[#allocation3 + $0x60] sm:$0xff] %v4900
        %4909 = vst [vmem:[#allocation3 + $0xa8] sm:$0xff] %v4901
        %4910 = vst [vmem:[#allocation3 + $0xf0] sm:$0xff] %v4902
        %4911 = vst [vmem:[#allocation3 + $0x138] sm:$0xff] %v4903
        %4912 = vst [vmem:[#allocation3 + $0x180] sm:$0xff] %v4904
        %4913 = vst [vmem:[#allocation3 + $0x1c8] sm:$0xff] %v4905
        %4914 = vst [vmem:[#allocation3 + $0x210] sm:$0xff] %v4906
        %v4915 = vld [vmem:[%s197 + $0x1] sm:$0xff]
        %v4916 = vld [vmem:[%s197 + $0x11] sm:$0xff]
        %v4917 = vld [vmem:[%s197 + $0x21] sm:$0xff]
        %v4918 = vld [vmem:[%s197 + $0x31] sm:$0xff]
        %v4919 = vld [vmem:[%s197 + $0x41] sm:$0xff]
        %v4920 = vld [vmem:[%s197 + $0x51] sm:$0xff]
        %v4921 = vld [vmem:[%s197 + $0x61] sm:$0xff]
        %v4922 = vld [vmem:[%s197 + $0x71] sm:$0xff]
        %4923 = vst [vmem:[#allocation3 + $0x20] sm:$0xff] %v4915
        %4924 = vst [vmem:[#allocation3 + $0x68] sm:$0xff] %v4916
        %4925 = vst [vmem:[#allocation3 + $0xb0] sm:$0xff] %v4917
        %4926 = vst [vmem:[#allocation3 + $0xf8] sm:$0xff] %v4918
        %4927 = vst [vmem:[#allocation3 + $0x140] sm:$0xff] %v4919
        %4928 = vst [vmem:[#allocation3 + $0x188] sm:$0xff] %v4920
        %4929 = vst [vmem:[#allocation3 + $0x1d0] sm:$0xff] %v4921
        %4930 = vst [vmem:[#allocation3 + $0x218] sm:$0xff] %v4922
        %v4931 = vld [vmem:[%s197 + $0x2] sm:$0xff]
        %v4932 = vld [vmem:[%s197 + $0x12] sm:$0xff]
        %v4933 = vld [vmem:[%s197 + $0x22] sm:$0xff]
        %v4934 = vld [vmem:[%s197 + $0x32] sm:$0xff]
        %v4935 = vld [vmem:[%s197 + $0x42] sm:$0xff]
        %v4936 = vld [vmem:[%s197 + $0x52] sm:$0xff]
        %v4937 = vld [vmem:[%s197 + $0x62] sm:$0xff]
        %v4938 = vld [vmem:[%s197 + $0x72] sm:$0xff]
        %4939 = vst [vmem:[#allocation3 + $0x28] sm:$0xff] %v4931
        %4940 = vst [vmem:[#allocation3 + $0x70] sm:$0xff] %v4932
        %4941 = vst [vmem:[#allocation3 + $0xb8] sm:$0xff] %v4933
        %4942 = vst [vmem:[#allocation3 + $0x100] sm:$0xff] %v4934
        %4943 = vst [vmem:[#allocation3 + $0x148] sm:$0xff] %v4935
        %4944 = vst [vmem:[#allocation3 + $0x190] sm:$0xff] %v4936
        %4945 = vst [vmem:[#allocation3 + $0x1d8] sm:$0xff] %v4937
        %4946 = vst [vmem:[#allocation3 + $0x220] sm:$0xff] %v4938
        %v4947 = vld [vmem:[%s302] sm:$0xff]
        %v4948 = vld [vmem:[%s302 + $0x10] sm:$0xff]
        %v4949 = vld [vmem:[%s302 + $0x20] sm:$0xff]
        %v4950 = vld [vmem:[%s302 + $0x30] sm:$0xff]
        %v4951 = vld [vmem:[%s302 + $0x40] sm:$0xff]
        %v4952 = vld [vmem:[%s302 + $0x50] sm:$0xff]
        %v4953 = vld [vmem:[%s302 + $0x60] sm:$0xff]
        %v4954 = vld [vmem:[%s302 + $0x70] sm:$0xff]
        %4955 = vst [vmem:[#allocation3 + $0x30] sm:$0xff] %v4947
        %4956 = vst [vmem:[#allocation3 + $0x78] sm:$0xff] %v4948
        %4957 = vst [vmem:[#allocation3 + $0xc0] sm:$0xff] %v4949
        %4958 = vst [vmem:[#allocation3 + $0x108] sm:$0xff] %v4950
        %4959 = vst [vmem:[#allocation3 + $0x150] sm:$0xff] %v4951
        %4960 = vst [vmem:[#allocation3 + $0x198] sm:$0xff] %v4952
        %4961 = vst [vmem:[#allocation3 + $0x1e0] sm:$0xff] %v4953
        %4962 = vst [vmem:[#allocation3 + $0x228] sm:$0xff] %v4954
        %v4963 = vld [vmem:[%s302 + $0x1] sm:$0xff]
        %v4964 = vld [vmem:[%s302 + $0x11] sm:$0xff]
        %v4965 = vld [vmem:[%s302 + $0x21] sm:$0xff]
        %v4966 = vld [vmem:[%s302 + $0x31] sm:$0xff]
        %v4967 = vld [vmem:[%s302 + $0x41] sm:$0xff]
        %v4968 = vld [vmem:[%s302 + $0x51] sm:$0xff]
        %v4969 = vld [vmem:[%s302 + $0x61] sm:$0xff]
        %v4970 = vld [vmem:[%s302 + $0x71] sm:$0xff]
        %4971 = vst [vmem:[#allocation3 + $0x38] sm:$0xff] %v4963
        %4972 = vst [vmem:[#allocation3 + $0x80] sm:$0xff] %v4964
        %4973 = vst [vmem:[#allocation3 + $0xc8] sm:$0xff] %v4965
        %4974 = vst [vmem:[#allocation3 + $0x110] sm:$0xff] %v4966
        %4975 = vst [vmem:[#allocation3 + $0x158] sm:$0xff] %v4967
        %4976 = vst [vmem:[#allocation3 + $0x1a0] sm:$0xff] %v4968
        %4977 = vst [vmem:[#allocation3 + $0x1e8] sm:$0xff] %v4969
        %4978 = vst [vmem:[#allocation3 + $0x230] sm:$0xff] %v4970
        %v4979 = vld [vmem:[%s302 + $0x2] sm:$0xff]
        %v4980 = vld [vmem:[%s302 + $0x12] sm:$0xff]
        %v4981 = vld [vmem:[%s302 + $0x22] sm:$0xff]
        %v4982 = vld [vmem:[%s302 + $0x32] sm:$0xff]
        %v4983 = vld [vmem:[%s302 + $0x42] sm:$0xff]
        %v4984 = vld [vmem:[%s302 + $0x52] sm:$0xff]
        %v4985 = vld [vmem:[%s302 + $0x62] sm:$0xff]
        %v4986 = vld [vmem:[%s302 + $0x72] sm:$0xff]
        %4987 = vst [vmem:[#allocation3 + $0x40] sm:$0xff] %v4979
        %4988 = vst [vmem:[#allocation3 + $0x88] sm:$0xff] %v4980
        %4989 = vst [vmem:[#allocation3 + $0xd0] sm:$0xff] %v4981
        %4990 = vst [vmem:[#allocation3 + $0x118] sm:$0xff] %v4982
        %4991 = vst [vmem:[#allocation3 + $0x160] sm:$0xff] %v4983
        %4992 = vst [vmem:[#allocation3 + $0x1a8] sm:$0xff] %v4984
        %4993 = vst [vmem:[#allocation3 + $0x1f0] sm:$0xff] %v4985
        %4994 = vst [vmem:[#allocation3 + $0x238] sm:$0xff] %v4986
        %v4995 = vld [vmem:[#allocation3] sm:$0xff]
        %v4996 = vld [vmem:[#allocation3 + $0x8] sm:$0xff]
        %v4997 = vld [vmem:[#allocation3 + $0x10] sm:$0xff]
        %v4998 = vld [vmem:[#allocation3 + $0x18] sm:$0xff]
        %v4999 = vld [vmem:[#allocation3 + $0x20] sm:$0xff]
        %v5000 = vld [vmem:[#allocation3 + $0x28] sm:$0xff]
        %v5001 = vld [vmem:[#allocation3 + $0x30] sm:$0xff]
        %v5002 = vld [vmem:[#allocation3 + $0x38] sm:$0xff]
        %v5003 = vld [vmem:[#allocation3 + $0x40] sm:$0xff]
        %v5004 = vld [vmem:[#allocation3 + $0x48] sm:$0xff]
        %v5005 = vld [vmem:[#allocation3 + $0x50] sm:$0xff]
        %v5006 = vld [vmem:[#allocation3 + $0x58] sm:$0xff]
        %v5007 = vld [vmem:[#allocation3 + $0x60] sm:$0xff]
        %v5008 = vld [vmem:[#allocation3 + $0x68] sm:$0xff]
        %v5009 = vld [vmem:[#allocation3 + $0x70] sm:$0xff]
        %v5010 = vld [vmem:[#allocation3 + $0x78] sm:$0xff]
        %v5011 = vld [vmem:[#allocation3 + $0x80] sm:$0xff]
        %v5012 = vld [vmem:[#allocation3 + $0x88] sm:$0xff]
        %v5013 = vld [vmem:[#allocation3 + $0x90] sm:$0xff]
        %v5014 = vld [vmem:[#allocation3 + $0x98] sm:$0xff]
        %v5015 = vld [vmem:[#allocation3 + $0xa0] sm:$0xff]
        %v5016 = vld [vmem:[#allocation3 + $0xa8] sm:$0xff]
        %v5017 = vld [vmem:[#allocation3 + $0xb0] sm:$0xff]
        %v5018 = vld [vmem:[#allocation3 + $0xb8] sm:$0xff]
        %v5019 = vld [vmem:[#allocation3 + $0xc0] sm:$0xff]
        %v5020 = vld [vmem:[#allocation3 + $0xc8] sm:$0xff]
        %v5021 = vld [vmem:[#allocation3 + $0xd0] sm:$0xff]
        %v5022 = vld [vmem:[#allocation3 + $0xd8] sm:$0xff]
        %v5023 = vld [vmem:[#allocation3 + $0xe0] sm:$0xff]
        %v5024 = vld [vmem:[#allocation3 + $0xe8] sm:$0xff]
        %v5025 = vld [vmem:[#allocation3 + $0xf0] sm:$0xff]
        %v5026 = vld [vmem:[#allocation3 + $0xf8] sm:$0xff]
        %v5027 = vld [vmem:[#allocation3 + $0x100] sm:$0xff]
        %v5028 = vld [vmem:[#allocation3 + $0x108] sm:$0xff]
        %v5029 = vld [vmem:[#allocation3 + $0x110] sm:$0xff]
        %v5030 = vld [vmem:[#allocation3 + $0x118] sm:$0xff]
        %v5031 = vld [vmem:[#allocation3 + $0x120] sm:$0xff]
        %v5032 = vld [vmem:[#allocation3 + $0x128] sm:$0xff]
        %v5033 = vld [vmem:[#allocation3 + $0x130] sm:$0xff]
        %v5034 = vld [vmem:[#allocation3 + $0x138] sm:$0xff]
        %v5035 = vld [vmem:[#allocation3 + $0x140] sm:$0xff]
        %v5036 = vld [vmem:[#allocation3 + $0x148] sm:$0xff]
        %v5037 = vld [vmem:[#allocation3 + $0x150] sm:$0xff]
        %v5038 = vld [vmem:[#allocation3 + $0x158] sm:$0xff]
        %v5039 = vld [vmem:[#allocation3 + $0x160] sm:$0xff]
        %v5040 = vld [vmem:[#allocation3 + $0x168] sm:$0xff]
        %v5041 = vld [vmem:[#allocation3 + $0x170] sm:$0xff]
        %v5042 = vld [vmem:[#allocation3 + $0x178] sm:$0xff]
        %v5043 = vld [vmem:[#allocation3 + $0x180] sm:$0xff]
        %v5044 = vld [vmem:[#allocation3 + $0x188] sm:$0xff]
        %v5045 = vld [vmem:[#allocation3 + $0x190] sm:$0xff]
        %v5046 = vld [vmem:[#allocation3 + $0x198] sm:$0xff]
        %v5047 = vld [vmem:[#allocation3 + $0x1a0] sm:$0xff]
        %v5048 = vld [vmem:[#allocation3 + $0x1a8] sm:$0xff]
        %v5049 = vld [vmem:[#allocation3 + $0x1b0] sm:$0xff]
        %v5050 = vld [vmem:[#allocation3 + $0x1b8] sm:$0xff]
        %v5051 = vld [vmem:[#allocation3 + $0x1c0] sm:$0xff]
        %v5052 = vld [vmem:[#allocation3 + $0x1c8] sm:$0xff]
        %v5053 = vld [vmem:[#allocation3 + $0x1d0] sm:$0xff]
        %v5054 = vld [vmem:[#allocation3 + $0x1d8] sm:$0xff]
        %v5055 = vld [vmem:[#allocation3 + $0x1e0] sm:$0xff]
        %v5056 = vld [vmem:[#allocation3 + $0x1e8] sm:$0xff]
        %v5057 = vld [vmem:[#allocation3 + $0x1f0] sm:$0xff]
        %v5058 = vld [vmem:[#allocation3 + $0x1f8] sm:$0xff]
        %v5059 = vld [vmem:[#allocation3 + $0x200] sm:$0xff]
        %v5060 = vld [vmem:[#allocation3 + $0x208] sm:$0xff]
        %v5061 = vld [vmem:[#allocation3 + $0x210] sm:$0xff]
        %v5062 = vld [vmem:[#allocation3 + $0x218] sm:$0xff]
        %v5063 = vld [vmem:[#allocation3 + $0x220] sm:$0xff]
        %v5064 = vld [vmem:[#allocation3 + $0x228] sm:$0xff]
        %v5065 = vld [vmem:[#allocation3 + $0x230] sm:$0xff]
        %v5066 = vld [vmem:[#allocation3 + $0x238] sm:$0xff]
        %s5067 = scalar_lea.vmem %s1, 5760
        %v5068 = vld [vmem:[%s5067] sm:$0xff]
        %v5069 = vld [vmem:[%s5067 + $0x8] sm:$0xff]
        %v5070 = vld [vmem:[%s5067 + $0x10] sm:$0xff]
        %v5071 = vld [vmem:[%s5067 + $0x18] sm:$0xff]
        %v5072 = vld [vmem:[%s5067 + $0x20] sm:$0xff]
        %v5073 = vld [vmem:[%s5067 + $0x28] sm:$0xff]
        %v5074 = vld [vmem:[%s5067 + $0x30] sm:$0xff]
        %v5075 = vld [vmem:[%s5067 + $0x38] sm:$0xff]
        %v5076 = vld [vmem:[%s5067 + $0x40] sm:$0xff]
        %v5077 = vld [vmem:[%s5067 + $0x48] sm:$0xff]
        %v5078 = vld [vmem:[%s5067 + $0x50] sm:$0xff]
        %v5079 = vld [vmem:[%s5067 + $0x58] sm:$0xff]
        %v5080 = vld [vmem:[%s5067 + $0x60] sm:$0xff]
        %v5081 = vld [vmem:[%s5067 + $0x68] sm:$0xff]
        %v5082 = vld [vmem:[%s5067 + $0x70] sm:$0xff]
        %v5083 = vld [vmem:[%s5067 + $0x78] sm:$0xff]
        %v5084 = vld [vmem:[%s5067 + $0x80] sm:$0xff]
        %v5085 = vld [vmem:[%s5067 + $0x88] sm:$0xff]
        %v5086 = vld [vmem:[%s5067 + $0x90] sm:$0xff]
        %v5087 = vld [vmem:[%s5067 + $0x98] sm:$0xff]
        %v5088 = vld [vmem:[%s5067 + $0xa0] sm:$0xff]
        %v5089 = vld [vmem:[%s5067 + $0xa8] sm:$0xff]
        %v5090 = vld [vmem:[%s5067 + $0xb0] sm:$0xff]
        %v5091 = vld [vmem:[%s5067 + $0xb8] sm:$0xff]
        %v5092 = vld [vmem:[%s5067 + $0xc0] sm:$0xff]
        %v5093 = vld [vmem:[%s5067 + $0xc8] sm:$0xff]
        %v5094 = vld [vmem:[%s5067 + $0xd0] sm:$0xff]
        %v5095 = vld [vmem:[%s5067 + $0xd8] sm:$0xff]
        %v5096 = vld [vmem:[%s5067 + $0xe0] sm:$0xff]
        %v5097 = vld [vmem:[%s5067 + $0xe8] sm:$0xff]
        %v5098 = vld [vmem:[%s5067 + $0xf0] sm:$0xff]
        %v5099 = vld [vmem:[%s5067 + $0xf8] sm:$0xff]
        %v5100 = vld [vmem:[%s5067 + $0x100] sm:$0xff]
        %v5101 = vld [vmem:[%s5067 + $0x108] sm:$0xff]
        %v5102 = vld [vmem:[%s5067 + $0x110] sm:$0xff]
        %v5103 = vld [vmem:[%s5067 + $0x118] sm:$0xff]
        %v5104 = vld [vmem:[%s5067 + $0x120] sm:$0xff]
        %v5105 = vld [vmem:[%s5067 + $0x128] sm:$0xff]
        %v5106 = vld [vmem:[%s5067 + $0x130] sm:$0xff]
        %v5107 = vld [vmem:[%s5067 + $0x138] sm:$0xff]
        %v5108 = vld [vmem:[%s5067 + $0x140] sm:$0xff]
        %v5109 = vld [vmem:[%s5067 + $0x148] sm:$0xff]
        %v5110 = vld [vmem:[%s5067 + $0x150] sm:$0xff]
        %v5111 = vld [vmem:[%s5067 + $0x158] sm:$0xff]
        %v5112 = vld [vmem:[%s5067 + $0x160] sm:$0xff]
        %v5113 = vld [vmem:[%s5067 + $0x168] sm:$0xff]
        %v5114 = vld [vmem:[%s5067 + $0x170] sm:$0xff]
        %v5115 = vld [vmem:[%s5067 + $0x178] sm:$0xff]
        %v5116 = vld [vmem:[%s5067 + $0x180] sm:$0xff]
        %v5117 = vld [vmem:[%s5067 + $0x188] sm:$0xff]
        %v5118 = vld [vmem:[%s5067 + $0x190] sm:$0xff]
        %v5119 = vld [vmem:[%s5067 + $0x198] sm:$0xff]
        %v5120 = vld [vmem:[%s5067 + $0x1a0] sm:$0xff]
        %v5121 = vld [vmem:[%s5067 + $0x1a8] sm:$0xff]
        %v5122 = vld [vmem:[%s5067 + $0x1b0] sm:$0xff]
        %v5123 = vld [vmem:[%s5067 + $0x1b8] sm:$0xff]
        %v5124 = vld [vmem:[%s5067 + $0x1c0] sm:$0xff]
        %v5125 = vld [vmem:[%s5067 + $0x1c8] sm:$0xff]
        %v5126 = vld [vmem:[%s5067 + $0x1d0] sm:$0xff]
        %v5127 = vld [vmem:[%s5067 + $0x1d8] sm:$0xff]
        %v5128 = vld [vmem:[%s5067 + $0x1e0] sm:$0xff]
        %v5129 = vld [vmem:[%s5067 + $0x1e8] sm:$0xff]
        %v5130 = vld [vmem:[%s5067 + $0x1f0] sm:$0xff]
        %v5131 = vld [vmem:[%s5067 + $0x1f8] sm:$0xff]
        %v5132 = vld [vmem:[%s5067 + $0x200] sm:$0xff]
        %v5133 = vld [vmem:[%s5067 + $0x208] sm:$0xff]
        %v5134 = vld [vmem:[%s5067 + $0x210] sm:$0xff]
        %v5135 = vld [vmem:[%s5067 + $0x218] sm:$0xff]
        %v5136 = vld [vmem:[%s5067 + $0x220] sm:$0xff]
        %v5137 = vld [vmem:[%s5067 + $0x228] sm:$0xff]
        %v5138 = vld [vmem:[%s5067 + $0x230] sm:$0xff]
        %v5139 = vld [vmem:[%s5067 + $0x238] sm:$0xff]
        %v5140 = vld [vmem:[%s5067 + $0x240] sm:$0xff]
        %v5141 = vld [vmem:[%s5067 + $0x248] sm:$0xff]
        %v5142 = vld [vmem:[%s5067 + $0x250] sm:$0xff]
        %v5143 = vld [vmem:[%s5067 + $0x258] sm:$0xff]
        %v5144 = vld [vmem:[%s5067 + $0x260] sm:$0xff]
        %v5145 = vld [vmem:[%s5067 + $0x268] sm:$0xff]
        %v5146 = vld [vmem:[%s5067 + $0x270] sm:$0xff]
        %v5147 = vld [vmem:[%s5067 + $0x278] sm:$0xff]
        %v5148 = vld [vmem:[%s5067 + $0x280] sm:$0xff]
        %v5149 = vld [vmem:[%s5067 + $0x288] sm:$0xff]
        %v5150 = vld [vmem:[%s5067 + $0x290] sm:$0xff]
        %v5151 = vld [vmem:[%s5067 + $0x298] sm:$0xff]
        %v5152 = vld [vmem:[%s5067 + $0x2a0] sm:$0xff]
        %v5153 = vld [vmem:[%s5067 + $0x2a8] sm:$0xff]
        %v5154 = vld [vmem:[%s5067 + $0x2b0] sm:$0xff]
        %v5155 = vld [vmem:[%s5067 + $0x2b8] sm:$0xff]
        %v5156 = vld [vmem:[%s5067 + $0x2c0] sm:$0xff]
        %v5157 = vld [vmem:[%s5067 + $0x2c8] sm:$0xff]
        %v5158 = vld [vmem:[%s5067 + $0x2d0] sm:$0xff]
        %v5159 = vld [vmem:[%s5067 + $0x2d8] sm:$0xff]
        %v5160 = vld [vmem:[%s5067 + $0x2e0] sm:$0xff]
        %v5161 = vld [vmem:[%s5067 + $0x2e8] sm:$0xff]
        %v5162 = vld [vmem:[%s5067 + $0x2f0] sm:$0xff]
        %v5163 = vld [vmem:[%s5067 + $0x2f8] sm:$0xff]
        %v5164 = vld [vmem:[%s5067 + $0x300] sm:$0xff]
        %v5165 = vld [vmem:[%s5067 + $0x308] sm:$0xff]
        %v5166 = vld [vmem:[%s5067 + $0x310] sm:$0xff]
        %v5167 = vld [vmem:[%s5067 + $0x318] sm:$0xff]
        %v5168 = vld [vmem:[%s5067 + $0x320] sm:$0xff]
        %v5169 = vld [vmem:[%s5067 + $0x328] sm:$0xff]
        %v5170 = vld [vmem:[%s5067 + $0x330] sm:$0xff]
        %v5171 = vld [vmem:[%s5067 + $0x338] sm:$0xff]
        %v5172 = vld [vmem:[%s5067 + $0x340] sm:$0xff]
        %v5173 = vld [vmem:[%s5067 + $0x348] sm:$0xff]
        %v5174 = vld [vmem:[%s5067 + $0x350] sm:$0xff]
        %v5175 = vld [vmem:[%s5067 + $0x358] sm:$0xff]
        %v5176 = vld [vmem:[%s5067 + $0x360] sm:$0xff]
        %v5177 = vld [vmem:[%s5067 + $0x368] sm:$0xff]
        %v5178 = vld [vmem:[%s5067 + $0x370] sm:$0xff]
        %v5179 = vld [vmem:[%s5067 + $0x378] sm:$0xff]
        %v5180 = vld [vmem:[%s5067 + $0x380] sm:$0xff]
        %v5181 = vld [vmem:[%s5067 + $0x388] sm:$0xff]
        %v5182 = vld [vmem:[%s5067 + $0x390] sm:$0xff]
        %v5183 = vld [vmem:[%s5067 + $0x398] sm:$0xff]
        %v5184 = vld [vmem:[%s5067 + $0x3a0] sm:$0xff]
        %v5185 = vld [vmem:[%s5067 + $0x3a8] sm:$0xff]
        %v5186 = vld [vmem:[%s5067 + $0x3b0] sm:$0xff]
        %v5187 = vld [vmem:[%s5067 + $0x3b8] sm:$0xff]
        %v5188 = vld [vmem:[%s5067 + $0x3c0] sm:$0xff]
        %v5189 = vld [vmem:[%s5067 + $0x3c8] sm:$0xff]
        %v5190 = vld [vmem:[%s5067 + $0x3d0] sm:$0xff]
        %v5191 = vld [vmem:[%s5067 + $0x3d8] sm:$0xff]
        %v5192 = vld [vmem:[%s5067 + $0x3e0] sm:$0xff]
        %v5193 = vld [vmem:[%s5067 + $0x3e8] sm:$0xff]
        %v5194 = vld [vmem:[%s5067 + $0x3f0] sm:$0xff]
        %v5195 = vld [vmem:[%s5067 + $0x3f8] sm:$0xff]
        %v5196 = vld [vmem:[%s5067 + $0x400] sm:$0xff]
        %v5197 = vld [vmem:[%s5067 + $0x408] sm:$0xff]
        %v5198 = vld [vmem:[%s5067 + $0x410] sm:$0xff]
        %v5199 = vld [vmem:[%s5067 + $0x418] sm:$0xff]
        %v5200 = vld [vmem:[%s5067 + $0x420] sm:$0xff]
        %v5201 = vld [vmem:[%s5067 + $0x428] sm:$0xff]
        %v5202 = vld [vmem:[%s5067 + $0x430] sm:$0xff]
        %v5203 = vld [vmem:[%s5067 + $0x438] sm:$0xff]
        %v5204 = vld [vmem:[%s5067 + $0x440] sm:$0xff]
        %v5205 = vld [vmem:[%s5067 + $0x448] sm:$0xff]
        %v5206 = vld [vmem:[%s5067 + $0x450] sm:$0xff]
        %v5207 = vld [vmem:[%s5067 + $0x458] sm:$0xff]
        %v5208 = vld [vmem:[%s5067 + $0x460] sm:$0xff]
        %v5209 = vld [vmem:[%s5067 + $0x468] sm:$0xff]
        %v5210 = vld [vmem:[%s5067 + $0x470] sm:$0xff]
        %v5211 = vld [vmem:[%s5067 + $0x478] sm:$0xff]
        %s5212 = scalar_lea.vmem %s2, 5
        %v5213 = vld [vmem:[%s5212] sm:$0x1]
        %v5215 = vlaneseq
        %v5216 = vshrl.u32 %v5215, 7
        %v5217 = vsub.s32 0, %v5216
        %v5218 = vrot.slane %v5213, %v5217
        %5220 = vmatprep.subr.mxu0 0.0
        %5221 = vmatpush1.msra.mxu0 %v5068
        %5222 = vmatprep.subr.mxu0 0.0
        %5223 = vmatpush1.msra.mxu0 %v5069
        %5224 = vmatprep.subr.mxu0 0.0
        %5225 = vmatpush1.msra.mxu0 %v5070
        %5226 = vmatprep.subr.mxu0 0.0
        %5227 = vmatpush1.msra.mxu0 %v5071
        %5228 = vmatprep.subr.mxu0 0.0
        %5229 = vmatpush1.msra.mxu0 %v5072
        %5230 = vmatprep.subr.mxu0 0.0
        %5231 = vmatpush1.msra.mxu0 %v5073
        %5232 = vmatprep.subr.mxu0 0.0
        %5233 = vmatpush1.msra.mxu0 %v5074
        %5234 = vmatprep.subr.mxu0 0.0
        %5235 = vmatpush1.msra.mxu0 %v5075
        %5236 = vmatprep.subr.mxu0 0.0
        %5237 = vmatpush1.msra.mxu0 %v5076
        %5238 = vmatprep.subr.mxu0 0.0
        %5239 = vmatpush1.msra.mxu0 %v5077
        %5240 = vmatprep.subr.mxu0 0.0
        %5241 = vmatpush1.msra.mxu0 %v5078
        %5242 = vmatprep.subr.mxu0 0.0
        %5243 = vmatpush1.msra.mxu0 %v5079
        %5244 = vmatprep.subr.mxu0 0.0
        %5245 = vmatpush1.msra.mxu0 %v5080
        %5246 = vmatprep.subr.mxu0 0.0
        %5247 = vmatpush1.msra.mxu0 %v5081
        %5248 = vmatprep.subr.mxu0 0.0
        %5249 = vmatpush1.msra.mxu0 %v5082
        %5250 = vmatprep.subr.mxu0 0.0
        %5251 = vmatpush1.msra.mxu0 %v5083
        %5252 = vmatprep.subr.mxu0 0.0
        %5253 = vmatpush1.msra.mxu0 %v5084
        %5254 = vmatprep.subr.mxu0 0.0
        %5255 = vmatpush1.msra.mxu0 %v5085
        %5256 = vmatprep.subr.mxu0 0.0
        %5257 = vmatpush1.msra.mxu0 %v5086
        %5258 = vmatprep.subr.mxu0 0.0
        %5259 = vmatpush1.msra.mxu0 %v5087
        %5260 = vmatprep.subr.mxu0 0.0
        %5261 = vmatpush1.msra.mxu0 %v5088
        %5262 = vmatprep.subr.mxu0 0.0
        %5263 = vmatpush1.msra.mxu0 %v5089
        %5264 = vmatprep.subr.mxu0 0.0
        %5265 = vmatpush1.msra.mxu0 %v5090
        %5266 = vmatprep.subr.mxu0 0.0
        %5267 = vmatpush1.msra.mxu0 %v5091
        %5268 = vmatprep.subr.mxu0 0.0
        %5269 = vmatpush1.msra.mxu0 %v5092
        %5270 = vmatprep.subr.mxu0 0.0
        %5271 = vmatpush1.msra.mxu0 %v5093
        %5272 = vmatprep.subr.mxu0 0.0
        %5273 = vmatpush1.msra.mxu0 %v5094
        %5274 = vmatprep.subr.mxu0 0.0
        %5275 = vmatpush1.msra.mxu0 %v5095
        %5276 = vmatprep.subr.mxu0 0.0
        %5277 = vmatpush1.msra.mxu0 %v5096
        %5278 = vmatprep.subr.mxu0 0.0
        %5279 = vmatpush1.msra.mxu0 %v5097
        %5280 = vmatprep.subr.mxu0 0.0
        %5281 = vmatpush1.msra.mxu0 %v5098
        %5282 = vmatprep.subr.mxu0 0.0
        %5283 = vmatpush1.msra.mxu0 %v5099
        %5284 = vmatprep.mubr.f32.mxu0 %v4996
        %5285 = vmatmul.mubr.f32.gmra.mrb[0].mxu0 %v4995
        %v5286 = vpop.f32.mrb[0].mxu0
        %v5287 = vadd.f32 %v5218, %v5286
        %v5288 = vpop.f32.mrb[0].mxu0
        %5289 = vmatprep.mubr.f32.mxu0 %v5005
        %5290 = vmatmul.mubr.f32.gmra.mrb[0].mxu0 %v5004
        %v5291 = vpop.f32.mrb[0].mxu0
        %v5292 = vadd.f32 %v5218, %v5291
        %v5293 = vpop.f32.mrb[0].mxu0
        %5294 = vmatprep.mubr.f32.mxu0 %v5014
        %5295 = vmatmul.mubr.f32.gmra.mrb[0].mxu0 %v5013
        %v5296 = vpop.f32.mrb[0].mxu0
        %v5297 = vadd.f32 %v5218, %v5296
        %v5298 = vpop.f32.mrb[0].mxu0
        %5299 = vmatprep.mubr.f32.mxu0 %v5023
        %5300 = vmatmul.mubr.f32.gmra.mrb[0].mxu0 %v5022
        %v5301 = vpop.f32.mrb[0].mxu0
        %v5302 = vadd.f32 %v5218, %v5301
        %v5303 = vpop.f32.mrb[0].mxu0
        %5304 = vmatprep.mubr.f32.mxu0 %v5032
        %5305 = vmatmul.mubr.f32.gmra.mrb[0].mxu0 %v5031
        %v5306 = vpop.f32.mrb[0].mxu0
        %v5307 = vadd.f32 %v5218, %v5306
        %v5308 = vpop.f32.mrb[0].mxu0
        %5309 = vmatprep.mubr.f32.mxu0 %v5041
        %5310 = vmatmul.mubr.f32.gmra.mrb[0].mxu0 %v5040
        %v5311 = vpop.f32.mrb[0].mxu0
        %v5312 = vadd.f32 %v5218, %v5311
        %v5313 = vpop.f32.mrb[0].mxu0
        %5314 = vmatprep.mubr.f32.mxu0 %v5050
        %5315 = vmatmul.mubr.f32.gmra.mrb[0].mxu0 %v5049
        %v5316 = vpop.f32.mrb[0].mxu0
        %v5317 = vadd.f32 %v5218, %v5316
        %v5318 = vpop.f32.mrb[0].mxu0
        %5319 = vmatprep.mubr.f32.mxu0 %v5059
        %5320 = vmatmul.mubr.f32.gmra.mrb[0].mxu0 %v5058
        %v5321 = vpop.f32.mrb[0].mxu0
        %v5322 = vadd.f32 %v5218, %v5321
        %v5323 = vpop.f32.mrb[0].mxu0
        %5324 = vdwg.mxu0
        %5325 = vmatprep.subr.mxu0 0.0
        %5326 = vmatpush1.msra.mxu0 %v5100
        %5327 = vmatprep.subr.mxu0 0.0
        %5328 = vmatpush1.msra.mxu0 %v5101
        %5329 = vmatprep.subr.mxu0 0.0
        %5330 = vmatpush1.msra.mxu0 %v5102
        %5331 = vmatprep.subr.mxu0 0.0
        %5332 = vmatpush1.msra.mxu0 %v5103
        %5333 = vmatprep.subr.mxu0 0.0
        %5334 = vmatpush1.msra.mxu0 %v5104
        %5335 = vmatprep.subr.mxu0 0.0
        %5336 = vmatpush1.msra.mxu0 %v5105
        %5337 = vmatprep.subr.mxu0 0.0
        %5338 = vmatpush1.msra.mxu0 %v5106
        %5339 = vmatprep.subr.mxu0 0.0
        %5340 = vmatpush1.msra.mxu0 %v5107
        %5341 = vmatprep.subr.mxu0 0.0
        %5342 = vmatpush1.msra.mxu0 %v5108
        %5343 = vmatprep.subr.mxu0 0.0
        %5344 = vmatpush1.msra.mxu0 %v5109
        %5345 = vmatprep.subr.mxu0 0.0
        %5346 = vmatpush1.msra.mxu0 %v5110
        %5347 = vmatprep.subr.mxu0 0.0
        %5348 = vmatpush1.msra.mxu0 %v5111
        %5349 = vmatprep.subr.mxu0 0.0
        %5350 = vmatpush1.msra.mxu0 %v5112
        %5351 = vmatprep.subr.mxu0 0.0
        %5352 = vmatpush1.msra.mxu0 %v5113
        %5353 = vmatprep.subr.mxu0 0.0
        %5354 = vmatpush1.msra.mxu0 %v5114
        %5355 = vmatprep.subr.mxu0 0.0
        %5356 = vmatpush1.msra.mxu0 %v5115
        %5357 = vmatprep.subr.mxu0 0.0
        %5358 = vmatpush1.msra.mxu0 %v5116
        %5359 = vmatprep.subr.mxu0 0.0
        %5360 = vmatpush1.msra.mxu0 %v5117
        %5361 = vmatprep.subr.mxu0 0.0
        %5362 = vmatpush1.msra.mxu0 %v5118
        %5363 = vmatprep.subr.mxu0 0.0
        %5364 = vmatpush1.msra.mxu0 %v5119
        %5365 = vmatprep.subr.mxu0 0.0
        %5366 = vmatpush1.msra.mxu0 %v5120
        %5367 = vmatprep.subr.mxu0 0.0
        %5368 = vmatpush1.msra.mxu0 %v5121
        %5369 = vmatprep.subr.mxu0 0.0
        %5370 = vmatpush1.msra.mxu0 %v5122
        %5371 = vmatprep.subr.mxu0 0.0
        %5372 = vmatpush1.msra.mxu0 %v5123
        %5373 = vmatprep.subr.mxu0 0.0
        %5374 = vmatpush1.msra.mxu0 %v5124
        %5375 = vmatprep.subr.mxu0 0.0
        %5376 = vmatpush1.msra.mxu0 %v5125
        %5377 = vmatprep.subr.mxu0 0.0
        %5378 = vmatpush1.msra.mxu0 %v5126
        %5379 = vmatprep.subr.mxu0 0.0
        %5380 = vmatpush1.msra.mxu0 %v5127
        %5381 = vmatprep.subr.mxu0 0.0
        %5382 = vmatpush1.msra.mxu0 %v5128
        %5383 = vmatprep.subr.mxu0 0.0
        %5384 = vmatpush1.msra.mxu0 %v5129
        %5385 = vmatprep.subr.mxu0 0.0
        %5386 = vmatpush1.msra.mxu0 %v5130
        %5387 = vmatprep.subr.mxu0 0.0
        %5388 = vmatpush1.msra.mxu0 %v5131
        %5389 = vmatprep.mubr.f32.mxu0 %v4998
        %5390 = vmatmul.mubr.f32.gmra.mrb[0].mxu0 %v4997
        %v5391 = vpop.f32.mrb[0].mxu0
        %v5392 = vadd.f32 %v5287, %v5391
        %v5393 = vpop.f32.mrb[0].mxu0
        %5394 = vmatprep.mubr.f32.mxu0 %v5007
        %5395 = vmatmul.mubr.f32.gmra.mrb[0].mxu0 %v5006
        %v5396 = vpop.f32.mrb[0].mxu0
        %v5397 = vadd.f32 %v5292, %v5396
        %v5398 = vpop.f32.mrb[0].mxu0
        %5399 = vmatprep.mubr.f32.mxu0 %v5016
        %5400 = vmatmul.mubr.f32.gmra.mrb[0].mxu0 %v5015
        %v5401 = vpop.f32.mrb[0].mxu0
        %v5402 = vadd.f32 %v5297, %v5401
        %v5403 = vpop.f32.mrb[0].mxu0
        %5404 = vmatprep.mubr.f32.mxu0 %v5025
        %5405 = vmatmul.mubr.f32.gmra.mrb[0].mxu0 %v5024
        %v5406 = vpop.f32.mrb[0].mxu0
        %v5407 = vadd.f32 %v5302, %v5406
        %v5408 = vpop.f32.mrb[0].mxu0
        %5409 = vmatprep.mubr.f32.mxu0 %v5034
        %5410 = vmatmul.mubr.f32.gmra.mrb[0].mxu0 %v5033
        %v5411 = vpop.f32.mrb[0].mxu0
        %v5412 = vadd.f32 %v5307, %v5411
        %v5413 = vpop.f32.mrb[0].mxu0
        %5414 = vmatprep.mubr.f32.mxu0 %v5043
        %5415 = vmatmul.mubr.f32.gmra.mrb[0].mxu0 %v5042
        %v5416 = vpop.f32.mrb[0].mxu0
        %v5417 = vadd.f32 %v5312, %v5416
        %v5418 = vpop.f32.mrb[0].mxu0
        %5419 = vmatprep.mubr.f32.mxu0 %v5052
        %5420 = vmatmul.mubr.f32.gmra.mrb[0].mxu0 %v5051
        %v5421 = vpop.f32.mrb[0].mxu0
        %v5422 = vadd.f32 %v5317, %v5421
        %v5423 = vpop.f32.mrb[0].mxu0
        %5424 = vmatprep.mubr.f32.mxu0 %v5061
        %5425 = vmatmul.mubr.f32.gmra.mrb[0].mxu0 %v5060
        %v5426 = vpop.f32.mrb[0].mxu0
        %v5427 = vadd.f32 %v5322, %v5426
        %v5428 = vpop.f32.mrb[0].mxu0
        %5429 = vdwg.mxu0
        %5430 = vmatprep.subr.mxu0 0.0
        %5431 = vmatpush1.msra.mxu0 %v5132
        %5432 = vmatprep.subr.mxu0 0.0
        %5433 = vmatpush1.msra.mxu0 %v5133
        %5434 = vmatprep.subr.mxu0 0.0
        %5435 = vmatpush1.msra.mxu0 %v5134
        %5436 = vmatprep.subr.mxu0 0.0
        %5437 = vmatpush1.msra.mxu0 %v5135
        %5438 = vmatprep.subr.mxu0 0.0
        %5439 = vmatpush1.msra.mxu0 %v5136
        %5440 = vmatprep.subr.mxu0 0.0
        %5441 = vmatpush1.msra.mxu0 %v5137
        %5442 = vmatprep.subr.mxu0 0.0
        %5443 = vmatpush1.msra.mxu0 %v5138
        %5444 = vmatprep.subr.mxu0 0.0
        %5445 = vmatpush1.msra.mxu0 %v5139
        %5446 = vmatprep.subr.mxu0 0.0
        %5447 = vmatpush1.msra.mxu0 %v5140
        %5448 = vmatprep.subr.mxu0 0.0
        %5449 = vmatpush1.msra.mxu0 %v5141
        %5450 = vmatprep.subr.mxu0 0.0
        %5451 = vmatpush1.msra.mxu0 %v5142
        %5452 = vmatprep.subr.mxu0 0.0
        %5453 = vmatpush1.msra.mxu0 %v5143
        %5454 = vmatprep.subr.mxu0 0.0
        %5455 = vmatpush1.msra.mxu0 %v5144
        %5456 = vmatprep.subr.mxu0 0.0
        %5457 = vmatpush1.msra.mxu0 %v5145
        %5458 = vmatprep.subr.mxu0 0.0
        %5459 = vmatpush1.msra.mxu0 %v5146
        %5460 = vmatprep.subr.mxu0 0.0
        %5461 = vmatpush1.msra.mxu0 %v5147
        %5462 = vmatprep.subr.mxu0 0.0
        %5463 = vmatpush1.msra.mxu0 %v5148
        %5464 = vmatprep.subr.mxu0 0.0
        %5465 = vmatpush1.msra.mxu0 %v5149
        %5466 = vmatprep.subr.mxu0 0.0
        %5467 = vmatpush1.msra.mxu0 %v5150
        %5468 = vmatprep.subr.mxu0 0.0
        %5469 = vmatpush1.msra.mxu0 %v5151
        %5470 = vmatprep.subr.mxu0 0.0
        %5471 = vmatpush1.msra.mxu0 %v5152
        %5472 = vmatprep.subr.mxu0 0.0
        %5473 = vmatpush1.msra.mxu0 %v5153
        %5474 = vmatprep.subr.mxu0 0.0
        %5475 = vmatpush1.msra.mxu0 %v5154
        %5476 = vmatprep.subr.mxu0 0.0
        %5477 = vmatpush1.msra.mxu0 %v5155
        %5478 = vmatprep.subr.mxu0 0.0
        %5479 = vmatpush1.msra.mxu0 %v5156
        %5480 = vmatprep.subr.mxu0 0.0
        %5481 = vmatpush1.msra.mxu0 %v5157
        %5482 = vmatprep.subr.mxu0 0.0
        %5483 = vmatpush1.msra.mxu0 %v5158
        %5484 = vmatprep.subr.mxu0 0.0
        %5485 = vmatpush1.msra.mxu0 %v5159
        %5486 = vmatprep.subr.mxu0 0.0
        %5487 = vmatpush1.msra.mxu0 %v5160
        %5488 = vmatprep.subr.mxu0 0.0
        %5489 = vmatpush1.msra.mxu0 %v5161
        %5490 = vmatprep.subr.mxu0 0.0
        %5491 = vmatpush1.msra.mxu0 %v5162
        %5492 = vmatprep.subr.mxu0 0.0
        %5493 = vmatpush1.msra.mxu0 %v5163
        %5494 = vmatprep.mubr.f32.mxu0 %v5000
        %5495 = vmatmul.mubr.f32.gmra.mrb[0].mxu0 %v4999
        %v5496 = vpop.f32.mrb[0].mxu0
        %v5497 = vadd.f32 %v5392, %v5496
        %v5498 = vpop.f32.mrb[0].mxu0
        %5499 = vmatprep.mubr.f32.mxu0 %v5009
        %5500 = vmatmul.mubr.f32.gmra.mrb[0].mxu0 %v5008
        %v5501 = vpop.f32.mrb[0].mxu0
        %v5502 = vadd.f32 %v5397, %v5501
        %v5503 = vpop.f32.mrb[0].mxu0
        %5504 = vmatprep.mubr.f32.mxu0 %v5018
        %5505 = vmatmul.mubr.f32.gmra.mrb[0].mxu0 %v5017
        %v5506 = vpop.f32.mrb[0].mxu0
        %v5507 = vadd.f32 %v5402, %v5506
        %v5508 = vpop.f32.mrb[0].mxu0
        %5509 = vmatprep.mubr.f32.mxu0 %v5027
        %5510 = vmatmul.mubr.f32.gmra.mrb[0].mxu0 %v5026
        %v5511 = vpop.f32.mrb[0].mxu0
        %v5512 = vadd.f32 %v5407, %v5511
        %v5513 = vpop.f32.mrb[0].mxu0
        %5514 = vmatprep.mubr.f32.mxu0 %v5036
        %5515 = vmatmul.mubr.f32.gmra.mrb[0].mxu0 %v5035
        %v5516 = vpop.f32.mrb[0].mxu0
        %v5517 = vadd.f32 %v5412, %v5516
        %v5518 = vpop.f32.mrb[0].mxu0
        %5519 = vmatprep.mubr.f32.mxu0 %v5045
        %5520 = vmatmul.mubr.f32.gmra.mrb[0].mxu0 %v5044
        %v5521 = vpop.f32.mrb[0].mxu0
        %v5522 = vadd.f32 %v5417, %v5521
        %v5523 = vpop.f32.mrb[0].mxu0
        %5524 = vmatprep.mubr.f32.mxu0 %v5054
        %5525 = vmatmul.mubr.f32.gmra.mrb[0].mxu0 %v5053
        %v5526 = vpop.f32.mrb[0].mxu0
        %v5527 = vadd.f32 %v5422, %v5526
        %v5528 = vpop.f32.mrb[0].mxu0
        %5529 = vmatprep.mubr.f32.mxu0 %v5063
        %5530 = vmatmul.mubr.f32.gmra.mrb[0].mxu0 %v5062
        %v5531 = vpop.f32.mrb[0].mxu0
        %v5532 = vadd.f32 %v5427, %v5531
        %v5533 = vpop.f32.mrb[0].mxu0
        %5534 = vdwg.mxu0
        %5535 = vmatprep.subr.mxu0 0.0
        %5536 = vmatpush1.msra.mxu0 %v5164
        %5537 = vmatprep.subr.mxu0 0.0
        %5538 = vmatpush1.msra.mxu0 %v5165
        %5539 = vmatprep.subr.mxu0 0.0
        %5540 = vmatpush1.msra.mxu0 %v5166
        %5541 = vmatprep.subr.mxu0 0.0
        %5542 = vmatpush1.msra.mxu0 %v5167
        %5543 = vmatprep.subr.mxu0 0.0
        %5544 = vmatpush1.msra.mxu0 %v5168
        %5545 = vmatprep.subr.mxu0 0.0
        %5546 = vmatpush1.msra.mxu0 %v5169
        %5547 = vmatprep.subr.mxu0 0.0
        %5548 = vmatpush1.msra.mxu0 %v5170
        %5549 = vmatprep.subr.mxu0 0.0
        %5550 = vmatpush1.msra.mxu0 %v5171
        %5551 = vmatprep.subr.mxu0 0.0
        %5552 = vmatpush1.msra.mxu0 %v5172
        %5553 = vmatprep.subr.mxu0 0.0
        %5554 = vmatpush1.msra.mxu0 %v5173
        %5555 = vmatprep.subr.mxu0 0.0
        %5556 = vmatpush1.msra.mxu0 %v5174
        %5557 = vmatprep.subr.mxu0 0.0
        %5558 = vmatpush1.msra.mxu0 %v5175
        %5559 = vmatprep.subr.mxu0 0.0
        %5560 = vmatpush1.msra.mxu0 %v5176
        %5561 = vmatprep.subr.mxu0 0.0
        %5562 = vmatpush1.msra.mxu0 %v5177
        %5563 = vmatprep.subr.mxu0 0.0
        %5564 = vmatpush1.msra.mxu0 %v5178
        %5565 = vmatprep.subr.mxu0 0.0
        %5566 = vmatpush1.msra.mxu0 %v5179
        %5567 = vmatprep.subr.mxu0 0.0
        %5568 = vmatpush1.msra.mxu0 %v5180
        %5569 = vmatprep.subr.mxu0 0.0
        %5570 = vmatpush1.msra.mxu0 %v5181
        %5571 = vmatprep.subr.mxu0 0.0
        %5572 = vmatpush1.msra.mxu0 %v5182
        %5573 = vmatprep.subr.mxu0 0.0
        %5574 = vmatpush1.msra.mxu0 %v5183
        %5575 = vmatprep.subr.mxu0 0.0
        %5576 = vmatpush1.msra.mxu0 %v5184
        %5577 = vmatprep.subr.mxu0 0.0
        %5578 = vmatpush1.msra.mxu0 %v5185
        %5579 = vmatprep.subr.mxu0 0.0
        %5580 = vmatpush1.msra.mxu0 %v5186
        %5581 = vmatprep.subr.mxu0 0.0
        %5582 = vmatpush1.msra.mxu0 %v5187
        %5583 = vmatprep.subr.mxu0 0.0
        %5584 = vmatpush1.msra.mxu0 %v5188
        %5585 = vmatprep.subr.mxu0 0.0
        %5586 = vmatpush1.msra.mxu0 %v5189
        %5587 = vmatprep.subr.mxu0 0.0
        %5588 = vmatpush1.msra.mxu0 %v5190
        %5589 = vmatprep.subr.mxu0 0.0
        %5590 = vmatpush1.msra.mxu0 %v5191
        %5591 = vmatprep.subr.mxu0 0.0
        %5592 = vmatpush1.msra.mxu0 %v5192
        %5593 = vmatprep.subr.mxu0 0.0
        %5594 = vmatpush1.msra.mxu0 %v5193
        %5595 = vmatprep.subr.mxu0 0.0
        %5596 = vmatpush1.msra.mxu0 %v5194
        %5597 = vmatprep.subr.mxu0 0.0
        %5598 = vmatpush1.msra.mxu0 %v5195
        %5599 = vmatprep.mubr.f32.mxu0 %v5002
        %5600 = vmatmul.mubr.f32.gmra.mrb[0].mxu0 %v5001
        %v5601 = vpop.f32.mrb[0].mxu0
        %v5602 = vadd.f32 %v5497, %v5601
        %v5603 = vpop.f32.mrb[0].mxu0
        %5604 = vmatprep.mubr.f32.mxu0 %v5011
        %5605 = vmatmul.mubr.f32.gmra.mrb[0].mxu0 %v5010
        %v5606 = vpop.f32.mrb[0].mxu0
        %v5607 = vadd.f32 %v5502, %v5606
        %v5608 = vpop.f32.mrb[0].mxu0
        %5609 = vmatprep.mubr.f32.mxu0 %v5020
        %5610 = vmatmul.mubr.f32.gmra.mrb[0].mxu0 %v5019
        %v5611 = vpop.f32.mrb[0].mxu0
        %v5612 = vadd.f32 %v5507, %v5611
        %v5613 = vpop.f32.mrb[0].mxu0
        %5614 = vmatprep.mubr.f32.mxu0 %v5029
        %5615 = vmatmul.mubr.f32.gmra.mrb[0].mxu0 %v5028
        %v5616 = vpop.f32.mrb[0].mxu0
        %v5617 = vadd.f32 %v5512, %v5616
        %v5618 = vpop.f32.mrb[0].mxu0
        %5619 = vmatprep.mubr.f32.mxu0 %v5038
        %5620 = vmatmul.mubr.f32.gmra.mrb[0].mxu0 %v5037
        %v5621 = vpop.f32.mrb[0].mxu0
        %v5622 = vadd.f32 %v5517, %v5621
        %v5623 = vpop.f32.mrb[0].mxu0
        %5624 = vmatprep.mubr.f32.mxu0 %v5047
        %5625 = vmatmul.mubr.f32.gmra.mrb[0].mxu0 %v5046
        %v5626 = vpop.f32.mrb[0].mxu0
        %v5627 = vadd.f32 %v5522, %v5626
        %v5628 = vpop.f32.mrb[0].mxu0
        %5629 = vmatprep.mubr.f32.mxu0 %v5056
        %5630 = vmatmul.mubr.f32.gmra.mrb[0].mxu0 %v5055
        %v5631 = vpop.f32.mrb[0].mxu0
        %v5632 = vadd.f32 %v5527, %v5631
        %v5633 = vpop.f32.mrb[0].mxu0
        %5634 = vmatprep.mubr.f32.mxu0 %v5065
        %5635 = vmatmul.mubr.f32.gmra.mrb[0].mxu0 %v5064
        %v5636 = vpop.f32.mrb[0].mxu0
        %v5637 = vadd.f32 %v5532, %v5636
        %v5638 = vpop.f32.mrb[0].mxu0
        %5639 = vdwg.mxu0
        %5640 = vmatprep.subr.mxu0 0.0
        %5641 = vmatpush1.msra.mxu0 %v5196
        %5642 = vmatprep.subr.mxu0 0.0
        %5643 = vmatpush1.msra.mxu0 %v5197
        %5644 = vmatprep.subr.mxu0 0.0
        %5645 = vmatpush1.msra.mxu0 %v5198
        %5646 = vmatprep.subr.mxu0 0.0
        %5647 = vmatpush1.msra.mxu0 %v5199
        %5648 = vmatprep.subr.mxu0 0.0
        %5649 = vmatpush1.msra.mxu0 %v5200
        %5650 = vmatprep.subr.mxu0 0.0
        %5651 = vmatpush1.msra.mxu0 %v5201
        %5652 = vmatprep.subr.mxu0 0.0
        %5653 = vmatpush1.msra.mxu0 %v5202
        %5654 = vmatprep.subr.mxu0 0.0
        %5655 = vmatpush1.msra.mxu0 %v5203
        %5656 = vmatprep.subr.mxu0 0.0
        %5657 = vmatpush1.msra.mxu0 %v5204
        %5658 = vmatprep.subr.mxu0 0.0
        %5659 = vmatpush1.msra.mxu0 %v5205
        %5660 = vmatprep.subr.mxu0 0.0
        %5661 = vmatpush1.msra.mxu0 %v5206
        %5662 = vmatprep.subr.mxu0 0.0
        %5663 = vmatpush1.msra.mxu0 %v5207
        %5664 = vmatprep.subr.mxu0 0.0
        %5665 = vmatpush1.msra.mxu0 %v5208
        %5666 = vmatprep.subr.mxu0 0.0
        %5667 = vmatpush1.msra.mxu0 %v5209
        %5668 = vmatprep.subr.mxu0 0.0
        %5669 = vmatpush1.msra.mxu0 %v5210
        %5670 = vmatprep.subr.mxu0 0.0
        %5671 = vmatpush1.msra.mxu0 %v5211
        %5672 = vmatprep.subr.mxu0 0.0
        %5673 = vmatpush1.msra.mxu0 0.0
        %5674 = vmatprep.subr.mxu0 0.0
        %5675 = vmatpush1.msra.mxu0 0.0
        %5676 = vmatprep.subr.mxu0 0.0
        %5677 = vmatpush1.msra.mxu0 0.0
        %5678 = vmatprep.subr.mxu0 0.0
        %5679 = vmatpush1.msra.mxu0 0.0
        %5680 = vmatprep.subr.mxu0 0.0
        %5681 = vmatpush1.msra.mxu0 0.0
        %5682 = vmatprep.subr.mxu0 0.0
        %5683 = vmatpush1.msra.mxu0 0.0
        %5684 = vmatprep.subr.mxu0 0.0
        %5685 = vmatpush1.msra.mxu0 0.0
        %5686 = vmatprep.subr.mxu0 0.0
        %5687 = vmatpush1.msra.mxu0 0.0
        %5688 = vmatprep.subr.mxu0 0.0
        %5689 = vmatpush1.msra.mxu0 0.0
        %5690 = vmatprep.subr.mxu0 0.0
        %5691 = vmatpush1.msra.mxu0 0.0
        %5692 = vmatprep.subr.mxu0 0.0
        %5693 = vmatpush1.msra.mxu0 0.0
        %5694 = vmatprep.subr.mxu0 0.0
        %5695 = vmatpush1.msra.mxu0 0.0
        %5696 = vmatprep.subr.mxu0 0.0
        %5697 = vmatpush1.msra.mxu0 0.0
        %5698 = vmatprep.subr.mxu0 0.0
        %5699 = vmatpush1.msra.mxu0 0.0
        %5700 = vmatprep.subr.mxu0 0.0
        %5701 = vmatpush1.msra.mxu0 0.0
        %5702 = vmatprep.subr.mxu0 0.0
        %5703 = vmatpush1.msra.mxu0 0.0
        %5704 = vmatprep.mubr.f32.mxu0 0.0
        %5705 = vmatmul.mubr.f32.gmra.mrb[0].mxu0 %v5003
        %v5706 = vpop.f32.mrb[0].mxu0
        %v5707 = vadd.f32 %v5602, %v5706
        %v5708 = vpop.f32.mrb[0].mxu0
        %5709 = vmatprep.mubr.f32.mxu0 0.0
        %5710 = vmatmul.mubr.f32.gmra.mrb[0].mxu0 %v5012
        %v5711 = vpop.f32.mrb[0].mxu0
        %v5712 = vadd.f32 %v5607, %v5711
        %v5713 = vpop.f32.mrb[0].mxu0
        %5714 = vmatprep.mubr.f32.mxu0 0.0
        %5715 = vmatmul.mubr.f32.gmra.mrb[0].mxu0 %v5021
        %v5716 = vpop.f32.mrb[0].mxu0
        %v5717 = vadd.f32 %v5612, %v5716
        %v5718 = vpop.f32.mrb[0].mxu0
        %5719 = vmatprep.mubr.f32.mxu0 0.0
        %5720 = vmatmul.mubr.f32.gmra.mrb[0].mxu0 %v5030
        %v5721 = vpop.f32.mrb[0].mxu0
        %v5722 = vadd.f32 %v5617, %v5721
        %v5723 = vpop.f32.mrb[0].mxu0
        %5724 = vmatprep.mubr.f32.mxu0 0.0
        %5725 = vmatmul.mubr.f32.gmra.mrb[0].mxu0 %v5039
        %v5726 = vpop.f32.mrb[0].mxu0
        %v5727 = vadd.f32 %v5622, %v5726
        %v5728 = vpop.f32.mrb[0].mxu0
        %5729 = vmatprep.mubr.f32.mxu0 0.0
        %5730 = vmatmul.mubr.f32.gmra.mrb[0].mxu0 %v5048
        %v5731 = vpop.f32.mrb[0].mxu0
        %v5732 = vadd.f32 %v5627, %v5731
        %v5733 = vpop.f32.mrb[0].mxu0
        %5734 = vmatprep.mubr.f32.mxu0 0.0
        %5735 = vmatmul.mubr.f32.gmra.mrb[0].mxu0 %v5057
        %v5736 = vpop.f32.mrb[0].mxu0
        %v5737 = vadd.f32 %v5632, %v5736
        %v5738 = vpop.f32.mrb[0].mxu0
        %5739 = vmatprep.mubr.f32.mxu0 0.0
        %5740 = vmatmul.mubr.f32.gmra.mrb[0].mxu0 %v5066
        %v5741 = vpop.f32.mrb[0].mxu0
        %v5742 = vadd.f32 %v5637, %v5741
        %v5743 = vpop.f32.mrb[0].mxu0
        %5744 = vdwg.mxu0
        %vm5745 = vcmp.gt.f32.partialorder %v5707, 0.0
        %vm5746 = vcmp.gt.f32.partialorder %v5712, 0.0
        %vm5747 = vcmp.gt.f32.partialorder %v5717, 0.0
        %vm5748 = vcmp.gt.f32.partialorder %v5722, 0.0
        %vm5749 = vcmp.gt.f32.partialorder %v5727, 0.0
        %vm5750 = vcmp.gt.f32.partialorder %v5732, 0.0
        %vm5751 = vcmp.gt.f32.partialorder %v5737, 0.0
        %vm5752 = vcmp.gt.f32.partialorder %v5742, 0.0
        %v5753 = vmul.f32 %v5707, 0.2
        %v5754 = vmul.f32 %v5712, 0.2
        %v5755 = vmul.f32 %v5717, 0.2
        %v5756 = vmul.f32 %v5722, 0.2
        %v5757 = vmul.f32 %v5727, 0.2
        %v5758 = vmul.f32 %v5732, 0.2
        %v5759 = vmul.f32 %v5737, 0.2
        %v5760 = vmul.f32 %v5742, 0.2
        %v5761 = vsel %vm5745, %v5707, %v5753
        %v5762 = vsel %vm5746, %v5712, %v5754
        %v5763 = vsel %vm5747, %v5717, %v5755
        %v5764 = vsel %vm5748, %v5722, %v5756
        %v5765 = vsel %vm5749, %v5727, %v5757
        %v5766 = vsel %vm5750, %v5732, %v5758
        %v5767 = vsel %vm5751, %v5737, %v5759
        %v5768 = vsel %vm5752, %v5742, %v5760
        %v5769 = vadd.f32 %v5761, %v3909
        %v5770 = vadd.f32 %v5762, %v3910
        %v5771 = vadd.f32 %v5763, %v3911
        %v5772 = vadd.f32 %v5764, %v3912
        %v5773 = vadd.f32 %v5765, %v3913
        %v5774 = vadd.f32 %v5766, %v3914
        %v5775 = vadd.f32 %v5767, %v3915
        %v5776 = vadd.f32 %v5768, %v3916
        %5777 = vst [vmem:[%s163] sm:$0xff] %v5769
        %5778 = vst [vmem:[%s163 + $0x8] sm:$0xff] %v5770
        %5779 = vst [vmem:[%s163 + $0x10] sm:$0xff] %v5771
        %5780 = vst [vmem:[%s163 + $0x18] sm:$0xff] %v5772
        %5781 = vst [vmem:[%s163 + $0x20] sm:$0xff] %v5773
        %5782 = vst [vmem:[%s163 + $0x28] sm:$0xff] %v5774
        %5783 = vst [vmem:[%s163 + $0x30] sm:$0xff] %v5775
        %5784 = vst [vmem:[%s163 + $0x38] sm:$0xff] %v5776
        %s5785 = sand.u32 %s93, 1
        %s5786 = scalar_lea.sflag [#allocation5], %s5785
        %s5787 = sand.u32 %s93, 1
        %s5788 = smul.addr %s5787, 64
        %s5789 = scalar_lea.vmem [#allocation4], %s5788
        // Predicated region
        $region33: #{generator_forward.1} parent=31 // pred_check
          %p5790 = pneg %p103
        $region34: #{generator_forward.1} parent=31 // pred_check_branch
          %5792 = sbr.rel (%p5790) target = $region36
        $region35: #{generator_forward.1} parent=31 // pred_region
          %s5794 = ssub.s32 1024, 1024
          %5795 = vsyncadd %s5786, %s5794
          %s5796 = smul.addr %s17, 8
          %s5797 = smul.addr %s5796, 128
          %s5798 = scalar_lea.hbm %s3, %s5797
          %s5799 = sshll.u32 %s5789, 4
          %s5800 = int_to_ptr.vmem [resolvable:$true] %s5799
          %5805 = dma.vmem_to_hbm [thread:$0]  %s5800, 1024, %s5798, %s5786, 128, 128, 8
        $region36: #{generator_forward.1} parent=31 // pred_fallthru
          _
      $region32: #{generator_forward.1} parent=5 // pred_fallthru
        _
      %p5806 = scmp.le.s32.totalorder 2, %s12
      // Predicated region
      $region37: #{generator_forward.1} parent=5 // pred_check
        %p5807 = pneg %p5806
      $region38: #{generator_forward.1} parent=5 // pred_check_branch
        %5809 = sbr.rel (%p5807) target = $region40
      $region39: #{generator_forward.1} parent=5 // pred_region
        %s5810 = ssub.s32 %s12, 2
        // Predicated region
        $region41: #{generator_forward.1} parent=39 // pred_check
          %p5811 = pneg %p109
        $region42: #{generator_forward.1} parent=39 // pred_check_branch
          %5813 = sbr.rel (%p5811) target = $region44
        $region43: #{generator_forward.1} parent=39 // pred_region
          %s5814 = sand.u32 %s94, 1
          %s5815 = scalar_lea.sflag [#allocation5], %s5814
          %s5816 = sand.u32 %s94, 1
          %s5817 = smul.addr %s5816, 64
          %s5818 = scalar_lea.vmem [#allocation4], %s5817
          %5819 = dma.done %s5815, 1024
        $region44: #{generator_forward.1} parent=39 // pred_fallthru
          _
      $region40: #{generator_forward.1} parent=5 // pred_fallthru
        _
    $region6: #{generator_forward.1} parent=1 // loop_footer
      %s16 = sadd.s32 1, %s12
    $region7: #{generator_forward.1} parent=1 // loop_footer_branch
      %11 = sbr.rel target = $region3
    $region8: #{generator_forward.1} parent=1 // loop_exit
      _
    %5820 = vsyncpa [#allocation5], 1
    %s5821 = scalar_lea.sflag [#allocation5], 1
    %5822 = vsyncpa %s5821, 1

</llo_original>
